<compile_context>
chip_gen: v5e
topology: v5e:2x2
jax: 0.10.0
libtpu: 0.0.40
codegen_flags: <defaults>
</compile_context>

<pallas_src>
import functools

import numpy as np
import jax
import jax.numpy as jnp
from jax import lax
from jax.experimental import pallas as pl
from jax.experimental.pallas import tpu as pltpu


# ---------------------------------------------------------------------------
# Fused kernel: one batch tile per grid step.
#   x_ref   : (TB, 30, 30)      spatially pre-padded single-channel input
#   m1_ref  : (3, 30, 448)      conv1 banded matrices (per dy), lanes = 16*w+c
#   b1_ref  : (1, 448)          conv1 bias tiled over w
#   m2_ref  : (3, 432, 448)     conv2 banded matrices (W-pad + W-pool folded in)
#   b2_ref  : (1, 448)          conv2 bias tiled over w
#   wf1_ref : (2912, 128)       fc1 weights (pool compaction + flatten order folded in)
#   bf1_ref : (1, 128)
#   wf2_ref : (128, 128)        fc2 weights, N padded 47 -> 128
#   bf2_ref : (1, 128)
#   o_ref   : (TB, 128)
# ---------------------------------------------------------------------------
def cnn_fused_kernel(x_ref, m1_ref, b1_ref, m2_ref, b2_ref,
                     wf1_ref, bf1_ref, wf2_ref, bf2_ref, o_ref):
    TB = x_ref.shape[0]
    f32 = jnp.float32

    # ---- conv1 + ReLU: 3 banded MXU matmuls (rows = (b, h), lanes = 16*w + c)
    x = x_ref[...]                                           # (TB, 30, 30)
    acc1 = jnp.zeros((TB * 28, 448), f32)
    for dy in range(3):
        xs = x[:, dy:dy + 28, :].reshape(TB * 28, 30)
        acc1 = acc1 + jnp.dot(xs, m1_ref[dy], preferred_element_type=f32)
    acc1 = jnp.maximum(acc1 + b1_ref[...], 0.0)

    # ---- max-pool #1 (2x2, stride 2)
    h1 = jnp.max(acc1.reshape(TB, 14, 2, 448), axis=2)       # H-pool -> (TB,14,448)
    m1w = jnp.maximum(h1[:, :, 0:432], h1[:, :, 16:448])     # W-pool; valid lanes 32*wp+ci

    # ---- conv2 + ReLU: 3 banded MXU matmuls, K=432
    #      (SAME W-padding and the W-pool lane compaction live inside m2_ref;
    #       SAME H-padding is two zero rows concatenated here.)
    zrow = jnp.zeros((TB, 1, 432), f32)
    mp = jnp.concatenate([zrow, m1w, zrow], axis=1)          # (TB, 16, 432)
    acc2 = jnp.zeros((TB * 14, 448), f32)
    for dy in range(3):
        slab = mp[:, dy:dy + 14, :].reshape(TB * 14, 432)
        acc2 = acc2 + jnp.dot(slab, m2_ref[dy], preferred_element_type=f32)
    acc2 = jnp.maximum(acc2 + b2_ref[...], 0.0)              # lanes = 32*wo + co

    # ---- max-pool #2 + flatten (NHWC flatten order is baked into wf1)
    h2 = jnp.max(acc2.reshape(TB, 7, 2, 448), axis=2)        # H-pool -> (TB,7,448)
    m2w = jnp.maximum(h2[:, :, 0:416], h2[:, :, 32:448])     # W-pool; valid lanes 64*q+co
    flat = m2w.reshape(TB, 7 * 416)                          # (TB, 2912)

    # ---- fc1 + ReLU, fc2 (lane-dense 128-wide output store)
    hf = jnp.dot(flat, wf1_ref[...], preferred_element_type=f32)
    hf = jnp.maximum(hf + bf1_ref[...], 0.0)
    o = jnp.dot(hf, wf2_ref[...], preferred_element_type=f32) + bf2_ref[...]
    o_ref[...] = o.astype(o_ref.dtype)


# ---------------------------------------------------------------------------
# One-time host-side parameter repack (banded conv matrices, folded pooling /
# padding / flatten order, lane padding of fc2).
# ---------------------------------------------------------------------------
def prepare_cnn_params(params):
    w1 = np.asarray(params["w_conv1"], np.float32)   # (16, 1, 3, 3)
    b1 = np.asarray(params["b_conv1"], np.float32)   # (16,)
    w2 = np.asarray(params["w_conv2"], np.float32)   # (32, 16, 3, 3)
    b2 = np.asarray(params["b_conv2"], np.float32)   # (32,)
    wf1 = np.asarray(params["w_fc1"], np.float32)    # (1568, 128)
    bf1 = np.asarray(params["b_fc1"], np.float32)    # (128,)
    wf2 = np.asarray(params["w_fc2"], np.float32)    # (128, 47)
    bf2 = np.asarray(params["b_fc2"], np.float32)    # (47,)

    # conv1: y1[b, h, 16*w + c] = sum_dy  x_pad[b, h+dy, :] @ M1[dy]
    M1 = np.zeros((3, 30, 448), np.float32)
    for dy in range(3):
        for dx in range(3):
            for w in range(28):
                M1[dy, w + dx, 16 * w:16 * w + 16] += w1[:, 0, dy, dx]
    b1t = np.tile(b1, 28).reshape(1, 448)

    # conv2: input lanes 32*wp + ci (ci < 16 valid, upper half of each 32-lane
    # group is W-pool garbage -> zero rows).  Output lanes 32*wo + co.
    # SAME W-padding is encoded by which (wo, dx) pairs get a block.
    M2 = np.zeros((3, 432, 448), np.float32)
    for dy in range(3):
        for dx in range(3):
            blk = w2[:, :, dy, dx].T                 # (ci=16, co=32)
            for wo in range(14):
                wx = wo + dx                         # padded input W position
                if 1 <= wx <= 14:
                    jin = 32 * (wx - 1)
                    M2[dy, jin:jin + 16, 32 * wo:32 * wo + 32] += blk
    b2t = np.tile(b2, 14).reshape(1, 448)

    # fc1: fold the conv2 W-pool compaction (valid lanes 64*q + co) and torch's
    # NCHW view(-1, 32*7*7) order into one (7*416, 128) matrix.
    Wf1 = np.zeros((7 * 416, 128), np.float32)
    ho = np.arange(7)[:, None, None]
    q = np.arange(7)[None, :, None]
    co = np.arange(32)[None, None, :]
    dst = (ho * 416 + 64 * q + co).reshape(-1)
    src = (co * 49 + ho * 7 + q).reshape(-1)
    Wf1[dst] = wf1[src]
    bf1p = bf1.reshape(1, 128)

    # fc2: pad N 47 -> 128 so the final store uses all lanes.
    Wf2 = np.zeros((128, 128), np.float32)
    Wf2[:, :47] = wf2
    bf2p = np.zeros((1, 128), np.float32)
    bf2p[0, :47] = bf2

    return tuple(jnp.asarray(a) for a in (M1, b1t, M2, b2t, Wf1, bf1p, Wf2, bf2p))


def _pick_batch_tile(batch):
    """Generation-aware batch tile: smaller on v7x (64 MiB VMEM)."""
    try:
        vmem_bytes = pltpu.get_tpu_info().vmem_capacity_bytes
    except Exception:
        vmem_bytes = 64 * 1024 * 1024
    tile = 16 if vmem_bytes >= 96 * 1024 * 1024 else 8
    return max(1, min(batch, tile))


# ---------------------------------------------------------------------------
# Fused forward pass.
# ---------------------------------------------------------------------------
@functools.partial(jax.jit, static_argnames=("batch_tile",))
def cnn_forward(x_nchw, packed, *, batch_tile):
    M1, b1t, M2, b2t, Wf1, bf1, Wf2, bf2 = packed
    B = x_nchw.shape[0]
    TB = batch_tile
    Bp = -(-B // TB) * TB

    # NCHW (B,1,28,28) -> (Bp,30,30): squeeze the single channel, pad the batch
    # to a tile multiple, and apply the 3x3 SAME zero border once in HBM.
    x = jnp.pad(x_nchw[:, 0], ((0, Bp - B), (1, 1), (1, 1)))

    const2 = lambda i: (0, 0)
    const3 = lambda i: (0, 0, 0)

    out = pl.pallas_call(
        cnn_fused_kernel,
        out_shape=jax.ShapeDtypeStruct((Bp, 128), jnp.float32),
        grid_spec=pltpu.PrefetchScalarGridSpec(
            num_scalar_prefetch=0,
            grid=(Bp // TB,),
            in_specs=[
                pl.BlockSpec((TB, 30, 30), lambda i: (i, 0, 0)),
                pl.BlockSpec((3, 30, 448), const3),
                pl.BlockSpec((1, 448), const2),
                pl.BlockSpec((3, 432, 448), const3),
                pl.BlockSpec((1, 448), const2),
                pl.BlockSpec((7 * 416, 128), const2),
                pl.BlockSpec((1, 128), const2),
                pl.BlockSpec((128, 128), const2),
                pl.BlockSpec((1, 128), const2),
            ],
            out_specs=pl.BlockSpec((TB, 128), lambda i: (i, 0)),
        ),
        compiler_params=pltpu.CompilerParams(
            dimension_semantics=("parallel",),
            vmem_limit_bytes=40 * 1024 * 1024,
        ),
    )(x, M1, b1t, M2, b2t, Wf1, bf1, Wf2, bf2)

    return out[:B, :47]


# ---------------------------------------------------------------------------
# Pure-JAX reference (identical semantics to the PyTorch module) for checking.
# ---------------------------------------------------------------------------
def cnn_reference(x, params):
    def conv(x, w, b):
        y = lax.conv_general_dilated(
            x, w, window_strides=(1, 1), padding="SAME",
            dimension_numbers=("NCHW", "OIHW", "NCHW"))
        return y + b.reshape(1, -1, 1, 1)

    def pool(x):
        return lax.reduce_window(x, -jnp.inf, lax.max,
                                 (1, 1, 2, 2), (1, 1, 2, 2), "VALID")

    x = pool(jnp.maximum(conv(x, params["w_conv1"], params["b_conv1"]), 0.0))
    x = pool(jnp.maximum(conv(x, params["w_conv2"], params["b_conv2"]), 0.0))
    x = x.reshape(x.shape[0], 32 * 7 * 7)
    x = jnp.maximum(x @ params["w_fc1"] + params["b_fc1"], 0.0)
    return x @ params["w_fc2"] + params["b_fc2"]


def init_params(key):
    ks = jax.random.split(key, 8)
    def w(k, shape, fan_in):
        return (jax.random.normal(k, shape, jnp.float32) / jnp.sqrt(fan_in)).astype(jnp.float32)
    return {
        "w_conv1": w(ks[0], (16, 1, 3, 3), 1 * 9),
        "b_conv1": w(ks[1], (16,), 9.0) * 0.1,
        "w_conv2": w(ks[2], (32, 16, 3, 3), 16 * 9),
        "b_conv2": w(ks[3], (32,), 144.0) * 0.1,
        "w_fc1":   w(ks[4], (32 * 7 * 7, 128), 32 * 7 * 7),
        "b_fc1":   w(ks[5], (128,), 1568.0) * 0.1,
        "w_fc2":   w(ks[6], (128, 47), 128),
        "b_fc2":   w(ks[7], (47,), 128.0) * 0.1,
    }


if __name__ == "__main__":
    key = jax.random.PRNGKey(0)
    k_x, k_p = jax.random.split(key)
    # Input shape is forced to (B, 1, 28, 28) by the 32*7*7 flatten in forward().
    x = jax.random.normal(k_x, (2, 1, 28, 28), jnp.float32)
    params = init_params(k_p)

    packed = prepare_cnn_params(params)      # one-time weight repack
    tb = _pick_batch_tile(x.shape[0])

    out = cnn_forward(x, packed, batch_tile=tb)
    out = jax.block_until_ready(out)
    assert out.shape == (2, 47), out.shape

    ref = cnn_reference(x, params)
    max_err = float(jnp.max(jnp.abs(out - ref)))
    assert jnp.allclose(out, ref, atol=1e-3, rtol=1e-3), max_err

    print("KERNEL_OK")
</pallas_src>

<mosaic_0001>
module attributes {stable_mosaic.version = 11 : i64} {
  func.func @cnn_fused_kernel(%arg0: i32, %arg1: memref<2x30x30xf32, #tpu.memory_space<vmem>>, %arg2: memref<3x30x448xf32, #tpu.memory_space<vmem>>, %arg3: memref<1x448xf32, #tpu.memory_space<vmem>>, %arg4: memref<3x432x448xf32, #tpu.memory_space<vmem>>, %arg5: memref<1x448xf32, #tpu.memory_space<vmem>>, %arg6: memref<2912x128xf32, #tpu.memory_space<vmem>>, %arg7: memref<1x128xf32, #tpu.memory_space<vmem>>, %arg8: memref<128x128xf32, #tpu.memory_space<vmem>>, %arg9: memref<1x128xf32, #tpu.memory_space<vmem>>, %arg10: memref<2x128xf32, #tpu.memory_space<vmem>>) attributes {dimension_semantics = [#tpu.dimension_semantics<parallel>], iteration_bounds = array<i64: 1>, scalar_prefetch = 0 : i64, scratch_operands = 0 : i64, tpu.core_type = #tpu.core_type<tc>, window_params = [{transform_indices = @transform_0, window_bounds = array<i64: 2, 30, 30>}, {pipeline_mode = #tpu.pipeline_mode<synchronous>, transform_indices = @transform_1, window_bounds = array<i64: 3, 30, 448>}, {pipeline_mode = #tpu.pipeline_mode<synchronous>, transform_indices = @transform_2, window_bounds = array<i64: 1, 448>}, {pipeline_mode = #tpu.pipeline_mode<synchronous>, transform_indices = @transform_3, window_bounds = array<i64: 3, 432, 448>}, {pipeline_mode = #tpu.pipeline_mode<synchronous>, transform_indices = @transform_4, window_bounds = array<i64: 1, 448>}, {pipeline_mode = #tpu.pipeline_mode<synchronous>, transform_indices = @transform_5, window_bounds = array<i64: 2912, 128>}, {pipeline_mode = #tpu.pipeline_mode<synchronous>, transform_indices = @transform_6, window_bounds = array<i64: 1, 128>}, {pipeline_mode = #tpu.pipeline_mode<synchronous>, transform_indices = @transform_7, window_bounds = array<i64: 128, 128>}, {pipeline_mode = #tpu.pipeline_mode<synchronous>, transform_indices = @transform_8, window_bounds = array<i64: 1, 128>}, {transform_indices = @transform_9, window_bounds = array<i64: 2, 128>}]} {
    %c0 = arith.constant 0 : index
    %c0_0 = arith.constant 0 : index
    %c0_1 = arith.constant 0 : index
    %0 = vector.load %arg1[%c0, %c0_0, %c0_1] : memref<2x30x30xf32, #tpu.memory_space<vmem>>, vector<2x30x30xf32>
    %cst = arith.constant 0.000000e+00 : f32
    %1 = vector.broadcast %cst : f32 to vector<56x448xf32>
    %2 = vector.extract_strided_slice %0 {offsets = [0, 0, 0], sizes = [2, 28, 30], strides = [1, 1, 1]} : vector<2x30x30xf32> to vector<2x28x30xf32>
    %3 = vector.shape_cast %2 : vector<2x28x30xf32> to vector<56x30xf32>
    %c0_2 = arith.constant 0 : index
    %c0_3 = arith.constant 0 : index
    %c0_4 = arith.constant 0 : index
    %4 = vector.load %arg2[%c0_2, %c0_3, %c0_4] : memref<3x30x448xf32, #tpu.memory_space<vmem>>, vector<1x30x448xf32>
    %5 = vector.shape_cast %4 : vector<1x30x448xf32> to vector<30x448xf32>
    %cst_5 = arith.constant dense<0.000000e+00> : vector<56x448xf32>
    %6 = tpu.matmul %3, %5, %cst_5 {dimension_numbers = #tpu.dot_dimension_numbers<[1], [0], [0], [1], [0, 0, 1, 1], [], []>} : vector<56x30xf32>, vector<30x448xf32>, vector<56x448xf32> -> vector<56x448xf32>
    %7 = arith.addf %1, %6 : vector<56x448xf32>
    %8 = vector.extract_strided_slice %0 {offsets = [0, 1, 0], sizes = [2, 28, 30], strides = [1, 1, 1]} : vector<2x30x30xf32> to vector<2x28x30xf32>
    %9 = vector.shape_cast %8 : vector<2x28x30xf32> to vector<56x30xf32>
    %c1 = arith.constant 1 : index
    %c0_6 = arith.constant 0 : index
    %c0_7 = arith.constant 0 : index
    %10 = vector.load %arg2[%c1, %c0_6, %c0_7] : memref<3x30x448xf32, #tpu.memory_space<vmem>>, vector<1x30x448xf32>
    %11 = vector.shape_cast %10 : vector<1x30x448xf32> to vector<30x448xf32>
    %cst_8 = arith.constant dense<0.000000e+00> : vector<56x448xf32>
    %12 = tpu.matmul %9, %11, %cst_8 {dimension_numbers = #tpu.dot_dimension_numbers<[1], [0], [0], [1], [0, 0, 1, 1], [], []>} : vector<56x30xf32>, vector<30x448xf32>, vector<56x448xf32> -> vector<56x448xf32>
    %13 = arith.addf %7, %12 : vector<56x448xf32>
    %14 = vector.extract_strided_slice %0 {offsets = [0, 2, 0], sizes = [2, 28, 30], strides = [1, 1, 1]} : vector<2x30x30xf32> to vector<2x28x30xf32>
    %15 = vector.shape_cast %14 : vector<2x28x30xf32> to vector<56x30xf32>
    %c2 = arith.constant 2 : index
    %c0_9 = arith.constant 0 : index
    %c0_10 = arith.constant 0 : index
    %16 = vector.load %arg2[%c2, %c0_9, %c0_10] : memref<3x30x448xf32, #tpu.memory_space<vmem>>, vector<1x30x448xf32>
    %17 = vector.shape_cast %16 : vector<1x30x448xf32> to vector<30x448xf32>
    %cst_11 = arith.constant dense<0.000000e+00> : vector<56x448xf32>
    %18 = tpu.matmul %15, %17, %cst_11 {dimension_numbers = #tpu.dot_dimension_numbers<[1], [0], [0], [1], [0, 0, 1, 1], [], []>} : vector<56x30xf32>, vector<30x448xf32>, vector<56x448xf32> -> vector<56x448xf32>
    %19 = arith.addf %13, %18 : vector<56x448xf32>
    %c0_12 = arith.constant 0 : index
    %c0_13 = arith.constant 0 : index
    %20 = vector.load %arg3[%c0_12, %c0_13] : memref<1x448xf32, #tpu.memory_space<vmem>>, vector<1x448xf32>
    %21 = vector.broadcast %20 : vector<1x448xf32> to vector<56x448xf32>
    %22 = arith.addf %19, %21 : vector<56x448xf32>
    %cst_14 = arith.constant 0.000000e+00 : f32
    %23 = vector.broadcast %cst_14 : f32 to vector<56x448xf32>
    %24 = arith.maximumf %22, %23 : vector<56x448xf32>
    %25 = vector.shape_cast %24 : vector<56x448xf32> to vector<2x14x2x448xf32>
    %cst_15 = arith.constant dense<0xFF800000> : vector<2x14x448xf32>
    %26 = vector.multi_reduction <maximumf>, %25, %cst_15 [2] : vector<2x14x2x448xf32> to vector<2x14x448xf32>
    %27 = vector.extract_strided_slice %26 {offsets = [0, 0, 0], sizes = [2, 14, 432], strides = [1, 1, 1]} : vector<2x14x448xf32> to vector<2x14x432xf32>
    %28 = vector.extract_strided_slice %26 {offsets = [0, 0, 16], sizes = [2, 14, 432], strides = [1, 1, 1]} : vector<2x14x448xf32> to vector<2x14x432xf32>
    %29 = arith.maximumf %27, %28 : vector<2x14x432xf32>
    %cst_16 = arith.constant 0.000000e+00 : f32
    %30 = vector.broadcast %cst_16 : f32 to vector<2x1x432xf32>
    %31 = tpu.concatenate %30, %29, %30 in 1 : vector<2x1x432xf32>, vector<2x14x432xf32>, vector<2x1x432xf32> -> vector<2x16x432xf32>
    %cst_17 = arith.constant 0.000000e+00 : f32
    %32 = vector.broadcast %cst_17 : f32 to vector<28x448xf32>
    %33 = vector.extract_strided_slice %31 {offsets = [0, 0, 0], sizes = [2, 14, 432], strides = [1, 1, 1]} : vector<2x16x432xf32> to vector<2x14x432xf32>
    %34 = vector.shape_cast %33 : vector<2x14x432xf32> to vector<28x432xf32>
    %c0_18 = arith.constant 0 : index
    %c0_19 = arith.constant 0 : index
    %c0_20 = arith.constant 0 : index
    %35 = vector.load %arg4[%c0_18, %c0_19, %c0_20] : memref<3x432x448xf32, #tpu.memory_space<vmem>>, vector<1x432x448xf32>
    %36 = vector.shape_cast %35 : vector<1x432x448xf32> to vector<432x448xf32>
    %cst_21 = arith.constant dense<0.000000e+00> : vector<28x448xf32>
    %37 = tpu.matmul %34, %36, %cst_21 {dimension_numbers = #tpu.dot_dimension_numbers<[1], [0], [0], [1], [0, 0, 1, 1], [], []>} : vector<28x432xf32>, vector<432x448xf32>, vector<28x448xf32> -> vector<28x448xf32>
    %38 = arith.addf %32, %37 : vector<28x448xf32>
    %39 = vector.extract_strided_slice %31 {offsets = [0, 1, 0], sizes = [2, 14, 432], strides = [1, 1, 1]} : vector<2x16x432xf32> to vector<2x14x432xf32>
    %40 = vector.shape_cast %39 : vector<2x14x432xf32> to vector<28x432xf32>
    %c1_22 = arith.constant 1 : index
    %c0_23 = arith.constant 0 : index
    %c0_24 = arith.constant 0 : index
    %41 = vector.load %arg4[%c1_22, %c0_23, %c0_24] : memref<3x432x448xf32, #tpu.memory_space<vmem>>, vector<1x432x448xf32>
    %42 = vector.shape_cast %41 : vector<1x432x448xf32> to vector<432x448xf32>
    %cst_25 = arith.constant dense<0.000000e+00> : vector<28x448xf32>
    %43 = tpu.matmul %40, %42, %cst_25 {dimension_numbers = #tpu.dot_dimension_numbers<[1], [0], [0], [1], [0, 0, 1, 1], [], []>} : vector<28x432xf32>, vector<432x448xf32>, vector<28x448xf32> -> vector<28x448xf32>
    %44 = arith.addf %38, %43 : vector<28x448xf32>
    %45 = vector.extract_strided_slice %31 {offsets = [0, 2, 0], sizes = [2, 14, 432], strides = [1, 1, 1]} : vector<2x16x432xf32> to vector<2x14x432xf32>
    %46 = vector.shape_cast %45 : vector<2x14x432xf32> to vector<28x432xf32>
    %c2_26 = arith.constant 2 : index
    %c0_27 = arith.constant 0 : index
    %c0_28 = arith.constant 0 : index
    %47 = vector.load %arg4[%c2_26, %c0_27, %c0_28] : memref<3x432x448xf32, #tpu.memory_space<vmem>>, vector<1x432x448xf32>
    %48 = vector.shape_cast %47 : vector<1x432x448xf32> to vector<432x448xf32>
    %cst_29 = arith.constant dense<0.000000e+00> : vector<28x448xf32>
    %49 = tpu.matmul %46, %48, %cst_29 {dimension_numbers = #tpu.dot_dimension_numbers<[1], [0], [0], [1], [0, 0, 1, 1], [], []>} : vector<28x432xf32>, vector<432x448xf32>, vector<28x448xf32> -> vector<28x448xf32>
    %50 = arith.addf %44, %49 : vector<28x448xf32>
    %c0_30 = arith.constant 0 : index
    %c0_31 = arith.constant 0 : index
    %51 = vector.load %arg5[%c0_30, %c0_31] : memref<1x448xf32, #tpu.memory_space<vmem>>, vector<1x448xf32>
    %52 = vector.broadcast %51 : vector<1x448xf32> to vector<28x448xf32>
    %53 = arith.addf %50, %52 : vector<28x448xf32>
    %cst_32 = arith.constant 0.000000e+00 : f32
    %54 = vector.broadcast %cst_32 : f32 to vector<28x448xf32>
    %55 = arith.maximumf %53, %54 : vector<28x448xf32>
    %56 = vector.shape_cast %55 : vector<28x448xf32> to vector<2x7x2x448xf32>
    %cst_33 = arith.constant dense<0xFF800000> : vector<2x7x448xf32>
    %57 = vector.multi_reduction <maximumf>, %56, %cst_33 [2] : vector<2x7x2x448xf32> to vector<2x7x448xf32>
    %58 = vector.extract_strided_slice %57 {offsets = [0, 0, 0], sizes = [2, 7, 416], strides = [1, 1, 1]} : vector<2x7x448xf32> to vector<2x7x416xf32>
    %59 = vector.extract_strided_slice %57 {offsets = [0, 0, 32], sizes = [2, 7, 416], strides = [1, 1, 1]} : vector<2x7x448xf32> to vector<2x7x416xf32>
    %60 = arith.maximumf %58, %59 : vector<2x7x416xf32>
    %61 = vector.shape_cast %60 : vector<2x7x416xf32> to vector<2x2912xf32>
    %c0_34 = arith.constant 0 : index
    %c0_35 = arith.constant 0 : index
    %62 = vector.load %arg6[%c0_34, %c0_35] : memref<2912x128xf32, #tpu.memory_space<vmem>>, vector<2912x128xf32>
    %cst_36 = arith.constant dense<0.000000e+00> : vector<2x128xf32>
    %63 = tpu.matmul %61, %62, %cst_36 {dimension_numbers = #tpu.dot_dimension_numbers<[1], [0], [0], [1], [0, 0, 1, 1], [], []>} : vector<2x2912xf32>, vector<2912x128xf32>, vector<2x128xf32> -> vector<2x128xf32>
    %c0_37 = arith.constant 0 : index
    %c0_38 = arith.constant 0 : index
    %64 = vector.load %arg7[%c0_37, %c0_38] : memref<1x128xf32, #tpu.memory_space<vmem>>, vector<1x128xf32>
    %65 = vector.broadcast %64 : vector<1x128xf32> to vector<2x128xf32>
    %66 = arith.addf %63, %65 : vector<2x128xf32>
    %cst_39 = arith.constant 0.000000e+00 : f32
    %67 = vector.broadcast %cst_39 : f32 to vector<2x128xf32>
    %68 = arith.maximumf %66, %67 : vector<2x128xf32>
    %c0_40 = arith.constant 0 : index
    %c0_41 = arith.constant 0 : index
    %69 = vector.load %arg8[%c0_40, %c0_41] : memref<128x128xf32, #tpu.memory_space<vmem>>, vector<128x128xf32>
    %cst_42 = arith.constant dense<0.000000e+00> : vector<2x128xf32>
    %70 = tpu.matmul %68, %69, %cst_42 {dimension_numbers = #tpu.dot_dimension_numbers<[1], [0], [0], [1], [0, 0, 1, 1], [], []>} : vector<2x128xf32>, vector<128x128xf32>, vector<2x128xf32> -> vector<2x128xf32>
    %c0_43 = arith.constant 0 : index
    %c0_44 = arith.constant 0 : index
    %71 = vector.load %arg9[%c0_43, %c0_44] : memref<1x128xf32, #tpu.memory_space<vmem>>, vector<1x128xf32>
    %72 = vector.broadcast %71 : vector<1x128xf32> to vector<2x128xf32>
    %73 = arith.addf %70, %72 : vector<2x128xf32>
    %c0_45 = arith.constant 0 : index
    %c0_46 = arith.constant 0 : index
    %74 = vector.load %arg10[%c0_45, %c0_46] : memref<2x128xf32, #tpu.memory_space<vmem>>, vector<2x128xf32>
    tpu.vector_store %arg10[%c0_45, %c0_46], %73 {strides = array<i32>} : memref<2x128xf32, #tpu.memory_space<vmem>>, vector<2x128xf32>,
    return
  }
  func.func @transform_0(%arg0: i32) -> (i32, i32, i32) {
    %c0_i32 = arith.constant 0 : i32
    %c0_i32_0 = arith.constant 0 : i32
    %c0_i32_1 = arith.constant 0 : i32
    return %arg0, %c0_i32, %c0_i32_0 : i32, i32, i32
  }
  func.func @transform_1(%arg0: i32) -> (i32, i32, i32) {
    %c0_i32 = arith.constant 0 : i32
    %c0_i32_0 = arith.constant 0 : i32
    %c0_i32_1 = arith.constant 0 : i32
    %c0_i32_2 = arith.constant 0 : i32
    return %c0_i32, %c0_i32_0, %c0_i32_1 : i32, i32, i32
  }
  func.func @transform_2(%arg0: i32) -> (i32, i32) {
    %c0_i32 = arith.constant 0 : i32
    %c0_i32_0 = arith.constant 0 : i32
    %c0_i32_1 = arith.constant 0 : i32
    return %c0_i32, %c0_i32_0 : i32, i32
  }
  func.func @transform_3(%arg0: i32) -> (i32, i32, i32) {
    %c0_i32 = arith.constant 0 : i32
    %c0_i32_0 = arith.constant 0 : i32
    %c0_i32_1 = arith.constant 0 : i32
    %c0_i32_2 = arith.constant 0 : i32
    return %c0_i32, %c0_i32_0, %c0_i32_1 : i32, i32, i32
  }
  func.func @transform_4(%arg0: i32) -> (i32, i32) {
    %c0_i32 = arith.constant 0 : i32
    %c0_i32_0 = arith.constant 0 : i32
    %c0_i32_1 = arith.constant 0 : i32
    return %c0_i32, %c0_i32_0 : i32, i32
  }
  func.func @transform_5(%arg0: i32) -> (i32, i32) {
    %c0_i32 = arith.constant 0 : i32
    %c0_i32_0 = arith.constant 0 : i32
    %c0_i32_1 = arith.constant 0 : i32
    return %c0_i32, %c0_i32_0 : i32, i32
  }
  func.func @transform_6(%arg0: i32) -> (i32, i32) {
    %c0_i32 = arith.constant 0 : i32
    %c0_i32_0 = arith.constant 0 : i32
    %c0_i32_1 = arith.constant 0 : i32
    return %c0_i32, %c0_i32_0 : i32, i32
  }
  func.func @transform_7(%arg0: i32) -> (i32, i32) {
    %c0_i32 = arith.constant 0 : i32
    %c0_i32_0 = arith.constant 0 : i32
    %c0_i32_1 = arith.constant 0 : i32
    return %c0_i32, %c0_i32_0 : i32, i32
  }
  func.func @transform_8(%arg0: i32) -> (i32, i32) {
    %c0_i32 = arith.constant 0 : i32
    %c0_i32_0 = arith.constant 0 : i32
    %c0_i32_1 = arith.constant 0 : i32
    return %c0_i32, %c0_i32_0 : i32, i32
  }
  func.func @transform_9(%arg0: i32) -> (i32, i32) {
    %c0_i32 = arith.constant 0 : i32
    %c0_i32_0 = arith.constant 0 : i32
    return %arg0, %c0_i32 : i32, i32
  }
}

</mosaic_0001>

<llo_original>
// kernel: cnn_forward.1
$region0: #{cnn_forward.1}
  #allocation0 [shape = 'u32[]', space=smem, size = 0x4, offset = 0x4, fixed_abs, tag = 'smem constant byte address 0x4 - core index']
  #allocation1 [shape = 'u32[72,128]{1,0:T(1,128)}', space=vmem, size = 0x9000, scoped, tag = 'internal scratch']
  %s0 = inlined_call_operand.vmem [shape: f32[2,30,30], index: 0, kind: input, shape index: {}]
  %s1 = inlined_call_operand.hbm [shape: f32[3,30,448], index: 1, kind: input, shape index: {}]
  %s2 = inlined_call_operand.hbm [shape: f32[1,448], index: 2, kind: input, shape index: {}]
  %s3 = inlined_call_operand.hbm [shape: f32[3,432,448], index: 3, kind: input, shape index: {}]
  %s4 = inlined_call_operand.hbm [shape: f32[1,448], index: 4, kind: input, shape index: {}]
  %s5 = inlined_call_operand.hbm [shape: f32[2912,128], index: 5, kind: input, shape index: {}]
  %s6 = inlined_call_operand.hbm [shape: f32[1,128], index: 6, kind: input, shape index: {}]
  %s7 = inlined_call_operand.hbm [shape: f32[128,128], index: 7, kind: input, shape index: {}]
  %s8 = inlined_call_operand.hbm [shape: f32[1,128], index: 8, kind: input, shape index: {}]
  %s9 = inlined_call_operand.hbm [shape: f32[2,128], index: 9, kind: output, shape index: {}]
  %s10 = sld [smem:[#allocation0]]
  $region78: #{cnn_forward.1} parent=0
    _
  %s12 = ssub.s32 1, %s10
  %s13 = scalar_select 0, %s12, %s10
  $region1: #{cnn_forward.1} parent=0
    #allocation2 [shape = 'u8[196608]{0}', space=vmem, size = 0x30000, scoped, tag = 'input window, operand 1, single buffered']
    #allocation3 [shape = 's32[1]{0}', space=sflag, size = 0x4, scoped, tag = 'scoped memory for cnn_forward.1']
    #allocation4 [shape = 's32[1]{0}', space=sflag, size = 0x4, scoped, tag = 'scoped memory for cnn_forward.1']
    #allocation5 [shape = 'u8[2048]{0}', space=vmem, size = 0x800, scoped, tag = 'input window, operand 2, single buffered']
    #allocation6 [shape = 's32[1]{0}', space=sflag, size = 0x4, scoped, tag = 'scoped memory for cnn_forward.1']
    #allocation7 [shape = 'u8[2654208]{0}', space=vmem, size = 0x288000, scoped, tag = 'input window, operand 3, single buffered']
    #allocation8 [shape = 'u8[2048]{0}', space=vmem, size = 0x800, scoped, tag = 'input window, operand 4, single buffered']
    #allocation9 [shape = 's32[1]{0}', space=sflag, size = 0x4, scoped, tag = 'scoped memory for cnn_forward.1']
    #allocation10 [shape = 'u8[1490944]{0}', space=vmem, size = 0x16c000, scoped, tag = 'input window, operand 5, single buffered']
    #allocation11 [shape = 'u8[512]{0}', space=vmem, size = 0x400, scoped, tag = 'input window, operand 6, single buffered']
    #allocation12 [shape = 's32[1]{0}', space=sflag, size = 0x4, scoped, tag = 'scoped memory for cnn_forward.1']
    #allocation13 [shape = 'u8[65536]{0}', space=vmem, size = 0x10000, scoped, tag = 'input window, operand 7, single buffered']
    #allocation14 [shape = 'u8[512]{0}', space=vmem, size = 0x400, scoped, tag = 'input window, operand 8, single buffered']
    #allocation15 [shape = 's32[1]{0}', space=sflag, size = 0x4, scoped, tag = 'scoped memory for cnn_forward.1']
    #allocation16 [shape = 'u8[1024]{0}', space=vmem, size = 0x400, scoped, tag = 'output window, operand 0, single buffered']
    %14 = vsyncpa [#allocation3], 0
    %15 = vsyncpa [#allocation6], 0
    %16 = vsyncpa [#allocation9], 0
    %17 = vsyncpa [#allocation12], 0
    %18 = vsyncpa [#allocation15], 0
    %19 = vsyncpa [#allocation4], 0
    // Predicated region
    $region2: #{cnn_forward.1} parent=1 // pred_check
      _
    $region3: #{cnn_forward.1} parent=1 // pred_check_branch
      %21 = sbr.rel (0) target = $region5
    $region4: #{cnn_forward.1} parent=1 // pred_region
      _
    $region5: #{cnn_forward.1} parent=1 // pred_fallthru
      _
    // Predicated region
    $region6: #{cnn_forward.1} parent=1 // pred_check
      _
    $region7: #{cnn_forward.1} parent=1 // pred_check_branch
      %23 = sbr.rel (0) target = $region9
    $region8: #{cnn_forward.1} parent=1 // pred_region
      %25 = vsyncadd [#allocation3], 0
      %s26 = sshll.u32 %s1, 4
      %s27 = int_to_ptr.hbm [resolvable:$true] %s26
      %s28 = sshll.u32 [#allocation2], 4
      %s29 = int_to_ptr.vmem [resolvable:$true] %s28
      %34 = dma.hbm_to_vmem [thread:$0]  %s27, 6144, %s29, [#allocation3], 512, 512, 32
    $region9: #{cnn_forward.1} parent=1 // pred_fallthru
      _
    // Predicated region
    $region10: #{cnn_forward.1} parent=1 // pred_check
      _
    $region11: #{cnn_forward.1} parent=1 // pred_check_branch
      %36 = sbr.rel (0) target = $region13
    $region12: #{cnn_forward.1} parent=1 // pred_region
      %38 = vsyncadd [#allocation6], 0
      %s40 = sshll.u32 %s2, 4
      %s41 = int_to_ptr.hbm [resolvable:$true] %s40
      %s42 = sshll.u32 [#allocation5], 4
      %s43 = int_to_ptr.vmem [resolvable:$true] %s42
      %45 = dma.hbm_to_vmem [thread:$0]  %s41, 64, %s43, [#allocation6]
    $region13: #{cnn_forward.1} parent=1 // pred_fallthru
      _
    // Predicated region
    $region14: #{cnn_forward.1} parent=1 // pred_check
      _
    $region15: #{cnn_forward.1} parent=1 // pred_check_branch
      %47 = sbr.rel (0) target = $region17
    $region16: #{cnn_forward.1} parent=1 // pred_region
      %49 = vsyncadd [#allocation6], 0
      %s50 = sshll.u32 %s3, 4
      %s51 = int_to_ptr.hbm [resolvable:$true] %s50
      %s52 = sshll.u32 [#allocation7], 4
      %s53 = int_to_ptr.vmem [resolvable:$true] %s52
      %58 = dma.hbm_to_vmem [thread:$0]  %s51, 82944, %s53, [#allocation6], 512, 512, 32
    $region17: #{cnn_forward.1} parent=1 // pred_fallthru
      _
    // Predicated region
    $region18: #{cnn_forward.1} parent=1 // pred_check
      _
    $region19: #{cnn_forward.1} parent=1 // pred_check_branch
      %60 = sbr.rel (0) target = $region21
    $region20: #{cnn_forward.1} parent=1 // pred_region
      %62 = vsyncadd [#allocation9], 0
      %s64 = sshll.u32 %s4, 4
      %s65 = int_to_ptr.hbm [resolvable:$true] %s64
      %s66 = sshll.u32 [#allocation8], 4
      %s67 = int_to_ptr.vmem [resolvable:$true] %s66
      %69 = dma.hbm_to_vmem [thread:$0]  %s65, 64, %s67, [#allocation9]
    $region21: #{cnn_forward.1} parent=1 // pred_fallthru
      _
    // Predicated region
    $region22: #{cnn_forward.1} parent=1 // pred_check
      _
    $region23: #{cnn_forward.1} parent=1 // pred_check_branch
      %71 = sbr.rel (0) target = $region25
    $region24: #{cnn_forward.1} parent=1 // pred_region
      %73 = vsyncadd [#allocation9], 0
      %s74 = sshll.u32 %s5, 4
      %s75 = int_to_ptr.hbm [resolvable:$true] %s74
      %s76 = sshll.u32 [#allocation10], 4
      %s77 = int_to_ptr.vmem [resolvable:$true] %s76
      %82 = dma.hbm_to_vmem [thread:$0]  %s75, 46592, %s77, [#allocation9], 128, 128, 8
    $region25: #{cnn_forward.1} parent=1 // pred_fallthru
      _
    // Predicated region
    $region26: #{cnn_forward.1} parent=1 // pred_check
      _
    $region27: #{cnn_forward.1} parent=1 // pred_check_branch
      %84 = sbr.rel (0) target = $region29
    $region28: #{cnn_forward.1} parent=1 // pred_region
      %86 = vsyncadd [#allocation12], 0
      %s88 = sshll.u32 %s6, 4
      %s89 = int_to_ptr.hbm [resolvable:$true] %s88
      %s90 = sshll.u32 [#allocation11], 4
      %s91 = int_to_ptr.vmem [resolvable:$true] %s90
      %93 = dma.hbm_to_vmem [thread:$0]  %s89, 16, %s91, [#allocation12]
    $region29: #{cnn_forward.1} parent=1 // pred_fallthru
      _
    // Predicated region
    $region30: #{cnn_forward.1} parent=1 // pred_check
      _
    $region31: #{cnn_forward.1} parent=1 // pred_check_branch
      %95 = sbr.rel (0) target = $region33
    $region32: #{cnn_forward.1} parent=1 // pred_region
      %97 = vsyncadd [#allocation12], 0
      %s98 = sshll.u32 %s7, 4
      %s99 = int_to_ptr.hbm [resolvable:$true] %s98
      %s100 = sshll.u32 [#allocation13], 4
      %s101 = int_to_ptr.vmem [resolvable:$true] %s100
      %106 = dma.hbm_to_vmem [thread:$0]  %s99, 2048, %s101, [#allocation12], 128, 128, 8
    $region33: #{cnn_forward.1} parent=1 // pred_fallthru
      _
    // Predicated region
    $region34: #{cnn_forward.1} parent=1 // pred_check
      _
    $region35: #{cnn_forward.1} parent=1 // pred_check_branch
      %108 = sbr.rel (0) target = $region37
    $region36: #{cnn_forward.1} parent=1 // pred_region
      %110 = vsyncadd [#allocation15], 0
      %s112 = sshll.u32 %s8, 4
      %s113 = int_to_ptr.hbm [resolvable:$true] %s112
      %s114 = sshll.u32 [#allocation14], 4
      %s115 = int_to_ptr.vmem [resolvable:$true] %s114
      %117 = dma.hbm_to_vmem [thread:$0]  %s113, 16, %s115, [#allocation15]
    $region37: #{cnn_forward.1} parent=1 // pred_fallthru
      _
    // Predicated region
    $region38: #{cnn_forward.1} parent=1 // pred_check
      _
    $region39: #{cnn_forward.1} parent=1 // pred_check_branch
      %119 = sbr.rel (0) target = $region41
    $region40: #{cnn_forward.1} parent=1 // pred_region
      %121 = dma.done [#allocation3], 6144
    $region41: #{cnn_forward.1} parent=1 // pred_fallthru
      _
    // Predicated region
    $region42: #{cnn_forward.1} parent=1 // pred_check
      _
    $region43: #{cnn_forward.1} parent=1 // pred_check_branch
      %123 = sbr.rel (0) target = $region45
    $region44: #{cnn_forward.1} parent=1 // pred_region
      %125 = dma.done [#allocation6], 64
    $region45: #{cnn_forward.1} parent=1 // pred_fallthru
      _
    // Predicated region
    $region46: #{cnn_forward.1} parent=1 // pred_check
      _
    $region47: #{cnn_forward.1} parent=1 // pred_check_branch
      %127 = sbr.rel (0) target = $region49
    $region48: #{cnn_forward.1} parent=1 // pred_region
      %129 = dma.done [#allocation6], 82944
    $region49: #{cnn_forward.1} parent=1 // pred_fallthru
      _
    // Predicated region
    $region50: #{cnn_forward.1} parent=1 // pred_check
      _
    $region51: #{cnn_forward.1} parent=1 // pred_check_branch
      %131 = sbr.rel (0) target = $region53
    $region52: #{cnn_forward.1} parent=1 // pred_region
      %133 = dma.done [#allocation9], 64
    $region53: #{cnn_forward.1} parent=1 // pred_fallthru
      _
    // Predicated region
    $region54: #{cnn_forward.1} parent=1 // pred_check
      _
    $region55: #{cnn_forward.1} parent=1 // pred_check_branch
      %135 = sbr.rel (0) target = $region57
    $region56: #{cnn_forward.1} parent=1 // pred_region
      %137 = dma.done [#allocation9], 46592
    $region57: #{cnn_forward.1} parent=1 // pred_fallthru
      _
    // Predicated region
    $region58: #{cnn_forward.1} parent=1 // pred_check
      _
    $region59: #{cnn_forward.1} parent=1 // pred_check_branch
      %139 = sbr.rel (0) target = $region61
    $region60: #{cnn_forward.1} parent=1 // pred_region
      %141 = dma.done [#allocation12], 16
    $region61: #{cnn_forward.1} parent=1 // pred_fallthru
      _
    // Predicated region
    $region62: #{cnn_forward.1} parent=1 // pred_check
      _
    $region63: #{cnn_forward.1} parent=1 // pred_check_branch
      %143 = sbr.rel (0) target = $region65
    $region64: #{cnn_forward.1} parent=1 // pred_region
      %145 = dma.done [#allocation12], 2048
    $region65: #{cnn_forward.1} parent=1 // pred_fallthru
      _
    // Predicated region
    $region66: #{cnn_forward.1} parent=1 // pred_check
      _
    $region67: #{cnn_forward.1} parent=1 // pred_check_branch
      %147 = sbr.rel (0) target = $region69
    $region68: #{cnn_forward.1} parent=1 // pred_region
      %149 = dma.done [#allocation15], 16
    $region69: #{cnn_forward.1} parent=1 // pred_fallthru
      _
    %v150 = vld [vmem:[%s0] sm:$0xff]
    %v151 = vld [vmem:[%s0 + $0x8] sm:$0xff]
    %v152 = vld [vmem:[%s0 + $0x10] sm:$0xff]
    %v153 = vld [vmem:[%s0 + $0x18] sm:$0x3f]
    %v154 = vld [vmem:[%s0 + $0x20] sm:$0xff]
    %v155 = vld [vmem:[%s0 + $0x28] sm:$0xff]
    %v156 = vld [vmem:[%s0 + $0x30] sm:$0xff]
    %v157 = vld [vmem:[%s0 + $0x38] sm:$0x3f]
    %v166 = vrot.slane %v150, 4
    %v167 = vrot.slane %v151, 4
    %v168 = vrot.slane %v152, 4
    %v169 = vrot.slane %v154, 4
    %v170 = vrot.slane %v155, 4
    %v171 = vrot.slane %v156, 4
    %v172 = vld [vmem:[#allocation2] sm:$0xff]
    %v173 = vld [vmem:[#allocation2 + $0x8] sm:$0xff]
    %v174 = vld [vmem:[#allocation2 + $0x10] sm:$0xff]
    %v175 = vld [vmem:[#allocation2 + $0x18] sm:$0xff]
    %v176 = vld [vmem:[#allocation2 + $0x20] sm:$0xff]
    %v177 = vld [vmem:[#allocation2 + $0x28] sm:$0xff]
    %v178 = vld [vmem:[#allocation2 + $0x30] sm:$0xff]
    %v179 = vld [vmem:[#allocation2 + $0x38] sm:$0xff]
    %v180 = vld [vmem:[#allocation2 + $0x40] sm:$0xff]
    %v181 = vld [vmem:[#allocation2 + $0x48] sm:$0xff]
    %v182 = vld [vmem:[#allocation2 + $0x50] sm:$0xff]
    %v183 = vld [vmem:[#allocation2 + $0x58] sm:$0xff]
    %v184 = vld [vmem:[#allocation2 + $0x60] sm:$0x3f]
    %v185 = vld [vmem:[#allocation2 + $0x68] sm:$0x3f]
    %v186 = vld [vmem:[#allocation2 + $0x70] sm:$0x3f]
    %v187 = vld [vmem:[#allocation2 + $0x78] sm:$0x3f]
    %v188 = vrot.slane %v153, 4
    %v189 = vrot.slane %v157, 4
    %vm190 = vcmask 1042432
    %vm191 = vcmask 1046532
    %vm192 = vmor %vm190, %vm191
    %v193 = vrot.slane %v150, 5
    %v194 = vrot.slane %v193, 4
    %v195 = vrot.slane %v166, 5
    %v196 = vsel %vm192, %v194, %v195
    %v197 = vrot.slane %v195, 4
    %v198 = vrot.slane %v151, 5
    %v199 = vsel %vm192, %v197, %v198
    %v200 = vrot.slane %v198, 4
    %v201 = vrot.slane %v167, 5
    %v202 = vsel %vm192, %v200, %v201
    %v203 = vrot.slane %v201, 4
    %v204 = vrot.slane %v152, 5
    %v205 = vsel %vm192, %v203, %v204
    %v206 = vrot.slane %v204, 4
    %v207 = vrot.slane %v168, 5
    %v208 = vsel %vm192, %v206, %v207
    %v209 = vrot.slane %v207, 4
    %v210 = vrot.slane %v153, 5
    %v211 = vsel %vm192, %v209, %v210
    %v212 = vrot.slane %v210, 4
    %v213 = vrot.slane %v188, 5
    %v214 = vsel %vm192, %v212, %v213
    %v215 = vrot.slane %v154, 5
    %v216 = vrot.slane %v215, 4
    %v217 = vrot.slane %v169, 5
    %v218 = vsel %vm192, %v216, %v217
    %v219 = vrot.slane %v217, 4
    %v220 = vrot.slane %v155, 5
    %v221 = vsel %vm192, %v219, %v220
    %v222 = vrot.slane %v220, 4
    %v223 = vrot.slane %v170, 5
    %v224 = vsel %vm192, %v222, %v223
    %v225 = vrot.slane %v223, 4
    %v226 = vrot.slane %v156, 5
    %v227 = vsel %vm192, %v225, %v226
    %v228 = vrot.slane %v226, 4
    %v229 = vrot.slane %v171, 5
    %v230 = vsel %vm192, %v228, %v229
    %v231 = vrot.slane %v229, 4
    %v232 = vrot.slane %v157, 5
    %v233 = vsel %vm192, %v231, %v232
    %v234 = vrot.slane %v232, 4
    %v235 = vrot.slane %v189, 5
    %v236 = vsel %vm192, %v234, %v235
    %s237 = scalar_lea.vmem [#allocation2], 128
    %v238 = vld [vmem:[%s237] sm:$0xff]
    %v239 = vld [vmem:[%s237 + $0x8] sm:$0xff]
    %v240 = vld [vmem:[%s237 + $0x10] sm:$0xff]
    %v241 = vld [vmem:[%s237 + $0x18] sm:$0xff]
    %v242 = vld [vmem:[%s237 + $0x20] sm:$0xff]
    %v243 = vld [vmem:[%s237 + $0x28] sm:$0xff]
    %v244 = vld [vmem:[%s237 + $0x30] sm:$0xff]
    %v245 = vld [vmem:[%s237 + $0x38] sm:$0xff]
    %v246 = vld [vmem:[%s237 + $0x40] sm:$0xff]
    %v247 = vld [vmem:[%s237 + $0x48] sm:$0xff]
    %v248 = vld [vmem:[%s237 + $0x50] sm:$0xff]
    %v249 = vld [vmem:[%s237 + $0x58] sm:$0xff]
    %v250 = vld [vmem:[%s237 + $0x60] sm:$0x3f]
    %v251 = vld [vmem:[%s237 + $0x68] sm:$0x3f]
    %v252 = vld [vmem:[%s237 + $0x70] sm:$0x3f]
    %v253 = vld [vmem:[%s237 + $0x78] sm:$0x3f]
    %254 = vst [vmem:[#allocation1] ss:$2 sm:$0xff] %v196
    %s255 = scalar_lea.vmem [#allocation1], 1
    %256 = vst [vmem:[%s255] ss:$2 sm:$0xff] %v199
    %s257 = scalar_lea.vmem [#allocation1], 16
    %258 = vst [vmem:[%s257] ss:$2 sm:$0xff] %v202
    %s259 = scalar_lea.vmem [#allocation1], 17
    %260 = vst [vmem:[%s259] ss:$2 sm:$0xff] %v205
    %s261 = scalar_lea.vmem [#allocation1], 32
    %262 = vst [vmem:[%s261] ss:$2 sm:$0xff] %v208
    %s263 = scalar_lea.vmem [#allocation1], 33
    %264 = vst [vmem:[%s263] ss:$2 sm:$0xff] %v211
    %s265 = scalar_lea.vmem [#allocation1], 48
    %266 = vst [vmem:[%s265] ss:$2 sm:$0xff] %v214
    %s267 = scalar_lea.vmem [#allocation1], 49
    %268 = vst [vmem:[%s267] ss:$2 sm:$0xff] %v218
    %v269 = vld.sshfl [vmem:[#allocation1] sm:$0xff pattern:$0x75316420]
    %v270 = vld.sshfl [vmem:[#allocation1 + $0x10] sm:$0xff pattern:$0x75316420]
    %v271 = vld.sshfl [vmem:[#allocation1 + $0x20] sm:$0xff pattern:$0x75316420]
    %v272 = vld.sshfl [vmem:[#allocation1 + $0x30] sm:$0xff pattern:$0x75316420]
    %273 = vst [vmem:[#allocation1] ss:$2 sm:$0xff] %v221
    %274 = vst [vmem:[%s255] ss:$2 sm:$0xff] %v224
    %275 = vst [vmem:[%s257] ss:$2 sm:$0xff] %v227
    %276 = vst [vmem:[%s259] ss:$2 sm:$0xff] %v230
    %277 = vst [vmem:[%s261] ss:$2 sm:$0xff] %v233
    %278 = vst [vmem:[%s263] ss:$2 sm:$0xff] %v236
    %v279 = vld.sshfl [vmem:[#allocation1] sm:$0xff pattern:$0x75316420]
    %v280 = vld.sshfl [vmem:[#allocation1 + $0x10] sm:$0xff pattern:$0x75316420]
    %v281 = vld.sshfl [vmem:[#allocation1 + $0x20] sm:$0xff pattern:$0x75316420]
    %vm282 = vcmask 244736
    %v283 = vsel %vm282, %v269, 0
    %v285 = vsel %vm282, %v270, 0
    %v287 = vsel %vm282, %v271, 0
    %v289 = vsel %vm282, %v272, 0
    %v291 = vsel %vm282, %v279, 0
    %v293 = vsel %vm282, %v280, 0
    %v295 = vsel %vm282, %v281, 0
    %vm297 = vcmask 1045504
    %v299 = vsel %vm297, %v250, 0
    %v302 = vsel %vm297, %v251, 0
    %v305 = vsel %vm297, %v252, 0
    %v308 = vsel %vm297, %v253, 0
    %310 = vmatpush.msra.mxu0 0.0
    %311 = vmatpush.msra.mxu0 0.0
    %312 = vmatpush.msra.mxu0 0.0
    %313 = vmatpush.msra.mxu0 0.0
    %314 = vmatpush.msra.mxu0 0.0
    %315 = vmatpush.msra.mxu0 0.0
    %316 = vmatpush.msra.mxu0 0.0
    %317 = vmatpush.msra.mxu0 0.0
    %318 = vmatpush.msra.mxu0 0.0
    %319 = vmatpush.msra.mxu0 0.0
    %320 = vmatpush.msra.mxu0 0.0
    %321 = vmatpush.msra.mxu0 0.0
    %322 = vmatpush.msra.mxu0 %v299
    %323 = vmatpush.msra.mxu0 %v246
    %324 = vmatpush.msra.mxu0 %v242
    %325 = vmatpush.msra.mxu0 %v238
    %326 = vmatmul.f32.gmra.mxu0 %v283
    %v327 = vpop.f32.mrf.mxu0
    %v328 = vadd.f32 0.0, %v327
    %329 = vmatmul.f32.gmra.mxu0 %v285
    %v330 = vpop.f32.mrf.mxu0
    %v331 = vadd.f32 0.0, %v330
    %332 = vmatmul.f32.gmra.mxu0 %v287
    %v333 = vpop.f32.mrf.mxu0
    %v334 = vadd.f32 0.0, %v333
    %335 = vmatmul.f32.gmra.mxu0 %v289
    %v336 = vpop.f32.mrf.mxu0
    %v337 = vadd.f32 0.0, %v336
    %338 = vmatmul.f32.gmra.mxu0 %v291
    %v339 = vpop.f32.mrf.mxu0
    %v340 = vadd.f32 0.0, %v339
    %341 = vmatmul.f32.gmra.mxu0 %v293
    %v342 = vpop.f32.mrf.mxu0
    %v343 = vadd.f32 0.0, %v342
    %344 = vmatmul.f32.gmra.mxu0 %v295
    %v345 = vpop.f32.mrf.mxu0
    %v346 = vadd.f32 0.0, %v345
    %347 = vdwg.mxu0
    %348 = vmatpush.msra.mxu0 0.0
    %349 = vmatpush.msra.mxu0 0.0
    %350 = vmatpush.msra.mxu0 0.0
    %351 = vmatpush.msra.mxu0 0.0
    %352 = vmatpush.msra.mxu0 0.0
    %353 = vmatpush.msra.mxu0 0.0
    %354 = vmatpush.msra.mxu0 0.0
    %355 = vmatpush.msra.mxu0 0.0
    %356 = vmatpush.msra.mxu0 0.0
    %357 = vmatpush.msra.mxu0 0.0
    %358 = vmatpush.msra.mxu0 0.0
    %359 = vmatpush.msra.mxu0 0.0
    %360 = vmatpush.msra.mxu0 %v302
    %361 = vmatpush.msra.mxu0 %v247
    %362 = vmatpush.msra.mxu0 %v243
    %363 = vmatpush.msra.mxu0 %v239
    %364 = vmatmul.f32.gmra.mxu0 %v283
    %v365 = vpop.f32.mrf.mxu0
    %v366 = vadd.f32 0.0, %v365
    %367 = vmatmul.f32.gmra.mxu0 %v285
    %v368 = vpop.f32.mrf.mxu0
    %v369 = vadd.f32 0.0, %v368
    %370 = vmatmul.f32.gmra.mxu0 %v287
    %v371 = vpop.f32.mrf.mxu0
    %v372 = vadd.f32 0.0, %v371
    %373 = vmatmul.f32.gmra.mxu0 %v289
    %v374 = vpop.f32.mrf.mxu0
    %v375 = vadd.f32 0.0, %v374
    %376 = vmatmul.f32.gmra.mxu0 %v291
    %v377 = vpop.f32.mrf.mxu0
    %v378 = vadd.f32 0.0, %v377
    %379 = vmatmul.f32.gmra.mxu0 %v293
    %v380 = vpop.f32.mrf.mxu0
    %v381 = vadd.f32 0.0, %v380
    %382 = vmatmul.f32.gmra.mxu0 %v295
    %v383 = vpop.f32.mrf.mxu0
    %v384 = vadd.f32 0.0, %v383
    %385 = vdwg.mxu0
    %386 = vmatpush.msra.mxu0 0.0
    %387 = vmatpush.msra.mxu0 0.0
    %388 = vmatpush.msra.mxu0 0.0
    %389 = vmatpush.msra.mxu0 0.0
    %390 = vmatpush.msra.mxu0 0.0
    %391 = vmatpush.msra.mxu0 0.0
    %392 = vmatpush.msra.mxu0 0.0
    %393 = vmatpush.msra.mxu0 0.0
    %394 = vmatpush.msra.mxu0 0.0
    %395 = vmatpush.msra.mxu0 0.0
    %396 = vmatpush.msra.mxu0 0.0
    %397 = vmatpush.msra.mxu0 0.0
    %398 = vmatpush.msra.mxu0 %v305
    %399 = vmatpush.msra.mxu0 %v248
    %400 = vmatpush.msra.mxu0 %v244
    %401 = vmatpush.msra.mxu0 %v240
    %402 = vmatmul.f32.gmra.mxu0 %v283
    %v403 = vpop.f32.mrf.mxu0
    %v404 = vadd.f32 0.0, %v403
    %405 = vmatmul.f32.gmra.mxu0 %v285
    %v406 = vpop.f32.mrf.mxu0
    %v407 = vadd.f32 0.0, %v406
    %408 = vmatmul.f32.gmra.mxu0 %v287
    %v409 = vpop.f32.mrf.mxu0
    %v410 = vadd.f32 0.0, %v409
    %411 = vmatmul.f32.gmra.mxu0 %v289
    %v412 = vpop.f32.mrf.mxu0
    %v413 = vadd.f32 0.0, %v412
    %414 = vmatmul.f32.gmra.mxu0 %v291
    %v415 = vpop.f32.mrf.mxu0
    %v416 = vadd.f32 0.0, %v415
    %417 = vmatmul.f32.gmra.mxu0 %v293
    %v418 = vpop.f32.mrf.mxu0
    %v419 = vadd.f32 0.0, %v418
    %420 = vmatmul.f32.gmra.mxu0 %v295
    %v421 = vpop.f32.mrf.mxu0
    %v422 = vadd.f32 0.0, %v421
    %423 = vdwg.mxu0
    %424 = vmatpush.msra.mxu0 0.0
    %425 = vmatpush.msra.mxu0 0.0
    %426 = vmatpush.msra.mxu0 0.0
    %427 = vmatpush.msra.mxu0 0.0
    %428 = vmatpush.msra.mxu0 0.0
    %429 = vmatpush.msra.mxu0 0.0
    %430 = vmatpush.msra.mxu0 0.0
    %431 = vmatpush.msra.mxu0 0.0
    %432 = vmatpush.msra.mxu0 0.0
    %433 = vmatpush.msra.mxu0 0.0
    %434 = vmatpush.msra.mxu0 0.0
    %435 = vmatpush.msra.mxu0 0.0
    %436 = vmatpush.msra.mxu0 %v308
    %437 = vmatpush.msra.mxu0 %v249
    %438 = vmatpush.msra.mxu0 %v245
    %439 = vmatpush.msra.mxu0 %v241
    %440 = vmatmul.f32.gmra.mxu0 %v283
    %v441 = vpop.f32.mrf.mxu0
    %v442 = vadd.f32 0.0, %v441
    %443 = vmatmul.f32.gmra.mxu0 %v285
    %v444 = vpop.f32.mrf.mxu0
    %v445 = vadd.f32 0.0, %v444
    %446 = vmatmul.f32.gmra.mxu0 %v287
    %v447 = vpop.f32.mrf.mxu0
    %v448 = vadd.f32 0.0, %v447
    %449 = vmatmul.f32.gmra.mxu0 %v289
    %v450 = vpop.f32.mrf.mxu0
    %v451 = vadd.f32 0.0, %v450
    %452 = vmatmul.f32.gmra.mxu0 %v291
    %v453 = vpop.f32.mrf.mxu0
    %v454 = vadd.f32 0.0, %v453
    %455 = vmatmul.f32.gmra.mxu0 %v293
    %v456 = vpop.f32.mrf.mxu0
    %v457 = vadd.f32 0.0, %v456
    %458 = vmatmul.f32.gmra.mxu0 %v295
    %v459 = vpop.f32.mrf.mxu0
    %v460 = vadd.f32 0.0, %v459
    %461 = vdwg.mxu0
    %462 = vst [vmem:[#allocation1] ss:$2 sm:$0xff] %v150
    %s463 = scalar_lea.vmem [#allocation1], 1
    %464 = vst [vmem:[%s463] ss:$2 sm:$0xff] %v166
    %s465 = scalar_lea.vmem [#allocation1], 16
    %466 = vst [vmem:[%s465] ss:$2 sm:$0xff] %v151
    %s467 = scalar_lea.vmem [#allocation1], 17
    %468 = vst [vmem:[%s467] ss:$2 sm:$0xff] %v167
    %s469 = scalar_lea.vmem [#allocation1], 32
    %470 = vst [vmem:[%s469] ss:$2 sm:$0xff] %v152
    %s471 = scalar_lea.vmem [#allocation1], 33
    %472 = vst [vmem:[%s471] ss:$2 sm:$0xff] %v168
    %s473 = scalar_lea.vmem [#allocation1], 48
    %474 = vst [vmem:[%s473] ss:$2 sm:$0xff] %v153
    %s475 = scalar_lea.vmem [#allocation1], 49
    %476 = vst [vmem:[%s475] ss:$2 sm:$0xff] %v154
    %v477 = vld.sshfl [vmem:[#allocation1] sm:$0xff pattern:$0x75316420]
    %v478 = vld.sshfl [vmem:[#allocation1 + $0x10] sm:$0xff pattern:$0x75316420]
    %v479 = vld.sshfl [vmem:[#allocation1 + $0x20] sm:$0xff pattern:$0x75316420]
    %v480 = vld.sshfl [vmem:[#allocation1 + $0x30] sm:$0xff pattern:$0x75316420]
    %481 = vst [vmem:[#allocation1] ss:$2 sm:$0xff] %v169
    %482 = vst [vmem:[%s463] ss:$2 sm:$0xff] %v155
    %483 = vst [vmem:[%s465] ss:$2 sm:$0xff] %v170
    %484 = vst [vmem:[%s467] ss:$2 sm:$0xff] %v156
    %485 = vst [vmem:[%s469] ss:$2 sm:$0xff] %v171
    %486 = vst [vmem:[%s471] ss:$2 sm:$0xff] %v157
    %v487 = vld.sshfl [vmem:[#allocation1] sm:$0xff pattern:$0x75316420]
    %v488 = vld.sshfl [vmem:[#allocation1 + $0x10] sm:$0xff pattern:$0x75316420]
    %v489 = vld.sshfl [vmem:[#allocation1 + $0x20] sm:$0xff pattern:$0x75316420]
    %v490 = vsel %vm282, %v477, 0
    %v492 = vsel %vm282, %v478, 0
    %v494 = vsel %vm282, %v479, 0
    %v496 = vsel %vm282, %v480, 0
    %v498 = vsel %vm282, %v487, 0
    %v500 = vsel %vm282, %v488, 0
    %v502 = vsel %vm282, %v489, 0
    %v505 = vsel %vm297, %v184, 0
    %v508 = vsel %vm297, %v185, 0
    %v511 = vsel %vm297, %v186, 0
    %v514 = vsel %vm297, %v187, 0
    %516 = vmatpush.msra.mxu0 0.0
    %517 = vmatpush.msra.mxu0 0.0
    %518 = vmatpush.msra.mxu0 0.0
    %519 = vmatpush.msra.mxu0 0.0
    %520 = vmatpush.msra.mxu0 0.0
    %521 = vmatpush.msra.mxu0 0.0
    %522 = vmatpush.msra.mxu0 0.0
    %523 = vmatpush.msra.mxu0 0.0
    %524 = vmatpush.msra.mxu0 0.0
    %525 = vmatpush.msra.mxu0 0.0
    %526 = vmatpush.msra.mxu0 0.0
    %527 = vmatpush.msra.mxu0 0.0
    %528 = vmatpush.msra.mxu0 %v505
    %529 = vmatpush.msra.mxu0 %v180
    %530 = vmatpush.msra.mxu0 %v176
    %531 = vmatpush.msra.mxu0 %v172
    %532 = vmatmul.f32.gmra.mxu0 %v490
    %v533 = vpop.f32.mrf.mxu0
    %v534 = vadd.f32 %v328, %v533
    %535 = vmatmul.f32.gmra.mxu0 %v492
    %v536 = vpop.f32.mrf.mxu0
    %v537 = vadd.f32 %v331, %v536
    %538 = vmatmul.f32.gmra.mxu0 %v494
    %v539 = vpop.f32.mrf.mxu0
    %v540 = vadd.f32 %v334, %v539
    %541 = vmatmul.f32.gmra.mxu0 %v496
    %v542 = vpop.f32.mrf.mxu0
    %v543 = vadd.f32 %v337, %v542
    %544 = vmatmul.f32.gmra.mxu0 %v498
    %v545 = vpop.f32.mrf.mxu0
    %v546 = vadd.f32 %v340, %v545
    %547 = vmatmul.f32.gmra.mxu0 %v500
    %v548 = vpop.f32.mrf.mxu0
    %v549 = vadd.f32 %v343, %v548
    %550 = vmatmul.f32.gmra.mxu0 %v502
    %v551 = vpop.f32.mrf.mxu0
    %v552 = vadd.f32 %v346, %v551
    %553 = vdwg.mxu0
    %554 = vmatpush.msra.mxu0 0.0
    %555 = vmatpush.msra.mxu0 0.0
    %556 = vmatpush.msra.mxu0 0.0
    %557 = vmatpush.msra.mxu0 0.0
    %558 = vmatpush.msra.mxu0 0.0
    %559 = vmatpush.msra.mxu0 0.0
    %560 = vmatpush.msra.mxu0 0.0
    %561 = vmatpush.msra.mxu0 0.0
    %562 = vmatpush.msra.mxu0 0.0
    %563 = vmatpush.msra.mxu0 0.0
    %564 = vmatpush.msra.mxu0 0.0
    %565 = vmatpush.msra.mxu0 0.0
    %566 = vmatpush.msra.mxu0 %v508
    %567 = vmatpush.msra.mxu0 %v181
    %568 = vmatpush.msra.mxu0 %v177
    %569 = vmatpush.msra.mxu0 %v173
    %570 = vmatmul.f32.gmra.mxu0 %v490
    %v571 = vpop.f32.mrf.mxu0
    %v572 = vadd.f32 %v366, %v571
    %573 = vmatmul.f32.gmra.mxu0 %v492
    %v574 = vpop.f32.mrf.mxu0
    %v575 = vadd.f32 %v369, %v574
    %576 = vmatmul.f32.gmra.mxu0 %v494
    %v577 = vpop.f32.mrf.mxu0
    %v578 = vadd.f32 %v372, %v577
    %579 = vmatmul.f32.gmra.mxu0 %v496
    %v580 = vpop.f32.mrf.mxu0
    %v581 = vadd.f32 %v375, %v580
    %582 = vmatmul.f32.gmra.mxu0 %v498
    %v583 = vpop.f32.mrf.mxu0
    %v584 = vadd.f32 %v378, %v583
    %585 = vmatmul.f32.gmra.mxu0 %v500
    %v586 = vpop.f32.mrf.mxu0
    %v587 = vadd.f32 %v381, %v586
    %588 = vmatmul.f32.gmra.mxu0 %v502
    %v589 = vpop.f32.mrf.mxu0
    %v590 = vadd.f32 %v384, %v589
    %591 = vdwg.mxu0
    %592 = vmatpush.msra.mxu0 0.0
    %593 = vmatpush.msra.mxu0 0.0
    %594 = vmatpush.msra.mxu0 0.0
    %595 = vmatpush.msra.mxu0 0.0
    %596 = vmatpush.msra.mxu0 0.0
    %597 = vmatpush.msra.mxu0 0.0
    %598 = vmatpush.msra.mxu0 0.0
    %599 = vmatpush.msra.mxu0 0.0
    %600 = vmatpush.msra.mxu0 0.0
    %601 = vmatpush.msra.mxu0 0.0
    %602 = vmatpush.msra.mxu0 0.0
    %603 = vmatpush.msra.mxu0 0.0
    %604 = vmatpush.msra.mxu0 %v511
    %605 = vmatpush.msra.mxu0 %v182
    %606 = vmatpush.msra.mxu0 %v178
    %607 = vmatpush.msra.mxu0 %v174
    %608 = vmatmul.f32.gmra.mxu0 %v490
    %v609 = vpop.f32.mrf.mxu0
    %v610 = vadd.f32 %v404, %v609
    %611 = vmatmul.f32.gmra.mxu0 %v492
    %v612 = vpop.f32.mrf.mxu0
    %v613 = vadd.f32 %v407, %v612
    %614 = vmatmul.f32.gmra.mxu0 %v494
    %v615 = vpop.f32.mrf.mxu0
    %v616 = vadd.f32 %v410, %v615
    %617 = vmatmul.f32.gmra.mxu0 %v496
    %v618 = vpop.f32.mrf.mxu0
    %v619 = vadd.f32 %v413, %v618
    %620 = vmatmul.f32.gmra.mxu0 %v498
    %v621 = vpop.f32.mrf.mxu0
    %v622 = vadd.f32 %v416, %v621
    %623 = vmatmul.f32.gmra.mxu0 %v500
    %v624 = vpop.f32.mrf.mxu0
    %v625 = vadd.f32 %v419, %v624
    %626 = vmatmul.f32.gmra.mxu0 %v502
    %v627 = vpop.f32.mrf.mxu0
    %v628 = vadd.f32 %v422, %v627
    %629 = vdwg.mxu0
    %630 = vmatpush.msra.mxu0 0.0
    %631 = vmatpush.msra.mxu0 0.0
    %632 = vmatpush.msra.mxu0 0.0
    %633 = vmatpush.msra.mxu0 0.0
    %634 = vmatpush.msra.mxu0 0.0
    %635 = vmatpush.msra.mxu0 0.0
    %636 = vmatpush.msra.mxu0 0.0
    %637 = vmatpush.msra.mxu0 0.0
    %638 = vmatpush.msra.mxu0 0.0
    %639 = vmatpush.msra.mxu0 0.0
    %640 = vmatpush.msra.mxu0 0.0
    %641 = vmatpush.msra.mxu0 0.0
    %642 = vmatpush.msra.mxu0 %v514
    %643 = vmatpush.msra.mxu0 %v183
    %644 = vmatpush.msra.mxu0 %v179
    %645 = vmatpush.msra.mxu0 %v175
    %646 = vmatmul.f32.gmra.mxu0 %v490
    %v647 = vpop.f32.mrf.mxu0
    %v648 = vadd.f32 %v442, %v647
    %649 = vmatmul.f32.gmra.mxu0 %v492
    %v650 = vpop.f32.mrf.mxu0
    %v651 = vadd.f32 %v445, %v650
    %652 = vmatmul.f32.gmra.mxu0 %v494
    %v653 = vpop.f32.mrf.mxu0
    %v654 = vadd.f32 %v448, %v653
    %655 = vmatmul.f32.gmra.mxu0 %v496
    %v656 = vpop.f32.mrf.mxu0
    %v657 = vadd.f32 %v451, %v656
    %658 = vmatmul.f32.gmra.mxu0 %v498
    %v659 = vpop.f32.mrf.mxu0
    %v660 = vadd.f32 %v454, %v659
    %661 = vmatmul.f32.gmra.mxu0 %v500
    %v662 = vpop.f32.mrf.mxu0
    %v663 = vadd.f32 %v457, %v662
    %664 = vmatmul.f32.gmra.mxu0 %v502
    %v665 = vpop.f32.mrf.mxu0
    %v666 = vadd.f32 %v460, %v665
    %667 = vdwg.mxu0
    %vm668 = vcmask 1041408
    %vm669 = vcmask 1045508
    %vm670 = vmor %vm668, %vm669
    %v671 = vrot.slane %v150, 6
    %v672 = vrot.slane %v671, 4
    %v673 = vrot.slane %v166, 6
    %v674 = vsel %vm670, %v672, %v673
    %v675 = vrot.slane %v673, 4
    %v676 = vrot.slane %v151, 6
    %v677 = vsel %vm670, %v675, %v676
    %v678 = vrot.slane %v676, 4
    %v679 = vrot.slane %v167, 6
    %v680 = vsel %vm670, %v678, %v679
    %v681 = vrot.slane %v679, 4
    %v682 = vrot.slane %v152, 6
    %v683 = vsel %vm670, %v681, %v682
    %v684 = vrot.slane %v682, 4
    %v685 = vrot.slane %v168, 6
    %v686 = vsel %vm670, %v684, %v685
    %v687 = vrot.slane %v685, 4
    %v688 = vrot.slane %v153, 6
    %v689 = vsel %vm670, %v687, %v688
    %v690 = vrot.slane %v688, 4
    %v691 = vrot.slane %v188, 6
    %v692 = vsel %vm670, %v690, %v691
    %v693 = vrot.slane %v154, 6
    %v694 = vrot.slane %v693, 4
    %v695 = vrot.slane %v169, 6
    %v696 = vsel %vm670, %v694, %v695
    %v697 = vrot.slane %v695, 4
    %v698 = vrot.slane %v155, 6
    %v699 = vsel %vm670, %v697, %v698
    %v700 = vrot.slane %v698, 4
    %v701 = vrot.slane %v170, 6
    %v702 = vsel %vm670, %v700, %v701
    %v703 = vrot.slane %v701, 4
    %v704 = vrot.slane %v156, 6
    %v705 = vsel %vm670, %v703, %v704
    %v706 = vrot.slane %v704, 4
    %v707 = vrot.slane %v171, 6
    %v708 = vsel %vm670, %v706, %v707
    %v709 = vrot.slane %v707, 4
    %v710 = vrot.slane %v157, 6
    %v711 = vsel %vm670, %v709, %v710
    %v712 = vrot.slane %v710, 4
    %v713 = vrot.slane %v189, 6
    %v714 = vsel %vm670, %v712, %v713
    %s715 = scalar_lea.vmem [#allocation2], 256
    %v716 = vld [vmem:[%s715] sm:$0xff]
    %v717 = vld [vmem:[%s715 + $0x8] sm:$0xff]
    %v718 = vld [vmem:[%s715 + $0x10] sm:$0xff]
    %v719 = vld [vmem:[%s715 + $0x18] sm:$0xff]
    %v720 = vld [vmem:[%s715 + $0x20] sm:$0xff]
    %v721 = vld [vmem:[%s715 + $0x28] sm:$0xff]
    %v722 = vld [vmem:[%s715 + $0x30] sm:$0xff]
    %v723 = vld [vmem:[%s715 + $0x38] sm:$0xff]
    %v724 = vld [vmem:[%s715 + $0x40] sm:$0xff]
    %v725 = vld [vmem:[%s715 + $0x48] sm:$0xff]
    %v726 = vld [vmem:[%s715 + $0x50] sm:$0xff]
    %v727 = vld [vmem:[%s715 + $0x58] sm:$0xff]
    %v728 = vld [vmem:[%s715 + $0x60] sm:$0x3f]
    %v729 = vld [vmem:[%s715 + $0x68] sm:$0x3f]
    %v730 = vld [vmem:[%s715 + $0x70] sm:$0x3f]
    %v731 = vld [vmem:[%s715 + $0x78] sm:$0x3f]
    %732 = vst [vmem:[#allocation1] ss:$2 sm:$0xff] %v674
    %s733 = scalar_lea.vmem [#allocation1], 1
    %734 = vst [vmem:[%s733] ss:$2 sm:$0xff] %v677
    %s735 = scalar_lea.vmem [#allocation1], 16
    %736 = vst [vmem:[%s735] ss:$2 sm:$0xff] %v680
    %s737 = scalar_lea.vmem [#allocation1], 17
    %738 = vst [vmem:[%s737] ss:$2 sm:$0xff] %v683
    %s739 = scalar_lea.vmem [#allocation1], 32
    %740 = vst [vmem:[%s739] ss:$2 sm:$0xff] %v686
    %s741 = scalar_lea.vmem [#allocation1], 33
    %742 = vst [vmem:[%s741] ss:$2 sm:$0xff] %v689
    %s743 = scalar_lea.vmem [#allocation1], 48
    %744 = vst [vmem:[%s743] ss:$2 sm:$0xff] %v692
    %s745 = scalar_lea.vmem [#allocation1], 49
    %746 = vst [vmem:[%s745] ss:$2 sm:$0xff] %v696
    %v747 = vld.sshfl [vmem:[#allocation1] sm:$0xff pattern:$0x75316420]
    %v748 = vld.sshfl [vmem:[#allocation1 + $0x10] sm:$0xff pattern:$0x75316420]
    %v749 = vld.sshfl [vmem:[#allocation1 + $0x20] sm:$0xff pattern:$0x75316420]
    %v750 = vld.sshfl [vmem:[#allocation1 + $0x30] sm:$0xff pattern:$0x75316420]
    %751 = vst [vmem:[#allocation1] ss:$2 sm:$0xff] %v699
    %752 = vst [vmem:[%s733] ss:$2 sm:$0xff] %v702
    %753 = vst [vmem:[%s735] ss:$2 sm:$0xff] %v705
    %754 = vst [vmem:[%s737] ss:$2 sm:$0xff] %v708
    %755 = vst [vmem:[%s739] ss:$2 sm:$0xff] %v711
    %756 = vst [vmem:[%s741] ss:$2 sm:$0xff] %v714
    %v757 = vld.sshfl [vmem:[#allocation1] sm:$0xff pattern:$0x75316420]
    %v758 = vld.sshfl [vmem:[#allocation1 + $0x10] sm:$0xff pattern:$0x75316420]
    %v759 = vld.sshfl [vmem:[#allocation1 + $0x20] sm:$0xff pattern:$0x75316420]
    %v760 = vsel %vm282, %v747, 0
    %v762 = vsel %vm282, %v748, 0
    %v764 = vsel %vm282, %v749, 0
    %v766 = vsel %vm282, %v750, 0
    %v768 = vsel %vm282, %v757, 0
    %v770 = vsel %vm282, %v758, 0
    %v772 = vsel %vm282, %v759, 0
    %v775 = vsel %vm297, %v728, 0
    %v778 = vsel %vm297, %v729, 0
    %v781 = vsel %vm297, %v730, 0
    %v784 = vsel %vm297, %v731, 0
    %786 = vmatpush.msra.mxu0 0.0
    %787 = vmatpush.msra.mxu0 0.0
    %788 = vmatpush.msra.mxu0 0.0
    %789 = vmatpush.msra.mxu0 0.0
    %790 = vmatpush.msra.mxu0 0.0
    %791 = vmatpush.msra.mxu0 0.0
    %792 = vmatpush.msra.mxu0 0.0
    %793 = vmatpush.msra.mxu0 0.0
    %794 = vmatpush.msra.mxu0 0.0
    %795 = vmatpush.msra.mxu0 0.0
    %796 = vmatpush.msra.mxu0 0.0
    %797 = vmatpush.msra.mxu0 0.0
    %798 = vmatpush.msra.mxu0 %v775
    %799 = vmatpush.msra.mxu0 %v724
    %800 = vmatpush.msra.mxu0 %v720
    %801 = vmatpush.msra.mxu0 %v716
    %802 = vmatmul.f32.gmra.mxu0 %v760
    %v803 = vpop.f32.mrf.mxu0
    %v804 = vadd.f32 0.0, %v803
    %805 = vmatmul.f32.gmra.mxu0 %v762
    %v806 = vpop.f32.mrf.mxu0
    %v807 = vadd.f32 0.0, %v806
    %808 = vmatmul.f32.gmra.mxu0 %v764
    %v809 = vpop.f32.mrf.mxu0
    %v810 = vadd.f32 0.0, %v809
    %811 = vmatmul.f32.gmra.mxu0 %v766
    %v812 = vpop.f32.mrf.mxu0
    %v813 = vadd.f32 0.0, %v812
    %814 = vmatmul.f32.gmra.mxu0 %v768
    %v815 = vpop.f32.mrf.mxu0
    %v816 = vadd.f32 0.0, %v815
    %817 = vmatmul.f32.gmra.mxu0 %v770
    %v818 = vpop.f32.mrf.mxu0
    %v819 = vadd.f32 0.0, %v818
    %820 = vmatmul.f32.gmra.mxu0 %v772
    %v821 = vpop.f32.mrf.mxu0
    %v822 = vadd.f32 0.0, %v821
    %823 = vdwg.mxu0
    %824 = vmatpush.msra.mxu0 0.0
    %825 = vmatpush.msra.mxu0 0.0
    %826 = vmatpush.msra.mxu0 0.0
    %827 = vmatpush.msra.mxu0 0.0
    %828 = vmatpush.msra.mxu0 0.0
    %829 = vmatpush.msra.mxu0 0.0
    %830 = vmatpush.msra.mxu0 0.0
    %831 = vmatpush.msra.mxu0 0.0
    %832 = vmatpush.msra.mxu0 0.0
    %833 = vmatpush.msra.mxu0 0.0
    %834 = vmatpush.msra.mxu0 0.0
    %835 = vmatpush.msra.mxu0 0.0
    %836 = vmatpush.msra.mxu0 %v778
    %837 = vmatpush.msra.mxu0 %v725
    %838 = vmatpush.msra.mxu0 %v721
    %839 = vmatpush.msra.mxu0 %v717
    %840 = vmatmul.f32.gmra.mxu0 %v760
    %v841 = vpop.f32.mrf.mxu0
    %v842 = vadd.f32 0.0, %v841
    %843 = vmatmul.f32.gmra.mxu0 %v762
    %v844 = vpop.f32.mrf.mxu0
    %v845 = vadd.f32 0.0, %v844
    %846 = vmatmul.f32.gmra.mxu0 %v764
    %v847 = vpop.f32.mrf.mxu0
    %v848 = vadd.f32 0.0, %v847
    %849 = vmatmul.f32.gmra.mxu0 %v766
    %v850 = vpop.f32.mrf.mxu0
    %v851 = vadd.f32 0.0, %v850
    %852 = vmatmul.f32.gmra.mxu0 %v768
    %v853 = vpop.f32.mrf.mxu0
    %v854 = vadd.f32 0.0, %v853
    %855 = vmatmul.f32.gmra.mxu0 %v770
    %v856 = vpop.f32.mrf.mxu0
    %v857 = vadd.f32 0.0, %v856
    %858 = vmatmul.f32.gmra.mxu0 %v772
    %v859 = vpop.f32.mrf.mxu0
    %v860 = vadd.f32 0.0, %v859
    %861 = vdwg.mxu0
    %862 = vmatpush.msra.mxu0 0.0
    %863 = vmatpush.msra.mxu0 0.0
    %864 = vmatpush.msra.mxu0 0.0
    %865 = vmatpush.msra.mxu0 0.0
    %866 = vmatpush.msra.mxu0 0.0
    %867 = vmatpush.msra.mxu0 0.0
    %868 = vmatpush.msra.mxu0 0.0
    %869 = vmatpush.msra.mxu0 0.0
    %870 = vmatpush.msra.mxu0 0.0
    %871 = vmatpush.msra.mxu0 0.0
    %872 = vmatpush.msra.mxu0 0.0
    %873 = vmatpush.msra.mxu0 0.0
    %874 = vmatpush.msra.mxu0 %v781
    %875 = vmatpush.msra.mxu0 %v726
    %876 = vmatpush.msra.mxu0 %v722
    %877 = vmatpush.msra.mxu0 %v718
    %878 = vmatmul.f32.gmra.mxu0 %v760
    %v879 = vpop.f32.mrf.mxu0
    %v880 = vadd.f32 0.0, %v879
    %881 = vmatmul.f32.gmra.mxu0 %v762
    %v882 = vpop.f32.mrf.mxu0
    %v883 = vadd.f32 0.0, %v882
    %884 = vmatmul.f32.gmra.mxu0 %v764
    %v885 = vpop.f32.mrf.mxu0
    %v886 = vadd.f32 0.0, %v885
    %887 = vmatmul.f32.gmra.mxu0 %v766
    %v888 = vpop.f32.mrf.mxu0
    %v889 = vadd.f32 0.0, %v888
    %890 = vmatmul.f32.gmra.mxu0 %v768
    %v891 = vpop.f32.mrf.mxu0
    %v892 = vadd.f32 0.0, %v891
    %893 = vmatmul.f32.gmra.mxu0 %v770
    %v894 = vpop.f32.mrf.mxu0
    %v895 = vadd.f32 0.0, %v894
    %896 = vmatmul.f32.gmra.mxu0 %v772
    %v897 = vpop.f32.mrf.mxu0
    %v898 = vadd.f32 0.0, %v897
    %899 = vdwg.mxu0
    %900 = vmatpush.msra.mxu0 0.0
    %901 = vmatpush.msra.mxu0 0.0
    %902 = vmatpush.msra.mxu0 0.0
    %903 = vmatpush.msra.mxu0 0.0
    %904 = vmatpush.msra.mxu0 0.0
    %905 = vmatpush.msra.mxu0 0.0
    %906 = vmatpush.msra.mxu0 0.0
    %907 = vmatpush.msra.mxu0 0.0
    %908 = vmatpush.msra.mxu0 0.0
    %909 = vmatpush.msra.mxu0 0.0
    %910 = vmatpush.msra.mxu0 0.0
    %911 = vmatpush.msra.mxu0 0.0
    %912 = vmatpush.msra.mxu0 %v784
    %913 = vmatpush.msra.mxu0 %v727
    %914 = vmatpush.msra.mxu0 %v723
    %915 = vmatpush.msra.mxu0 %v719
    %916 = vmatmul.f32.gmra.mxu0 %v760
    %v917 = vpop.f32.mrf.mxu0
    %v918 = vadd.f32 0.0, %v917
    %919 = vmatmul.f32.gmra.mxu0 %v762
    %v920 = vpop.f32.mrf.mxu0
    %v921 = vadd.f32 0.0, %v920
    %922 = vmatmul.f32.gmra.mxu0 %v764
    %v923 = vpop.f32.mrf.mxu0
    %v924 = vadd.f32 0.0, %v923
    %925 = vmatmul.f32.gmra.mxu0 %v766
    %v926 = vpop.f32.mrf.mxu0
    %v927 = vadd.f32 0.0, %v926
    %928 = vmatmul.f32.gmra.mxu0 %v768
    %v929 = vpop.f32.mrf.mxu0
    %v930 = vadd.f32 0.0, %v929
    %931 = vmatmul.f32.gmra.mxu0 %v770
    %v932 = vpop.f32.mrf.mxu0
    %v933 = vadd.f32 0.0, %v932
    %934 = vmatmul.f32.gmra.mxu0 %v772
    %v935 = vpop.f32.mrf.mxu0
    %v936 = vadd.f32 0.0, %v935
    %937 = vdwg.mxu0
    %v938 = vadd.f32 %v534, %v804
    %v939 = vadd.f32 %v572, %v842
    %v940 = vadd.f32 %v610, %v880
    %v941 = vadd.f32 %v648, %v918
    %v942 = vadd.f32 %v537, %v807
    %v943 = vadd.f32 %v575, %v845
    %v944 = vadd.f32 %v613, %v883
    %v945 = vadd.f32 %v651, %v921
    %v946 = vadd.f32 %v540, %v810
    %v947 = vadd.f32 %v578, %v848
    %v948 = vadd.f32 %v616, %v886
    %v949 = vadd.f32 %v654, %v924
    %v950 = vadd.f32 %v543, %v813
    %v951 = vadd.f32 %v581, %v851
    %v952 = vadd.f32 %v619, %v889
    %v953 = vadd.f32 %v657, %v927
    %v954 = vadd.f32 %v546, %v816
    %v955 = vadd.f32 %v584, %v854
    %v956 = vadd.f32 %v622, %v892
    %v957 = vadd.f32 %v660, %v930
    %v958 = vadd.f32 %v549, %v819
    %v959 = vadd.f32 %v587, %v857
    %v960 = vadd.f32 %v625, %v895
    %v961 = vadd.f32 %v663, %v933
    %v962 = vadd.f32 %v552, %v822
    %v963 = vadd.f32 %v590, %v860
    %v964 = vadd.f32 %v628, %v898
    %v965 = vadd.f32 %v666, %v936
    %v966 = vld [vmem:[#allocation5] sm:$0xf]
    %v968 = vperm.slane %v966, 0
    %v969 = vperm.slane %v966, 1
    %v970 = vperm.slane %v966, 2
    %v971 = vperm.slane %v966, 3
    %v976 = vadd.f32 %v938, %v968
    %v977 = vadd.f32 %v939, %v969
    %v978 = vadd.f32 %v940, %v970
    %v979 = vadd.f32 %v941, %v971
    %v980 = vadd.f32 %v942, %v968
    %v981 = vadd.f32 %v943, %v969
    %v982 = vadd.f32 %v944, %v970
    %v983 = vadd.f32 %v945, %v971
    %v984 = vadd.f32 %v946, %v968
    %v985 = vadd.f32 %v947, %v969
    %v986 = vadd.f32 %v948, %v970
    %v987 = vadd.f32 %v949, %v971
    %v988 = vadd.f32 %v950, %v968
    %v989 = vadd.f32 %v951, %v969
    %v990 = vadd.f32 %v952, %v970
    %v991 = vadd.f32 %v953, %v971
    %v992 = vadd.f32 %v954, %v968
    %v993 = vadd.f32 %v955, %v969
    %v994 = vadd.f32 %v956, %v970
    %v995 = vadd.f32 %v957, %v971
    %v996 = vadd.f32 %v958, %v968
    %v997 = vadd.f32 %v959, %v969
    %v998 = vadd.f32 %v960, %v970
    %v999 = vadd.f32 %v961, %v971
    %v1000 = vadd.f32 %v962, %v968
    %v1001 = vadd.f32 %v963, %v969
    %v1002 = vadd.f32 %v964, %v970
    %v1003 = vadd.f32 %v965, %v971
    %v1004 = vmax.f32 %v976, 0.0
    %v1005 = vmax.f32 %v977, 0.0
    %v1006 = vmax.f32 %v978, 0.0
    %v1007 = vmax.f32 %v979, 0.0
    %v1008 = vmax.f32 %v980, 0.0
    %v1009 = vmax.f32 %v981, 0.0
    %v1010 = vmax.f32 %v982, 0.0
    %v1011 = vmax.f32 %v983, 0.0
    %v1012 = vmax.f32 %v984, 0.0
    %v1013 = vmax.f32 %v985, 0.0
    %v1014 = vmax.f32 %v986, 0.0
    %v1015 = vmax.f32 %v987, 0.0
    %v1016 = vmax.f32 %v988, 0.0
    %v1017 = vmax.f32 %v989, 0.0
    %v1018 = vmax.f32 %v990, 0.0
    %v1019 = vmax.f32 %v991, 0.0
    %v1020 = vmax.f32 %v992, 0.0
    %v1021 = vmax.f32 %v993, 0.0
    %v1022 = vmax.f32 %v994, 0.0
    %v1023 = vmax.f32 %v995, 0.0
    %v1024 = vmax.f32 %v996, 0.0
    %v1025 = vmax.f32 %v997, 0.0
    %v1026 = vmax.f32 %v998, 0.0
    %v1027 = vmax.f32 %v999, 0.0
    %v1028 = vmax.f32 %v1000, 0.0
    %v1029 = vmax.f32 %v1001, 0.0
    %v1030 = vmax.f32 %v1002, 0.0
    %v1031 = vmax.f32 %v1003, 0.0
    %v1060 = vrot.slane %v1005, 6
    %v1061 = vrot.slane %v1006, 4
    %v1062 = vrot.slane %v1007, 2
    %v1063 = vrot.slane %v1009, 6
    %v1064 = vrot.slane %v1010, 4
    %v1065 = vrot.slane %v1011, 2
    %v1066 = vrot.slane %v1013, 6
    %v1067 = vrot.slane %v1014, 4
    %v1068 = vrot.slane %v1015, 2
    %v1069 = vrot.slane %v1017, 6
    %v1070 = vrot.slane %v1018, 4
    %v1071 = vrot.slane %v1019, 2
    %v1072 = vrot.slane %v1021, 6
    %v1073 = vrot.slane %v1022, 4
    %v1074 = vrot.slane %v1023, 2
    %v1075 = vrot.slane %v1025, 6
    %v1076 = vrot.slane %v1026, 4
    %v1077 = vrot.slane %v1027, 2
    %v1078 = vrot.slane %v1029, 6
    %v1079 = vrot.slane %v1030, 4
    %v1080 = vrot.slane %v1031, 2
    %v1081 = vsel %vm668, %v1004, %v1060
    %v1082 = vsel %vm669, %v1061, %v1062
    %vm1083 = vcmask 1043456
    %v1084 = vsel %vm1083, %v1081, %v1082
    %vm1085 = vcmask 1043458
    %v1086 = vsel %vm1085, %v1004, %v1060
    %v1087 = vsel %vm297, %v1062, %v1061
    %vm1088 = vcmask 1045506
    %v1089 = vsel %vm1088, %v1086, %v1087
    %v1090 = vrot.slane %v1089, 2
    %v1091 = vsel %vm669, %v1004, %v1060
    %v1092 = vsel %vm668, %v1061, %v1062
    %v1093 = vsel %vm1083, %v1092, %v1091
    %v1094 = vrot.slane %v1093, 4
    %v1095 = vsel %vm297, %v1060, %v1004
    %v1096 = vsel %vm1085, %v1061, %v1062
    %v1097 = vsel %vm1088, %v1096, %v1095
    %v1098 = vrot.slane %v1097, 6
    %v1099 = vsel %vm668, %v1008, %v1063
    %v1100 = vsel %vm669, %v1064, %v1065
    %v1101 = vsel %vm1083, %v1099, %v1100
    %v1102 = vsel %vm1085, %v1008, %v1063
    %v1103 = vsel %vm297, %v1065, %v1064
    %v1104 = vsel %vm1088, %v1102, %v1103
    %v1105 = vrot.slane %v1104, 2
    %v1106 = vsel %vm669, %v1008, %v1063
    %v1107 = vsel %vm668, %v1064, %v1065
    %v1108 = vsel %vm1083, %v1107, %v1106
    %v1109 = vrot.slane %v1108, 4
    %v1110 = vsel %vm297, %v1063, %v1008
    %v1111 = vsel %vm1085, %v1064, %v1065
    %v1112 = vsel %vm1088, %v1111, %v1110
    %v1113 = vrot.slane %v1112, 6
    %v1114 = vsel %vm668, %v1012, %v1066
    %v1115 = vsel %vm669, %v1067, %v1068
    %v1116 = vsel %vm1083, %v1114, %v1115
    %v1117 = vsel %vm1085, %v1012, %v1066
    %v1118 = vsel %vm297, %v1068, %v1067
    %v1119 = vsel %vm1088, %v1117, %v1118
    %v1120 = vrot.slane %v1119, 2
    %v1121 = vsel %vm669, %v1012, %v1066
    %v1122 = vsel %vm668, %v1067, %v1068
    %v1123 = vsel %vm1083, %v1122, %v1121
    %v1124 = vrot.slane %v1123, 4
    %v1125 = vsel %vm297, %v1066, %v1012
    %v1126 = vsel %vm1085, %v1067, %v1068
    %v1127 = vsel %vm1088, %v1126, %v1125
    %v1128 = vrot.slane %v1127, 6
    %v1129 = vsel %vm668, %v1016, %v1069
    %v1130 = vsel %vm669, %v1070, %v1071
    %v1131 = vsel %vm1083, %v1129, %v1130
    %v1132 = vsel %vm1085, %v1016, %v1069
    %v1133 = vsel %vm297, %v1071, %v1070
    %v1134 = vsel %vm1088, %v1132, %v1133
    %v1135 = vrot.slane %v1134, 2
    %v1136 = vsel %vm669, %v1016, %v1069
    %v1137 = vsel %vm668, %v1070, %v1071
    %v1138 = vsel %vm1083, %v1137, %v1136
    %v1139 = vrot.slane %v1138, 4
    %v1140 = vsel %vm297, %v1069, %v1016
    %v1141 = vsel %vm1085, %v1070, %v1071
    %v1142 = vsel %vm1088, %v1141, %v1140
    %v1143 = vrot.slane %v1142, 6
    %v1144 = vsel %vm668, %v1020, %v1072
    %v1145 = vsel %vm669, %v1073, %v1074
    %v1146 = vsel %vm1083, %v1144, %v1145
    %v1147 = vsel %vm1085, %v1020, %v1072
    %v1148 = vsel %vm297, %v1074, %v1073
    %v1149 = vsel %vm1088, %v1147, %v1148
    %v1150 = vrot.slane %v1149, 2
    %v1151 = vsel %vm669, %v1020, %v1072
    %v1152 = vsel %vm668, %v1073, %v1074
    %v1153 = vsel %vm1083, %v1152, %v1151
    %v1154 = vrot.slane %v1153, 4
    %v1155 = vsel %vm297, %v1072, %v1020
    %v1156 = vsel %vm1085, %v1073, %v1074
    %v1157 = vsel %vm1088, %v1156, %v1155
    %v1158 = vrot.slane %v1157, 6
    %v1159 = vsel %vm668, %v1024, %v1075
    %v1160 = vsel %vm669, %v1076, %v1077
    %v1161 = vsel %vm1083, %v1159, %v1160
    %v1162 = vsel %vm1085, %v1024, %v1075
    %v1163 = vsel %vm297, %v1077, %v1076
    %v1164 = vsel %vm1088, %v1162, %v1163
    %v1165 = vrot.slane %v1164, 2
    %v1166 = vsel %vm669, %v1024, %v1075
    %v1167 = vsel %vm668, %v1076, %v1077
    %v1168 = vsel %vm1083, %v1167, %v1166
    %v1169 = vrot.slane %v1168, 4
    %v1170 = vsel %vm297, %v1075, %v1024
    %v1171 = vsel %vm1085, %v1076, %v1077
    %v1172 = vsel %vm1088, %v1171, %v1170
    %v1173 = vrot.slane %v1172, 6
    %v1174 = vsel %vm668, %v1028, %v1078
    %v1175 = vsel %vm669, %v1079, %v1080
    %v1176 = vsel %vm1083, %v1174, %v1175
    %v1177 = vsel %vm1085, %v1028, %v1078
    %v1178 = vsel %vm297, %v1080, %v1079
    %v1179 = vsel %vm1088, %v1177, %v1178
    %v1180 = vrot.slane %v1179, 2
    %v1181 = vsel %vm669, %v1028, %v1078
    %v1182 = vsel %vm668, %v1079, %v1080
    %v1183 = vsel %vm1083, %v1182, %v1181
    %v1184 = vrot.slane %v1183, 4
    %v1185 = vsel %vm297, %v1078, %v1028
    %v1186 = vsel %vm1085, %v1079, %v1080
    %v1187 = vsel %vm1088, %v1186, %v1185
    %v1188 = vrot.slane %v1187, 6
    %1189 = vst [vmem:[#allocation1] ss:$4 sm:$0xff] %v1084
    %v1190 = vld.sshfl [vmem:[#allocation1] sm:$0xff pattern:$0x73625140]
    %v1191 = vld.sshfl [vmem:[#allocation1 + $0x8] sm:$0xff pattern:$0x73625140]
    %v1192 = vld.sshfl [vmem:[#allocation1 + $0x10] sm:$0xff pattern:$0x73625140]
    %v1193 = vld.sshfl [vmem:[#allocation1 + $0x18] sm:$0xff pattern:$0x73625140]
    %s1194 = scalar_lea.vmem [#allocation1], 32
    %1195 = vst [vmem:[%s1194] ss:$4 sm:$0xff] %v1090
    %v1196 = vld.sshfl [vmem:[#allocation1 + $0x20] sm:$0xff pattern:$0x73625140]
    %v1197 = vld.sshfl [vmem:[#allocation1 + $0x28] sm:$0xff pattern:$0x73625140]
    %v1198 = vld.sshfl [vmem:[#allocation1 + $0x30] sm:$0xff pattern:$0x73625140]
    %v1199 = vld.sshfl [vmem:[#allocation1 + $0x38] sm:$0xff pattern:$0x73625140]
    %1200 = vst [vmem:[#allocation1] ss:$4 sm:$0xff] %v1094
    %v1201 = vld.sshfl [vmem:[#allocation1] sm:$0xff pattern:$0x73625140]
    %v1202 = vld.sshfl [vmem:[#allocation1 + $0x8] sm:$0xff pattern:$0x73625140]
    %v1203 = vld.sshfl [vmem:[#allocation1 + $0x10] sm:$0xff pattern:$0x73625140]
    %v1204 = vld.sshfl [vmem:[#allocation1 + $0x18] sm:$0xff pattern:$0x73625140]
    %1205 = vst [vmem:[%s1194] ss:$4 sm:$0xff] %v1098
    %v1206 = vld.sshfl [vmem:[#allocation1 + $0x20] sm:$0xff pattern:$0x73625140]
    %v1207 = vld.sshfl [vmem:[#allocation1 + $0x28] sm:$0xff pattern:$0x73625140]
    %v1208 = vld.sshfl [vmem:[#allocation1 + $0x30] sm:$0xff pattern:$0x73625140]
    %v1209 = vld.sshfl [vmem:[#allocation1 + $0x38] sm:$0xff pattern:$0x73625140]
    %1210 = vst [vmem:[#allocation1] ss:$4 sm:$0xff] %v1101
    %v1211 = vld.sshfl [vmem:[#allocation1] sm:$0xff pattern:$0x73625140]
    %v1212 = vld.sshfl [vmem:[#allocation1 + $0x8] sm:$0xff pattern:$0x73625140]
    %v1213 = vld.sshfl [vmem:[#allocation1 + $0x10] sm:$0xff pattern:$0x73625140]
    %v1214 = vld.sshfl [vmem:[#allocation1 + $0x18] sm:$0xff pattern:$0x73625140]
    %1215 = vst [vmem:[%s1194] ss:$4 sm:$0xff] %v1105
    %v1216 = vld.sshfl [vmem:[#allocation1 + $0x20] sm:$0xff pattern:$0x73625140]
    %v1217 = vld.sshfl [vmem:[#allocation1 + $0x28] sm:$0xff pattern:$0x73625140]
    %v1218 = vld.sshfl [vmem:[#allocation1 + $0x30] sm:$0xff pattern:$0x73625140]
    %v1219 = vld.sshfl [vmem:[#allocation1 + $0x38] sm:$0xff pattern:$0x73625140]
    %1220 = vst [vmem:[#allocation1] ss:$4 sm:$0xff] %v1109
    %v1221 = vld.sshfl [vmem:[#allocation1] sm:$0xff pattern:$0x73625140]
    %v1222 = vld.sshfl [vmem:[#allocation1 + $0x8] sm:$0xff pattern:$0x73625140]
    %v1223 = vld.sshfl [vmem:[#allocation1 + $0x10] sm:$0xff pattern:$0x73625140]
    %v1224 = vld.sshfl [vmem:[#allocation1 + $0x18] sm:$0xff pattern:$0x73625140]
    %1225 = vst [vmem:[%s1194] ss:$4 sm:$0xff] %v1113
    %v1226 = vld.sshfl [vmem:[#allocation1 + $0x20] sm:$0xff pattern:$0x73625140]
    %v1227 = vld.sshfl [vmem:[#allocation1 + $0x28] sm:$0xff pattern:$0x73625140]
    %v1228 = vld.sshfl [vmem:[#allocation1 + $0x30] sm:$0xff pattern:$0x73625140]
    %v1229 = vld.sshfl [vmem:[#allocation1 + $0x38] sm:$0xff pattern:$0x73625140]
    %1230 = vst [vmem:[#allocation1] ss:$4 sm:$0xff] %v1116
    %v1231 = vld.sshfl [vmem:[#allocation1] sm:$0xff pattern:$0x73625140]
    %v1232 = vld.sshfl [vmem:[#allocation1 + $0x8] sm:$0xff pattern:$0x73625140]
    %v1233 = vld.sshfl [vmem:[#allocation1 + $0x10] sm:$0xff pattern:$0x73625140]
    %v1234 = vld.sshfl [vmem:[#allocation1 + $0x18] sm:$0xff pattern:$0x73625140]
    %1235 = vst [vmem:[%s1194] ss:$4 sm:$0xff] %v1120
    %v1236 = vld.sshfl [vmem:[#allocation1 + $0x20] sm:$0xff pattern:$0x73625140]
    %v1237 = vld.sshfl [vmem:[#allocation1 + $0x28] sm:$0xff pattern:$0x73625140]
    %v1238 = vld.sshfl [vmem:[#allocation1 + $0x30] sm:$0xff pattern:$0x73625140]
    %v1239 = vld.sshfl [vmem:[#allocation1 + $0x38] sm:$0xff pattern:$0x73625140]
    %1240 = vst [vmem:[#allocation1] ss:$4 sm:$0xff] %v1124
    %v1241 = vld.sshfl [vmem:[#allocation1] sm:$0xff pattern:$0x73625140]
    %v1242 = vld.sshfl [vmem:[#allocation1 + $0x8] sm:$0xff pattern:$0x73625140]
    %v1243 = vld.sshfl [vmem:[#allocation1 + $0x10] sm:$0xff pattern:$0x73625140]
    %v1244 = vld.sshfl [vmem:[#allocation1 + $0x18] sm:$0xff pattern:$0x73625140]
    %1245 = vst [vmem:[%s1194] ss:$4 sm:$0xff] %v1128
    %v1246 = vld.sshfl [vmem:[#allocation1 + $0x20] sm:$0xff pattern:$0x73625140]
    %v1247 = vld.sshfl [vmem:[#allocation1 + $0x28] sm:$0xff pattern:$0x73625140]
    %v1248 = vld.sshfl [vmem:[#allocation1 + $0x30] sm:$0xff pattern:$0x73625140]
    %v1249 = vld.sshfl [vmem:[#allocation1 + $0x38] sm:$0xff pattern:$0x73625140]
    %1250 = vst [vmem:[#allocation1] ss:$4 sm:$0xff] %v1131
    %v1251 = vld.sshfl [vmem:[#allocation1] sm:$0xff pattern:$0x73625140]
    %v1252 = vld.sshfl [vmem:[#allocation1 + $0x8] sm:$0xff pattern:$0x73625140]
    %v1253 = vld.sshfl [vmem:[#allocation1 + $0x10] sm:$0xff pattern:$0x73625140]
    %v1254 = vld.sshfl [vmem:[#allocation1 + $0x18] sm:$0xff pattern:$0x73625140]
    %1255 = vst [vmem:[%s1194] ss:$4 sm:$0xff] %v1135
    %v1256 = vld.sshfl [vmem:[#allocation1 + $0x20] sm:$0xff pattern:$0x73625140]
    %v1257 = vld.sshfl [vmem:[#allocation1 + $0x28] sm:$0xff pattern:$0x73625140]
    %v1258 = vld.sshfl [vmem:[#allocation1 + $0x30] sm:$0xff pattern:$0x73625140]
    %v1259 = vld.sshfl [vmem:[#allocation1 + $0x38] sm:$0xff pattern:$0x73625140]
    %1260 = vst [vmem:[#allocation1] ss:$4 sm:$0xff] %v1139
    %v1261 = vld.sshfl [vmem:[#allocation1] sm:$0xff pattern:$0x73625140]
    %v1262 = vld.sshfl [vmem:[#allocation1 + $0x8] sm:$0xff pattern:$0x73625140]
    %v1263 = vld.sshfl [vmem:[#allocation1 + $0x10] sm:$0xff pattern:$0x73625140]
    %v1264 = vld.sshfl [vmem:[#allocation1 + $0x18] sm:$0xff pattern:$0x73625140]
    %1265 = vst [vmem:[%s1194] ss:$4 sm:$0xff] %v1143
    %v1266 = vld.sshfl [vmem:[#allocation1 + $0x20] sm:$0xff pattern:$0x73625140]
    %v1267 = vld.sshfl [vmem:[#allocation1 + $0x28] sm:$0xff pattern:$0x73625140]
    %v1268 = vld.sshfl [vmem:[#allocation1 + $0x30] sm:$0xff pattern:$0x73625140]
    %v1269 = vld.sshfl [vmem:[#allocation1 + $0x38] sm:$0xff pattern:$0x73625140]
    %1270 = vst [vmem:[#allocation1] ss:$4 sm:$0xff] %v1146
    %v1271 = vld.sshfl [vmem:[#allocation1] sm:$0xff pattern:$0x73625140]
    %v1272 = vld.sshfl [vmem:[#allocation1 + $0x8] sm:$0xff pattern:$0x73625140]
    %v1273 = vld.sshfl [vmem:[#allocation1 + $0x10] sm:$0xff pattern:$0x73625140]
    %v1274 = vld.sshfl [vmem:[#allocation1 + $0x18] sm:$0xff pattern:$0x73625140]
    %1275 = vst [vmem:[%s1194] ss:$4 sm:$0xff] %v1150
    %v1276 = vld.sshfl [vmem:[#allocation1 + $0x20] sm:$0xff pattern:$0x73625140]
    %v1277 = vld.sshfl [vmem:[#allocation1 + $0x28] sm:$0xff pattern:$0x73625140]
    %v1278 = vld.sshfl [vmem:[#allocation1 + $0x30] sm:$0xff pattern:$0x73625140]
    %v1279 = vld.sshfl [vmem:[#allocation1 + $0x38] sm:$0xff pattern:$0x73625140]
    %1280 = vst [vmem:[#allocation1] ss:$4 sm:$0xff] %v1154
    %v1281 = vld.sshfl [vmem:[#allocation1] sm:$0xff pattern:$0x73625140]
    %v1282 = vld.sshfl [vmem:[#allocation1 + $0x8] sm:$0xff pattern:$0x73625140]
    %v1283 = vld.sshfl [vmem:[#allocation1 + $0x10] sm:$0xff pattern:$0x73625140]
    %v1284 = vld.sshfl [vmem:[#allocation1 + $0x18] sm:$0xff pattern:$0x73625140]
    %1285 = vst [vmem:[%s1194] ss:$4 sm:$0xff] %v1158
    %v1286 = vld.sshfl [vmem:[#allocation1 + $0x20] sm:$0xff pattern:$0x73625140]
    %v1287 = vld.sshfl [vmem:[#allocation1 + $0x28] sm:$0xff pattern:$0x73625140]
    %v1288 = vld.sshfl [vmem:[#allocation1 + $0x30] sm:$0xff pattern:$0x73625140]
    %v1289 = vld.sshfl [vmem:[#allocation1 + $0x38] sm:$0xff pattern:$0x73625140]
    %1290 = vst [vmem:[#allocation1] ss:$4 sm:$0xff] %v1161
    %v1291 = vld.sshfl [vmem:[#allocation1] sm:$0xff pattern:$0x73625140]
    %v1292 = vld.sshfl [vmem:[#allocation1 + $0x8] sm:$0xff pattern:$0x73625140]
    %v1293 = vld.sshfl [vmem:[#allocation1 + $0x10] sm:$0xff pattern:$0x73625140]
    %v1294 = vld.sshfl [vmem:[#allocation1 + $0x18] sm:$0xff pattern:$0x73625140]
    %1295 = vst [vmem:[%s1194] ss:$4 sm:$0xff] %v1165
    %v1296 = vld.sshfl [vmem:[#allocation1 + $0x20] sm:$0xff pattern:$0x73625140]
    %v1297 = vld.sshfl [vmem:[#allocation1 + $0x28] sm:$0xff pattern:$0x73625140]
    %v1298 = vld.sshfl [vmem:[#allocation1 + $0x30] sm:$0xff pattern:$0x73625140]
    %v1299 = vld.sshfl [vmem:[#allocation1 + $0x38] sm:$0xff pattern:$0x73625140]
    %1300 = vst [vmem:[#allocation1] ss:$4 sm:$0xff] %v1169
    %v1301 = vld.sshfl [vmem:[#allocation1] sm:$0xff pattern:$0x73625140]
    %v1302 = vld.sshfl [vmem:[#allocation1 + $0x8] sm:$0xff pattern:$0x73625140]
    %v1303 = vld.sshfl [vmem:[#allocation1 + $0x10] sm:$0xff pattern:$0x73625140]
    %v1304 = vld.sshfl [vmem:[#allocation1 + $0x18] sm:$0xff pattern:$0x73625140]
    %1305 = vst [vmem:[%s1194] ss:$4 sm:$0xff] %v1173
    %v1306 = vld.sshfl [vmem:[#allocation1 + $0x20] sm:$0xff pattern:$0x73625140]
    %v1307 = vld.sshfl [vmem:[#allocation1 + $0x28] sm:$0xff pattern:$0x73625140]
    %v1308 = vld.sshfl [vmem:[#allocation1 + $0x30] sm:$0xff pattern:$0x73625140]
    %v1309 = vld.sshfl [vmem:[#allocation1 + $0x38] sm:$0xff pattern:$0x73625140]
    %1310 = vst [vmem:[#allocation1] ss:$4 sm:$0xff] %v1176
    %v1311 = vld.sshfl [vmem:[#allocation1] sm:$0xff pattern:$0x73625140]
    %v1312 = vld.sshfl [vmem:[#allocation1 + $0x8] sm:$0xff pattern:$0x73625140]
    %v1313 = vld.sshfl [vmem:[#allocation1 + $0x10] sm:$0xff pattern:$0x73625140]
    %v1314 = vld.sshfl [vmem:[#allocation1 + $0x18] sm:$0xff pattern:$0x73625140]
    %1315 = vst [vmem:[%s1194] ss:$4 sm:$0xff] %v1180
    %v1316 = vld.sshfl [vmem:[#allocation1 + $0x20] sm:$0xff pattern:$0x73625140]
    %v1317 = vld.sshfl [vmem:[#allocation1 + $0x28] sm:$0xff pattern:$0x73625140]
    %v1318 = vld.sshfl [vmem:[#allocation1 + $0x30] sm:$0xff pattern:$0x73625140]
    %v1319 = vld.sshfl [vmem:[#allocation1 + $0x38] sm:$0xff pattern:$0x73625140]
    %1320 = vst [vmem:[#allocation1] ss:$4 sm:$0xff] %v1184
    %v1321 = vld.sshfl [vmem:[#allocation1] sm:$0xff pattern:$0x73625140]
    %v1322 = vld.sshfl [vmem:[#allocation1 + $0x8] sm:$0xff pattern:$0x73625140]
    %v1323 = vld.sshfl [vmem:[#allocation1 + $0x10] sm:$0xff pattern:$0x73625140]
    %v1324 = vld.sshfl [vmem:[#allocation1 + $0x18] sm:$0xff pattern:$0x73625140]
    %1325 = vst [vmem:[%s1194] ss:$4 sm:$0xff] %v1188
    %v1326 = vld.sshfl [vmem:[#allocation1 + $0x20] sm:$0xff pattern:$0x73625140]
    %v1327 = vld.sshfl [vmem:[#allocation1 + $0x28] sm:$0xff pattern:$0x73625140]
    %v1328 = vld.sshfl [vmem:[#allocation1 + $0x30] sm:$0xff pattern:$0x73625140]
    %v1329 = vld.sshfl [vmem:[#allocation1 + $0x38] sm:$0xff pattern:$0x73625140]
    %v1442 = vsel %vm668, %v1190, -inf
    %v1443 = vrot.slane %v1442, 4
    %v1444 = vmax.f32 %v1442, %v1443
    %v1445 = vrot.slane %v1444, 2
    %v1446 = vmax.f32 %v1444, %v1445
    %v1447 = vrot.slane %v1446, 1
    %v1448 = vmax.f32 %v1446, %v1447
    %v1449 = vsel %vm668, %v1191, -inf
    %v1450 = vrot.slane %v1449, 4
    %v1451 = vmax.f32 %v1449, %v1450
    %v1452 = vrot.slane %v1451, 2
    %v1453 = vmax.f32 %v1451, %v1452
    %v1454 = vrot.slane %v1453, 1
    %v1455 = vmax.f32 %v1453, %v1454
    %v1456 = vsel %vm668, %v1192, -inf
    %v1457 = vrot.slane %v1456, 4
    %v1458 = vmax.f32 %v1456, %v1457
    %v1459 = vrot.slane %v1458, 2
    %v1460 = vmax.f32 %v1458, %v1459
    %v1461 = vrot.slane %v1460, 1
    %v1462 = vmax.f32 %v1460, %v1461
    %vm1463 = vcmask 517120
    %v1464 = vsel %vm1463, %v1193, -inf
    %v1465 = vrot.slane %v1464, 4
    %v1466 = vmax.f32 %v1464, %v1465
    %v1467 = vrot.slane %v1466, 2
    %v1468 = vmax.f32 %v1466, %v1467
    %v1469 = vrot.slane %v1468, 1
    %v1470 = vmax.f32 %v1468, %v1469
    %v1471 = vsel %vm668, %v1196, -inf
    %v1472 = vrot.slane %v1471, 4
    %v1473 = vmax.f32 %v1471, %v1472
    %v1474 = vrot.slane %v1473, 2
    %v1475 = vmax.f32 %v1473, %v1474
    %v1476 = vrot.slane %v1475, 1
    %v1477 = vmax.f32 %v1475, %v1476
    %v1478 = vsel %vm668, %v1197, -inf
    %v1479 = vrot.slane %v1478, 4
    %v1480 = vmax.f32 %v1478, %v1479
    %v1481 = vrot.slane %v1480, 2
    %v1482 = vmax.f32 %v1480, %v1481
    %v1483 = vrot.slane %v1482, 1
    %v1484 = vmax.f32 %v1482, %v1483
    %v1485 = vsel %vm668, %v1198, -inf
    %v1486 = vrot.slane %v1485, 4
    %v1487 = vmax.f32 %v1485, %v1486
    %v1488 = vrot.slane %v1487, 2
    %v1489 = vmax.f32 %v1487, %v1488
    %v1490 = vrot.slane %v1489, 1
    %v1491 = vmax.f32 %v1489, %v1490
    %v1492 = vsel %vm1463, %v1199, -inf
    %v1493 = vrot.slane %v1492, 4
    %v1494 = vmax.f32 %v1492, %v1493
    %v1495 = vrot.slane %v1494, 2
    %v1496 = vmax.f32 %v1494, %v1495
    %v1497 = vrot.slane %v1496, 1
    %v1498 = vmax.f32 %v1496, %v1497
    %v1499 = vsel %vm668, %v1201, -inf
    %v1500 = vrot.slane %v1499, 4
    %v1501 = vmax.f32 %v1499, %v1500
    %v1502 = vrot.slane %v1501, 2
    %v1503 = vmax.f32 %v1501, %v1502
    %v1504 = vrot.slane %v1503, 1
    %v1505 = vmax.f32 %v1503, %v1504
    %v1506 = vsel %vm668, %v1202, -inf
    %v1507 = vrot.slane %v1506, 4
    %v1508 = vmax.f32 %v1506, %v1507
    %v1509 = vrot.slane %v1508, 2
    %v1510 = vmax.f32 %v1508, %v1509
    %v1511 = vrot.slane %v1510, 1
    %v1512 = vmax.f32 %v1510, %v1511
    %v1513 = vsel %vm668, %v1203, -inf
    %v1514 = vrot.slane %v1513, 4
    %v1515 = vmax.f32 %v1513, %v1514
    %v1516 = vrot.slane %v1515, 2
    %v1517 = vmax.f32 %v1515, %v1516
    %v1518 = vrot.slane %v1517, 1
    %v1519 = vmax.f32 %v1517, %v1518
    %v1520 = vsel %vm1463, %v1204, -inf
    %v1521 = vrot.slane %v1520, 4
    %v1522 = vmax.f32 %v1520, %v1521
    %v1523 = vrot.slane %v1522, 2
    %v1524 = vmax.f32 %v1522, %v1523
    %v1525 = vrot.slane %v1524, 1
    %v1526 = vmax.f32 %v1524, %v1525
    %v1527 = vsel %vm668, %v1206, -inf
    %v1528 = vrot.slane %v1527, 4
    %v1529 = vmax.f32 %v1527, %v1528
    %v1530 = vrot.slane %v1529, 2
    %v1531 = vmax.f32 %v1529, %v1530
    %v1532 = vrot.slane %v1531, 1
    %v1533 = vmax.f32 %v1531, %v1532
    %v1534 = vsel %vm668, %v1207, -inf
    %v1535 = vrot.slane %v1534, 4
    %v1536 = vmax.f32 %v1534, %v1535
    %v1537 = vrot.slane %v1536, 2
    %v1538 = vmax.f32 %v1536, %v1537
    %v1539 = vrot.slane %v1538, 1
    %v1540 = vmax.f32 %v1538, %v1539
    %v1541 = vsel %vm668, %v1208, -inf
    %v1542 = vrot.slane %v1541, 4
    %v1543 = vmax.f32 %v1541, %v1542
    %v1544 = vrot.slane %v1543, 2
    %v1545 = vmax.f32 %v1543, %v1544
    %v1546 = vrot.slane %v1545, 1
    %v1547 = vmax.f32 %v1545, %v1546
    %v1548 = vsel %vm1463, %v1209, -inf
    %v1549 = vrot.slane %v1548, 4
    %v1550 = vmax.f32 %v1548, %v1549
    %v1551 = vrot.slane %v1550, 2
    %v1552 = vmax.f32 %v1550, %v1551
    %v1553 = vrot.slane %v1552, 1
    %v1554 = vmax.f32 %v1552, %v1553
    %v1555 = vsel %vm668, %v1211, -inf
    %v1556 = vrot.slane %v1555, 4
    %v1557 = vmax.f32 %v1555, %v1556
    %v1558 = vrot.slane %v1557, 2
    %v1559 = vmax.f32 %v1557, %v1558
    %v1560 = vrot.slane %v1559, 1
    %v1561 = vmax.f32 %v1559, %v1560
    %v1562 = vsel %vm668, %v1212, -inf
    %v1563 = vrot.slane %v1562, 4
    %v1564 = vmax.f32 %v1562, %v1563
    %v1565 = vrot.slane %v1564, 2
    %v1566 = vmax.f32 %v1564, %v1565
    %v1567 = vrot.slane %v1566, 1
    %v1568 = vmax.f32 %v1566, %v1567
    %v1569 = vsel %vm668, %v1213, -inf
    %v1570 = vrot.slane %v1569, 4
    %v1571 = vmax.f32 %v1569, %v1570
    %v1572 = vrot.slane %v1571, 2
    %v1573 = vmax.f32 %v1571, %v1572
    %v1574 = vrot.slane %v1573, 1
    %v1575 = vmax.f32 %v1573, %v1574
    %v1576 = vsel %vm1463, %v1214, -inf
    %v1577 = vrot.slane %v1576, 4
    %v1578 = vmax.f32 %v1576, %v1577
    %v1579 = vrot.slane %v1578, 2
    %v1580 = vmax.f32 %v1578, %v1579
    %v1581 = vrot.slane %v1580, 1
    %v1582 = vmax.f32 %v1580, %v1581
    %v1583 = vsel %vm668, %v1216, -inf
    %v1584 = vrot.slane %v1583, 4
    %v1585 = vmax.f32 %v1583, %v1584
    %v1586 = vrot.slane %v1585, 2
    %v1587 = vmax.f32 %v1585, %v1586
    %v1588 = vrot.slane %v1587, 1
    %v1589 = vmax.f32 %v1587, %v1588
    %v1590 = vsel %vm668, %v1217, -inf
    %v1591 = vrot.slane %v1590, 4
    %v1592 = vmax.f32 %v1590, %v1591
    %v1593 = vrot.slane %v1592, 2
    %v1594 = vmax.f32 %v1592, %v1593
    %v1595 = vrot.slane %v1594, 1
    %v1596 = vmax.f32 %v1594, %v1595
    %v1597 = vsel %vm668, %v1218, -inf
    %v1598 = vrot.slane %v1597, 4
    %v1599 = vmax.f32 %v1597, %v1598
    %v1600 = vrot.slane %v1599, 2
    %v1601 = vmax.f32 %v1599, %v1600
    %v1602 = vrot.slane %v1601, 1
    %v1603 = vmax.f32 %v1601, %v1602
    %v1604 = vsel %vm1463, %v1219, -inf
    %v1605 = vrot.slane %v1604, 4
    %v1606 = vmax.f32 %v1604, %v1605
    %v1607 = vrot.slane %v1606, 2
    %v1608 = vmax.f32 %v1606, %v1607
    %v1609 = vrot.slane %v1608, 1
    %v1610 = vmax.f32 %v1608, %v1609
    %v1611 = vsel %vm668, %v1221, -inf
    %v1612 = vrot.slane %v1611, 4
    %v1613 = vmax.f32 %v1611, %v1612
    %v1614 = vrot.slane %v1613, 2
    %v1615 = vmax.f32 %v1613, %v1614
    %v1616 = vrot.slane %v1615, 1
    %v1617 = vmax.f32 %v1615, %v1616
    %v1618 = vsel %vm668, %v1222, -inf
    %v1619 = vrot.slane %v1618, 4
    %v1620 = vmax.f32 %v1618, %v1619
    %v1621 = vrot.slane %v1620, 2
    %v1622 = vmax.f32 %v1620, %v1621
    %v1623 = vrot.slane %v1622, 1
    %v1624 = vmax.f32 %v1622, %v1623
    %v1625 = vsel %vm668, %v1223, -inf
    %v1626 = vrot.slane %v1625, 4
    %v1627 = vmax.f32 %v1625, %v1626
    %v1628 = vrot.slane %v1627, 2
    %v1629 = vmax.f32 %v1627, %v1628
    %v1630 = vrot.slane %v1629, 1
    %v1631 = vmax.f32 %v1629, %v1630
    %v1632 = vsel %vm1463, %v1224, -inf
    %v1633 = vrot.slane %v1632, 4
    %v1634 = vmax.f32 %v1632, %v1633
    %v1635 = vrot.slane %v1634, 2
    %v1636 = vmax.f32 %v1634, %v1635
    %v1637 = vrot.slane %v1636, 1
    %v1638 = vmax.f32 %v1636, %v1637
    %v1639 = vsel %vm668, %v1226, -inf
    %v1640 = vrot.slane %v1639, 4
    %v1641 = vmax.f32 %v1639, %v1640
    %v1642 = vrot.slane %v1641, 2
    %v1643 = vmax.f32 %v1641, %v1642
    %v1644 = vrot.slane %v1643, 1
    %v1645 = vmax.f32 %v1643, %v1644
    %v1646 = vsel %vm668, %v1227, -inf
    %v1647 = vrot.slane %v1646, 4
    %v1648 = vmax.f32 %v1646, %v1647
    %v1649 = vrot.slane %v1648, 2
    %v1650 = vmax.f32 %v1648, %v1649
    %v1651 = vrot.slane %v1650, 1
    %v1652 = vmax.f32 %v1650, %v1651
    %v1653 = vsel %vm668, %v1228, -inf
    %v1654 = vrot.slane %v1653, 4
    %v1655 = vmax.f32 %v1653, %v1654
    %v1656 = vrot.slane %v1655, 2
    %v1657 = vmax.f32 %v1655, %v1656
    %v1658 = vrot.slane %v1657, 1
    %v1659 = vmax.f32 %v1657, %v1658
    %v1660 = vsel %vm1463, %v1229, -inf
    %v1661 = vrot.slane %v1660, 4
    %v1662 = vmax.f32 %v1660, %v1661
    %v1663 = vrot.slane %v1662, 2
    %v1664 = vmax.f32 %v1662, %v1663
    %v1665 = vrot.slane %v1664, 1
    %v1666 = vmax.f32 %v1664, %v1665
    %v1667 = vsel %vm668, %v1231, -inf
    %v1668 = vrot.slane %v1667, 4
    %v1669 = vmax.f32 %v1667, %v1668
    %v1670 = vrot.slane %v1669, 2
    %v1671 = vmax.f32 %v1669, %v1670
    %v1672 = vrot.slane %v1671, 1
    %v1673 = vmax.f32 %v1671, %v1672
    %v1674 = vsel %vm668, %v1232, -inf
    %v1675 = vrot.slane %v1674, 4
    %v1676 = vmax.f32 %v1674, %v1675
    %v1677 = vrot.slane %v1676, 2
    %v1678 = vmax.f32 %v1676, %v1677
    %v1679 = vrot.slane %v1678, 1
    %v1680 = vmax.f32 %v1678, %v1679
    %v1681 = vsel %vm668, %v1233, -inf
    %v1682 = vrot.slane %v1681, 4
    %v1683 = vmax.f32 %v1681, %v1682
    %v1684 = vrot.slane %v1683, 2
    %v1685 = vmax.f32 %v1683, %v1684
    %v1686 = vrot.slane %v1685, 1
    %v1687 = vmax.f32 %v1685, %v1686
    %v1688 = vsel %vm1463, %v1234, -inf
    %v1689 = vrot.slane %v1688, 4
    %v1690 = vmax.f32 %v1688, %v1689
    %v1691 = vrot.slane %v1690, 2
    %v1692 = vmax.f32 %v1690, %v1691
    %v1693 = vrot.slane %v1692, 1
    %v1694 = vmax.f32 %v1692, %v1693
    %v1695 = vsel %vm668, %v1236, -inf
    %v1696 = vrot.slane %v1695, 4
    %v1697 = vmax.f32 %v1695, %v1696
    %v1698 = vrot.slane %v1697, 2
    %v1699 = vmax.f32 %v1697, %v1698
    %v1700 = vrot.slane %v1699, 1
    %v1701 = vmax.f32 %v1699, %v1700
    %v1702 = vsel %vm668, %v1237, -inf
    %v1703 = vrot.slane %v1702, 4
    %v1704 = vmax.f32 %v1702, %v1703
    %v1705 = vrot.slane %v1704, 2
    %v1706 = vmax.f32 %v1704, %v1705
    %v1707 = vrot.slane %v1706, 1
    %v1708 = vmax.f32 %v1706, %v1707
    %v1709 = vsel %vm668, %v1238, -inf
    %v1710 = vrot.slane %v1709, 4
    %v1711 = vmax.f32 %v1709, %v1710
    %v1712 = vrot.slane %v1711, 2
    %v1713 = vmax.f32 %v1711, %v1712
    %v1714 = vrot.slane %v1713, 1
    %v1715 = vmax.f32 %v1713, %v1714
    %v1716 = vsel %vm1463, %v1239, -inf
    %v1717 = vrot.slane %v1716, 4
    %v1718 = vmax.f32 %v1716, %v1717
    %v1719 = vrot.slane %v1718, 2
    %v1720 = vmax.f32 %v1718, %v1719
    %v1721 = vrot.slane %v1720, 1
    %v1722 = vmax.f32 %v1720, %v1721
    %v1723 = vsel %vm668, %v1241, -inf
    %v1724 = vrot.slane %v1723, 4
    %v1725 = vmax.f32 %v1723, %v1724
    %v1726 = vrot.slane %v1725, 2
    %v1727 = vmax.f32 %v1725, %v1726
    %v1728 = vrot.slane %v1727, 1
    %v1729 = vmax.f32 %v1727, %v1728
    %v1730 = vsel %vm668, %v1242, -inf
    %v1731 = vrot.slane %v1730, 4
    %v1732 = vmax.f32 %v1730, %v1731
    %v1733 = vrot.slane %v1732, 2
    %v1734 = vmax.f32 %v1732, %v1733
    %v1735 = vrot.slane %v1734, 1
    %v1736 = vmax.f32 %v1734, %v1735
    %v1737 = vsel %vm668, %v1243, -inf
    %v1738 = vrot.slane %v1737, 4
    %v1739 = vmax.f32 %v1737, %v1738
    %v1740 = vrot.slane %v1739, 2
    %v1741 = vmax.f32 %v1739, %v1740
    %v1742 = vrot.slane %v1741, 1
    %v1743 = vmax.f32 %v1741, %v1742
    %v1744 = vsel %vm1463, %v1244, -inf
    %v1745 = vrot.slane %v1744, 4
    %v1746 = vmax.f32 %v1744, %v1745
    %v1747 = vrot.slane %v1746, 2
    %v1748 = vmax.f32 %v1746, %v1747
    %v1749 = vrot.slane %v1748, 1
    %v1750 = vmax.f32 %v1748, %v1749
    %v1751 = vsel %vm668, %v1246, -inf
    %v1752 = vrot.slane %v1751, 4
    %v1753 = vmax.f32 %v1751, %v1752
    %v1754 = vrot.slane %v1753, 2
    %v1755 = vmax.f32 %v1753, %v1754
    %v1756 = vrot.slane %v1755, 1
    %v1757 = vmax.f32 %v1755, %v1756
    %v1758 = vsel %vm668, %v1247, -inf
    %v1759 = vrot.slane %v1758, 4
    %v1760 = vmax.f32 %v1758, %v1759
    %v1761 = vrot.slane %v1760, 2
    %v1762 = vmax.f32 %v1760, %v1761
    %v1763 = vrot.slane %v1762, 1
    %v1764 = vmax.f32 %v1762, %v1763
    %v1765 = vsel %vm668, %v1248, -inf
    %v1766 = vrot.slane %v1765, 4
    %v1767 = vmax.f32 %v1765, %v1766
    %v1768 = vrot.slane %v1767, 2
    %v1769 = vmax.f32 %v1767, %v1768
    %v1770 = vrot.slane %v1769, 1
    %v1771 = vmax.f32 %v1769, %v1770
    %v1772 = vsel %vm1463, %v1249, -inf
    %v1773 = vrot.slane %v1772, 4
    %v1774 = vmax.f32 %v1772, %v1773
    %v1775 = vrot.slane %v1774, 2
    %v1776 = vmax.f32 %v1774, %v1775
    %v1777 = vrot.slane %v1776, 1
    %v1778 = vmax.f32 %v1776, %v1777
    %v1779 = vsel %vm668, %v1251, -inf
    %v1780 = vrot.slane %v1779, 4
    %v1781 = vmax.f32 %v1779, %v1780
    %v1782 = vrot.slane %v1781, 2
    %v1783 = vmax.f32 %v1781, %v1782
    %v1784 = vrot.slane %v1783, 1
    %v1785 = vmax.f32 %v1783, %v1784
    %v1786 = vsel %vm668, %v1252, -inf
    %v1787 = vrot.slane %v1786, 4
    %v1788 = vmax.f32 %v1786, %v1787
    %v1789 = vrot.slane %v1788, 2
    %v1790 = vmax.f32 %v1788, %v1789
    %v1791 = vrot.slane %v1790, 1
    %v1792 = vmax.f32 %v1790, %v1791
    %v1793 = vsel %vm668, %v1253, -inf
    %v1794 = vrot.slane %v1793, 4
    %v1795 = vmax.f32 %v1793, %v1794
    %v1796 = vrot.slane %v1795, 2
    %v1797 = vmax.f32 %v1795, %v1796
    %v1798 = vrot.slane %v1797, 1
    %v1799 = vmax.f32 %v1797, %v1798
    %v1800 = vsel %vm1463, %v1254, -inf
    %v1801 = vrot.slane %v1800, 4
    %v1802 = vmax.f32 %v1800, %v1801
    %v1803 = vrot.slane %v1802, 2
    %v1804 = vmax.f32 %v1802, %v1803
    %v1805 = vrot.slane %v1804, 1
    %v1806 = vmax.f32 %v1804, %v1805
    %v1807 = vsel %vm668, %v1256, -inf
    %v1808 = vrot.slane %v1807, 4
    %v1809 = vmax.f32 %v1807, %v1808
    %v1810 = vrot.slane %v1809, 2
    %v1811 = vmax.f32 %v1809, %v1810
    %v1812 = vrot.slane %v1811, 1
    %v1813 = vmax.f32 %v1811, %v1812
    %v1814 = vsel %vm668, %v1257, -inf
    %v1815 = vrot.slane %v1814, 4
    %v1816 = vmax.f32 %v1814, %v1815
    %v1817 = vrot.slane %v1816, 2
    %v1818 = vmax.f32 %v1816, %v1817
    %v1819 = vrot.slane %v1818, 1
    %v1820 = vmax.f32 %v1818, %v1819
    %v1821 = vsel %vm668, %v1258, -inf
    %v1822 = vrot.slane %v1821, 4
    %v1823 = vmax.f32 %v1821, %v1822
    %v1824 = vrot.slane %v1823, 2
    %v1825 = vmax.f32 %v1823, %v1824
    %v1826 = vrot.slane %v1825, 1
    %v1827 = vmax.f32 %v1825, %v1826
    %v1828 = vsel %vm1463, %v1259, -inf
    %v1829 = vrot.slane %v1828, 4
    %v1830 = vmax.f32 %v1828, %v1829
    %v1831 = vrot.slane %v1830, 2
    %v1832 = vmax.f32 %v1830, %v1831
    %v1833 = vrot.slane %v1832, 1
    %v1834 = vmax.f32 %v1832, %v1833
    %v1835 = vsel %vm668, %v1261, -inf
    %v1836 = vrot.slane %v1835, 4
    %v1837 = vmax.f32 %v1835, %v1836
    %v1838 = vrot.slane %v1837, 2
    %v1839 = vmax.f32 %v1837, %v1838
    %v1840 = vrot.slane %v1839, 1
    %v1841 = vmax.f32 %v1839, %v1840
    %v1842 = vsel %vm668, %v1262, -inf
    %v1843 = vrot.slane %v1842, 4
    %v1844 = vmax.f32 %v1842, %v1843
    %v1845 = vrot.slane %v1844, 2
    %v1846 = vmax.f32 %v1844, %v1845
    %v1847 = vrot.slane %v1846, 1
    %v1848 = vmax.f32 %v1846, %v1847
    %v1849 = vsel %vm668, %v1263, -inf
    %v1850 = vrot.slane %v1849, 4
    %v1851 = vmax.f32 %v1849, %v1850
    %v1852 = vrot.slane %v1851, 2
    %v1853 = vmax.f32 %v1851, %v1852
    %v1854 = vrot.slane %v1853, 1
    %v1855 = vmax.f32 %v1853, %v1854
    %v1856 = vsel %vm1463, %v1264, -inf
    %v1857 = vrot.slane %v1856, 4
    %v1858 = vmax.f32 %v1856, %v1857
    %v1859 = vrot.slane %v1858, 2
    %v1860 = vmax.f32 %v1858, %v1859
    %v1861 = vrot.slane %v1860, 1
    %v1862 = vmax.f32 %v1860, %v1861
    %v1863 = vsel %vm668, %v1266, -inf
    %v1864 = vrot.slane %v1863, 4
    %v1865 = vmax.f32 %v1863, %v1864
    %v1866 = vrot.slane %v1865, 2
    %v1867 = vmax.f32 %v1865, %v1866
    %v1868 = vrot.slane %v1867, 1
    %v1869 = vmax.f32 %v1867, %v1868
    %v1870 = vsel %vm668, %v1267, -inf
    %v1871 = vrot.slane %v1870, 4
    %v1872 = vmax.f32 %v1870, %v1871
    %v1873 = vrot.slane %v1872, 2
    %v1874 = vmax.f32 %v1872, %v1873
    %v1875 = vrot.slane %v1874, 1
    %v1876 = vmax.f32 %v1874, %v1875
    %v1877 = vsel %vm668, %v1268, -inf
    %v1878 = vrot.slane %v1877, 4
    %v1879 = vmax.f32 %v1877, %v1878
    %v1880 = vrot.slane %v1879, 2
    %v1881 = vmax.f32 %v1879, %v1880
    %v1882 = vrot.slane %v1881, 1
    %v1883 = vmax.f32 %v1881, %v1882
    %v1884 = vsel %vm1463, %v1269, -inf
    %v1885 = vrot.slane %v1884, 4
    %v1886 = vmax.f32 %v1884, %v1885
    %v1887 = vrot.slane %v1886, 2
    %v1888 = vmax.f32 %v1886, %v1887
    %v1889 = vrot.slane %v1888, 1
    %v1890 = vmax.f32 %v1888, %v1889
    %v1891 = vsel %vm668, %v1271, -inf
    %v1892 = vrot.slane %v1891, 4
    %v1893 = vmax.f32 %v1891, %v1892
    %v1894 = vrot.slane %v1893, 2
    %v1895 = vmax.f32 %v1893, %v1894
    %v1896 = vrot.slane %v1895, 1
    %v1897 = vmax.f32 %v1895, %v1896
    %v1898 = vsel %vm668, %v1272, -inf
    %v1899 = vrot.slane %v1898, 4
    %v1900 = vmax.f32 %v1898, %v1899
    %v1901 = vrot.slane %v1900, 2
    %v1902 = vmax.f32 %v1900, %v1901
    %v1903 = vrot.slane %v1902, 1
    %v1904 = vmax.f32 %v1902, %v1903
    %v1905 = vsel %vm668, %v1273, -inf
    %v1906 = vrot.slane %v1905, 4
    %v1907 = vmax.f32 %v1905, %v1906
    %v1908 = vrot.slane %v1907, 2
    %v1909 = vmax.f32 %v1907, %v1908
    %v1910 = vrot.slane %v1909, 1
    %v1911 = vmax.f32 %v1909, %v1910
    %v1912 = vsel %vm1463, %v1274, -inf
    %v1913 = vrot.slane %v1912, 4
    %v1914 = vmax.f32 %v1912, %v1913
    %v1915 = vrot.slane %v1914, 2
    %v1916 = vmax.f32 %v1914, %v1915
    %v1917 = vrot.slane %v1916, 1
    %v1918 = vmax.f32 %v1916, %v1917
    %v1919 = vsel %vm668, %v1276, -inf
    %v1920 = vrot.slane %v1919, 4
    %v1921 = vmax.f32 %v1919, %v1920
    %v1922 = vrot.slane %v1921, 2
    %v1923 = vmax.f32 %v1921, %v1922
    %v1924 = vrot.slane %v1923, 1
    %v1925 = vmax.f32 %v1923, %v1924
    %v1926 = vsel %vm668, %v1277, -inf
    %v1927 = vrot.slane %v1926, 4
    %v1928 = vmax.f32 %v1926, %v1927
    %v1929 = vrot.slane %v1928, 2
    %v1930 = vmax.f32 %v1928, %v1929
    %v1931 = vrot.slane %v1930, 1
    %v1932 = vmax.f32 %v1930, %v1931
    %v1933 = vsel %vm668, %v1278, -inf
    %v1934 = vrot.slane %v1933, 4
    %v1935 = vmax.f32 %v1933, %v1934
    %v1936 = vrot.slane %v1935, 2
    %v1937 = vmax.f32 %v1935, %v1936
    %v1938 = vrot.slane %v1937, 1
    %v1939 = vmax.f32 %v1937, %v1938
    %v1940 = vsel %vm1463, %v1279, -inf
    %v1941 = vrot.slane %v1940, 4
    %v1942 = vmax.f32 %v1940, %v1941
    %v1943 = vrot.slane %v1942, 2
    %v1944 = vmax.f32 %v1942, %v1943
    %v1945 = vrot.slane %v1944, 1
    %v1946 = vmax.f32 %v1944, %v1945
    %v1947 = vsel %vm668, %v1281, -inf
    %v1948 = vrot.slane %v1947, 4
    %v1949 = vmax.f32 %v1947, %v1948
    %v1950 = vrot.slane %v1949, 2
    %v1951 = vmax.f32 %v1949, %v1950
    %v1952 = vrot.slane %v1951, 1
    %v1953 = vmax.f32 %v1951, %v1952
    %v1954 = vsel %vm668, %v1282, -inf
    %v1955 = vrot.slane %v1954, 4
    %v1956 = vmax.f32 %v1954, %v1955
    %v1957 = vrot.slane %v1956, 2
    %v1958 = vmax.f32 %v1956, %v1957
    %v1959 = vrot.slane %v1958, 1
    %v1960 = vmax.f32 %v1958, %v1959
    %v1961 = vsel %vm668, %v1283, -inf
    %v1962 = vrot.slane %v1961, 4
    %v1963 = vmax.f32 %v1961, %v1962
    %v1964 = vrot.slane %v1963, 2
    %v1965 = vmax.f32 %v1963, %v1964
    %v1966 = vrot.slane %v1965, 1
    %v1967 = vmax.f32 %v1965, %v1966
    %v1968 = vsel %vm1463, %v1284, -inf
    %v1969 = vrot.slane %v1968, 4
    %v1970 = vmax.f32 %v1968, %v1969
    %v1971 = vrot.slane %v1970, 2
    %v1972 = vmax.f32 %v1970, %v1971
    %v1973 = vrot.slane %v1972, 1
    %v1974 = vmax.f32 %v1972, %v1973
    %v1975 = vsel %vm668, %v1286, -inf
    %v1976 = vrot.slane %v1975, 4
    %v1977 = vmax.f32 %v1975, %v1976
    %v1978 = vrot.slane %v1977, 2
    %v1979 = vmax.f32 %v1977, %v1978
    %v1980 = vrot.slane %v1979, 1
    %v1981 = vmax.f32 %v1979, %v1980
    %v1982 = vsel %vm668, %v1287, -inf
    %v1983 = vrot.slane %v1982, 4
    %v1984 = vmax.f32 %v1982, %v1983
    %v1985 = vrot.slane %v1984, 2
    %v1986 = vmax.f32 %v1984, %v1985
    %v1987 = vrot.slane %v1986, 1
    %v1988 = vmax.f32 %v1986, %v1987
    %v1989 = vsel %vm668, %v1288, -inf
    %v1990 = vrot.slane %v1989, 4
    %v1991 = vmax.f32 %v1989, %v1990
    %v1992 = vrot.slane %v1991, 2
    %v1993 = vmax.f32 %v1991, %v1992
    %v1994 = vrot.slane %v1993, 1
    %v1995 = vmax.f32 %v1993, %v1994
    %v1996 = vsel %vm1463, %v1289, -inf
    %v1997 = vrot.slane %v1996, 4
    %v1998 = vmax.f32 %v1996, %v1997
    %v1999 = vrot.slane %v1998, 2
    %v2000 = vmax.f32 %v1998, %v1999
    %v2001 = vrot.slane %v2000, 1
    %v2002 = vmax.f32 %v2000, %v2001
    %v2003 = vsel %vm668, %v1291, -inf
    %v2004 = vrot.slane %v2003, 4
    %v2005 = vmax.f32 %v2003, %v2004
    %v2006 = vrot.slane %v2005, 2
    %v2007 = vmax.f32 %v2005, %v2006
    %v2008 = vrot.slane %v2007, 1
    %v2009 = vmax.f32 %v2007, %v2008
    %v2010 = vsel %vm668, %v1292, -inf
    %v2011 = vrot.slane %v2010, 4
    %v2012 = vmax.f32 %v2010, %v2011
    %v2013 = vrot.slane %v2012, 2
    %v2014 = vmax.f32 %v2012, %v2013
    %v2015 = vrot.slane %v2014, 1
    %v2016 = vmax.f32 %v2014, %v2015
    %v2017 = vsel %vm668, %v1293, -inf
    %v2018 = vrot.slane %v2017, 4
    %v2019 = vmax.f32 %v2017, %v2018
    %v2020 = vrot.slane %v2019, 2
    %v2021 = vmax.f32 %v2019, %v2020
    %v2022 = vrot.slane %v2021, 1
    %v2023 = vmax.f32 %v2021, %v2022
    %v2024 = vsel %vm1463, %v1294, -inf
    %v2025 = vrot.slane %v2024, 4
    %v2026 = vmax.f32 %v2024, %v2025
    %v2027 = vrot.slane %v2026, 2
    %v2028 = vmax.f32 %v2026, %v2027
    %v2029 = vrot.slane %v2028, 1
    %v2030 = vmax.f32 %v2028, %v2029
    %v2031 = vsel %vm668, %v1296, -inf
    %v2032 = vrot.slane %v2031, 4
    %v2033 = vmax.f32 %v2031, %v2032
    %v2034 = vrot.slane %v2033, 2
    %v2035 = vmax.f32 %v2033, %v2034
    %v2036 = vrot.slane %v2035, 1
    %v2037 = vmax.f32 %v2035, %v2036
    %v2038 = vsel %vm668, %v1297, -inf
    %v2039 = vrot.slane %v2038, 4
    %v2040 = vmax.f32 %v2038, %v2039
    %v2041 = vrot.slane %v2040, 2
    %v2042 = vmax.f32 %v2040, %v2041
    %v2043 = vrot.slane %v2042, 1
    %v2044 = vmax.f32 %v2042, %v2043
    %v2045 = vsel %vm668, %v1298, -inf
    %v2046 = vrot.slane %v2045, 4
    %v2047 = vmax.f32 %v2045, %v2046
    %v2048 = vrot.slane %v2047, 2
    %v2049 = vmax.f32 %v2047, %v2048
    %v2050 = vrot.slane %v2049, 1
    %v2051 = vmax.f32 %v2049, %v2050
    %v2052 = vsel %vm1463, %v1299, -inf
    %v2053 = vrot.slane %v2052, 4
    %v2054 = vmax.f32 %v2052, %v2053
    %v2055 = vrot.slane %v2054, 2
    %v2056 = vmax.f32 %v2054, %v2055
    %v2057 = vrot.slane %v2056, 1
    %v2058 = vmax.f32 %v2056, %v2057
    %v2059 = vsel %vm668, %v1301, -inf
    %v2060 = vrot.slane %v2059, 4
    %v2061 = vmax.f32 %v2059, %v2060
    %v2062 = vrot.slane %v2061, 2
    %v2063 = vmax.f32 %v2061, %v2062
    %v2064 = vrot.slane %v2063, 1
    %v2065 = vmax.f32 %v2063, %v2064
    %v2066 = vsel %vm668, %v1302, -inf
    %v2067 = vrot.slane %v2066, 4
    %v2068 = vmax.f32 %v2066, %v2067
    %v2069 = vrot.slane %v2068, 2
    %v2070 = vmax.f32 %v2068, %v2069
    %v2071 = vrot.slane %v2070, 1
    %v2072 = vmax.f32 %v2070, %v2071
    %v2073 = vsel %vm668, %v1303, -inf
    %v2074 = vrot.slane %v2073, 4
    %v2075 = vmax.f32 %v2073, %v2074
    %v2076 = vrot.slane %v2075, 2
    %v2077 = vmax.f32 %v2075, %v2076
    %v2078 = vrot.slane %v2077, 1
    %v2079 = vmax.f32 %v2077, %v2078
    %v2080 = vsel %vm1463, %v1304, -inf
    %v2081 = vrot.slane %v2080, 4
    %v2082 = vmax.f32 %v2080, %v2081
    %v2083 = vrot.slane %v2082, 2
    %v2084 = vmax.f32 %v2082, %v2083
    %v2085 = vrot.slane %v2084, 1
    %v2086 = vmax.f32 %v2084, %v2085
    %v2087 = vsel %vm668, %v1306, -inf
    %v2088 = vrot.slane %v2087, 4
    %v2089 = vmax.f32 %v2087, %v2088
    %v2090 = vrot.slane %v2089, 2
    %v2091 = vmax.f32 %v2089, %v2090
    %v2092 = vrot.slane %v2091, 1
    %v2093 = vmax.f32 %v2091, %v2092
    %v2094 = vsel %vm668, %v1307, -inf
    %v2095 = vrot.slane %v2094, 4
    %v2096 = vmax.f32 %v2094, %v2095
    %v2097 = vrot.slane %v2096, 2
    %v2098 = vmax.f32 %v2096, %v2097
    %v2099 = vrot.slane %v2098, 1
    %v2100 = vmax.f32 %v2098, %v2099
    %v2101 = vsel %vm668, %v1308, -inf
    %v2102 = vrot.slane %v2101, 4
    %v2103 = vmax.f32 %v2101, %v2102
    %v2104 = vrot.slane %v2103, 2
    %v2105 = vmax.f32 %v2103, %v2104
    %v2106 = vrot.slane %v2105, 1
    %v2107 = vmax.f32 %v2105, %v2106
    %v2108 = vsel %vm1463, %v1309, -inf
    %v2109 = vrot.slane %v2108, 4
    %v2110 = vmax.f32 %v2108, %v2109
    %v2111 = vrot.slane %v2110, 2
    %v2112 = vmax.f32 %v2110, %v2111
    %v2113 = vrot.slane %v2112, 1
    %v2114 = vmax.f32 %v2112, %v2113
    %v2115 = vsel %vm668, %v1311, -inf
    %v2116 = vrot.slane %v2115, 4
    %v2117 = vmax.f32 %v2115, %v2116
    %v2118 = vrot.slane %v2117, 2
    %v2119 = vmax.f32 %v2117, %v2118
    %v2120 = vrot.slane %v2119, 1
    %v2121 = vmax.f32 %v2119, %v2120
    %v2122 = vsel %vm668, %v1312, -inf
    %v2123 = vrot.slane %v2122, 4
    %v2124 = vmax.f32 %v2122, %v2123
    %v2125 = vrot.slane %v2124, 2
    %v2126 = vmax.f32 %v2124, %v2125
    %v2127 = vrot.slane %v2126, 1
    %v2128 = vmax.f32 %v2126, %v2127
    %v2129 = vsel %vm668, %v1313, -inf
    %v2130 = vrot.slane %v2129, 4
    %v2131 = vmax.f32 %v2129, %v2130
    %v2132 = vrot.slane %v2131, 2
    %v2133 = vmax.f32 %v2131, %v2132
    %v2134 = vrot.slane %v2133, 1
    %v2135 = vmax.f32 %v2133, %v2134
    %v2136 = vsel %vm1463, %v1314, -inf
    %v2137 = vrot.slane %v2136, 4
    %v2138 = vmax.f32 %v2136, %v2137
    %v2139 = vrot.slane %v2138, 2
    %v2140 = vmax.f32 %v2138, %v2139
    %v2141 = vrot.slane %v2140, 1
    %v2142 = vmax.f32 %v2140, %v2141
    %v2143 = vsel %vm668, %v1316, -inf
    %v2144 = vrot.slane %v2143, 4
    %v2145 = vmax.f32 %v2143, %v2144
    %v2146 = vrot.slane %v2145, 2
    %v2147 = vmax.f32 %v2145, %v2146
    %v2148 = vrot.slane %v2147, 1
    %v2149 = vmax.f32 %v2147, %v2148
    %v2150 = vsel %vm668, %v1317, -inf
    %v2151 = vrot.slane %v2150, 4
    %v2152 = vmax.f32 %v2150, %v2151
    %v2153 = vrot.slane %v2152, 2
    %v2154 = vmax.f32 %v2152, %v2153
    %v2155 = vrot.slane %v2154, 1
    %v2156 = vmax.f32 %v2154, %v2155
    %v2157 = vsel %vm668, %v1318, -inf
    %v2158 = vrot.slane %v2157, 4
    %v2159 = vmax.f32 %v2157, %v2158
    %v2160 = vrot.slane %v2159, 2
    %v2161 = vmax.f32 %v2159, %v2160
    %v2162 = vrot.slane %v2161, 1
    %v2163 = vmax.f32 %v2161, %v2162
    %v2164 = vsel %vm1463, %v1319, -inf
    %v2165 = vrot.slane %v2164, 4
    %v2166 = vmax.f32 %v2164, %v2165
    %v2167 = vrot.slane %v2166, 2
    %v2168 = vmax.f32 %v2166, %v2167
    %v2169 = vrot.slane %v2168, 1
    %v2170 = vmax.f32 %v2168, %v2169
    %v2171 = vsel %vm668, %v1321, -inf
    %v2172 = vrot.slane %v2171, 4
    %v2173 = vmax.f32 %v2171, %v2172
    %v2174 = vrot.slane %v2173, 2
    %v2175 = vmax.f32 %v2173, %v2174
    %v2176 = vrot.slane %v2175, 1
    %v2177 = vmax.f32 %v2175, %v2176
    %v2178 = vsel %vm668, %v1322, -inf
    %v2179 = vrot.slane %v2178, 4
    %v2180 = vmax.f32 %v2178, %v2179
    %v2181 = vrot.slane %v2180, 2
    %v2182 = vmax.f32 %v2180, %v2181
    %v2183 = vrot.slane %v2182, 1
    %v2184 = vmax.f32 %v2182, %v2183
    %v2185 = vsel %vm668, %v1323, -inf
    %v2186 = vrot.slane %v2185, 4
    %v2187 = vmax.f32 %v2185, %v2186
    %v2188 = vrot.slane %v2187, 2
    %v2189 = vmax.f32 %v2187, %v2188
    %v2190 = vrot.slane %v2189, 1
    %v2191 = vmax.f32 %v2189, %v2190
    %v2192 = vsel %vm1463, %v1324, -inf
    %v2193 = vrot.slane %v2192, 4
    %v2194 = vmax.f32 %v2192, %v2193
    %v2195 = vrot.slane %v2194, 2
    %v2196 = vmax.f32 %v2194, %v2195
    %v2197 = vrot.slane %v2196, 1
    %v2198 = vmax.f32 %v2196, %v2197
    %v2199 = vsel %vm668, %v1326, -inf
    %v2200 = vrot.slane %v2199, 4
    %v2201 = vmax.f32 %v2199, %v2200
    %v2202 = vrot.slane %v2201, 2
    %v2203 = vmax.f32 %v2201, %v2202
    %v2204 = vrot.slane %v2203, 1
    %v2205 = vmax.f32 %v2203, %v2204
    %v2206 = vsel %vm668, %v1327, -inf
    %v2207 = vrot.slane %v2206, 4
    %v2208 = vmax.f32 %v2206, %v2207
    %v2209 = vrot.slane %v2208, 2
    %v2210 = vmax.f32 %v2208, %v2209
    %v2211 = vrot.slane %v2210, 1
    %v2212 = vmax.f32 %v2210, %v2211
    %v2213 = vsel %vm668, %v1328, -inf
    %v2214 = vrot.slane %v2213, 4
    %v2215 = vmax.f32 %v2213, %v2214
    %v2216 = vrot.slane %v2215, 2
    %v2217 = vmax.f32 %v2215, %v2216
    %v2218 = vrot.slane %v2217, 1
    %v2219 = vmax.f32 %v2217, %v2218
    %v2220 = vsel %vm1463, %v1329, -inf
    %v2221 = vrot.slane %v2220, 4
    %v2222 = vmax.f32 %v2220, %v2221
    %v2223 = vrot.slane %v2222, 2
    %v2224 = vmax.f32 %v2222, %v2223
    %v2225 = vrot.slane %v2224, 1
    %v2226 = vmax.f32 %v2224, %v2225
    %2339 = vrot.lane.b32.xlu0 %v1448, 112
    %v2340 = vpop.permute.xlu0 %2339
    %2341 = vrot.lane.b32.xlu0 %v1455, 112
    %v2342 = vpop.permute.xlu0 %2341
    %2343 = vrot.lane.b32.xlu0 %v1462, 112
    %v2344 = vpop.permute.xlu0 %2343
    %2345 = vrot.lane.b32.xlu0 %v1470, 112
    %v2346 = vpop.permute.xlu0 %2345
    %2347 = vrot.lane.b32.xlu0 %v1477, 112
    %v2348 = vpop.permute.xlu0 %2347
    %2349 = vrot.lane.b32.xlu0 %v1484, 112
    %v2350 = vpop.permute.xlu0 %2349
    %2351 = vrot.lane.b32.xlu0 %v1491, 112
    %v2352 = vpop.permute.xlu0 %2351
    %2353 = vrot.lane.b32.xlu0 %v1498, 112
    %v2354 = vpop.permute.xlu0 %2353
    %2355 = vrot.lane.b32.xlu0 %v1505, 112
    %v2356 = vpop.permute.xlu0 %2355
    %2357 = vrot.lane.b32.xlu0 %v1512, 112
    %v2358 = vpop.permute.xlu0 %2357
    %2359 = vrot.lane.b32.xlu0 %v1519, 112
    %v2360 = vpop.permute.xlu0 %2359
    %2361 = vrot.lane.b32.xlu0 %v1526, 112
    %v2362 = vpop.permute.xlu0 %2361
    %2363 = vrot.lane.b32.xlu0 %v1533, 112
    %v2364 = vpop.permute.xlu0 %2363
    %2365 = vrot.lane.b32.xlu0 %v1540, 112
    %v2366 = vpop.permute.xlu0 %2365
    %2367 = vrot.lane.b32.xlu0 %v1547, 112
    %v2368 = vpop.permute.xlu0 %2367
    %2369 = vrot.lane.b32.xlu0 %v1554, 112
    %v2370 = vpop.permute.xlu0 %2369
    %2371 = vrot.lane.b32.xlu0 %v1561, 112
    %v2372 = vpop.permute.xlu0 %2371
    %2373 = vrot.lane.b32.xlu0 %v1568, 112
    %v2374 = vpop.permute.xlu0 %2373
    %2375 = vrot.lane.b32.xlu0 %v1575, 112
    %v2376 = vpop.permute.xlu0 %2375
    %2377 = vrot.lane.b32.xlu0 %v1582, 112
    %v2378 = vpop.permute.xlu0 %2377
    %2379 = vrot.lane.b32.xlu0 %v1589, 112
    %v2380 = vpop.permute.xlu0 %2379
    %2381 = vrot.lane.b32.xlu0 %v1596, 112
    %v2382 = vpop.permute.xlu0 %2381
    %2383 = vrot.lane.b32.xlu0 %v1603, 112
    %v2384 = vpop.permute.xlu0 %2383
    %2385 = vrot.lane.b32.xlu0 %v1610, 112
    %v2386 = vpop.permute.xlu0 %2385
    %2387 = vrot.lane.b32.xlu0 %v1617, 112
    %v2388 = vpop.permute.xlu0 %2387
    %2389 = vrot.lane.b32.xlu0 %v1624, 112
    %v2390 = vpop.permute.xlu0 %2389
    %2391 = vrot.lane.b32.xlu0 %v1631, 112
    %v2392 = vpop.permute.xlu0 %2391
    %2393 = vrot.lane.b32.xlu0 %v1638, 112
    %v2394 = vpop.permute.xlu0 %2393
    %2395 = vrot.lane.b32.xlu0 %v1645, 112
    %v2396 = vpop.permute.xlu0 %2395
    %2397 = vrot.lane.b32.xlu0 %v1652, 112
    %v2398 = vpop.permute.xlu0 %2397
    %2399 = vrot.lane.b32.xlu0 %v1659, 112
    %v2400 = vpop.permute.xlu0 %2399
    %2401 = vrot.lane.b32.xlu0 %v1666, 112
    %v2402 = vpop.permute.xlu0 %2401
    %2403 = vrot.lane.b32.xlu0 %v1673, 112
    %v2404 = vpop.permute.xlu0 %2403
    %2405 = vrot.lane.b32.xlu0 %v1680, 112
    %v2406 = vpop.permute.xlu0 %2405
    %2407 = vrot.lane.b32.xlu0 %v1687, 112
    %v2408 = vpop.permute.xlu0 %2407
    %2409 = vrot.lane.b32.xlu0 %v1694, 112
    %v2410 = vpop.permute.xlu0 %2409
    %2411 = vrot.lane.b32.xlu0 %v1701, 112
    %v2412 = vpop.permute.xlu0 %2411
    %2413 = vrot.lane.b32.xlu0 %v1708, 112
    %v2414 = vpop.permute.xlu0 %2413
    %2415 = vrot.lane.b32.xlu0 %v1715, 112
    %v2416 = vpop.permute.xlu0 %2415
    %2417 = vrot.lane.b32.xlu0 %v1722, 112
    %v2418 = vpop.permute.xlu0 %2417
    %2419 = vrot.lane.b32.xlu0 %v1729, 112
    %v2420 = vpop.permute.xlu0 %2419
    %2421 = vrot.lane.b32.xlu0 %v1736, 112
    %v2422 = vpop.permute.xlu0 %2421
    %2423 = vrot.lane.b32.xlu0 %v1743, 112
    %v2424 = vpop.permute.xlu0 %2423
    %2425 = vrot.lane.b32.xlu0 %v1750, 112
    %v2426 = vpop.permute.xlu0 %2425
    %2427 = vrot.lane.b32.xlu0 %v1757, 112
    %v2428 = vpop.permute.xlu0 %2427
    %2429 = vrot.lane.b32.xlu0 %v1764, 112
    %v2430 = vpop.permute.xlu0 %2429
    %2431 = vrot.lane.b32.xlu0 %v1771, 112
    %v2432 = vpop.permute.xlu0 %2431
    %2433 = vrot.lane.b32.xlu0 %v1778, 112
    %v2434 = vpop.permute.xlu0 %2433
    %2435 = vrot.lane.b32.xlu0 %v1785, 112
    %v2436 = vpop.permute.xlu0 %2435
    %2437 = vrot.lane.b32.xlu0 %v1792, 112
    %v2438 = vpop.permute.xlu0 %2437
    %2439 = vrot.lane.b32.xlu0 %v1799, 112
    %v2440 = vpop.permute.xlu0 %2439
    %2441 = vrot.lane.b32.xlu0 %v1806, 112
    %v2442 = vpop.permute.xlu0 %2441
    %2443 = vrot.lane.b32.xlu0 %v1813, 112
    %v2444 = vpop.permute.xlu0 %2443
    %2445 = vrot.lane.b32.xlu0 %v1820, 112
    %v2446 = vpop.permute.xlu0 %2445
    %2447 = vrot.lane.b32.xlu0 %v1827, 112
    %v2448 = vpop.permute.xlu0 %2447
    %2449 = vrot.lane.b32.xlu0 %v1834, 112
    %v2450 = vpop.permute.xlu0 %2449
    %2451 = vrot.lane.b32.xlu0 %v1841, 112
    %v2452 = vpop.permute.xlu0 %2451
    %2453 = vrot.lane.b32.xlu0 %v1848, 112
    %v2454 = vpop.permute.xlu0 %2453
    %2455 = vrot.lane.b32.xlu0 %v1855, 112
    %v2456 = vpop.permute.xlu0 %2455
    %2457 = vrot.lane.b32.xlu0 %v1862, 112
    %v2458 = vpop.permute.xlu0 %2457
    %2459 = vrot.lane.b32.xlu0 %v1869, 112
    %v2460 = vpop.permute.xlu0 %2459
    %2461 = vrot.lane.b32.xlu0 %v1876, 112
    %v2462 = vpop.permute.xlu0 %2461
    %2463 = vrot.lane.b32.xlu0 %v1883, 112
    %v2464 = vpop.permute.xlu0 %2463
    %2465 = vrot.lane.b32.xlu0 %v1890, 112
    %v2466 = vpop.permute.xlu0 %2465
    %2467 = vrot.lane.b32.xlu0 %v1897, 112
    %v2468 = vpop.permute.xlu0 %2467
    %2469 = vrot.lane.b32.xlu0 %v1904, 112
    %v2470 = vpop.permute.xlu0 %2469
    %2471 = vrot.lane.b32.xlu0 %v1911, 112
    %v2472 = vpop.permute.xlu0 %2471
    %2473 = vrot.lane.b32.xlu0 %v1918, 112
    %v2474 = vpop.permute.xlu0 %2473
    %2475 = vrot.lane.b32.xlu0 %v1925, 112
    %v2476 = vpop.permute.xlu0 %2475
    %2477 = vrot.lane.b32.xlu0 %v1932, 112
    %v2478 = vpop.permute.xlu0 %2477
    %2479 = vrot.lane.b32.xlu0 %v1939, 112
    %v2480 = vpop.permute.xlu0 %2479
    %2481 = vrot.lane.b32.xlu0 %v1946, 112
    %v2482 = vpop.permute.xlu0 %2481
    %2483 = vrot.lane.b32.xlu0 %v1953, 112
    %v2484 = vpop.permute.xlu0 %2483
    %2485 = vrot.lane.b32.xlu0 %v1960, 112
    %v2486 = vpop.permute.xlu0 %2485
    %2487 = vrot.lane.b32.xlu0 %v1967, 112
    %v2488 = vpop.permute.xlu0 %2487
    %2489 = vrot.lane.b32.xlu0 %v1974, 112
    %v2490 = vpop.permute.xlu0 %2489
    %2491 = vrot.lane.b32.xlu0 %v1981, 112
    %v2492 = vpop.permute.xlu0 %2491
    %2493 = vrot.lane.b32.xlu0 %v1988, 112
    %v2494 = vpop.permute.xlu0 %2493
    %2495 = vrot.lane.b32.xlu0 %v1995, 112
    %v2496 = vpop.permute.xlu0 %2495
    %2497 = vrot.lane.b32.xlu0 %v2002, 112
    %v2498 = vpop.permute.xlu0 %2497
    %2499 = vrot.lane.b32.xlu0 %v2009, 112
    %v2500 = vpop.permute.xlu0 %2499
    %2501 = vrot.lane.b32.xlu0 %v2016, 112
    %v2502 = vpop.permute.xlu0 %2501
    %2503 = vrot.lane.b32.xlu0 %v2023, 112
    %v2504 = vpop.permute.xlu0 %2503
    %2505 = vrot.lane.b32.xlu0 %v2030, 112
    %v2506 = vpop.permute.xlu0 %2505
    %2507 = vrot.lane.b32.xlu0 %v2037, 112
    %v2508 = vpop.permute.xlu0 %2507
    %2509 = vrot.lane.b32.xlu0 %v2044, 112
    %v2510 = vpop.permute.xlu0 %2509
    %2511 = vrot.lane.b32.xlu0 %v2051, 112
    %v2512 = vpop.permute.xlu0 %2511
    %2513 = vrot.lane.b32.xlu0 %v2058, 112
    %v2514 = vpop.permute.xlu0 %2513
    %2515 = vrot.lane.b32.xlu0 %v2065, 112
    %v2516 = vpop.permute.xlu0 %2515
    %2517 = vrot.lane.b32.xlu0 %v2072, 112
    %v2518 = vpop.permute.xlu0 %2517
    %2519 = vrot.lane.b32.xlu0 %v2079, 112
    %v2520 = vpop.permute.xlu0 %2519
    %2521 = vrot.lane.b32.xlu0 %v2086, 112
    %v2522 = vpop.permute.xlu0 %2521
    %2523 = vrot.lane.b32.xlu0 %v2093, 112
    %v2524 = vpop.permute.xlu0 %2523
    %2525 = vrot.lane.b32.xlu0 %v2100, 112
    %v2526 = vpop.permute.xlu0 %2525
    %2527 = vrot.lane.b32.xlu0 %v2107, 112
    %v2528 = vpop.permute.xlu0 %2527
    %2529 = vrot.lane.b32.xlu0 %v2114, 112
    %v2530 = vpop.permute.xlu0 %2529
    %2531 = vrot.lane.b32.xlu0 %v2121, 112
    %v2532 = vpop.permute.xlu0 %2531
    %2533 = vrot.lane.b32.xlu0 %v2128, 112
    %v2534 = vpop.permute.xlu0 %2533
    %2535 = vrot.lane.b32.xlu0 %v2135, 112
    %v2536 = vpop.permute.xlu0 %2535
    %2537 = vrot.lane.b32.xlu0 %v2142, 112
    %v2538 = vpop.permute.xlu0 %2537
    %2539 = vrot.lane.b32.xlu0 %v2149, 112
    %v2540 = vpop.permute.xlu0 %2539
    %2541 = vrot.lane.b32.xlu0 %v2156, 112
    %v2542 = vpop.permute.xlu0 %2541
    %2543 = vrot.lane.b32.xlu0 %v2163, 112
    %v2544 = vpop.permute.xlu0 %2543
    %2545 = vrot.lane.b32.xlu0 %v2170, 112
    %v2546 = vpop.permute.xlu0 %2545
    %2547 = vrot.lane.b32.xlu0 %v2177, 112
    %v2548 = vpop.permute.xlu0 %2547
    %2549 = vrot.lane.b32.xlu0 %v2184, 112
    %v2550 = vpop.permute.xlu0 %2549
    %2551 = vrot.lane.b32.xlu0 %v2191, 112
    %v2552 = vpop.permute.xlu0 %2551
    %2553 = vrot.lane.b32.xlu0 %v2198, 112
    %v2554 = vpop.permute.xlu0 %2553
    %2555 = vrot.lane.b32.xlu0 %v2205, 112
    %v2556 = vpop.permute.xlu0 %2555
    %2557 = vrot.lane.b32.xlu0 %v2212, 112
    %v2558 = vpop.permute.xlu0 %2557
    %2559 = vrot.lane.b32.xlu0 %v2219, 112
    %v2560 = vpop.permute.xlu0 %2559
    %2561 = vrot.lane.b32.xlu0 %v2226, 112
    %v2562 = vpop.permute.xlu0 %2561
    %vm2563 = vcmask 916480
    %v2564 = vsel %vm2563, %v2340, %v2342
    %v2565 = vsel %vm2563, %v2342, %v2344
    %v2566 = vsel %vm2563, %v2344, %v2346
    %v2567 = vsel %vm2563, %v2348, %v2350
    %v2568 = vsel %vm2563, %v2350, %v2352
    %v2569 = vsel %vm2563, %v2352, %v2354
    %v2570 = vsel %vm2563, %v2356, %v2358
    %v2571 = vsel %vm2563, %v2358, %v2360
    %v2572 = vsel %vm2563, %v2360, %v2362
    %v2573 = vsel %vm2563, %v2364, %v2366
    %v2574 = vsel %vm2563, %v2366, %v2368
    %v2575 = vsel %vm2563, %v2368, %v2370
    %v2576 = vsel %vm2563, %v2372, %v2374
    %v2577 = vsel %vm2563, %v2374, %v2376
    %v2578 = vsel %vm2563, %v2376, %v2378
    %v2579 = vsel %vm2563, %v2380, %v2382
    %v2580 = vsel %vm2563, %v2382, %v2384
    %v2581 = vsel %vm2563, %v2384, %v2386
    %v2582 = vsel %vm2563, %v2388, %v2390
    %v2583 = vsel %vm2563, %v2390, %v2392
    %v2584 = vsel %vm2563, %v2392, %v2394
    %v2585 = vsel %vm2563, %v2396, %v2398
    %v2586 = vsel %vm2563, %v2398, %v2400
    %v2587 = vsel %vm2563, %v2400, %v2402
    %v2588 = vsel %vm2563, %v2404, %v2406
    %v2589 = vsel %vm2563, %v2406, %v2408
    %v2590 = vsel %vm2563, %v2408, %v2410
    %v2591 = vsel %vm2563, %v2412, %v2414
    %v2592 = vsel %vm2563, %v2414, %v2416
    %v2593 = vsel %vm2563, %v2416, %v2418
    %v2594 = vsel %vm2563, %v2420, %v2422
    %v2595 = vsel %vm2563, %v2422, %v2424
    %v2596 = vsel %vm2563, %v2424, %v2426
    %v2597 = vsel %vm2563, %v2428, %v2430
    %v2598 = vsel %vm2563, %v2430, %v2432
    %v2599 = vsel %vm2563, %v2432, %v2434
    %v2600 = vsel %vm2563, %v2436, %v2438
    %v2601 = vsel %vm2563, %v2438, %v2440
    %v2602 = vsel %vm2563, %v2440, %v2442
    %v2603 = vsel %vm2563, %v2444, %v2446
    %v2604 = vsel %vm2563, %v2446, %v2448
    %v2605 = vsel %vm2563, %v2448, %v2450
    %v2606 = vsel %vm2563, %v2452, %v2454
    %v2607 = vsel %vm2563, %v2454, %v2456
    %v2608 = vsel %vm2563, %v2456, %v2458
    %v2609 = vsel %vm2563, %v2460, %v2462
    %v2610 = vsel %vm2563, %v2462, %v2464
    %v2611 = vsel %vm2563, %v2464, %v2466
    %v2612 = vsel %vm2563, %v2468, %v2470
    %v2613 = vsel %vm2563, %v2470, %v2472
    %v2614 = vsel %vm2563, %v2472, %v2474
    %v2615 = vsel %vm2563, %v2476, %v2478
    %v2616 = vsel %vm2563, %v2478, %v2480
    %v2617 = vsel %vm2563, %v2480, %v2482
    %v2618 = vsel %vm2563, %v2484, %v2486
    %v2619 = vsel %vm2563, %v2486, %v2488
    %v2620 = vsel %vm2563, %v2488, %v2490
    %v2621 = vsel %vm2563, %v2492, %v2494
    %v2622 = vsel %vm2563, %v2494, %v2496
    %v2623 = vsel %vm2563, %v2496, %v2498
    %v2624 = vsel %vm2563, %v2500, %v2502
    %v2625 = vsel %vm2563, %v2502, %v2504
    %v2626 = vsel %vm2563, %v2504, %v2506
    %v2627 = vsel %vm2563, %v2508, %v2510
    %v2628 = vsel %vm2563, %v2510, %v2512
    %v2629 = vsel %vm2563, %v2512, %v2514
    %v2630 = vsel %vm2563, %v2516, %v2518
    %v2631 = vsel %vm2563, %v2518, %v2520
    %v2632 = vsel %vm2563, %v2520, %v2522
    %v2633 = vsel %vm2563, %v2524, %v2526
    %v2634 = vsel %vm2563, %v2526, %v2528
    %v2635 = vsel %vm2563, %v2528, %v2530
    %v2636 = vsel %vm2563, %v2532, %v2534
    %v2637 = vsel %vm2563, %v2534, %v2536
    %v2638 = vsel %vm2563, %v2536, %v2538
    %v2639 = vsel %vm2563, %v2540, %v2542
    %v2640 = vsel %vm2563, %v2542, %v2544
    %v2641 = vsel %vm2563, %v2544, %v2546
    %v2642 = vsel %vm2563, %v2548, %v2550
    %v2643 = vsel %vm2563, %v2550, %v2552
    %v2644 = vsel %vm2563, %v2552, %v2554
    %v2645 = vsel %vm2563, %v2556, %v2558
    %v2646 = vsel %vm2563, %v2558, %v2560
    %v2647 = vsel %vm2563, %v2560, %v2562
    %v2760 = vmax.f32 %v1448, %v2564
    %v2761 = vmax.f32 %v1455, %v2565
    %v2762 = vmax.f32 %v1462, %v2566
    %v2763 = vmax.f32 %v1470, %v2346
    %v2764 = vmax.f32 %v1477, %v2567
    %v2765 = vmax.f32 %v1484, %v2568
    %v2766 = vmax.f32 %v1491, %v2569
    %v2767 = vmax.f32 %v1498, %v2354
    %v2768 = vmax.f32 %v1505, %v2570
    %v2769 = vmax.f32 %v1512, %v2571
    %v2770 = vmax.f32 %v1519, %v2572
    %v2771 = vmax.f32 %v1526, %v2362
    %v2772 = vmax.f32 %v1533, %v2573
    %v2773 = vmax.f32 %v1540, %v2574
    %v2774 = vmax.f32 %v1547, %v2575
    %v2775 = vmax.f32 %v1554, %v2370
    %v2776 = vmax.f32 %v1561, %v2576
    %v2777 = vmax.f32 %v1568, %v2577
    %v2778 = vmax.f32 %v1575, %v2578
    %v2779 = vmax.f32 %v1582, %v2378
    %v2780 = vmax.f32 %v1589, %v2579
    %v2781 = vmax.f32 %v1596, %v2580
    %v2782 = vmax.f32 %v1603, %v2581
    %v2783 = vmax.f32 %v1610, %v2386
    %v2784 = vmax.f32 %v1617, %v2582
    %v2785 = vmax.f32 %v1624, %v2583
    %v2786 = vmax.f32 %v1631, %v2584
    %v2787 = vmax.f32 %v1638, %v2394
    %v2788 = vmax.f32 %v1645, %v2585
    %v2789 = vmax.f32 %v1652, %v2586
    %v2790 = vmax.f32 %v1659, %v2587
    %v2791 = vmax.f32 %v1666, %v2402
    %v2792 = vmax.f32 %v1673, %v2588
    %v2793 = vmax.f32 %v1680, %v2589
    %v2794 = vmax.f32 %v1687, %v2590
    %v2795 = vmax.f32 %v1694, %v2410
    %v2796 = vmax.f32 %v1701, %v2591
    %v2797 = vmax.f32 %v1708, %v2592
    %v2798 = vmax.f32 %v1715, %v2593
    %v2799 = vmax.f32 %v1722, %v2418
    %v2800 = vmax.f32 %v1729, %v2594
    %v2801 = vmax.f32 %v1736, %v2595
    %v2802 = vmax.f32 %v1743, %v2596
    %v2803 = vmax.f32 %v1750, %v2426
    %v2804 = vmax.f32 %v1757, %v2597
    %v2805 = vmax.f32 %v1764, %v2598
    %v2806 = vmax.f32 %v1771, %v2599
    %v2807 = vmax.f32 %v1778, %v2434
    %v2808 = vmax.f32 %v1785, %v2600
    %v2809 = vmax.f32 %v1792, %v2601
    %v2810 = vmax.f32 %v1799, %v2602
    %v2811 = vmax.f32 %v1806, %v2442
    %v2812 = vmax.f32 %v1813, %v2603
    %v2813 = vmax.f32 %v1820, %v2604
    %v2814 = vmax.f32 %v1827, %v2605
    %v2815 = vmax.f32 %v1834, %v2450
    %v2816 = vmax.f32 %v1841, %v2606
    %v2817 = vmax.f32 %v1848, %v2607
    %v2818 = vmax.f32 %v1855, %v2608
    %v2819 = vmax.f32 %v1862, %v2458
    %v2820 = vmax.f32 %v1869, %v2609
    %v2821 = vmax.f32 %v1876, %v2610
    %v2822 = vmax.f32 %v1883, %v2611
    %v2823 = vmax.f32 %v1890, %v2466
    %v2824 = vmax.f32 %v1897, %v2612
    %v2825 = vmax.f32 %v1904, %v2613
    %v2826 = vmax.f32 %v1911, %v2614
    %v2827 = vmax.f32 %v1918, %v2474
    %v2828 = vmax.f32 %v1925, %v2615
    %v2829 = vmax.f32 %v1932, %v2616
    %v2830 = vmax.f32 %v1939, %v2617
    %v2831 = vmax.f32 %v1946, %v2482
    %v2832 = vmax.f32 %v1953, %v2618
    %v2833 = vmax.f32 %v1960, %v2619
    %v2834 = vmax.f32 %v1967, %v2620
    %v2835 = vmax.f32 %v1974, %v2490
    %v2836 = vmax.f32 %v1981, %v2621
    %v2837 = vmax.f32 %v1988, %v2622
    %v2838 = vmax.f32 %v1995, %v2623
    %v2839 = vmax.f32 %v2002, %v2498
    %v2840 = vmax.f32 %v2009, %v2624
    %v2841 = vmax.f32 %v2016, %v2625
    %v2842 = vmax.f32 %v2023, %v2626
    %v2843 = vmax.f32 %v2030, %v2506
    %v2844 = vmax.f32 %v2037, %v2627
    %v2845 = vmax.f32 %v2044, %v2628
    %v2846 = vmax.f32 %v2051, %v2629
    %v2847 = vmax.f32 %v2058, %v2514
    %v2848 = vmax.f32 %v2065, %v2630
    %v2849 = vmax.f32 %v2072, %v2631
    %v2850 = vmax.f32 %v2079, %v2632
    %v2851 = vmax.f32 %v2086, %v2522
    %v2852 = vmax.f32 %v2093, %v2633
    %v2853 = vmax.f32 %v2100, %v2634
    %v2854 = vmax.f32 %v2107, %v2635
    %v2855 = vmax.f32 %v2114, %v2530
    %v2856 = vmax.f32 %v2121, %v2636
    %v2857 = vmax.f32 %v2128, %v2637
    %v2858 = vmax.f32 %v2135, %v2638
    %v2859 = vmax.f32 %v2142, %v2538
    %v2860 = vmax.f32 %v2149, %v2639
    %v2861 = vmax.f32 %v2156, %v2640
    %v2862 = vmax.f32 %v2163, %v2641
    %v2863 = vmax.f32 %v2170, %v2546
    %v2864 = vmax.f32 %v2177, %v2642
    %v2865 = vmax.f32 %v2184, %v2643
    %v2866 = vmax.f32 %v2191, %v2644
    %v2867 = vmax.f32 %v2198, %v2554
    %v2868 = vmax.f32 %v2205, %v2645
    %v2869 = vmax.f32 %v2212, %v2646
    %v2870 = vmax.f32 %v2219, %v2647
    %v2871 = vmax.f32 %v2226, %v2562
    %v2984 = vrot.slane %v2760, 7
    %v2985 = vrot.slane %v2764, 6
    %vm2986 = vcmask 1042434
    %v2987 = vsel %vm2986, %v2985, %v2984
    %v2988 = vrot.slane %v2768, 5
    %vm2989 = vcmask 1043459
    %v2990 = vsel %vm2989, %v2988, %v2987
    %v2991 = vrot.slane %v2772, 4
    %vm2992 = vcmask 1044484
    %v2993 = vsel %vm2992, %v2991, %v2990
    %v2994 = vrot.slane %v2776, 3
    %vm2995 = vcmask 1045509
    %v2996 = vsel %vm2995, %v2994, %v2993
    %v2997 = vrot.slane %v2780, 2
    %vm2998 = vcmask 1046534
    %v2999 = vsel %vm2998, %v2997, %v2996
    %v3000 = vrot.slane %v2784, 1
    %vm3001 = vcmask 1047559
    %v3002 = vsel %vm3001, %v3000, %v2999
    %v3003 = vrot.slane %v2761, 7
    %v3004 = vrot.slane %v2765, 6
    %v3005 = vsel %vm2986, %v3004, %v3003
    %v3006 = vrot.slane %v2769, 5
    %v3007 = vsel %vm2989, %v3006, %v3005
    %v3008 = vrot.slane %v2773, 4
    %v3009 = vsel %vm2992, %v3008, %v3007
    %v3010 = vrot.slane %v2777, 3
    %v3011 = vsel %vm2995, %v3010, %v3009
    %v3012 = vrot.slane %v2781, 2
    %v3013 = vsel %vm2998, %v3012, %v3011
    %v3014 = vrot.slane %v2785, 1
    %v3015 = vsel %vm3001, %v3014, %v3013
    %v3016 = vrot.slane %v2762, 7
    %v3017 = vrot.slane %v2766, 6
    %v3018 = vsel %vm2986, %v3017, %v3016
    %v3019 = vrot.slane %v2770, 5
    %v3020 = vsel %vm2989, %v3019, %v3018
    %v3021 = vrot.slane %v2774, 4
    %v3022 = vsel %vm2992, %v3021, %v3020
    %v3023 = vrot.slane %v2778, 3
    %v3024 = vsel %vm2995, %v3023, %v3022
    %v3025 = vrot.slane %v2782, 2
    %v3026 = vsel %vm2998, %v3025, %v3024
    %v3027 = vrot.slane %v2786, 1
    %v3028 = vsel %vm3001, %v3027, %v3026
    %v3029 = vrot.slane %v2763, 7
    %v3030 = vrot.slane %v2767, 6
    %v3031 = vsel %vm2986, %v3030, %v3029
    %v3032 = vrot.slane %v2771, 5
    %v3033 = vsel %vm2989, %v3032, %v3031
    %v3034 = vrot.slane %v2775, 4
    %v3035 = vsel %vm2992, %v3034, %v3033
    %v3036 = vrot.slane %v2779, 3
    %v3037 = vsel %vm2995, %v3036, %v3035
    %v3038 = vrot.slane %v2783, 2
    %v3039 = vsel %vm2998, %v3038, %v3037
    %v3040 = vrot.slane %v2787, 1
    %v3041 = vsel %vm3001, %v3040, %v3039
    %v3042 = vrot.slane %v2792, 7
    %vm3043 = vcmask 1041409
    %v3044 = vsel %vm3043, %v3042, %v2788
    %v3045 = vrot.slane %v2796, 6
    %v3046 = vsel %vm2986, %v3045, %v3044
    %v3047 = vrot.slane %v2800, 5
    %v3048 = vsel %vm2989, %v3047, %v3046
    %v3049 = vrot.slane %v2804, 4
    %v3050 = vsel %vm2992, %v3049, %v3048
    %v3051 = vrot.slane %v2808, 3
    %v3052 = vsel %vm2995, %v3051, %v3050
    %v3053 = vrot.slane %v2812, 2
    %v3054 = vsel %vm2998, %v3053, %v3052
    %v3055 = vrot.slane %v2793, 7
    %v3056 = vsel %vm3043, %v3055, %v2789
    %v3057 = vrot.slane %v2797, 6
    %v3058 = vsel %vm2986, %v3057, %v3056
    %v3059 = vrot.slane %v2801, 5
    %v3060 = vsel %vm2989, %v3059, %v3058
    %v3061 = vrot.slane %v2805, 4
    %v3062 = vsel %vm2992, %v3061, %v3060
    %v3063 = vrot.slane %v2809, 3
    %v3064 = vsel %vm2995, %v3063, %v3062
    %v3065 = vrot.slane %v2813, 2
    %v3066 = vsel %vm2998, %v3065, %v3064
    %v3067 = vrot.slane %v2794, 7
    %v3068 = vsel %vm3043, %v3067, %v2790
    %v3069 = vrot.slane %v2798, 6
    %v3070 = vsel %vm2986, %v3069, %v3068
    %v3071 = vrot.slane %v2802, 5
    %v3072 = vsel %vm2989, %v3071, %v3070
    %v3073 = vrot.slane %v2806, 4
    %v3074 = vsel %vm2992, %v3073, %v3072
    %v3075 = vrot.slane %v2810, 3
    %v3076 = vsel %vm2995, %v3075, %v3074
    %v3077 = vrot.slane %v2814, 2
    %v3078 = vsel %vm2998, %v3077, %v3076
    %v3079 = vrot.slane %v2795, 7
    %v3080 = vsel %vm3043, %v3079, %v2791
    %v3081 = vrot.slane %v2799, 6
    %v3082 = vsel %vm2986, %v3081, %v3080
    %v3083 = vrot.slane %v2803, 5
    %v3084 = vsel %vm2989, %v3083, %v3082
    %v3085 = vrot.slane %v2807, 4
    %v3086 = vsel %vm2992, %v3085, %v3084
    %v3087 = vrot.slane %v2811, 3
    %v3088 = vsel %vm2995, %v3087, %v3086
    %v3089 = vrot.slane %v2815, 2
    %v3090 = vsel %vm2998, %v3089, %v3088
    %v3091 = vrot.slane %v2816, 7
    %v3092 = vrot.slane %v2820, 6
    %v3093 = vsel %vm2986, %v3092, %v3091
    %v3094 = vrot.slane %v2824, 5
    %v3095 = vsel %vm2989, %v3094, %v3093
    %v3096 = vrot.slane %v2828, 4
    %v3097 = vsel %vm2992, %v3096, %v3095
    %v3098 = vrot.slane %v2832, 3
    %v3099 = vsel %vm2995, %v3098, %v3097
    %v3100 = vrot.slane %v2836, 2
    %v3101 = vsel %vm2998, %v3100, %v3099
    %v3102 = vrot.slane %v2840, 1
    %v3103 = vsel %vm3001, %v3102, %v3101
    %v3104 = vrot.slane %v2817, 7
    %v3105 = vrot.slane %v2821, 6
    %v3106 = vsel %vm2986, %v3105, %v3104
    %v3107 = vrot.slane %v2825, 5
    %v3108 = vsel %vm2989, %v3107, %v3106
    %v3109 = vrot.slane %v2829, 4
    %v3110 = vsel %vm2992, %v3109, %v3108
    %v3111 = vrot.slane %v2833, 3
    %v3112 = vsel %vm2995, %v3111, %v3110
    %v3113 = vrot.slane %v2837, 2
    %v3114 = vsel %vm2998, %v3113, %v3112
    %v3115 = vrot.slane %v2841, 1
    %v3116 = vsel %vm3001, %v3115, %v3114
    %v3117 = vrot.slane %v2818, 7
    %v3118 = vrot.slane %v2822, 6
    %v3119 = vsel %vm2986, %v3118, %v3117
    %v3120 = vrot.slane %v2826, 5
    %v3121 = vsel %vm2989, %v3120, %v3119
    %v3122 = vrot.slane %v2830, 4
    %v3123 = vsel %vm2992, %v3122, %v3121
    %v3124 = vrot.slane %v2834, 3
    %v3125 = vsel %vm2995, %v3124, %v3123
    %v3126 = vrot.slane %v2838, 2
    %v3127 = vsel %vm2998, %v3126, %v3125
    %v3128 = vrot.slane %v2842, 1
    %v3129 = vsel %vm3001, %v3128, %v3127
    %v3130 = vrot.slane %v2819, 7
    %v3131 = vrot.slane %v2823, 6
    %v3132 = vsel %vm2986, %v3131, %v3130
    %v3133 = vrot.slane %v2827, 5
    %v3134 = vsel %vm2989, %v3133, %v3132
    %v3135 = vrot.slane %v2831, 4
    %v3136 = vsel %vm2992, %v3135, %v3134
    %v3137 = vrot.slane %v2835, 3
    %v3138 = vsel %vm2995, %v3137, %v3136
    %v3139 = vrot.slane %v2839, 2
    %v3140 = vsel %vm2998, %v3139, %v3138
    %v3141 = vrot.slane %v2843, 1
    %v3142 = vsel %vm3001, %v3141, %v3140
    %v3143 = vrot.slane %v2848, 7
    %v3144 = vsel %vm3043, %v3143, %v2844
    %v3145 = vrot.slane %v2852, 6
    %v3146 = vsel %vm2986, %v3145, %v3144
    %v3147 = vrot.slane %v2856, 5
    %v3148 = vsel %vm2989, %v3147, %v3146
    %v3149 = vrot.slane %v2860, 4
    %v3150 = vsel %vm2992, %v3149, %v3148
    %v3151 = vrot.slane %v2864, 3
    %v3152 = vsel %vm2995, %v3151, %v3150
    %v3153 = vrot.slane %v2868, 2
    %v3154 = vsel %vm2998, %v3153, %v3152
    %v3155 = vrot.slane %v2849, 7
    %v3156 = vsel %vm3043, %v3155, %v2845
    %v3157 = vrot.slane %v2853, 6
    %v3158 = vsel %vm2986, %v3157, %v3156
    %v3159 = vrot.slane %v2857, 5
    %v3160 = vsel %vm2989, %v3159, %v3158
    %v3161 = vrot.slane %v2861, 4
    %v3162 = vsel %vm2992, %v3161, %v3160
    %v3163 = vrot.slane %v2865, 3
    %v3164 = vsel %vm2995, %v3163, %v3162
    %v3165 = vrot.slane %v2869, 2
    %v3166 = vsel %vm2998, %v3165, %v3164
    %v3167 = vrot.slane %v2850, 7
    %v3168 = vsel %vm3043, %v3167, %v2846
    %v3169 = vrot.slane %v2854, 6
    %v3170 = vsel %vm2986, %v3169, %v3168
    %v3171 = vrot.slane %v2858, 5
    %v3172 = vsel %vm2989, %v3171, %v3170
    %v3173 = vrot.slane %v2862, 4
    %v3174 = vsel %vm2992, %v3173, %v3172
    %v3175 = vrot.slane %v2866, 3
    %v3176 = vsel %vm2995, %v3175, %v3174
    %v3177 = vrot.slane %v2870, 2
    %v3178 = vsel %vm2998, %v3177, %v3176
    %v3179 = vrot.slane %v2851, 7
    %v3180 = vsel %vm3043, %v3179, %v2847
    %v3181 = vrot.slane %v2855, 6
    %v3182 = vsel %vm2986, %v3181, %v3180
    %v3183 = vrot.slane %v2859, 5
    %v3184 = vsel %vm2989, %v3183, %v3182
    %v3185 = vrot.slane %v2863, 4
    %v3186 = vsel %vm2992, %v3185, %v3184
    %v3187 = vrot.slane %v2867, 3
    %v3188 = vsel %vm2995, %v3187, %v3186
    %v3189 = vrot.slane %v2871, 2
    %v3190 = vsel %vm2998, %v3189, %v3188
    %vm3207 = vcmask 1040384
    %v3208 = vsel %vm3207, 0.0, %v3002
    %v3209 = vsel %vm3207, 0.0, %v3015
    %v3210 = vsel %vm3207, 0.0, %v3028
    %v3211 = vsel %vm3207, 0.0, %v3041
    %v3212 = vsel %vm3207, 0.0, %v3103
    %v3213 = vsel %vm3207, 0.0, %v3116
    %v3214 = vsel %vm3207, 0.0, %v3129
    %v3215 = vsel %vm3207, 0.0, %v3142
    %vm3216 = vcmask 1046528
    %v3217 = vsel %vm3216, %v3054, 0.0
    %v3218 = vsel %vm3216, %v3066, 0.0
    %v3219 = vsel %vm3216, %v3078, 0.0
    %v3220 = vsel %vm3216, %v3090, 0.0
    %v3221 = vsel %vm3216, %v3154, 0.0
    %v3222 = vsel %vm3216, %v3166, 0.0
    %v3223 = vsel %vm3216, %v3178, 0.0
    %v3224 = vsel %vm3216, %v3190, 0.0
    %v3241 = vrot.slane %v3209, 6
    %v3242 = vrot.slane %v3210, 4
    %v3243 = vrot.slane %v3211, 2
    %v3244 = vrot.slane %v3218, 6
    %v3245 = vrot.slane %v3219, 4
    %v3246 = vrot.slane %v3220, 2
    %v3247 = vrot.slane %v3213, 6
    %v3248 = vrot.slane %v3214, 4
    %v3249 = vrot.slane %v3215, 2
    %v3250 = vrot.slane %v3222, 6
    %v3251 = vrot.slane %v3223, 4
    %v3252 = vrot.slane %v3224, 2
    %v3253 = vsel %vm668, %v3208, %v3241
    %v3254 = vsel %vm669, %v3242, %v3243
    %v3255 = vsel %vm1083, %v3253, %v3254
    %v3256 = vsel %vm1085, %v3208, %v3241
    %v3257 = vsel %vm297, %v3243, %v3242
    %v3258 = vsel %vm1088, %v3256, %v3257
    %v3259 = vrot.slane %v3258, 2
    %v3260 = vsel %vm669, %v3208, %v3241
    %v3261 = vsel %vm668, %v3242, %v3243
    %v3262 = vsel %vm1083, %v3261, %v3260
    %v3263 = vrot.slane %v3262, 4
    %v3264 = vsel %vm297, %v3241, %v3208
    %v3265 = vsel %vm1085, %v3242, %v3243
    %v3266 = vsel %vm1088, %v3265, %v3264
    %v3267 = vrot.slane %v3266, 6
    %v3268 = vsel %vm668, %v3217, %v3244
    %v3269 = vsel %vm669, %v3245, %v3246
    %v3270 = vsel %vm1083, %v3268, %v3269
    %v3271 = vsel %vm1085, %v3217, %v3244
    %v3272 = vsel %vm297, %v3246, %v3245
    %v3273 = vsel %vm1088, %v3271, %v3272
    %v3274 = vrot.slane %v3273, 2
    %v3275 = vsel %vm669, %v3217, %v3244
    %v3276 = vsel %vm668, %v3245, %v3246
    %v3277 = vsel %vm1083, %v3276, %v3275
    %v3278 = vrot.slane %v3277, 4
    %v3279 = vsel %vm668, %v3212, %v3247
    %v3280 = vsel %vm669, %v3248, %v3249
    %v3281 = vsel %vm1083, %v3279, %v3280
    %v3282 = vsel %vm1085, %v3212, %v3247
    %v3283 = vsel %vm297, %v3249, %v3248
    %v3284 = vsel %vm1088, %v3282, %v3283
    %v3285 = vrot.slane %v3284, 2
    %v3286 = vsel %vm669, %v3212, %v3247
    %v3287 = vsel %vm668, %v3248, %v3249
    %v3288 = vsel %vm1083, %v3287, %v3286
    %v3289 = vrot.slane %v3288, 4
    %v3290 = vsel %vm297, %v3247, %v3212
    %v3291 = vsel %vm1085, %v3248, %v3249
    %v3292 = vsel %vm1088, %v3291, %v3290
    %v3293 = vrot.slane %v3292, 6
    %v3294 = vsel %vm668, %v3221, %v3250
    %v3295 = vsel %vm669, %v3251, %v3252
    %v3296 = vsel %vm1083, %v3294, %v3295
    %v3297 = vsel %vm1085, %v3221, %v3250
    %v3298 = vsel %vm297, %v3252, %v3251
    %v3299 = vsel %vm1088, %v3297, %v3298
    %v3300 = vrot.slane %v3299, 2
    %v3301 = vsel %vm669, %v3221, %v3250
    %v3302 = vsel %vm668, %v3251, %v3252
    %v3303 = vsel %vm1083, %v3302, %v3301
    %v3304 = vrot.slane %v3303, 4
    %v3305 = vld [vmem:[#allocation7] sm:$0xff]
    %v3306 = vld [vmem:[#allocation7 + $0x8] sm:$0xff]
    %v3307 = vld [vmem:[#allocation7 + $0x10] sm:$0xff]
    %v3308 = vld [vmem:[#allocation7 + $0x18] sm:$0xff]
    %v3309 = vld [vmem:[#allocation7 + $0x20] sm:$0xff]
    %v3310 = vld [vmem:[#allocation7 + $0x28] sm:$0xff]
    %v3311 = vld [vmem:[#allocation7 + $0x30] sm:$0xff]
    %v3312 = vld [vmem:[#allocation7 + $0x38] sm:$0xff]
    %v3313 = vld [vmem:[#allocation7 + $0x40] sm:$0xff]
    %v3314 = vld [vmem:[#allocation7 + $0x48] sm:$0xff]
    %v3315 = vld [vmem:[#allocation7 + $0x50] sm:$0xff]
    %v3316 = vld [vmem:[#allocation7 + $0x58] sm:$0xff]
    %v3317 = vld [vmem:[#allocation7 + $0x60] sm:$0xff]
    %v3318 = vld [vmem:[#allocation7 + $0x68] sm:$0xff]
    %v3319 = vld [vmem:[#allocation7 + $0x70] sm:$0xff]
    %v3320 = vld [vmem:[#allocation7 + $0x78] sm:$0xff]
    %v3321 = vld [vmem:[#allocation7 + $0x80] sm:$0xff]
    %v3322 = vld [vmem:[#allocation7 + $0x88] sm:$0xff]
    %v3323 = vld [vmem:[#allocation7 + $0x90] sm:$0xff]
    %v3324 = vld [vmem:[#allocation7 + $0x98] sm:$0xff]
    %v3325 = vld [vmem:[#allocation7 + $0xa0] sm:$0xff]
    %v3326 = vld [vmem:[#allocation7 + $0xa8] sm:$0xff]
    %v3327 = vld [vmem:[#allocation7 + $0xb0] sm:$0xff]
    %v3328 = vld [vmem:[#allocation7 + $0xb8] sm:$0xff]
    %v3329 = vld [vmem:[#allocation7 + $0xc0] sm:$0xff]
    %v3330 = vld [vmem:[#allocation7 + $0xc8] sm:$0xff]
    %v3331 = vld [vmem:[#allocation7 + $0xd0] sm:$0xff]
    %v3332 = vld [vmem:[#allocation7 + $0xd8] sm:$0xff]
    %v3333 = vld [vmem:[#allocation7 + $0xe0] sm:$0xff]
    %v3334 = vld [vmem:[#allocation7 + $0xe8] sm:$0xff]
    %v3335 = vld [vmem:[#allocation7 + $0xf0] sm:$0xff]
    %v3336 = vld [vmem:[#allocation7 + $0xf8] sm:$0xff]
    %v3337 = vld [vmem:[#allocation7 + $0x100] sm:$0xff]
    %v3338 = vld [vmem:[#allocation7 + $0x108] sm:$0xff]
    %v3339 = vld [vmem:[#allocation7 + $0x110] sm:$0xff]
    %v3340 = vld [vmem:[#allocation7 + $0x118] sm:$0xff]
    %v3341 = vld [vmem:[#allocation7 + $0x120] sm:$0xff]
    %v3342 = vld [vmem:[#allocation7 + $0x128] sm:$0xff]
    %v3343 = vld [vmem:[#allocation7 + $0x130] sm:$0xff]
    %v3344 = vld [vmem:[#allocation7 + $0x138] sm:$0xff]
    %v3345 = vld [vmem:[#allocation7 + $0x140] sm:$0xff]
    %v3346 = vld [vmem:[#allocation7 + $0x148] sm:$0xff]
    %v3347 = vld [vmem:[#allocation7 + $0x150] sm:$0xff]
    %v3348 = vld [vmem:[#allocation7 + $0x158] sm:$0xff]
    %v3349 = vld [vmem:[#allocation7 + $0x160] sm:$0xff]
    %v3350 = vld [vmem:[#allocation7 + $0x168] sm:$0xff]
    %v3351 = vld [vmem:[#allocation7 + $0x170] sm:$0xff]
    %v3352 = vld [vmem:[#allocation7 + $0x178] sm:$0xff]
    %v3353 = vld [vmem:[#allocation7 + $0x180] sm:$0xff]
    %v3354 = vld [vmem:[#allocation7 + $0x188] sm:$0xff]
    %v3355 = vld [vmem:[#allocation7 + $0x190] sm:$0xff]
    %v3356 = vld [vmem:[#allocation7 + $0x198] sm:$0xff]
    %v3357 = vld [vmem:[#allocation7 + $0x1a0] sm:$0xff]
    %v3358 = vld [vmem:[#allocation7 + $0x1a8] sm:$0xff]
    %v3359 = vld [vmem:[#allocation7 + $0x1b0] sm:$0xff]
    %v3360 = vld [vmem:[#allocation7 + $0x1b8] sm:$0xff]
    %v3361 = vld [vmem:[#allocation7 + $0x1c0] sm:$0xff]
    %v3362 = vld [vmem:[#allocation7 + $0x1c8] sm:$0xff]
    %v3363 = vld [vmem:[#allocation7 + $0x1d0] sm:$0xff]
    %v3364 = vld [vmem:[#allocation7 + $0x1d8] sm:$0xff]
    %v3365 = vld [vmem:[#allocation7 + $0x1e0] sm:$0xff]
    %v3366 = vld [vmem:[#allocation7 + $0x1e8] sm:$0xff]
    %v3367 = vld [vmem:[#allocation7 + $0x1f0] sm:$0xff]
    %v3368 = vld [vmem:[#allocation7 + $0x1f8] sm:$0xff]
    %v3369 = vld [vmem:[#allocation7 + $0x200] sm:$0xff]
    %v3370 = vld [vmem:[#allocation7 + $0x208] sm:$0xff]
    %v3371 = vld [vmem:[#allocation7 + $0x210] sm:$0xff]
    %v3372 = vld [vmem:[#allocation7 + $0x218] sm:$0xff]
    %v3373 = vld [vmem:[#allocation7 + $0x220] sm:$0xff]
    %v3374 = vld [vmem:[#allocation7 + $0x228] sm:$0xff]
    %v3375 = vld [vmem:[#allocation7 + $0x230] sm:$0xff]
    %v3376 = vld [vmem:[#allocation7 + $0x238] sm:$0xff]
    %v3377 = vld [vmem:[#allocation7 + $0x240] sm:$0xff]
    %v3378 = vld [vmem:[#allocation7 + $0x248] sm:$0xff]
    %v3379 = vld [vmem:[#allocation7 + $0x250] sm:$0xff]
    %v3380 = vld [vmem:[#allocation7 + $0x258] sm:$0xff]
    %v3381 = vld [vmem:[#allocation7 + $0x260] sm:$0xff]
    %v3382 = vld [vmem:[#allocation7 + $0x268] sm:$0xff]
    %v3383 = vld [vmem:[#allocation7 + $0x270] sm:$0xff]
    %v3384 = vld [vmem:[#allocation7 + $0x278] sm:$0xff]
    %v3385 = vld [vmem:[#allocation7 + $0x280] sm:$0xff]
    %v3386 = vld [vmem:[#allocation7 + $0x288] sm:$0xff]
    %v3387 = vld [vmem:[#allocation7 + $0x290] sm:$0xff]
    %v3388 = vld [vmem:[#allocation7 + $0x298] sm:$0xff]
    %v3389 = vld [vmem:[#allocation7 + $0x2a0] sm:$0xff]
    %v3390 = vld [vmem:[#allocation7 + $0x2a8] sm:$0xff]
    %v3391 = vld [vmem:[#allocation7 + $0x2b0] sm:$0xff]
    %v3392 = vld [vmem:[#allocation7 + $0x2b8] sm:$0xff]
    %v3393 = vld [vmem:[#allocation7 + $0x2c0] sm:$0xff]
    %v3394 = vld [vmem:[#allocation7 + $0x2c8] sm:$0xff]
    %v3395 = vld [vmem:[#allocation7 + $0x2d0] sm:$0xff]
    %v3396 = vld [vmem:[#allocation7 + $0x2d8] sm:$0xff]
    %v3397 = vld [vmem:[#allocation7 + $0x2e0] sm:$0xff]
    %v3398 = vld [vmem:[#allocation7 + $0x2e8] sm:$0xff]
    %v3399 = vld [vmem:[#allocation7 + $0x2f0] sm:$0xff]
    %v3400 = vld [vmem:[#allocation7 + $0x2f8] sm:$0xff]
    %v3401 = vld [vmem:[#allocation7 + $0x300] sm:$0xff]
    %v3402 = vld [vmem:[#allocation7 + $0x308] sm:$0xff]
    %v3403 = vld [vmem:[#allocation7 + $0x310] sm:$0xff]
    %v3404 = vld [vmem:[#allocation7 + $0x318] sm:$0xff]
    %v3405 = vld [vmem:[#allocation7 + $0x320] sm:$0xff]
    %v3406 = vld [vmem:[#allocation7 + $0x328] sm:$0xff]
    %v3407 = vld [vmem:[#allocation7 + $0x330] sm:$0xff]
    %v3408 = vld [vmem:[#allocation7 + $0x338] sm:$0xff]
    %v3409 = vld [vmem:[#allocation7 + $0x340] sm:$0xff]
    %v3410 = vld [vmem:[#allocation7 + $0x348] sm:$0xff]
    %v3411 = vld [vmem:[#allocation7 + $0x350] sm:$0xff]
    %v3412 = vld [vmem:[#allocation7 + $0x358] sm:$0xff]
    %v3413 = vld [vmem:[#allocation7 + $0x360] sm:$0xff]
    %v3414 = vld [vmem:[#allocation7 + $0x368] sm:$0xff]
    %v3415 = vld [vmem:[#allocation7 + $0x370] sm:$0xff]
    %v3416 = vld [vmem:[#allocation7 + $0x378] sm:$0xff]
    %v3417 = vld [vmem:[#allocation7 + $0x380] sm:$0xff]
    %v3418 = vld [vmem:[#allocation7 + $0x388] sm:$0xff]
    %v3419 = vld [vmem:[#allocation7 + $0x390] sm:$0xff]
    %v3420 = vld [vmem:[#allocation7 + $0x398] sm:$0xff]
    %v3421 = vld [vmem:[#allocation7 + $0x3a0] sm:$0xff]
    %v3422 = vld [vmem:[#allocation7 + $0x3a8] sm:$0xff]
    %v3423 = vld [vmem:[#allocation7 + $0x3b0] sm:$0xff]
    %v3424 = vld [vmem:[#allocation7 + $0x3b8] sm:$0xff]
    %v3425 = vld [vmem:[#allocation7 + $0x3c0] sm:$0xff]
    %v3426 = vld [vmem:[#allocation7 + $0x3c8] sm:$0xff]
    %v3427 = vld [vmem:[#allocation7 + $0x3d0] sm:$0xff]
    %v3428 = vld [vmem:[#allocation7 + $0x3d8] sm:$0xff]
    %v3429 = vld [vmem:[#allocation7 + $0x3e0] sm:$0xff]
    %v3430 = vld [vmem:[#allocation7 + $0x3e8] sm:$0xff]
    %v3431 = vld [vmem:[#allocation7 + $0x3f0] sm:$0xff]
    %v3432 = vld [vmem:[#allocation7 + $0x3f8] sm:$0xff]
    %v3433 = vld [vmem:[#allocation7 + $0x400] sm:$0xff]
    %v3434 = vld [vmem:[#allocation7 + $0x408] sm:$0xff]
    %v3435 = vld [vmem:[#allocation7 + $0x410] sm:$0xff]
    %v3436 = vld [vmem:[#allocation7 + $0x418] sm:$0xff]
    %v3437 = vld [vmem:[#allocation7 + $0x420] sm:$0xff]
    %v3438 = vld [vmem:[#allocation7 + $0x428] sm:$0xff]
    %v3439 = vld [vmem:[#allocation7 + $0x430] sm:$0xff]
    %v3440 = vld [vmem:[#allocation7 + $0x438] sm:$0xff]
    %v3441 = vld [vmem:[#allocation7 + $0x440] sm:$0xff]
    %v3442 = vld [vmem:[#allocation7 + $0x448] sm:$0xff]
    %v3443 = vld [vmem:[#allocation7 + $0x450] sm:$0xff]
    %v3444 = vld [vmem:[#allocation7 + $0x458] sm:$0xff]
    %v3445 = vld [vmem:[#allocation7 + $0x460] sm:$0xff]
    %v3446 = vld [vmem:[#allocation7 + $0x468] sm:$0xff]
    %v3447 = vld [vmem:[#allocation7 + $0x470] sm:$0xff]
    %v3448 = vld [vmem:[#allocation7 + $0x478] sm:$0xff]
    %v3449 = vld [vmem:[#allocation7 + $0x480] sm:$0xff]
    %v3450 = vld [vmem:[#allocation7 + $0x488] sm:$0xff]
    %v3451 = vld [vmem:[#allocation7 + $0x490] sm:$0xff]
    %v3452 = vld [vmem:[#allocation7 + $0x498] sm:$0xff]
    %v3453 = vld [vmem:[#allocation7 + $0x4a0] sm:$0xff]
    %v3454 = vld [vmem:[#allocation7 + $0x4a8] sm:$0xff]
    %v3455 = vld [vmem:[#allocation7 + $0x4b0] sm:$0xff]
    %v3456 = vld [vmem:[#allocation7 + $0x4b8] sm:$0xff]
    %v3457 = vld [vmem:[#allocation7 + $0x4c0] sm:$0xff]
    %v3458 = vld [vmem:[#allocation7 + $0x4c8] sm:$0xff]
    %v3459 = vld [vmem:[#allocation7 + $0x4d0] sm:$0xff]
    %v3460 = vld [vmem:[#allocation7 + $0x4d8] sm:$0xff]
    %v3461 = vld [vmem:[#allocation7 + $0x4e0] sm:$0xff]
    %v3462 = vld [vmem:[#allocation7 + $0x4e8] sm:$0xff]
    %v3463 = vld [vmem:[#allocation7 + $0x4f0] sm:$0xff]
    %v3464 = vld [vmem:[#allocation7 + $0x4f8] sm:$0xff]
    %v3465 = vld [vmem:[#allocation7 + $0x500] sm:$0xff]
    %v3466 = vld [vmem:[#allocation7 + $0x508] sm:$0xff]
    %v3467 = vld [vmem:[#allocation7 + $0x510] sm:$0xff]
    %v3468 = vld [vmem:[#allocation7 + $0x518] sm:$0xff]
    %v3469 = vld [vmem:[#allocation7 + $0x520] sm:$0xff]
    %v3470 = vld [vmem:[#allocation7 + $0x528] sm:$0xff]
    %v3471 = vld [vmem:[#allocation7 + $0x530] sm:$0xff]
    %v3472 = vld [vmem:[#allocation7 + $0x538] sm:$0xff]
    %v3473 = vld [vmem:[#allocation7 + $0x540] sm:$0xff]
    %v3474 = vld [vmem:[#allocation7 + $0x548] sm:$0xff]
    %v3475 = vld [vmem:[#allocation7 + $0x550] sm:$0xff]
    %v3476 = vld [vmem:[#allocation7 + $0x558] sm:$0xff]
    %v3477 = vld [vmem:[#allocation7 + $0x560] sm:$0xff]
    %v3478 = vld [vmem:[#allocation7 + $0x568] sm:$0xff]
    %v3479 = vld [vmem:[#allocation7 + $0x570] sm:$0xff]
    %v3480 = vld [vmem:[#allocation7 + $0x578] sm:$0xff]
    %v3481 = vld [vmem:[#allocation7 + $0x580] sm:$0xff]
    %v3482 = vld [vmem:[#allocation7 + $0x588] sm:$0xff]
    %v3483 = vld [vmem:[#allocation7 + $0x590] sm:$0xff]
    %v3484 = vld [vmem:[#allocation7 + $0x598] sm:$0xff]
    %v3485 = vld [vmem:[#allocation7 + $0x5a0] sm:$0xff]
    %v3486 = vld [vmem:[#allocation7 + $0x5a8] sm:$0xff]
    %v3487 = vld [vmem:[#allocation7 + $0x5b0] sm:$0xff]
    %v3488 = vld [vmem:[#allocation7 + $0x5b8] sm:$0xff]
    %v3489 = vld [vmem:[#allocation7 + $0x5c0] sm:$0xff]
    %v3490 = vld [vmem:[#allocation7 + $0x5c8] sm:$0xff]
    %v3491 = vld [vmem:[#allocation7 + $0x5d0] sm:$0xff]
    %v3492 = vld [vmem:[#allocation7 + $0x5d8] sm:$0xff]
    %v3493 = vld [vmem:[#allocation7 + $0x5e0] sm:$0xff]
    %v3494 = vld [vmem:[#allocation7 + $0x5e8] sm:$0xff]
    %v3495 = vld [vmem:[#allocation7 + $0x5f0] sm:$0xff]
    %v3496 = vld [vmem:[#allocation7 + $0x5f8] sm:$0xff]
    %v3497 = vld [vmem:[#allocation7 + $0x600] sm:$0xff]
    %v3498 = vld [vmem:[#allocation7 + $0x608] sm:$0xff]
    %v3499 = vld [vmem:[#allocation7 + $0x610] sm:$0xff]
    %v3500 = vld [vmem:[#allocation7 + $0x618] sm:$0xff]
    %v3501 = vld [vmem:[#allocation7 + $0x620] sm:$0xff]
    %v3502 = vld [vmem:[#allocation7 + $0x628] sm:$0xff]
    %v3503 = vld [vmem:[#allocation7 + $0x630] sm:$0xff]
    %v3504 = vld [vmem:[#allocation7 + $0x638] sm:$0xff]
    %v3505 = vld [vmem:[#allocation7 + $0x640] sm:$0xff]
    %v3506 = vld [vmem:[#allocation7 + $0x648] sm:$0xff]
    %v3507 = vld [vmem:[#allocation7 + $0x650] sm:$0xff]
    %v3508 = vld [vmem:[#allocation7 + $0x658] sm:$0xff]
    %v3509 = vld [vmem:[#allocation7 + $0x660] sm:$0xff]
    %v3510 = vld [vmem:[#allocation7 + $0x668] sm:$0xff]
    %v3511 = vld [vmem:[#allocation7 + $0x670] sm:$0xff]
    %v3512 = vld [vmem:[#allocation7 + $0x678] sm:$0xff]
    %v3513 = vld [vmem:[#allocation7 + $0x680] sm:$0xff]
    %v3514 = vld [vmem:[#allocation7 + $0x688] sm:$0xff]
    %v3515 = vld [vmem:[#allocation7 + $0x690] sm:$0xff]
    %v3516 = vld [vmem:[#allocation7 + $0x698] sm:$0xff]
    %v3517 = vld [vmem:[#allocation7 + $0x6a0] sm:$0xff]
    %v3518 = vld [vmem:[#allocation7 + $0x6a8] sm:$0xff]
    %v3519 = vld [vmem:[#allocation7 + $0x6b0] sm:$0xff]
    %v3520 = vld [vmem:[#allocation7 + $0x6b8] sm:$0xff]
    %v3521 = vsel %vm297, %v3244, %v3217
    %v3522 = vsel %vm1085, %v3245, %v3246
    %v3523 = vsel %vm1088, %v3522, %v3521
    %v3524 = vrot.slane %v3523, 6
    %v3525 = vsel %vm297, %v3250, %v3221
    %v3526 = vsel %vm1085, %v3251, %v3252
    %v3527 = vsel %vm1088, %v3526, %v3525
    %v3528 = vrot.slane %v3527, 6
    %vm3529 = vmor %vm3207, %vm2986
    %vm3530 = vmor %vm3529, %vm2992
    %vm3531 = vmor %vm3530, %vm2998
    %v3532 = vrot.slane %v3255, 7
    %v3533 = vrot.slane %v3532, 2
    %v3534 = vrot.slane %v3259, 7
    %v3535 = vsel %vm3531, %v3533, %v3534
    %v3536 = vrot.slane %v3534, 2
    %v3537 = vrot.slane %v3263, 7
    %v3538 = vsel %vm3531, %v3536, %v3537
    %v3539 = vrot.slane %v3537, 2
    %v3540 = vrot.slane %v3267, 7
    %v3541 = vsel %vm3531, %v3539, %v3540
    %v3542 = vrot.slane %v3540, 2
    %v3543 = vrot.slane %v3270, 7
    %v3544 = vsel %vm3531, %v3542, %v3543
    %v3545 = vrot.slane %v3543, 2
    %v3546 = vrot.slane %v3274, 7
    %v3547 = vsel %vm3531, %v3545, %v3546
    %v3548 = vrot.slane %v3546, 2
    %v3549 = vrot.slane %v3278, 7
    %v3550 = vsel %vm3531, %v3548, %v3549
    %v3551 = vrot.slane %v3549, 2
    %v3552 = vrot.slane %v3524, 7
    %v3553 = vsel %vm3531, %v3551, %v3552
    %v3554 = vrot.slane %v3281, 7
    %v3555 = vrot.slane %v3554, 2
    %v3556 = vrot.slane %v3285, 7
    %v3557 = vsel %vm3531, %v3555, %v3556
    %v3558 = vrot.slane %v3556, 2
    %v3559 = vrot.slane %v3289, 7
    %v3560 = vsel %vm3531, %v3558, %v3559
    %v3561 = vrot.slane %v3559, 2
    %v3562 = vrot.slane %v3293, 7
    %v3563 = vsel %vm3531, %v3561, %v3562
    %v3564 = vrot.slane %v3562, 2
    %v3565 = vrot.slane %v3296, 7
    %v3566 = vsel %vm3531, %v3564, %v3565
    %v3567 = vrot.slane %v3565, 2
    %v3568 = vrot.slane %v3300, 7
    %v3569 = vsel %vm3531, %v3567, %v3568
    %v3570 = vrot.slane %v3568, 2
    %v3571 = vrot.slane %v3304, 7
    %v3572 = vsel %vm3531, %v3570, %v3571
    %v3573 = vrot.slane %v3571, 2
    %v3574 = vrot.slane %v3528, 7
    %v3575 = vsel %vm3531, %v3573, %v3574
    %s3576 = scalar_lea.vmem [#allocation7], 1728
    %v3577 = vld [vmem:[%s3576] sm:$0xff]
    %v3578 = vld [vmem:[%s3576 + $0x8] sm:$0xff]
    %v3579 = vld [vmem:[%s3576 + $0x10] sm:$0xff]
    %v3580 = vld [vmem:[%s3576 + $0x18] sm:$0xff]
    %v3581 = vld [vmem:[%s3576 + $0x20] sm:$0xff]
    %v3582 = vld [vmem:[%s3576 + $0x28] sm:$0xff]
    %v3583 = vld [vmem:[%s3576 + $0x30] sm:$0xff]
    %v3584 = vld [vmem:[%s3576 + $0x38] sm:$0xff]
    %v3585 = vld [vmem:[%s3576 + $0x40] sm:$0xff]
    %v3586 = vld [vmem:[%s3576 + $0x48] sm:$0xff]
    %v3587 = vld [vmem:[%s3576 + $0x50] sm:$0xff]
    %v3588 = vld [vmem:[%s3576 + $0x58] sm:$0xff]
    %v3589 = vld [vmem:[%s3576 + $0x60] sm:$0xff]
    %v3590 = vld [vmem:[%s3576 + $0x68] sm:$0xff]
    %v3591 = vld [vmem:[%s3576 + $0x70] sm:$0xff]
    %v3592 = vld [vmem:[%s3576 + $0x78] sm:$0xff]
    %v3593 = vld [vmem:[%s3576 + $0x80] sm:$0xff]
    %v3594 = vld [vmem:[%s3576 + $0x88] sm:$0xff]
    %v3595 = vld [vmem:[%s3576 + $0x90] sm:$0xff]
    %v3596 = vld [vmem:[%s3576 + $0x98] sm:$0xff]
    %v3597 = vld [vmem:[%s3576 + $0xa0] sm:$0xff]
    %v3598 = vld [vmem:[%s3576 + $0xa8] sm:$0xff]
    %v3599 = vld [vmem:[%s3576 + $0xb0] sm:$0xff]
    %v3600 = vld [vmem:[%s3576 + $0xb8] sm:$0xff]
    %v3601 = vld [vmem:[%s3576 + $0xc0] sm:$0xff]
    %v3602 = vld [vmem:[%s3576 + $0xc8] sm:$0xff]
    %v3603 = vld [vmem:[%s3576 + $0xd0] sm:$0xff]
    %v3604 = vld [vmem:[%s3576 + $0xd8] sm:$0xff]
    %v3605 = vld [vmem:[%s3576 + $0xe0] sm:$0xff]
    %v3606 = vld [vmem:[%s3576 + $0xe8] sm:$0xff]
    %v3607 = vld [vmem:[%s3576 + $0xf0] sm:$0xff]
    %v3608 = vld [vmem:[%s3576 + $0xf8] sm:$0xff]
    %v3609 = vld [vmem:[%s3576 + $0x100] sm:$0xff]
    %v3610 = vld [vmem:[%s3576 + $0x108] sm:$0xff]
    %v3611 = vld [vmem:[%s3576 + $0x110] sm:$0xff]
    %v3612 = vld [vmem:[%s3576 + $0x118] sm:$0xff]
    %v3613 = vld [vmem:[%s3576 + $0x120] sm:$0xff]
    %v3614 = vld [vmem:[%s3576 + $0x128] sm:$0xff]
    %v3615 = vld [vmem:[%s3576 + $0x130] sm:$0xff]
    %v3616 = vld [vmem:[%s3576 + $0x138] sm:$0xff]
    %v3617 = vld [vmem:[%s3576 + $0x140] sm:$0xff]
    %v3618 = vld [vmem:[%s3576 + $0x148] sm:$0xff]
    %v3619 = vld [vmem:[%s3576 + $0x150] sm:$0xff]
    %v3620 = vld [vmem:[%s3576 + $0x158] sm:$0xff]
    %v3621 = vld [vmem:[%s3576 + $0x160] sm:$0xff]
    %v3622 = vld [vmem:[%s3576 + $0x168] sm:$0xff]
    %v3623 = vld [vmem:[%s3576 + $0x170] sm:$0xff]
    %v3624 = vld [vmem:[%s3576 + $0x178] sm:$0xff]
    %v3625 = vld [vmem:[%s3576 + $0x180] sm:$0xff]
    %v3626 = vld [vmem:[%s3576 + $0x188] sm:$0xff]
    %v3627 = vld [vmem:[%s3576 + $0x190] sm:$0xff]
    %v3628 = vld [vmem:[%s3576 + $0x198] sm:$0xff]
    %v3629 = vld [vmem:[%s3576 + $0x1a0] sm:$0xff]
    %v3630 = vld [vmem:[%s3576 + $0x1a8] sm:$0xff]
    %v3631 = vld [vmem:[%s3576 + $0x1b0] sm:$0xff]
    %v3632 = vld [vmem:[%s3576 + $0x1b8] sm:$0xff]
    %v3633 = vld [vmem:[%s3576 + $0x1c0] sm:$0xff]
    %v3634 = vld [vmem:[%s3576 + $0x1c8] sm:$0xff]
    %v3635 = vld [vmem:[%s3576 + $0x1d0] sm:$0xff]
    %v3636 = vld [vmem:[%s3576 + $0x1d8] sm:$0xff]
    %v3637 = vld [vmem:[%s3576 + $0x1e0] sm:$0xff]
    %v3638 = vld [vmem:[%s3576 + $0x1e8] sm:$0xff]
    %v3639 = vld [vmem:[%s3576 + $0x1f0] sm:$0xff]
    %v3640 = vld [vmem:[%s3576 + $0x1f8] sm:$0xff]
    %v3641 = vld [vmem:[%s3576 + $0x200] sm:$0xff]
    %v3642 = vld [vmem:[%s3576 + $0x208] sm:$0xff]
    %v3643 = vld [vmem:[%s3576 + $0x210] sm:$0xff]
    %v3644 = vld [vmem:[%s3576 + $0x218] sm:$0xff]
    %v3645 = vld [vmem:[%s3576 + $0x220] sm:$0xff]
    %v3646 = vld [vmem:[%s3576 + $0x228] sm:$0xff]
    %v3647 = vld [vmem:[%s3576 + $0x230] sm:$0xff]
    %v3648 = vld [vmem:[%s3576 + $0x238] sm:$0xff]
    %v3649 = vld [vmem:[%s3576 + $0x240] sm:$0xff]
    %v3650 = vld [vmem:[%s3576 + $0x248] sm:$0xff]
    %v3651 = vld [vmem:[%s3576 + $0x250] sm:$0xff]
    %v3652 = vld [vmem:[%s3576 + $0x258] sm:$0xff]
    %v3653 = vld [vmem:[%s3576 + $0x260] sm:$0xff]
    %v3654 = vld [vmem:[%s3576 + $0x268] sm:$0xff]
    %v3655 = vld [vmem:[%s3576 + $0x270] sm:$0xff]
    %v3656 = vld [vmem:[%s3576 + $0x278] sm:$0xff]
    %v3657 = vld [vmem:[%s3576 + $0x280] sm:$0xff]
    %v3658 = vld [vmem:[%s3576 + $0x288] sm:$0xff]
    %v3659 = vld [vmem:[%s3576 + $0x290] sm:$0xff]
    %v3660 = vld [vmem:[%s3576 + $0x298] sm:$0xff]
    %v3661 = vld [vmem:[%s3576 + $0x2a0] sm:$0xff]
    %v3662 = vld [vmem:[%s3576 + $0x2a8] sm:$0xff]
    %v3663 = vld [vmem:[%s3576 + $0x2b0] sm:$0xff]
    %v3664 = vld [vmem:[%s3576 + $0x2b8] sm:$0xff]
    %v3665 = vld [vmem:[%s3576 + $0x2c0] sm:$0xff]
    %v3666 = vld [vmem:[%s3576 + $0x2c8] sm:$0xff]
    %v3667 = vld [vmem:[%s3576 + $0x2d0] sm:$0xff]
    %v3668 = vld [vmem:[%s3576 + $0x2d8] sm:$0xff]
    %v3669 = vld [vmem:[%s3576 + $0x2e0] sm:$0xff]
    %v3670 = vld [vmem:[%s3576 + $0x2e8] sm:$0xff]
    %v3671 = vld [vmem:[%s3576 + $0x2f0] sm:$0xff]
    %v3672 = vld [vmem:[%s3576 + $0x2f8] sm:$0xff]
    %v3673 = vld [vmem:[%s3576 + $0x300] sm:$0xff]
    %v3674 = vld [vmem:[%s3576 + $0x308] sm:$0xff]
    %v3675 = vld [vmem:[%s3576 + $0x310] sm:$0xff]
    %v3676 = vld [vmem:[%s3576 + $0x318] sm:$0xff]
    %v3677 = vld [vmem:[%s3576 + $0x320] sm:$0xff]
    %v3678 = vld [vmem:[%s3576 + $0x328] sm:$0xff]
    %v3679 = vld [vmem:[%s3576 + $0x330] sm:$0xff]
    %v3680 = vld [vmem:[%s3576 + $0x338] sm:$0xff]
    %v3681 = vld [vmem:[%s3576 + $0x340] sm:$0xff]
    %v3682 = vld [vmem:[%s3576 + $0x348] sm:$0xff]
    %v3683 = vld [vmem:[%s3576 + $0x350] sm:$0xff]
    %v3684 = vld [vmem:[%s3576 + $0x358] sm:$0xff]
    %v3685 = vld [vmem:[%s3576 + $0x360] sm:$0xff]
    %v3686 = vld [vmem:[%s3576 + $0x368] sm:$0xff]
    %v3687 = vld [vmem:[%s3576 + $0x370] sm:$0xff]
    %v3688 = vld [vmem:[%s3576 + $0x378] sm:$0xff]
    %v3689 = vld [vmem:[%s3576 + $0x380] sm:$0xff]
    %v3690 = vld [vmem:[%s3576 + $0x388] sm:$0xff]
    %v3691 = vld [vmem:[%s3576 + $0x390] sm:$0xff]
    %v3692 = vld [vmem:[%s3576 + $0x398] sm:$0xff]
    %v3693 = vld [vmem:[%s3576 + $0x3a0] sm:$0xff]
    %v3694 = vld [vmem:[%s3576 + $0x3a8] sm:$0xff]
    %v3695 = vld [vmem:[%s3576 + $0x3b0] sm:$0xff]
    %v3696 = vld [vmem:[%s3576 + $0x3b8] sm:$0xff]
    %v3697 = vld [vmem:[%s3576 + $0x3c0] sm:$0xff]
    %v3698 = vld [vmem:[%s3576 + $0x3c8] sm:$0xff]
    %v3699 = vld [vmem:[%s3576 + $0x3d0] sm:$0xff]
    %v3700 = vld [vmem:[%s3576 + $0x3d8] sm:$0xff]
    %v3701 = vld [vmem:[%s3576 + $0x3e0] sm:$0xff]
    %v3702 = vld [vmem:[%s3576 + $0x3e8] sm:$0xff]
    %v3703 = vld [vmem:[%s3576 + $0x3f0] sm:$0xff]
    %v3704 = vld [vmem:[%s3576 + $0x3f8] sm:$0xff]
    %v3705 = vld [vmem:[%s3576 + $0x400] sm:$0xff]
    %v3706 = vld [vmem:[%s3576 + $0x408] sm:$0xff]
    %v3707 = vld [vmem:[%s3576 + $0x410] sm:$0xff]
    %v3708 = vld [vmem:[%s3576 + $0x418] sm:$0xff]
    %v3709 = vld [vmem:[%s3576 + $0x420] sm:$0xff]
    %v3710 = vld [vmem:[%s3576 + $0x428] sm:$0xff]
    %v3711 = vld [vmem:[%s3576 + $0x430] sm:$0xff]
    %v3712 = vld [vmem:[%s3576 + $0x438] sm:$0xff]
    %v3713 = vld [vmem:[%s3576 + $0x440] sm:$0xff]
    %v3714 = vld [vmem:[%s3576 + $0x448] sm:$0xff]
    %v3715 = vld [vmem:[%s3576 + $0x450] sm:$0xff]
    %v3716 = vld [vmem:[%s3576 + $0x458] sm:$0xff]
    %v3717 = vld [vmem:[%s3576 + $0x460] sm:$0xff]
    %v3718 = vld [vmem:[%s3576 + $0x468] sm:$0xff]
    %v3719 = vld [vmem:[%s3576 + $0x470] sm:$0xff]
    %v3720 = vld [vmem:[%s3576 + $0x478] sm:$0xff]
    %v3721 = vld [vmem:[%s3576 + $0x480] sm:$0xff]
    %v3722 = vld [vmem:[%s3576 + $0x488] sm:$0xff]
    %v3723 = vld [vmem:[%s3576 + $0x490] sm:$0xff]
    %v3724 = vld [vmem:[%s3576 + $0x498] sm:$0xff]
    %v3725 = vld [vmem:[%s3576 + $0x4a0] sm:$0xff]
    %v3726 = vld [vmem:[%s3576 + $0x4a8] sm:$0xff]
    %v3727 = vld [vmem:[%s3576 + $0x4b0] sm:$0xff]
    %v3728 = vld [vmem:[%s3576 + $0x4b8] sm:$0xff]
    %v3729 = vld [vmem:[%s3576 + $0x4c0] sm:$0xff]
    %v3730 = vld [vmem:[%s3576 + $0x4c8] sm:$0xff]
    %v3731 = vld [vmem:[%s3576 + $0x4d0] sm:$0xff]
    %v3732 = vld [vmem:[%s3576 + $0x4d8] sm:$0xff]
    %v3733 = vld [vmem:[%s3576 + $0x4e0] sm:$0xff]
    %v3734 = vld [vmem:[%s3576 + $0x4e8] sm:$0xff]
    %v3735 = vld [vmem:[%s3576 + $0x4f0] sm:$0xff]
    %v3736 = vld [vmem:[%s3576 + $0x4f8] sm:$0xff]
    %v3737 = vld [vmem:[%s3576 + $0x500] sm:$0xff]
    %v3738 = vld [vmem:[%s3576 + $0x508] sm:$0xff]
    %v3739 = vld [vmem:[%s3576 + $0x510] sm:$0xff]
    %v3740 = vld [vmem:[%s3576 + $0x518] sm:$0xff]
    %v3741 = vld [vmem:[%s3576 + $0x520] sm:$0xff]
    %v3742 = vld [vmem:[%s3576 + $0x528] sm:$0xff]
    %v3743 = vld [vmem:[%s3576 + $0x530] sm:$0xff]
    %v3744 = vld [vmem:[%s3576 + $0x538] sm:$0xff]
    %v3745 = vld [vmem:[%s3576 + $0x540] sm:$0xff]
    %v3746 = vld [vmem:[%s3576 + $0x548] sm:$0xff]
    %v3747 = vld [vmem:[%s3576 + $0x550] sm:$0xff]
    %v3748 = vld [vmem:[%s3576 + $0x558] sm:$0xff]
    %v3749 = vld [vmem:[%s3576 + $0x560] sm:$0xff]
    %v3750 = vld [vmem:[%s3576 + $0x568] sm:$0xff]
    %v3751 = vld [vmem:[%s3576 + $0x570] sm:$0xff]
    %v3752 = vld [vmem:[%s3576 + $0x578] sm:$0xff]
    %v3753 = vld [vmem:[%s3576 + $0x580] sm:$0xff]
    %v3754 = vld [vmem:[%s3576 + $0x588] sm:$0xff]
    %v3755 = vld [vmem:[%s3576 + $0x590] sm:$0xff]
    %v3756 = vld [vmem:[%s3576 + $0x598] sm:$0xff]
    %v3757 = vld [vmem:[%s3576 + $0x5a0] sm:$0xff]
    %v3758 = vld [vmem:[%s3576 + $0x5a8] sm:$0xff]
    %v3759 = vld [vmem:[%s3576 + $0x5b0] sm:$0xff]
    %v3760 = vld [vmem:[%s3576 + $0x5b8] sm:$0xff]
    %v3761 = vld [vmem:[%s3576 + $0x5c0] sm:$0xff]
    %v3762 = vld [vmem:[%s3576 + $0x5c8] sm:$0xff]
    %v3763 = vld [vmem:[%s3576 + $0x5d0] sm:$0xff]
    %v3764 = vld [vmem:[%s3576 + $0x5d8] sm:$0xff]
    %v3765 = vld [vmem:[%s3576 + $0x5e0] sm:$0xff]
    %v3766 = vld [vmem:[%s3576 + $0x5e8] sm:$0xff]
    %v3767 = vld [vmem:[%s3576 + $0x5f0] sm:$0xff]
    %v3768 = vld [vmem:[%s3576 + $0x5f8] sm:$0xff]
    %v3769 = vld [vmem:[%s3576 + $0x600] sm:$0xff]
    %v3770 = vld [vmem:[%s3576 + $0x608] sm:$0xff]
    %v3771 = vld [vmem:[%s3576 + $0x610] sm:$0xff]
    %v3772 = vld [vmem:[%s3576 + $0x618] sm:$0xff]
    %v3773 = vld [vmem:[%s3576 + $0x620] sm:$0xff]
    %v3774 = vld [vmem:[%s3576 + $0x628] sm:$0xff]
    %v3775 = vld [vmem:[%s3576 + $0x630] sm:$0xff]
    %v3776 = vld [vmem:[%s3576 + $0x638] sm:$0xff]
    %v3777 = vld [vmem:[%s3576 + $0x640] sm:$0xff]
    %v3778 = vld [vmem:[%s3576 + $0x648] sm:$0xff]
    %v3779 = vld [vmem:[%s3576 + $0x650] sm:$0xff]
    %v3780 = vld [vmem:[%s3576 + $0x658] sm:$0xff]
    %v3781 = vld [vmem:[%s3576 + $0x660] sm:$0xff]
    %v3782 = vld [vmem:[%s3576 + $0x668] sm:$0xff]
    %v3783 = vld [vmem:[%s3576 + $0x670] sm:$0xff]
    %v3784 = vld [vmem:[%s3576 + $0x678] sm:$0xff]
    %v3785 = vld [vmem:[%s3576 + $0x680] sm:$0xff]
    %v3786 = vld [vmem:[%s3576 + $0x688] sm:$0xff]
    %v3787 = vld [vmem:[%s3576 + $0x690] sm:$0xff]
    %v3788 = vld [vmem:[%s3576 + $0x698] sm:$0xff]
    %v3789 = vld [vmem:[%s3576 + $0x6a0] sm:$0xff]
    %v3790 = vld [vmem:[%s3576 + $0x6a8] sm:$0xff]
    %v3791 = vld [vmem:[%s3576 + $0x6b0] sm:$0xff]
    %v3792 = vld [vmem:[%s3576 + $0x6b8] sm:$0xff]
    %3793 = vst [vmem:[#allocation1] ss:$4 sm:$0xff] %v3535
    %s3794 = scalar_lea.vmem [#allocation1], 1
    %3795 = vst [vmem:[%s3794] ss:$4 sm:$0xff] %v3538
    %s3796 = scalar_lea.vmem [#allocation1], 2
    %3797 = vst [vmem:[%s3796] ss:$4 sm:$0xff] %v3541
    %s3798 = scalar_lea.vmem [#allocation1], 3
    %3799 = vst [vmem:[%s3798] ss:$4 sm:$0xff] %v3544
    %s3800 = scalar_lea.vmem [#allocation1], 32
    %3801 = vst [vmem:[%s3800] ss:$4 sm:$0xff] %v3547
    %s3802 = scalar_lea.vmem [#allocation1], 33
    %3803 = vst [vmem:[%s3802] ss:$4 sm:$0xff] %v3550
    %s3804 = scalar_lea.vmem [#allocation1], 34
    %3805 = vst [vmem:[%s3804] ss:$4 sm:$0xff] %v3553
    %s3806 = scalar_lea.vmem [#allocation1], 35
    %3807 = vst [vmem:[%s3806] ss:$4 sm:$0xff] %v3557
    %v3808 = vld.sshfl [vmem:[#allocation1] sm:$0xff pattern:$0x73625140]
    %v3809 = vld.sshfl [vmem:[#allocation1 + $0x8] sm:$0xff pattern:$0x73625140]
    %v3810 = vld.sshfl [vmem:[#allocation1 + $0x10] sm:$0xff pattern:$0x73625140]
    %v3811 = vld.sshfl [vmem:[#allocation1 + $0x18] sm:$0xff pattern:$0x73625140]
    %v3812 = vld.sshfl [vmem:[#allocation1 + $0x20] sm:$0xff pattern:$0x73625140]
    %v3813 = vld.sshfl [vmem:[#allocation1 + $0x28] sm:$0xff pattern:$0x73625140]
    %v3814 = vld.sshfl [vmem:[#allocation1 + $0x30] sm:$0xff pattern:$0x73625140]
    %v3815 = vld.sshfl [vmem:[#allocation1 + $0x38] sm:$0xff pattern:$0x73625140]
    %3816 = vst [vmem:[#allocation1] ss:$4 sm:$0xff] %v3560
    %3817 = vst [vmem:[%s3794] ss:$4 sm:$0xff] %v3563
    %3818 = vst [vmem:[%s3796] ss:$4 sm:$0xff] %v3566
    %3819 = vst [vmem:[%s3798] ss:$4 sm:$0xff] %v3569
    %3820 = vst [vmem:[%s3800] ss:$4 sm:$0xff] %v3572
    %3821 = vst [vmem:[%s3802] ss:$4 sm:$0xff] %v3575
    %v3822 = vld.sshfl [vmem:[#allocation1] sm:$0xff pattern:$0x73625140]
    %v3823 = vld.sshfl [vmem:[#allocation1 + $0x8] sm:$0xff pattern:$0x73625140]
    %v3824 = vld.sshfl [vmem:[#allocation1 + $0x10] sm:$0xff pattern:$0x73625140]
    %v3825 = vld.sshfl [vmem:[#allocation1 + $0x18] sm:$0xff pattern:$0x73625140]
    %v3826 = vld.sshfl [vmem:[#allocation1 + $0x20] sm:$0xff pattern:$0x73625140]
    %v3827 = vld.sshfl [vmem:[#allocation1 + $0x28] sm:$0xff pattern:$0x73625140]
    %v3828 = vld.sshfl [vmem:[#allocation1 + $0x30] sm:$0xff pattern:$0x73625140]
    %v3829 = vld.sshfl [vmem:[#allocation1 + $0x38] sm:$0xff pattern:$0x73625140]
    %vm3842 = vcmask 392192
    %v3843 = vsel %vm3842, %v3811, 0
    %v3845 = vsel %vm3842, %v3815, 0
    %v3847 = vsel %vm3842, %v3825, 0
    %v3849 = vsel %vm3842, %v3829, 0
    %3851 = vmatpush.msra.mxu0 %v3637
    %3852 = vmatpush.msra.mxu0 %v3633
    %3853 = vmatpush.msra.mxu0 %v3629
    %3854 = vmatpush.msra.mxu0 %v3625
    %3855 = vmatpush.msra.mxu0 %v3621
    %3856 = vmatpush.msra.mxu0 %v3617
    %3857 = vmatpush.msra.mxu0 %v3613
    %3858 = vmatpush.msra.mxu0 %v3609
    %3859 = vmatpush.msra.mxu0 %v3605
    %3860 = vmatpush.msra.mxu0 %v3601
    %3861 = vmatpush.msra.mxu0 %v3597
    %3862 = vmatpush.msra.mxu0 %v3593
    %3863 = vmatpush.msra.mxu0 %v3589
    %3864 = vmatpush.msra.mxu0 %v3585
    %3865 = vmatpush.msra.mxu0 %v3581
    %3866 = vmatpush.msra.mxu0 %v3577
    %3867 = vmatmul.f32.gmra.mxu0 %v3808
    %v3868 = vpop.f32.mrf.mxu0
    %v3869 = vadd.f32 0.0, %v3868
    %3870 = vmatmul.f32.gmra.mxu0 %v3812
    %v3871 = vpop.f32.mrf.mxu0
    %v3872 = vadd.f32 0.0, %v3871
    %3873 = vmatmul.f32.gmra.mxu0 %v3822
    %v3874 = vpop.f32.mrf.mxu0
    %v3875 = vadd.f32 0.0, %v3874
    %3876 = vmatmul.f32.gmra.mxu0 %v3826
    %v3877 = vpop.f32.mrf.mxu0
    %v3878 = vadd.f32 0.0, %v3877
    %3879 = vdwg.mxu0
    %3880 = vmatpush.msra.mxu0 %v3701
    %3881 = vmatpush.msra.mxu0 %v3697
    %3882 = vmatpush.msra.mxu0 %v3693
    %3883 = vmatpush.msra.mxu0 %v3689
    %3884 = vmatpush.msra.mxu0 %v3685
    %3885 = vmatpush.msra.mxu0 %v3681
    %3886 = vmatpush.msra.mxu0 %v3677
    %3887 = vmatpush.msra.mxu0 %v3673
    %3888 = vmatpush.msra.mxu0 %v3669
    %3889 = vmatpush.msra.mxu0 %v3665
    %3890 = vmatpush.msra.mxu0 %v3661
    %3891 = vmatpush.msra.mxu0 %v3657
    %3892 = vmatpush.msra.mxu0 %v3653
    %3893 = vmatpush.msra.mxu0 %v3649
    %3894 = vmatpush.msra.mxu0 %v3645
    %3895 = vmatpush.msra.mxu0 %v3641
    %3896 = vmatmul.f32.gmra.mxu0 %v3809
    %v3897 = vpop.f32.mrf.mxu0
    %v3898 = vadd.f32 %v3869, %v3897
    %3899 = vmatmul.f32.gmra.mxu0 %v3813
    %v3900 = vpop.f32.mrf.mxu0
    %v3901 = vadd.f32 %v3872, %v3900
    %3902 = vmatmul.f32.gmra.mxu0 %v3823
    %v3903 = vpop.f32.mrf.mxu0
    %v3904 = vadd.f32 %v3875, %v3903
    %3905 = vmatmul.f32.gmra.mxu0 %v3827
    %v3906 = vpop.f32.mrf.mxu0
    %v3907 = vadd.f32 %v3878, %v3906
    %3908 = vdwg.mxu0
    %3909 = vmatpush.msra.mxu0 %v3765
    %3910 = vmatpush.msra.mxu0 %v3761
    %3911 = vmatpush.msra.mxu0 %v3757
    %3912 = vmatpush.msra.mxu0 %v3753
    %3913 = vmatpush.msra.mxu0 %v3749
    %3914 = vmatpush.msra.mxu0 %v3745
    %3915 = vmatpush.msra.mxu0 %v3741
    %3916 = vmatpush.msra.mxu0 %v3737
    %3917 = vmatpush.msra.mxu0 %v3733
    %3918 = vmatpush.msra.mxu0 %v3729
    %3919 = vmatpush.msra.mxu0 %v3725
    %3920 = vmatpush.msra.mxu0 %v3721
    %3921 = vmatpush.msra.mxu0 %v3717
    %3922 = vmatpush.msra.mxu0 %v3713
    %3923 = vmatpush.msra.mxu0 %v3709
    %3924 = vmatpush.msra.mxu0 %v3705
    %3925 = vmatmul.f32.gmra.mxu0 %v3810
    %v3926 = vpop.f32.mrf.mxu0
    %v3927 = vadd.f32 %v3898, %v3926
    %3928 = vmatmul.f32.gmra.mxu0 %v3814
    %v3929 = vpop.f32.mrf.mxu0
    %v3930 = vadd.f32 %v3901, %v3929
    %3931 = vmatmul.f32.gmra.mxu0 %v3824
    %v3932 = vpop.f32.mrf.mxu0
    %v3933 = vadd.f32 %v3904, %v3932
    %3934 = vmatmul.f32.gmra.mxu0 %v3828
    %v3935 = vpop.f32.mrf.mxu0
    %v3936 = vadd.f32 %v3907, %v3935
    %3937 = vdwg.mxu0
    %3938 = vmatpush.msra.mxu0 0.0
    %3939 = vmatpush.msra.mxu0 0.0
    %3940 = vmatpush.msra.mxu0 0.0
    %3941 = vmatpush.msra.mxu0 0.0
    %3942 = vmatpush.msra.mxu0 0.0
    %3943 = vmatpush.msra.mxu0 0.0
    %3944 = vmatpush.msra.mxu0 0.0
    %3945 = vmatpush.msra.mxu0 0.0
    %3946 = vmatpush.msra.mxu0 0.0
    %3947 = vmatpush.msra.mxu0 0.0
    %3948 = vmatpush.msra.mxu0 %v3789
    %3949 = vmatpush.msra.mxu0 %v3785
    %3950 = vmatpush.msra.mxu0 %v3781
    %3951 = vmatpush.msra.mxu0 %v3777
    %3952 = vmatpush.msra.mxu0 %v3773
    %3953 = vmatpush.msra.mxu0 %v3769
    %3954 = vmatmul.f32.gmra.mxu0 %v3843
    %v3955 = vpop.f32.mrf.mxu0
    %v3956 = vadd.f32 %v3927, %v3955
    %3957 = vmatmul.f32.gmra.mxu0 %v3845
    %v3958 = vpop.f32.mrf.mxu0
    %v3959 = vadd.f32 %v3930, %v3958
    %3960 = vmatmul.f32.gmra.mxu0 %v3847
    %v3961 = vpop.f32.mrf.mxu0
    %v3962 = vadd.f32 %v3933, %v3961
    %3963 = vmatmul.f32.gmra.mxu0 %v3849
    %v3964 = vpop.f32.mrf.mxu0
    %v3965 = vadd.f32 %v3936, %v3964
    %3966 = vdwg.mxu0
    %3967 = vmatpush.msra.mxu0 %v3638
    %3968 = vmatpush.msra.mxu0 %v3634
    %3969 = vmatpush.msra.mxu0 %v3630
    %3970 = vmatpush.msra.mxu0 %v3626
    %3971 = vmatpush.msra.mxu0 %v3622
    %3972 = vmatpush.msra.mxu0 %v3618
    %3973 = vmatpush.msra.mxu0 %v3614
    %3974 = vmatpush.msra.mxu0 %v3610
    %3975 = vmatpush.msra.mxu0 %v3606
    %3976 = vmatpush.msra.mxu0 %v3602
    %3977 = vmatpush.msra.mxu0 %v3598
    %3978 = vmatpush.msra.mxu0 %v3594
    %3979 = vmatpush.msra.mxu0 %v3590
    %3980 = vmatpush.msra.mxu0 %v3586
    %3981 = vmatpush.msra.mxu0 %v3582
    %3982 = vmatpush.msra.mxu0 %v3578
    %3983 = vmatmul.f32.gmra.mxu0 %v3808
    %v3984 = vpop.f32.mrf.mxu0
    %v3985 = vadd.f32 0.0, %v3984
    %3986 = vmatmul.f32.gmra.mxu0 %v3812
    %v3987 = vpop.f32.mrf.mxu0
    %v3988 = vadd.f32 0.0, %v3987
    %3989 = vmatmul.f32.gmra.mxu0 %v3822
    %v3990 = vpop.f32.mrf.mxu0
    %v3991 = vadd.f32 0.0, %v3990
    %3992 = vmatmul.f32.gmra.mxu0 %v3826
    %v3993 = vpop.f32.mrf.mxu0
    %v3994 = vadd.f32 0.0, %v3993
    %3995 = vdwg.mxu0
    %3996 = vmatpush.msra.mxu0 %v3702
    %3997 = vmatpush.msra.mxu0 %v3698
    %3998 = vmatpush.msra.mxu0 %v3694
    %3999 = vmatpush.msra.mxu0 %v3690
    %4000 = vmatpush.msra.mxu0 %v3686
    %4001 = vmatpush.msra.mxu0 %v3682
    %4002 = vmatpush.msra.mxu0 %v3678
    %4003 = vmatpush.msra.mxu0 %v3674
    %4004 = vmatpush.msra.mxu0 %v3670
    %4005 = vmatpush.msra.mxu0 %v3666
    %4006 = vmatpush.msra.mxu0 %v3662
    %4007 = vmatpush.msra.mxu0 %v3658
    %4008 = vmatpush.msra.mxu0 %v3654
    %4009 = vmatpush.msra.mxu0 %v3650
    %4010 = vmatpush.msra.mxu0 %v3646
    %4011 = vmatpush.msra.mxu0 %v3642
    %4012 = vmatmul.f32.gmra.mxu0 %v3809
    %v4013 = vpop.f32.mrf.mxu0
    %v4014 = vadd.f32 %v3985, %v4013
    %4015 = vmatmul.f32.gmra.mxu0 %v3813
    %v4016 = vpop.f32.mrf.mxu0
    %v4017 = vadd.f32 %v3988, %v4016
    %4018 = vmatmul.f32.gmra.mxu0 %v3823
    %v4019 = vpop.f32.mrf.mxu0
    %v4020 = vadd.f32 %v3991, %v4019
    %4021 = vmatmul.f32.gmra.mxu0 %v3827
    %v4022 = vpop.f32.mrf.mxu0
    %v4023 = vadd.f32 %v3994, %v4022
    %4024 = vdwg.mxu0
    %4025 = vmatpush.msra.mxu0 %v3766
    %4026 = vmatpush.msra.mxu0 %v3762
    %4027 = vmatpush.msra.mxu0 %v3758
    %4028 = vmatpush.msra.mxu0 %v3754
    %4029 = vmatpush.msra.mxu0 %v3750
    %4030 = vmatpush.msra.mxu0 %v3746
    %4031 = vmatpush.msra.mxu0 %v3742
    %4032 = vmatpush.msra.mxu0 %v3738
    %4033 = vmatpush.msra.mxu0 %v3734
    %4034 = vmatpush.msra.mxu0 %v3730
    %4035 = vmatpush.msra.mxu0 %v3726
    %4036 = vmatpush.msra.mxu0 %v3722
    %4037 = vmatpush.msra.mxu0 %v3718
    %4038 = vmatpush.msra.mxu0 %v3714
    %4039 = vmatpush.msra.mxu0 %v3710
    %4040 = vmatpush.msra.mxu0 %v3706
    %4041 = vmatmul.f32.gmra.mxu0 %v3810
    %v4042 = vpop.f32.mrf.mxu0
    %v4043 = vadd.f32 %v4014, %v4042
    %4044 = vmatmul.f32.gmra.mxu0 %v3814
    %v4045 = vpop.f32.mrf.mxu0
    %v4046 = vadd.f32 %v4017, %v4045
    %4047 = vmatmul.f32.gmra.mxu0 %v3824
    %v4048 = vpop.f32.mrf.mxu0
    %v4049 = vadd.f32 %v4020, %v4048
    %4050 = vmatmul.f32.gmra.mxu0 %v3828
    %v4051 = vpop.f32.mrf.mxu0
    %v4052 = vadd.f32 %v4023, %v4051
    %4053 = vdwg.mxu0
    %4054 = vmatpush.msra.mxu0 0.0
    %4055 = vmatpush.msra.mxu0 0.0
    %4056 = vmatpush.msra.mxu0 0.0
    %4057 = vmatpush.msra.mxu0 0.0
    %4058 = vmatpush.msra.mxu0 0.0
    %4059 = vmatpush.msra.mxu0 0.0
    %4060 = vmatpush.msra.mxu0 0.0
    %4061 = vmatpush.msra.mxu0 0.0
    %4062 = vmatpush.msra.mxu0 0.0
    %4063 = vmatpush.msra.mxu0 0.0
    %4064 = vmatpush.msra.mxu0 %v3790
    %4065 = vmatpush.msra.mxu0 %v3786
    %4066 = vmatpush.msra.mxu0 %v3782
    %4067 = vmatpush.msra.mxu0 %v3778
    %4068 = vmatpush.msra.mxu0 %v3774
    %4069 = vmatpush.msra.mxu0 %v3770
    %4070 = vmatmul.f32.gmra.mxu0 %v3843
    %v4071 = vpop.f32.mrf.mxu0
    %v4072 = vadd.f32 %v4043, %v4071
    %4073 = vmatmul.f32.gmra.mxu0 %v3845
    %v4074 = vpop.f32.mrf.mxu0
    %v4075 = vadd.f32 %v4046, %v4074
    %4076 = vmatmul.f32.gmra.mxu0 %v3847
    %v4077 = vpop.f32.mrf.mxu0
    %v4078 = vadd.f32 %v4049, %v4077
    %4079 = vmatmul.f32.gmra.mxu0 %v3849
    %v4080 = vpop.f32.mrf.mxu0
    %v4081 = vadd.f32 %v4052, %v4080
    %4082 = vdwg.mxu0
    %4083 = vmatpush.msra.mxu0 %v3639
    %4084 = vmatpush.msra.mxu0 %v3635
    %4085 = vmatpush.msra.mxu0 %v3631
    %4086 = vmatpush.msra.mxu0 %v3627
    %4087 = vmatpush.msra.mxu0 %v3623
    %4088 = vmatpush.msra.mxu0 %v3619
    %4089 = vmatpush.msra.mxu0 %v3615
    %4090 = vmatpush.msra.mxu0 %v3611
    %4091 = vmatpush.msra.mxu0 %v3607
    %4092 = vmatpush.msra.mxu0 %v3603
    %4093 = vmatpush.msra.mxu0 %v3599
    %4094 = vmatpush.msra.mxu0 %v3595
    %4095 = vmatpush.msra.mxu0 %v3591
    %4096 = vmatpush.msra.mxu0 %v3587
    %4097 = vmatpush.msra.mxu0 %v3583
    %4098 = vmatpush.msra.mxu0 %v3579
    %4099 = vmatmul.f32.gmra.mxu0 %v3808
    %v4100 = vpop.f32.mrf.mxu0
    %v4101 = vadd.f32 0.0, %v4100
    %4102 = vmatmul.f32.gmra.mxu0 %v3812
    %v4103 = vpop.f32.mrf.mxu0
    %v4104 = vadd.f32 0.0, %v4103
    %4105 = vmatmul.f32.gmra.mxu0 %v3822
    %v4106 = vpop.f32.mrf.mxu0
    %v4107 = vadd.f32 0.0, %v4106
    %4108 = vmatmul.f32.gmra.mxu0 %v3826
    %v4109 = vpop.f32.mrf.mxu0
    %v4110 = vadd.f32 0.0, %v4109
    %4111 = vdwg.mxu0
    %4112 = vmatpush.msra.mxu0 %v3703
    %4113 = vmatpush.msra.mxu0 %v3699
    %4114 = vmatpush.msra.mxu0 %v3695
    %4115 = vmatpush.msra.mxu0 %v3691
    %4116 = vmatpush.msra.mxu0 %v3687
    %4117 = vmatpush.msra.mxu0 %v3683
    %4118 = vmatpush.msra.mxu0 %v3679
    %4119 = vmatpush.msra.mxu0 %v3675
    %4120 = vmatpush.msra.mxu0 %v3671
    %4121 = vmatpush.msra.mxu0 %v3667
    %4122 = vmatpush.msra.mxu0 %v3663
    %4123 = vmatpush.msra.mxu0 %v3659
    %4124 = vmatpush.msra.mxu0 %v3655
    %4125 = vmatpush.msra.mxu0 %v3651
    %4126 = vmatpush.msra.mxu0 %v3647
    %4127 = vmatpush.msra.mxu0 %v3643
    %4128 = vmatmul.f32.gmra.mxu0 %v3809
    %v4129 = vpop.f32.mrf.mxu0
    %v4130 = vadd.f32 %v4101, %v4129
    %4131 = vmatmul.f32.gmra.mxu0 %v3813
    %v4132 = vpop.f32.mrf.mxu0
    %v4133 = vadd.f32 %v4104, %v4132
    %4134 = vmatmul.f32.gmra.mxu0 %v3823
    %v4135 = vpop.f32.mrf.mxu0
    %v4136 = vadd.f32 %v4107, %v4135
    %4137 = vmatmul.f32.gmra.mxu0 %v3827
    %v4138 = vpop.f32.mrf.mxu0
    %v4139 = vadd.f32 %v4110, %v4138
    %4140 = vdwg.mxu0
    %4141 = vmatpush.msra.mxu0 %v3767
    %4142 = vmatpush.msra.mxu0 %v3763
    %4143 = vmatpush.msra.mxu0 %v3759
    %4144 = vmatpush.msra.mxu0 %v3755
    %4145 = vmatpush.msra.mxu0 %v3751
    %4146 = vmatpush.msra.mxu0 %v3747
    %4147 = vmatpush.msra.mxu0 %v3743
    %4148 = vmatpush.msra.mxu0 %v3739
    %4149 = vmatpush.msra.mxu0 %v3735
    %4150 = vmatpush.msra.mxu0 %v3731
    %4151 = vmatpush.msra.mxu0 %v3727
    %4152 = vmatpush.msra.mxu0 %v3723
    %4153 = vmatpush.msra.mxu0 %v3719
    %4154 = vmatpush.msra.mxu0 %v3715
    %4155 = vmatpush.msra.mxu0 %v3711
    %4156 = vmatpush.msra.mxu0 %v3707
    %4157 = vmatmul.f32.gmra.mxu0 %v3810
    %v4158 = vpop.f32.mrf.mxu0
    %v4159 = vadd.f32 %v4130, %v4158
    %4160 = vmatmul.f32.gmra.mxu0 %v3814
    %v4161 = vpop.f32.mrf.mxu0
    %v4162 = vadd.f32 %v4133, %v4161
    %4163 = vmatmul.f32.gmra.mxu0 %v3824
    %v4164 = vpop.f32.mrf.mxu0
    %v4165 = vadd.f32 %v4136, %v4164
    %4166 = vmatmul.f32.gmra.mxu0 %v3828
    %v4167 = vpop.f32.mrf.mxu0
    %v4168 = vadd.f32 %v4139, %v4167
    %4169 = vdwg.mxu0
    %4170 = vmatpush.msra.mxu0 0.0
    %4171 = vmatpush.msra.mxu0 0.0
    %4172 = vmatpush.msra.mxu0 0.0
    %4173 = vmatpush.msra.mxu0 0.0
    %4174 = vmatpush.msra.mxu0 0.0
    %4175 = vmatpush.msra.mxu0 0.0
    %4176 = vmatpush.msra.mxu0 0.0
    %4177 = vmatpush.msra.mxu0 0.0
    %4178 = vmatpush.msra.mxu0 0.0
    %4179 = vmatpush.msra.mxu0 0.0
    %4180 = vmatpush.msra.mxu0 %v3791
    %4181 = vmatpush.msra.mxu0 %v3787
    %4182 = vmatpush.msra.mxu0 %v3783
    %4183 = vmatpush.msra.mxu0 %v3779
    %4184 = vmatpush.msra.mxu0 %v3775
    %4185 = vmatpush.msra.mxu0 %v3771
    %4186 = vmatmul.f32.gmra.mxu0 %v3843
    %v4187 = vpop.f32.mrf.mxu0
    %v4188 = vadd.f32 %v4159, %v4187
    %4189 = vmatmul.f32.gmra.mxu0 %v3845
    %v4190 = vpop.f32.mrf.mxu0
    %v4191 = vadd.f32 %v4162, %v4190
    %4192 = vmatmul.f32.gmra.mxu0 %v3847
    %v4193 = vpop.f32.mrf.mxu0
    %v4194 = vadd.f32 %v4165, %v4193
    %4195 = vmatmul.f32.gmra.mxu0 %v3849
    %v4196 = vpop.f32.mrf.mxu0
    %v4197 = vadd.f32 %v4168, %v4196
    %4198 = vdwg.mxu0
    %4199 = vmatpush.msra.mxu0 %v3640
    %4200 = vmatpush.msra.mxu0 %v3636
    %4201 = vmatpush.msra.mxu0 %v3632
    %4202 = vmatpush.msra.mxu0 %v3628
    %4203 = vmatpush.msra.mxu0 %v3624
    %4204 = vmatpush.msra.mxu0 %v3620
    %4205 = vmatpush.msra.mxu0 %v3616
    %4206 = vmatpush.msra.mxu0 %v3612
    %4207 = vmatpush.msra.mxu0 %v3608
    %4208 = vmatpush.msra.mxu0 %v3604
    %4209 = vmatpush.msra.mxu0 %v3600
    %4210 = vmatpush.msra.mxu0 %v3596
    %4211 = vmatpush.msra.mxu0 %v3592
    %4212 = vmatpush.msra.mxu0 %v3588
    %4213 = vmatpush.msra.mxu0 %v3584
    %4214 = vmatpush.msra.mxu0 %v3580
    %4215 = vmatmul.f32.gmra.mxu0 %v3808
    %v4216 = vpop.f32.mrf.mxu0
    %v4217 = vadd.f32 0.0, %v4216
    %4218 = vmatmul.f32.gmra.mxu0 %v3812
    %v4219 = vpop.f32.mrf.mxu0
    %v4220 = vadd.f32 0.0, %v4219
    %4221 = vmatmul.f32.gmra.mxu0 %v3822
    %v4222 = vpop.f32.mrf.mxu0
    %v4223 = vadd.f32 0.0, %v4222
    %4224 = vmatmul.f32.gmra.mxu0 %v3826
    %v4225 = vpop.f32.mrf.mxu0
    %v4226 = vadd.f32 0.0, %v4225
    %4227 = vdwg.mxu0
    %4228 = vmatpush.msra.mxu0 %v3704
    %4229 = vmatpush.msra.mxu0 %v3700
    %4230 = vmatpush.msra.mxu0 %v3696
    %4231 = vmatpush.msra.mxu0 %v3692
    %4232 = vmatpush.msra.mxu0 %v3688
    %4233 = vmatpush.msra.mxu0 %v3684
    %4234 = vmatpush.msra.mxu0 %v3680
    %4235 = vmatpush.msra.mxu0 %v3676
    %4236 = vmatpush.msra.mxu0 %v3672
    %4237 = vmatpush.msra.mxu0 %v3668
    %4238 = vmatpush.msra.mxu0 %v3664
    %4239 = vmatpush.msra.mxu0 %v3660
    %4240 = vmatpush.msra.mxu0 %v3656
    %4241 = vmatpush.msra.mxu0 %v3652
    %4242 = vmatpush.msra.mxu0 %v3648
    %4243 = vmatpush.msra.mxu0 %v3644
    %4244 = vmatmul.f32.gmra.mxu0 %v3809
    %v4245 = vpop.f32.mrf.mxu0
    %v4246 = vadd.f32 %v4217, %v4245
    %4247 = vmatmul.f32.gmra.mxu0 %v3813
    %v4248 = vpop.f32.mrf.mxu0
    %v4249 = vadd.f32 %v4220, %v4248
    %4250 = vmatmul.f32.gmra.mxu0 %v3823
    %v4251 = vpop.f32.mrf.mxu0
    %v4252 = vadd.f32 %v4223, %v4251
    %4253 = vmatmul.f32.gmra.mxu0 %v3827
    %v4254 = vpop.f32.mrf.mxu0
    %v4255 = vadd.f32 %v4226, %v4254
    %4256 = vdwg.mxu0
    %4257 = vmatpush.msra.mxu0 %v3768
    %4258 = vmatpush.msra.mxu0 %v3764
    %4259 = vmatpush.msra.mxu0 %v3760
    %4260 = vmatpush.msra.mxu0 %v3756
    %4261 = vmatpush.msra.mxu0 %v3752
    %4262 = vmatpush.msra.mxu0 %v3748
    %4263 = vmatpush.msra.mxu0 %v3744
    %4264 = vmatpush.msra.mxu0 %v3740
    %4265 = vmatpush.msra.mxu0 %v3736
    %4266 = vmatpush.msra.mxu0 %v3732
    %4267 = vmatpush.msra.mxu0 %v3728
    %4268 = vmatpush.msra.mxu0 %v3724
    %4269 = vmatpush.msra.mxu0 %v3720
    %4270 = vmatpush.msra.mxu0 %v3716
    %4271 = vmatpush.msra.mxu0 %v3712
    %4272 = vmatpush.msra.mxu0 %v3708
    %4273 = vmatmul.f32.gmra.mxu0 %v3810
    %v4274 = vpop.f32.mrf.mxu0
    %v4275 = vadd.f32 %v4246, %v4274
    %4276 = vmatmul.f32.gmra.mxu0 %v3814
    %v4277 = vpop.f32.mrf.mxu0
    %v4278 = vadd.f32 %v4249, %v4277
    %4279 = vmatmul.f32.gmra.mxu0 %v3824
    %v4280 = vpop.f32.mrf.mxu0
    %v4281 = vadd.f32 %v4252, %v4280
    %4282 = vmatmul.f32.gmra.mxu0 %v3828
    %v4283 = vpop.f32.mrf.mxu0
    %v4284 = vadd.f32 %v4255, %v4283
    %4285 = vdwg.mxu0
    %4286 = vmatpush.msra.mxu0 0.0
    %4287 = vmatpush.msra.mxu0 0.0
    %4288 = vmatpush.msra.mxu0 0.0
    %4289 = vmatpush.msra.mxu0 0.0
    %4290 = vmatpush.msra.mxu0 0.0
    %4291 = vmatpush.msra.mxu0 0.0
    %4292 = vmatpush.msra.mxu0 0.0
    %4293 = vmatpush.msra.mxu0 0.0
    %4294 = vmatpush.msra.mxu0 0.0
    %4295 = vmatpush.msra.mxu0 0.0
    %4296 = vmatpush.msra.mxu0 %v3792
    %4297 = vmatpush.msra.mxu0 %v3788
    %4298 = vmatpush.msra.mxu0 %v3784
    %4299 = vmatpush.msra.mxu0 %v3780
    %4300 = vmatpush.msra.mxu0 %v3776
    %4301 = vmatpush.msra.mxu0 %v3772
    %4302 = vmatmul.f32.gmra.mxu0 %v3843
    %v4303 = vpop.f32.mrf.mxu0
    %v4304 = vadd.f32 %v4275, %v4303
    %4305 = vmatmul.f32.gmra.mxu0 %v3845
    %v4306 = vpop.f32.mrf.mxu0
    %v4307 = vadd.f32 %v4278, %v4306
    %4308 = vmatmul.f32.gmra.mxu0 %v3847
    %v4309 = vpop.f32.mrf.mxu0
    %v4310 = vadd.f32 %v4281, %v4309
    %4311 = vmatmul.f32.gmra.mxu0 %v3849
    %v4312 = vpop.f32.mrf.mxu0
    %v4313 = vadd.f32 %v4284, %v4312
    %4314 = vdwg.mxu0
    %4315 = vst [vmem:[#allocation1] ss:$4 sm:$0xff] %v3255
    %s4316 = scalar_lea.vmem [#allocation1], 1
    %4317 = vst [vmem:[%s4316] ss:$4 sm:$0xff] %v3259
    %s4318 = scalar_lea.vmem [#allocation1], 2
    %4319 = vst [vmem:[%s4318] ss:$4 sm:$0xff] %v3263
    %s4320 = scalar_lea.vmem [#allocation1], 3
    %4321 = vst [vmem:[%s4320] ss:$4 sm:$0xff] %v3267
    %s4322 = scalar_lea.vmem [#allocation1], 32
    %4323 = vst [vmem:[%s4322] ss:$4 sm:$0xff] %v3270
    %s4324 = scalar_lea.vmem [#allocation1], 33
    %4325 = vst [vmem:[%s4324] ss:$4 sm:$0xff] %v3274
    %s4326 = scalar_lea.vmem [#allocation1], 34
    %4327 = vst [vmem:[%s4326] ss:$4 sm:$0xff] %v3278
    %s4328 = scalar_lea.vmem [#allocation1], 35
    %4329 = vst [vmem:[%s4328] ss:$4 sm:$0xff] %v3281
    %v4330 = vld.sshfl [vmem:[#allocation1] sm:$0xff pattern:$0x73625140]
    %v4331 = vld.sshfl [vmem:[#allocation1 + $0x8] sm:$0xff pattern:$0x73625140]
    %v4332 = vld.sshfl [vmem:[#allocation1 + $0x10] sm:$0xff pattern:$0x73625140]
    %v4333 = vld.sshfl [vmem:[#allocation1 + $0x18] sm:$0xff pattern:$0x73625140]
    %v4334 = vld.sshfl [vmem:[#allocation1 + $0x20] sm:$0xff pattern:$0x73625140]
    %v4335 = vld.sshfl [vmem:[#allocation1 + $0x28] sm:$0xff pattern:$0x73625140]
    %v4336 = vld.sshfl [vmem:[#allocation1 + $0x30] sm:$0xff pattern:$0x73625140]
    %v4337 = vld.sshfl [vmem:[#allocation1 + $0x38] sm:$0xff pattern:$0x73625140]
    %4338 = vst [vmem:[#allocation1] ss:$4 sm:$0xff] %v3285
    %4339 = vst [vmem:[%s4316] ss:$4 sm:$0xff] %v3289
    %4340 = vst [vmem:[%s4318] ss:$4 sm:$0xff] %v3293
    %4341 = vst [vmem:[%s4320] ss:$4 sm:$0xff] %v3296
    %4342 = vst [vmem:[%s4322] ss:$4 sm:$0xff] %v3300
    %4343 = vst [vmem:[%s4324] ss:$4 sm:$0xff] %v3304
    %v4344 = vld.sshfl [vmem:[#allocation1] sm:$0xff pattern:$0x73625140]
    %v4345 = vld.sshfl [vmem:[#allocation1 + $0x8] sm:$0xff pattern:$0x73625140]
    %v4346 = vld.sshfl [vmem:[#allocation1 + $0x10] sm:$0xff pattern:$0x73625140]
    %v4347 = vld.sshfl [vmem:[#allocation1 + $0x18] sm:$0xff pattern:$0x73625140]
    %v4348 = vld.sshfl [vmem:[#allocation1 + $0x20] sm:$0xff pattern:$0x73625140]
    %v4349 = vld.sshfl [vmem:[#allocation1 + $0x28] sm:$0xff pattern:$0x73625140]
    %v4350 = vld.sshfl [vmem:[#allocation1 + $0x30] sm:$0xff pattern:$0x73625140]
    %v4351 = vld.sshfl [vmem:[#allocation1 + $0x38] sm:$0xff pattern:$0x73625140]
    %v4364 = vsel %vm3842, %v4333, 0
    %v4366 = vsel %vm3842, %v4337, 0
    %v4368 = vsel %vm3842, %v4347, 0
    %v4370 = vsel %vm3842, %v4351, 0
    %4372 = vmatpush.msra.mxu0 %v3365
    %4373 = vmatpush.msra.mxu0 %v3361
    %4374 = vmatpush.msra.mxu0 %v3357
    %4375 = vmatpush.msra.mxu0 %v3353
    %4376 = vmatpush.msra.mxu0 %v3349
    %4377 = vmatpush.msra.mxu0 %v3345
    %4378 = vmatpush.msra.mxu0 %v3341
    %4379 = vmatpush.msra.mxu0 %v3337
    %4380 = vmatpush.msra.mxu0 %v3333
    %4381 = vmatpush.msra.mxu0 %v3329
    %4382 = vmatpush.msra.mxu0 %v3325
    %4383 = vmatpush.msra.mxu0 %v3321
    %4384 = vmatpush.msra.mxu0 %v3317
    %4385 = vmatpush.msra.mxu0 %v3313
    %4386 = vmatpush.msra.mxu0 %v3309
    %4387 = vmatpush.msra.mxu0 %v3305
    %4388 = vmatmul.f32.gmra.mxu0 %v4330
    %v4389 = vpop.f32.mrf.mxu0
    %v4390 = vadd.f32 %v3956, %v4389
    %4391 = vmatmul.f32.gmra.mxu0 %v4334
    %v4392 = vpop.f32.mrf.mxu0
    %v4393 = vadd.f32 %v3959, %v4392
    %4394 = vmatmul.f32.gmra.mxu0 %v4344
    %v4395 = vpop.f32.mrf.mxu0
    %v4396 = vadd.f32 %v3962, %v4395
    %4397 = vmatmul.f32.gmra.mxu0 %v4348
    %v4398 = vpop.f32.mrf.mxu0
    %v4399 = vadd.f32 %v3965, %v4398
    %4400 = vdwg.mxu0
    %4401 = vmatpush.msra.mxu0 %v3429
    %4402 = vmatpush.msra.mxu0 %v3425
    %4403 = vmatpush.msra.mxu0 %v3421
    %4404 = vmatpush.msra.mxu0 %v3417
    %4405 = vmatpush.msra.mxu0 %v3413
    %4406 = vmatpush.msra.mxu0 %v3409
    %4407 = vmatpush.msra.mxu0 %v3405
    %4408 = vmatpush.msra.mxu0 %v3401
    %4409 = vmatpush.msra.mxu0 %v3397
    %4410 = vmatpush.msra.mxu0 %v3393
    %4411 = vmatpush.msra.mxu0 %v3389
    %4412 = vmatpush.msra.mxu0 %v3385
    %4413 = vmatpush.msra.mxu0 %v3381
    %4414 = vmatpush.msra.mxu0 %v3377
    %4415 = vmatpush.msra.mxu0 %v3373
    %4416 = vmatpush.msra.mxu0 %v3369
    %4417 = vmatmul.f32.gmra.mxu0 %v4331
    %v4418 = vpop.f32.mrf.mxu0
    %v4419 = vadd.f32 %v4390, %v4418
    %4420 = vmatmul.f32.gmra.mxu0 %v4335
    %v4421 = vpop.f32.mrf.mxu0
    %v4422 = vadd.f32 %v4393, %v4421
    %4423 = vmatmul.f32.gmra.mxu0 %v4345
    %v4424 = vpop.f32.mrf.mxu0
    %v4425 = vadd.f32 %v4396, %v4424
    %4426 = vmatmul.f32.gmra.mxu0 %v4349
    %v4427 = vpop.f32.mrf.mxu0
    %v4428 = vadd.f32 %v4399, %v4427
    %4429 = vdwg.mxu0
    %4430 = vmatpush.msra.mxu0 %v3493
    %4431 = vmatpush.msra.mxu0 %v3489
    %4432 = vmatpush.msra.mxu0 %v3485
    %4433 = vmatpush.msra.mxu0 %v3481
    %4434 = vmatpush.msra.mxu0 %v3477
    %4435 = vmatpush.msra.mxu0 %v3473
    %4436 = vmatpush.msra.mxu0 %v3469
    %4437 = vmatpush.msra.mxu0 %v3465
    %4438 = vmatpush.msra.mxu0 %v3461
    %4439 = vmatpush.msra.mxu0 %v3457
    %4440 = vmatpush.msra.mxu0 %v3453
    %4441 = vmatpush.msra.mxu0 %v3449
    %4442 = vmatpush.msra.mxu0 %v3445
    %4443 = vmatpush.msra.mxu0 %v3441
    %4444 = vmatpush.msra.mxu0 %v3437
    %4445 = vmatpush.msra.mxu0 %v3433
    %4446 = vmatmul.f32.gmra.mxu0 %v4332
    %v4447 = vpop.f32.mrf.mxu0
    %v4448 = vadd.f32 %v4419, %v4447
    %4449 = vmatmul.f32.gmra.mxu0 %v4336
    %v4450 = vpop.f32.mrf.mxu0
    %v4451 = vadd.f32 %v4422, %v4450
    %4452 = vmatmul.f32.gmra.mxu0 %v4346
    %v4453 = vpop.f32.mrf.mxu0
    %v4454 = vadd.f32 %v4425, %v4453
    %4455 = vmatmul.f32.gmra.mxu0 %v4350
    %v4456 = vpop.f32.mrf.mxu0
    %v4457 = vadd.f32 %v4428, %v4456
    %4458 = vdwg.mxu0
    %4459 = vmatpush.msra.mxu0 0.0
    %4460 = vmatpush.msra.mxu0 0.0
    %4461 = vmatpush.msra.mxu0 0.0
    %4462 = vmatpush.msra.mxu0 0.0
    %4463 = vmatpush.msra.mxu0 0.0
    %4464 = vmatpush.msra.mxu0 0.0
    %4465 = vmatpush.msra.mxu0 0.0
    %4466 = vmatpush.msra.mxu0 0.0
    %4467 = vmatpush.msra.mxu0 0.0
    %4468 = vmatpush.msra.mxu0 0.0
    %4469 = vmatpush.msra.mxu0 %v3517
    %4470 = vmatpush.msra.mxu0 %v3513
    %4471 = vmatpush.msra.mxu0 %v3509
    %4472 = vmatpush.msra.mxu0 %v3505
    %4473 = vmatpush.msra.mxu0 %v3501
    %4474 = vmatpush.msra.mxu0 %v3497
    %4475 = vmatmul.f32.gmra.mxu0 %v4364
    %v4476 = vpop.f32.mrf.mxu0
    %v4477 = vadd.f32 %v4448, %v4476
    %4478 = vmatmul.f32.gmra.mxu0 %v4366
    %v4479 = vpop.f32.mrf.mxu0
    %v4480 = vadd.f32 %v4451, %v4479
    %4481 = vmatmul.f32.gmra.mxu0 %v4368
    %v4482 = vpop.f32.mrf.mxu0
    %v4483 = vadd.f32 %v4454, %v4482
    %4484 = vmatmul.f32.gmra.mxu0 %v4370
    %v4485 = vpop.f32.mrf.mxu0
    %v4486 = vadd.f32 %v4457, %v4485
    %4487 = vdwg.mxu0
    %4488 = vmatpush.msra.mxu0 %v3366
    %4489 = vmatpush.msra.mxu0 %v3362
    %4490 = vmatpush.msra.mxu0 %v3358
    %4491 = vmatpush.msra.mxu0 %v3354
    %4492 = vmatpush.msra.mxu0 %v3350
    %4493 = vmatpush.msra.mxu0 %v3346
    %4494 = vmatpush.msra.mxu0 %v3342
    %4495 = vmatpush.msra.mxu0 %v3338
    %4496 = vmatpush.msra.mxu0 %v3334
    %4497 = vmatpush.msra.mxu0 %v3330
    %4498 = vmatpush.msra.mxu0 %v3326
    %4499 = vmatpush.msra.mxu0 %v3322
    %4500 = vmatpush.msra.mxu0 %v3318
    %4501 = vmatpush.msra.mxu0 %v3314
    %4502 = vmatpush.msra.mxu0 %v3310
    %4503 = vmatpush.msra.mxu0 %v3306
    %4504 = vmatmul.f32.gmra.mxu0 %v4330
    %v4505 = vpop.f32.mrf.mxu0
    %v4506 = vadd.f32 %v4072, %v4505
    %4507 = vmatmul.f32.gmra.mxu0 %v4334
    %v4508 = vpop.f32.mrf.mxu0
    %v4509 = vadd.f32 %v4075, %v4508
    %4510 = vmatmul.f32.gmra.mxu0 %v4344
    %v4511 = vpop.f32.mrf.mxu0
    %v4512 = vadd.f32 %v4078, %v4511
    %4513 = vmatmul.f32.gmra.mxu0 %v4348
    %v4514 = vpop.f32.mrf.mxu0
    %v4515 = vadd.f32 %v4081, %v4514
    %4516 = vdwg.mxu0
    %4517 = vmatpush.msra.mxu0 %v3430
    %4518 = vmatpush.msra.mxu0 %v3426
    %4519 = vmatpush.msra.mxu0 %v3422
    %4520 = vmatpush.msra.mxu0 %v3418
    %4521 = vmatpush.msra.mxu0 %v3414
    %4522 = vmatpush.msra.mxu0 %v3410
    %4523 = vmatpush.msra.mxu0 %v3406
    %4524 = vmatpush.msra.mxu0 %v3402
    %4525 = vmatpush.msra.mxu0 %v3398
    %4526 = vmatpush.msra.mxu0 %v3394
    %4527 = vmatpush.msra.mxu0 %v3390
    %4528 = vmatpush.msra.mxu0 %v3386
    %4529 = vmatpush.msra.mxu0 %v3382
    %4530 = vmatpush.msra.mxu0 %v3378
    %4531 = vmatpush.msra.mxu0 %v3374
    %4532 = vmatpush.msra.mxu0 %v3370
    %4533 = vmatmul.f32.gmra.mxu0 %v4331
    %v4534 = vpop.f32.mrf.mxu0
    %v4535 = vadd.f32 %v4506, %v4534
    %4536 = vmatmul.f32.gmra.mxu0 %v4335
    %v4537 = vpop.f32.mrf.mxu0
    %v4538 = vadd.f32 %v4509, %v4537
    %4539 = vmatmul.f32.gmra.mxu0 %v4345
    %v4540 = vpop.f32.mrf.mxu0
    %v4541 = vadd.f32 %v4512, %v4540
    %4542 = vmatmul.f32.gmra.mxu0 %v4349
    %v4543 = vpop.f32.mrf.mxu0
    %v4544 = vadd.f32 %v4515, %v4543
    %4545 = vdwg.mxu0
    %4546 = vmatpush.msra.mxu0 %v3494
    %4547 = vmatpush.msra.mxu0 %v3490
    %4548 = vmatpush.msra.mxu0 %v3486
    %4549 = vmatpush.msra.mxu0 %v3482
    %4550 = vmatpush.msra.mxu0 %v3478
    %4551 = vmatpush.msra.mxu0 %v3474
    %4552 = vmatpush.msra.mxu0 %v3470
    %4553 = vmatpush.msra.mxu0 %v3466
    %4554 = vmatpush.msra.mxu0 %v3462
    %4555 = vmatpush.msra.mxu0 %v3458
    %4556 = vmatpush.msra.mxu0 %v3454
    %4557 = vmatpush.msra.mxu0 %v3450
    %4558 = vmatpush.msra.mxu0 %v3446
    %4559 = vmatpush.msra.mxu0 %v3442
    %4560 = vmatpush.msra.mxu0 %v3438
    %4561 = vmatpush.msra.mxu0 %v3434
    %4562 = vmatmul.f32.gmra.mxu0 %v4332
    %v4563 = vpop.f32.mrf.mxu0
    %v4564 = vadd.f32 %v4535, %v4563
    %4565 = vmatmul.f32.gmra.mxu0 %v4336
    %v4566 = vpop.f32.mrf.mxu0
    %v4567 = vadd.f32 %v4538, %v4566
    %4568 = vmatmul.f32.gmra.mxu0 %v4346
    %v4569 = vpop.f32.mrf.mxu0
    %v4570 = vadd.f32 %v4541, %v4569
    %4571 = vmatmul.f32.gmra.mxu0 %v4350
    %v4572 = vpop.f32.mrf.mxu0
    %v4573 = vadd.f32 %v4544, %v4572
    %4574 = vdwg.mxu0
    %4575 = vmatpush.msra.mxu0 0.0
    %4576 = vmatpush.msra.mxu0 0.0
    %4577 = vmatpush.msra.mxu0 0.0
    %4578 = vmatpush.msra.mxu0 0.0
    %4579 = vmatpush.msra.mxu0 0.0
    %4580 = vmatpush.msra.mxu0 0.0
    %4581 = vmatpush.msra.mxu0 0.0
    %4582 = vmatpush.msra.mxu0 0.0
    %4583 = vmatpush.msra.mxu0 0.0
    %4584 = vmatpush.msra.mxu0 0.0
    %4585 = vmatpush.msra.mxu0 %v3518
    %4586 = vmatpush.msra.mxu0 %v3514
    %4587 = vmatpush.msra.mxu0 %v3510
    %4588 = vmatpush.msra.mxu0 %v3506
    %4589 = vmatpush.msra.mxu0 %v3502
    %4590 = vmatpush.msra.mxu0 %v3498
    %4591 = vmatmul.f32.gmra.mxu0 %v4364
    %v4592 = vpop.f32.mrf.mxu0
    %v4593 = vadd.f32 %v4564, %v4592
    %4594 = vmatmul.f32.gmra.mxu0 %v4366
    %v4595 = vpop.f32.mrf.mxu0
    %v4596 = vadd.f32 %v4567, %v4595
    %4597 = vmatmul.f32.gmra.mxu0 %v4368
    %v4598 = vpop.f32.mrf.mxu0
    %v4599 = vadd.f32 %v4570, %v4598
    %4600 = vmatmul.f32.gmra.mxu0 %v4370
    %v4601 = vpop.f32.mrf.mxu0
    %v4602 = vadd.f32 %v4573, %v4601
    %4603 = vdwg.mxu0
    %4604 = vmatpush.msra.mxu0 %v3367
    %4605 = vmatpush.msra.mxu0 %v3363
    %4606 = vmatpush.msra.mxu0 %v3359
    %4607 = vmatpush.msra.mxu0 %v3355
    %4608 = vmatpush.msra.mxu0 %v3351
    %4609 = vmatpush.msra.mxu0 %v3347
    %4610 = vmatpush.msra.mxu0 %v3343
    %4611 = vmatpush.msra.mxu0 %v3339
    %4612 = vmatpush.msra.mxu0 %v3335
    %4613 = vmatpush.msra.mxu0 %v3331
    %4614 = vmatpush.msra.mxu0 %v3327
    %4615 = vmatpush.msra.mxu0 %v3323
    %4616 = vmatpush.msra.mxu0 %v3319
    %4617 = vmatpush.msra.mxu0 %v3315
    %4618 = vmatpush.msra.mxu0 %v3311
    %4619 = vmatpush.msra.mxu0 %v3307
    %4620 = vmatmul.f32.gmra.mxu0 %v4330
    %v4621 = vpop.f32.mrf.mxu0
    %v4622 = vadd.f32 %v4188, %v4621
    %4623 = vmatmul.f32.gmra.mxu0 %v4334
    %v4624 = vpop.f32.mrf.mxu0
    %v4625 = vadd.f32 %v4191, %v4624
    %4626 = vmatmul.f32.gmra.mxu0 %v4344
    %v4627 = vpop.f32.mrf.mxu0
    %v4628 = vadd.f32 %v4194, %v4627
    %4629 = vmatmul.f32.gmra.mxu0 %v4348
    %v4630 = vpop.f32.mrf.mxu0
    %v4631 = vadd.f32 %v4197, %v4630
    %4632 = vdwg.mxu0
    %4633 = vmatpush.msra.mxu0 %v3431
    %4634 = vmatpush.msra.mxu0 %v3427
    %4635 = vmatpush.msra.mxu0 %v3423
    %4636 = vmatpush.msra.mxu0 %v3419
    %4637 = vmatpush.msra.mxu0 %v3415
    %4638 = vmatpush.msra.mxu0 %v3411
    %4639 = vmatpush.msra.mxu0 %v3407
    %4640 = vmatpush.msra.mxu0 %v3403
    %4641 = vmatpush.msra.mxu0 %v3399
    %4642 = vmatpush.msra.mxu0 %v3395
    %4643 = vmatpush.msra.mxu0 %v3391
    %4644 = vmatpush.msra.mxu0 %v3387
    %4645 = vmatpush.msra.mxu0 %v3383
    %4646 = vmatpush.msra.mxu0 %v3379
    %4647 = vmatpush.msra.mxu0 %v3375
    %4648 = vmatpush.msra.mxu0 %v3371
    %4649 = vmatmul.f32.gmra.mxu0 %v4331
    %v4650 = vpop.f32.mrf.mxu0
    %v4651 = vadd.f32 %v4622, %v4650
    %4652 = vmatmul.f32.gmra.mxu0 %v4335
    %v4653 = vpop.f32.mrf.mxu0
    %v4654 = vadd.f32 %v4625, %v4653
    %4655 = vmatmul.f32.gmra.mxu0 %v4345
    %v4656 = vpop.f32.mrf.mxu0
    %v4657 = vadd.f32 %v4628, %v4656
    %4658 = vmatmul.f32.gmra.mxu0 %v4349
    %v4659 = vpop.f32.mrf.mxu0
    %v4660 = vadd.f32 %v4631, %v4659
    %4661 = vdwg.mxu0
    %4662 = vmatpush.msra.mxu0 %v3495
    %4663 = vmatpush.msra.mxu0 %v3491
    %4664 = vmatpush.msra.mxu0 %v3487
    %4665 = vmatpush.msra.mxu0 %v3483
    %4666 = vmatpush.msra.mxu0 %v3479
    %4667 = vmatpush.msra.mxu0 %v3475
    %4668 = vmatpush.msra.mxu0 %v3471
    %4669 = vmatpush.msra.mxu0 %v3467
    %4670 = vmatpush.msra.mxu0 %v3463
    %4671 = vmatpush.msra.mxu0 %v3459
    %4672 = vmatpush.msra.mxu0 %v3455
    %4673 = vmatpush.msra.mxu0 %v3451
    %4674 = vmatpush.msra.mxu0 %v3447
    %4675 = vmatpush.msra.mxu0 %v3443
    %4676 = vmatpush.msra.mxu0 %v3439
    %4677 = vmatpush.msra.mxu0 %v3435
    %4678 = vmatmul.f32.gmra.mxu0 %v4332
    %v4679 = vpop.f32.mrf.mxu0
    %v4680 = vadd.f32 %v4651, %v4679
    %4681 = vmatmul.f32.gmra.mxu0 %v4336
    %v4682 = vpop.f32.mrf.mxu0
    %v4683 = vadd.f32 %v4654, %v4682
    %4684 = vmatmul.f32.gmra.mxu0 %v4346
    %v4685 = vpop.f32.mrf.mxu0
    %v4686 = vadd.f32 %v4657, %v4685
    %4687 = vmatmul.f32.gmra.mxu0 %v4350
    %v4688 = vpop.f32.mrf.mxu0
    %v4689 = vadd.f32 %v4660, %v4688
    %4690 = vdwg.mxu0
    %4691 = vmatpush.msra.mxu0 0.0
    %4692 = vmatpush.msra.mxu0 0.0
    %4693 = vmatpush.msra.mxu0 0.0
    %4694 = vmatpush.msra.mxu0 0.0
    %4695 = vmatpush.msra.mxu0 0.0
    %4696 = vmatpush.msra.mxu0 0.0
    %4697 = vmatpush.msra.mxu0 0.0
    %4698 = vmatpush.msra.mxu0 0.0
    %4699 = vmatpush.msra.mxu0 0.0
    %4700 = vmatpush.msra.mxu0 0.0
    %4701 = vmatpush.msra.mxu0 %v3519
    %4702 = vmatpush.msra.mxu0 %v3515
    %4703 = vmatpush.msra.mxu0 %v3511
    %4704 = vmatpush.msra.mxu0 %v3507
    %4705 = vmatpush.msra.mxu0 %v3503
    %4706 = vmatpush.msra.mxu0 %v3499
    %4707 = vmatmul.f32.gmra.mxu0 %v4364
    %v4708 = vpop.f32.mrf.mxu0
    %v4709 = vadd.f32 %v4680, %v4708
    %4710 = vmatmul.f32.gmra.mxu0 %v4366
    %v4711 = vpop.f32.mrf.mxu0
    %v4712 = vadd.f32 %v4683, %v4711
    %4713 = vmatmul.f32.gmra.mxu0 %v4368
    %v4714 = vpop.f32.mrf.mxu0
    %v4715 = vadd.f32 %v4686, %v4714
    %4716 = vmatmul.f32.gmra.mxu0 %v4370
    %v4717 = vpop.f32.mrf.mxu0
    %v4718 = vadd.f32 %v4689, %v4717
    %4719 = vdwg.mxu0
    %4720 = vmatpush.msra.mxu0 %v3368
    %4721 = vmatpush.msra.mxu0 %v3364
    %4722 = vmatpush.msra.mxu0 %v3360
    %4723 = vmatpush.msra.mxu0 %v3356
    %4724 = vmatpush.msra.mxu0 %v3352
    %4725 = vmatpush.msra.mxu0 %v3348
    %4726 = vmatpush.msra.mxu0 %v3344
    %4727 = vmatpush.msra.mxu0 %v3340
    %4728 = vmatpush.msra.mxu0 %v3336
    %4729 = vmatpush.msra.mxu0 %v3332
    %4730 = vmatpush.msra.mxu0 %v3328
    %4731 = vmatpush.msra.mxu0 %v3324
    %4732 = vmatpush.msra.mxu0 %v3320
    %4733 = vmatpush.msra.mxu0 %v3316
    %4734 = vmatpush.msra.mxu0 %v3312
    %4735 = vmatpush.msra.mxu0 %v3308
    %4736 = vmatmul.f32.gmra.mxu0 %v4330
    %v4737 = vpop.f32.mrf.mxu0
    %v4738 = vadd.f32 %v4304, %v4737
    %4739 = vmatmul.f32.gmra.mxu0 %v4334
    %v4740 = vpop.f32.mrf.mxu0
    %v4741 = vadd.f32 %v4307, %v4740
    %4742 = vmatmul.f32.gmra.mxu0 %v4344
    %v4743 = vpop.f32.mrf.mxu0
    %v4744 = vadd.f32 %v4310, %v4743
    %4745 = vmatmul.f32.gmra.mxu0 %v4348
    %v4746 = vpop.f32.mrf.mxu0
    %v4747 = vadd.f32 %v4313, %v4746
    %4748 = vdwg.mxu0
    %4749 = vmatpush.msra.mxu0 %v3432
    %4750 = vmatpush.msra.mxu0 %v3428
    %4751 = vmatpush.msra.mxu0 %v3424
    %4752 = vmatpush.msra.mxu0 %v3420
    %4753 = vmatpush.msra.mxu0 %v3416
    %4754 = vmatpush.msra.mxu0 %v3412
    %4755 = vmatpush.msra.mxu0 %v3408
    %4756 = vmatpush.msra.mxu0 %v3404
    %4757 = vmatpush.msra.mxu0 %v3400
    %4758 = vmatpush.msra.mxu0 %v3396
    %4759 = vmatpush.msra.mxu0 %v3392
    %4760 = vmatpush.msra.mxu0 %v3388
    %4761 = vmatpush.msra.mxu0 %v3384
    %4762 = vmatpush.msra.mxu0 %v3380
    %4763 = vmatpush.msra.mxu0 %v3376
    %4764 = vmatpush.msra.mxu0 %v3372
    %4765 = vmatmul.f32.gmra.mxu0 %v4331
    %v4766 = vpop.f32.mrf.mxu0
    %v4767 = vadd.f32 %v4738, %v4766
    %4768 = vmatmul.f32.gmra.mxu0 %v4335
    %v4769 = vpop.f32.mrf.mxu0
    %v4770 = vadd.f32 %v4741, %v4769
    %4771 = vmatmul.f32.gmra.mxu0 %v4345
    %v4772 = vpop.f32.mrf.mxu0
    %v4773 = vadd.f32 %v4744, %v4772
    %4774 = vmatmul.f32.gmra.mxu0 %v4349
    %v4775 = vpop.f32.mrf.mxu0
    %v4776 = vadd.f32 %v4747, %v4775
    %4777 = vdwg.mxu0
    %4778 = vmatpush.msra.mxu0 %v3496
    %4779 = vmatpush.msra.mxu0 %v3492
    %4780 = vmatpush.msra.mxu0 %v3488
    %4781 = vmatpush.msra.mxu0 %v3484
    %4782 = vmatpush.msra.mxu0 %v3480
    %4783 = vmatpush.msra.mxu0 %v3476
    %4784 = vmatpush.msra.mxu0 %v3472
    %4785 = vmatpush.msra.mxu0 %v3468
    %4786 = vmatpush.msra.mxu0 %v3464
    %4787 = vmatpush.msra.mxu0 %v3460
    %4788 = vmatpush.msra.mxu0 %v3456
    %4789 = vmatpush.msra.mxu0 %v3452
    %4790 = vmatpush.msra.mxu0 %v3448
    %4791 = vmatpush.msra.mxu0 %v3444
    %4792 = vmatpush.msra.mxu0 %v3440
    %4793 = vmatpush.msra.mxu0 %v3436
    %4794 = vmatmul.f32.gmra.mxu0 %v4332
    %v4795 = vpop.f32.mrf.mxu0
    %v4796 = vadd.f32 %v4767, %v4795
    %4797 = vmatmul.f32.gmra.mxu0 %v4336
    %v4798 = vpop.f32.mrf.mxu0
    %v4799 = vadd.f32 %v4770, %v4798
    %4800 = vmatmul.f32.gmra.mxu0 %v4346
    %v4801 = vpop.f32.mrf.mxu0
    %v4802 = vadd.f32 %v4773, %v4801
    %4803 = vmatmul.f32.gmra.mxu0 %v4350
    %v4804 = vpop.f32.mrf.mxu0
    %v4805 = vadd.f32 %v4776, %v4804
    %4806 = vdwg.mxu0
    %4807 = vmatpush.msra.mxu0 0.0
    %4808 = vmatpush.msra.mxu0 0.0
    %4809 = vmatpush.msra.mxu0 0.0
    %4810 = vmatpush.msra.mxu0 0.0
    %4811 = vmatpush.msra.mxu0 0.0
    %4812 = vmatpush.msra.mxu0 0.0
    %4813 = vmatpush.msra.mxu0 0.0
    %4814 = vmatpush.msra.mxu0 0.0
    %4815 = vmatpush.msra.mxu0 0.0
    %4816 = vmatpush.msra.mxu0 0.0
    %4817 = vmatpush.msra.mxu0 %v3520
    %4818 = vmatpush.msra.mxu0 %v3516
    %4819 = vmatpush.msra.mxu0 %v3512
    %4820 = vmatpush.msra.mxu0 %v3508
    %4821 = vmatpush.msra.mxu0 %v3504
    %4822 = vmatpush.msra.mxu0 %v3500
    %4823 = vmatmul.f32.gmra.mxu0 %v4364
    %v4824 = vpop.f32.mrf.mxu0
    %v4825 = vadd.f32 %v4796, %v4824
    %4826 = vmatmul.f32.gmra.mxu0 %v4366
    %v4827 = vpop.f32.mrf.mxu0
    %v4828 = vadd.f32 %v4799, %v4827
    %4829 = vmatmul.f32.gmra.mxu0 %v4368
    %v4830 = vpop.f32.mrf.mxu0
    %v4831 = vadd.f32 %v4802, %v4830
    %4832 = vmatmul.f32.gmra.mxu0 %v4370
    %v4833 = vpop.f32.mrf.mxu0
    %v4834 = vadd.f32 %v4805, %v4833
    %4835 = vdwg.mxu0
    %4836 = vst.sshfl [vmem:[#allocation1] sm:$0xff pattern:$0x73625140] %v3208
    %4837 = vst.sshfl [vmem:[#allocation1 + $0x8] sm:$0xff pattern:$0x73625140] %v3209
    %4838 = vst.sshfl [vmem:[#allocation1 + $0x10] sm:$0xff pattern:$0x73625140] %v3210
    %4839 = vst.sshfl [vmem:[#allocation1 + $0x18] sm:$0xff pattern:$0x73625140] %v3211
    %4840 = vst.sshfl [vmem:[#allocation1 + $0x20] sm:$0xff pattern:$0x73625140] %v3217
    %4841 = vst.sshfl [vmem:[#allocation1 + $0x28] sm:$0xff pattern:$0x73625140] %v3218
    %4842 = vst.sshfl [vmem:[#allocation1 + $0x30] sm:$0xff pattern:$0x73625140] %v3219
    %4843 = vst.sshfl [vmem:[#allocation1 + $0x38] sm:$0xff pattern:$0x73625140] %v3220
    %s4844 = scalar_lea.vmem [#allocation1], 1
    %v4845 = vld [vmem:[%s4844] ss:$4 sm:$0xff]
    %s4846 = scalar_lea.vmem [#allocation1], 2
    %v4847 = vld [vmem:[%s4846] ss:$4 sm:$0xff]
    %s4848 = scalar_lea.vmem [#allocation1], 3
    %v4849 = vld [vmem:[%s4848] ss:$4 sm:$0xff]
    %s4850 = scalar_lea.vmem [#allocation1], 32
    %v4851 = vld [vmem:[%s4850] ss:$4 sm:$0xff]
    %s4852 = scalar_lea.vmem [#allocation1], 33
    %v4853 = vld [vmem:[%s4852] ss:$4 sm:$0xff]
    %s4854 = scalar_lea.vmem [#allocation1], 34
    %v4855 = vld [vmem:[%s4854] ss:$4 sm:$0xff]
    %s4856 = scalar_lea.vmem [#allocation1], 35
    %v4857 = vld [vmem:[%s4856] ss:$4 sm:$0xff]
    %4858 = vst.sshfl [vmem:[#allocation1] sm:$0xff pattern:$0x73625140] %v3212
    %4859 = vst.sshfl [vmem:[#allocation1 + $0x8] sm:$0xff pattern:$0x73625140] %v3213
    %4860 = vst.sshfl [vmem:[#allocation1 + $0x10] sm:$0xff pattern:$0x73625140] %v3214
    %4861 = vst.sshfl [vmem:[#allocation1 + $0x18] sm:$0xff pattern:$0x73625140] %v3215
    %4862 = vst.sshfl [vmem:[#allocation1 + $0x20] sm:$0xff pattern:$0x73625140] %v3221
    %4863 = vst.sshfl [vmem:[#allocation1 + $0x28] sm:$0xff pattern:$0x73625140] %v3222
    %4864 = vst.sshfl [vmem:[#allocation1 + $0x30] sm:$0xff pattern:$0x73625140] %v3223
    %4865 = vst.sshfl [vmem:[#allocation1 + $0x38] sm:$0xff pattern:$0x73625140] %v3224
    %v4866 = vld [vmem:[%s4844] ss:$4 sm:$0xff]
    %v4867 = vld [vmem:[%s4846] ss:$4 sm:$0xff]
    %v4868 = vld [vmem:[%s4848] ss:$4 sm:$0xff]
    %v4869 = vld [vmem:[%s4850] ss:$4 sm:$0xff]
    %v4870 = vld [vmem:[%s4852] ss:$4 sm:$0xff]
    %v4871 = vld [vmem:[%s4854] ss:$4 sm:$0xff]
    %v4872 = vld [vmem:[%s4856] ss:$4 sm:$0xff]
    %s4873 = scalar_lea.vmem [#allocation7], 3456
    %v4874 = vld [vmem:[%s4873] sm:$0xff]
    %v4875 = vld [vmem:[%s4873 + $0x8] sm:$0xff]
    %v4876 = vld [vmem:[%s4873 + $0x10] sm:$0xff]
    %v4877 = vld [vmem:[%s4873 + $0x18] sm:$0xff]
    %v4878 = vld [vmem:[%s4873 + $0x20] sm:$0xff]
    %v4879 = vld [vmem:[%s4873 + $0x28] sm:$0xff]
    %v4880 = vld [vmem:[%s4873 + $0x30] sm:$0xff]
    %v4881 = vld [vmem:[%s4873 + $0x38] sm:$0xff]
    %v4882 = vld [vmem:[%s4873 + $0x40] sm:$0xff]
    %v4883 = vld [vmem:[%s4873 + $0x48] sm:$0xff]
    %v4884 = vld [vmem:[%s4873 + $0x50] sm:$0xff]
    %v4885 = vld [vmem:[%s4873 + $0x58] sm:$0xff]
    %v4886 = vld [vmem:[%s4873 + $0x60] sm:$0xff]
    %v4887 = vld [vmem:[%s4873 + $0x68] sm:$0xff]
    %v4888 = vld [vmem:[%s4873 + $0x70] sm:$0xff]
    %v4889 = vld [vmem:[%s4873 + $0x78] sm:$0xff]
    %v4890 = vld [vmem:[%s4873 + $0x80] sm:$0xff]
    %v4891 = vld [vmem:[%s4873 + $0x88] sm:$0xff]
    %v4892 = vld [vmem:[%s4873 + $0x90] sm:$0xff]
    %v4893 = vld [vmem:[%s4873 + $0x98] sm:$0xff]
    %v4894 = vld [vmem:[%s4873 + $0xa0] sm:$0xff]
    %v4895 = vld [vmem:[%s4873 + $0xa8] sm:$0xff]
    %v4896 = vld [vmem:[%s4873 + $0xb0] sm:$0xff]
    %v4897 = vld [vmem:[%s4873 + $0xb8] sm:$0xff]
    %v4898 = vld [vmem:[%s4873 + $0xc0] sm:$0xff]
    %v4899 = vld [vmem:[%s4873 + $0xc8] sm:$0xff]
    %v4900 = vld [vmem:[%s4873 + $0xd0] sm:$0xff]
    %v4901 = vld [vmem:[%s4873 + $0xd8] sm:$0xff]
    %v4902 = vld [vmem:[%s4873 + $0xe0] sm:$0xff]
    %v4903 = vld [vmem:[%s4873 + $0xe8] sm:$0xff]
    %v4904 = vld [vmem:[%s4873 + $0xf0] sm:$0xff]
    %v4905 = vld [vmem:[%s4873 + $0xf8] sm:$0xff]
    %v4906 = vld [vmem:[%s4873 + $0x100] sm:$0xff]
    %v4907 = vld [vmem:[%s4873 + $0x108] sm:$0xff]
    %v4908 = vld [vmem:[%s4873 + $0x110] sm:$0xff]
    %v4909 = vld [vmem:[%s4873 + $0x118] sm:$0xff]
    %v4910 = vld [vmem:[%s4873 + $0x120] sm:$0xff]
    %v4911 = vld [vmem:[%s4873 + $0x128] sm:$0xff]
    %v4912 = vld [vmem:[%s4873 + $0x130] sm:$0xff]
    %v4913 = vld [vmem:[%s4873 + $0x138] sm:$0xff]
    %v4914 = vld [vmem:[%s4873 + $0x140] sm:$0xff]
    %v4915 = vld [vmem:[%s4873 + $0x148] sm:$0xff]
    %v4916 = vld [vmem:[%s4873 + $0x150] sm:$0xff]
    %v4917 = vld [vmem:[%s4873 + $0x158] sm:$0xff]
    %v4918 = vld [vmem:[%s4873 + $0x160] sm:$0xff]
    %v4919 = vld [vmem:[%s4873 + $0x168] sm:$0xff]
    %v4920 = vld [vmem:[%s4873 + $0x170] sm:$0xff]
    %v4921 = vld [vmem:[%s4873 + $0x178] sm:$0xff]
    %v4922 = vld [vmem:[%s4873 + $0x180] sm:$0xff]
    %v4923 = vld [vmem:[%s4873 + $0x188] sm:$0xff]
    %v4924 = vld [vmem:[%s4873 + $0x190] sm:$0xff]
    %v4925 = vld [vmem:[%s4873 + $0x198] sm:$0xff]
    %v4926 = vld [vmem:[%s4873 + $0x1a0] sm:$0xff]
    %v4927 = vld [vmem:[%s4873 + $0x1a8] sm:$0xff]
    %v4928 = vld [vmem:[%s4873 + $0x1b0] sm:$0xff]
    %v4929 = vld [vmem:[%s4873 + $0x1b8] sm:$0xff]
    %v4930 = vld [vmem:[%s4873 + $0x1c0] sm:$0xff]
    %v4931 = vld [vmem:[%s4873 + $0x1c8] sm:$0xff]
    %v4932 = vld [vmem:[%s4873 + $0x1d0] sm:$0xff]
    %v4933 = vld [vmem:[%s4873 + $0x1d8] sm:$0xff]
    %v4934 = vld [vmem:[%s4873 + $0x1e0] sm:$0xff]
    %v4935 = vld [vmem:[%s4873 + $0x1e8] sm:$0xff]
    %v4936 = vld [vmem:[%s4873 + $0x1f0] sm:$0xff]
    %v4937 = vld [vmem:[%s4873 + $0x1f8] sm:$0xff]
    %v4938 = vld [vmem:[%s4873 + $0x200] sm:$0xff]
    %v4939 = vld [vmem:[%s4873 + $0x208] sm:$0xff]
    %v4940 = vld [vmem:[%s4873 + $0x210] sm:$0xff]
    %v4941 = vld [vmem:[%s4873 + $0x218] sm:$0xff]
    %v4942 = vld [vmem:[%s4873 + $0x220] sm:$0xff]
    %v4943 = vld [vmem:[%s4873 + $0x228] sm:$0xff]
    %v4944 = vld [vmem:[%s4873 + $0x230] sm:$0xff]
    %v4945 = vld [vmem:[%s4873 + $0x238] sm:$0xff]
    %v4946 = vld [vmem:[%s4873 + $0x240] sm:$0xff]
    %v4947 = vld [vmem:[%s4873 + $0x248] sm:$0xff]
    %v4948 = vld [vmem:[%s4873 + $0x250] sm:$0xff]
    %v4949 = vld [vmem:[%s4873 + $0x258] sm:$0xff]
    %v4950 = vld [vmem:[%s4873 + $0x260] sm:$0xff]
    %v4951 = vld [vmem:[%s4873 + $0x268] sm:$0xff]
    %v4952 = vld [vmem:[%s4873 + $0x270] sm:$0xff]
    %v4953 = vld [vmem:[%s4873 + $0x278] sm:$0xff]
    %v4954 = vld [vmem:[%s4873 + $0x280] sm:$0xff]
    %v4955 = vld [vmem:[%s4873 + $0x288] sm:$0xff]
    %v4956 = vld [vmem:[%s4873 + $0x290] sm:$0xff]
    %v4957 = vld [vmem:[%s4873 + $0x298] sm:$0xff]
    %v4958 = vld [vmem:[%s4873 + $0x2a0] sm:$0xff]
    %v4959 = vld [vmem:[%s4873 + $0x2a8] sm:$0xff]
    %v4960 = vld [vmem:[%s4873 + $0x2b0] sm:$0xff]
    %v4961 = vld [vmem:[%s4873 + $0x2b8] sm:$0xff]
    %v4962 = vld [vmem:[%s4873 + $0x2c0] sm:$0xff]
    %v4963 = vld [vmem:[%s4873 + $0x2c8] sm:$0xff]
    %v4964 = vld [vmem:[%s4873 + $0x2d0] sm:$0xff]
    %v4965 = vld [vmem:[%s4873 + $0x2d8] sm:$0xff]
    %v4966 = vld [vmem:[%s4873 + $0x2e0] sm:$0xff]
    %v4967 = vld [vmem:[%s4873 + $0x2e8] sm:$0xff]
    %v4968 = vld [vmem:[%s4873 + $0x2f0] sm:$0xff]
    %v4969 = vld [vmem:[%s4873 + $0x2f8] sm:$0xff]
    %v4970 = vld [vmem:[%s4873 + $0x300] sm:$0xff]
    %v4971 = vld [vmem:[%s4873 + $0x308] sm:$0xff]
    %v4972 = vld [vmem:[%s4873 + $0x310] sm:$0xff]
    %v4973 = vld [vmem:[%s4873 + $0x318] sm:$0xff]
    %v4974 = vld [vmem:[%s4873 + $0x320] sm:$0xff]
    %v4975 = vld [vmem:[%s4873 + $0x328] sm:$0xff]
    %v4976 = vld [vmem:[%s4873 + $0x330] sm:$0xff]
    %v4977 = vld [vmem:[%s4873 + $0x338] sm:$0xff]
    %v4978 = vld [vmem:[%s4873 + $0x340] sm:$0xff]
    %v4979 = vld [vmem:[%s4873 + $0x348] sm:$0xff]
    %v4980 = vld [vmem:[%s4873 + $0x350] sm:$0xff]
    %v4981 = vld [vmem:[%s4873 + $0x358] sm:$0xff]
    %v4982 = vld [vmem:[%s4873 + $0x360] sm:$0xff]
    %v4983 = vld [vmem:[%s4873 + $0x368] sm:$0xff]
    %v4984 = vld [vmem:[%s4873 + $0x370] sm:$0xff]
    %v4985 = vld [vmem:[%s4873 + $0x378] sm:$0xff]
    %v4986 = vld [vmem:[%s4873 + $0x380] sm:$0xff]
    %v4987 = vld [vmem:[%s4873 + $0x388] sm:$0xff]
    %v4988 = vld [vmem:[%s4873 + $0x390] sm:$0xff]
    %v4989 = vld [vmem:[%s4873 + $0x398] sm:$0xff]
    %v4990 = vld [vmem:[%s4873 + $0x3a0] sm:$0xff]
    %v4991 = vld [vmem:[%s4873 + $0x3a8] sm:$0xff]
    %v4992 = vld [vmem:[%s4873 + $0x3b0] sm:$0xff]
    %v4993 = vld [vmem:[%s4873 + $0x3b8] sm:$0xff]
    %v4994 = vld [vmem:[%s4873 + $0x3c0] sm:$0xff]
    %v4995 = vld [vmem:[%s4873 + $0x3c8] sm:$0xff]
    %v4996 = vld [vmem:[%s4873 + $0x3d0] sm:$0xff]
    %v4997 = vld [vmem:[%s4873 + $0x3d8] sm:$0xff]
    %v4998 = vld [vmem:[%s4873 + $0x3e0] sm:$0xff]
    %v4999 = vld [vmem:[%s4873 + $0x3e8] sm:$0xff]
    %v5000 = vld [vmem:[%s4873 + $0x3f0] sm:$0xff]
    %v5001 = vld [vmem:[%s4873 + $0x3f8] sm:$0xff]
    %v5002 = vld [vmem:[%s4873 + $0x400] sm:$0xff]
    %v5003 = vld [vmem:[%s4873 + $0x408] sm:$0xff]
    %v5004 = vld [vmem:[%s4873 + $0x410] sm:$0xff]
    %v5005 = vld [vmem:[%s4873 + $0x418] sm:$0xff]
    %v5006 = vld [vmem:[%s4873 + $0x420] sm:$0xff]
    %v5007 = vld [vmem:[%s4873 + $0x428] sm:$0xff]
    %v5008 = vld [vmem:[%s4873 + $0x430] sm:$0xff]
    %v5009 = vld [vmem:[%s4873 + $0x438] sm:$0xff]
    %v5010 = vld [vmem:[%s4873 + $0x440] sm:$0xff]
    %v5011 = vld [vmem:[%s4873 + $0x448] sm:$0xff]
    %v5012 = vld [vmem:[%s4873 + $0x450] sm:$0xff]
    %v5013 = vld [vmem:[%s4873 + $0x458] sm:$0xff]
    %v5014 = vld [vmem:[%s4873 + $0x460] sm:$0xff]
    %v5015 = vld [vmem:[%s4873 + $0x468] sm:$0xff]
    %v5016 = vld [vmem:[%s4873 + $0x470] sm:$0xff]
    %v5017 = vld [vmem:[%s4873 + $0x478] sm:$0xff]
    %v5018 = vld [vmem:[%s4873 + $0x480] sm:$0xff]
    %v5019 = vld [vmem:[%s4873 + $0x488] sm:$0xff]
    %v5020 = vld [vmem:[%s4873 + $0x490] sm:$0xff]
    %v5021 = vld [vmem:[%s4873 + $0x498] sm:$0xff]
    %v5022 = vld [vmem:[%s4873 + $0x4a0] sm:$0xff]
    %v5023 = vld [vmem:[%s4873 + $0x4a8] sm:$0xff]
    %v5024 = vld [vmem:[%s4873 + $0x4b0] sm:$0xff]
    %v5025 = vld [vmem:[%s4873 + $0x4b8] sm:$0xff]
    %v5026 = vld [vmem:[%s4873 + $0x4c0] sm:$0xff]
    %v5027 = vld [vmem:[%s4873 + $0x4c8] sm:$0xff]
    %v5028 = vld [vmem:[%s4873 + $0x4d0] sm:$0xff]
    %v5029 = vld [vmem:[%s4873 + $0x4d8] sm:$0xff]
    %v5030 = vld [vmem:[%s4873 + $0x4e0] sm:$0xff]
    %v5031 = vld [vmem:[%s4873 + $0x4e8] sm:$0xff]
    %v5032 = vld [vmem:[%s4873 + $0x4f0] sm:$0xff]
    %v5033 = vld [vmem:[%s4873 + $0x4f8] sm:$0xff]
    %v5034 = vld [vmem:[%s4873 + $0x500] sm:$0xff]
    %v5035 = vld [vmem:[%s4873 + $0x508] sm:$0xff]
    %v5036 = vld [vmem:[%s4873 + $0x510] sm:$0xff]
    %v5037 = vld [vmem:[%s4873 + $0x518] sm:$0xff]
    %v5038 = vld [vmem:[%s4873 + $0x520] sm:$0xff]
    %v5039 = vld [vmem:[%s4873 + $0x528] sm:$0xff]
    %v5040 = vld [vmem:[%s4873 + $0x530] sm:$0xff]
    %v5041 = vld [vmem:[%s4873 + $0x538] sm:$0xff]
    %v5042 = vld [vmem:[%s4873 + $0x540] sm:$0xff]
    %v5043 = vld [vmem:[%s4873 + $0x548] sm:$0xff]
    %v5044 = vld [vmem:[%s4873 + $0x550] sm:$0xff]
    %v5045 = vld [vmem:[%s4873 + $0x558] sm:$0xff]
    %v5046 = vld [vmem:[%s4873 + $0x560] sm:$0xff]
    %v5047 = vld [vmem:[%s4873 + $0x568] sm:$0xff]
    %v5048 = vld [vmem:[%s4873 + $0x570] sm:$0xff]
    %v5049 = vld [vmem:[%s4873 + $0x578] sm:$0xff]
    %v5050 = vld [vmem:[%s4873 + $0x580] sm:$0xff]
    %v5051 = vld [vmem:[%s4873 + $0x588] sm:$0xff]
    %v5052 = vld [vmem:[%s4873 + $0x590] sm:$0xff]
    %v5053 = vld [vmem:[%s4873 + $0x598] sm:$0xff]
    %v5054 = vld [vmem:[%s4873 + $0x5a0] sm:$0xff]
    %v5055 = vld [vmem:[%s4873 + $0x5a8] sm:$0xff]
    %v5056 = vld [vmem:[%s4873 + $0x5b0] sm:$0xff]
    %v5057 = vld [vmem:[%s4873 + $0x5b8] sm:$0xff]
    %v5058 = vld [vmem:[%s4873 + $0x5c0] sm:$0xff]
    %v5059 = vld [vmem:[%s4873 + $0x5c8] sm:$0xff]
    %v5060 = vld [vmem:[%s4873 + $0x5d0] sm:$0xff]
    %v5061 = vld [vmem:[%s4873 + $0x5d8] sm:$0xff]
    %v5062 = vld [vmem:[%s4873 + $0x5e0] sm:$0xff]
    %v5063 = vld [vmem:[%s4873 + $0x5e8] sm:$0xff]
    %v5064 = vld [vmem:[%s4873 + $0x5f0] sm:$0xff]
    %v5065 = vld [vmem:[%s4873 + $0x5f8] sm:$0xff]
    %v5066 = vld [vmem:[%s4873 + $0x600] sm:$0xff]
    %v5067 = vld [vmem:[%s4873 + $0x608] sm:$0xff]
    %v5068 = vld [vmem:[%s4873 + $0x610] sm:$0xff]
    %v5069 = vld [vmem:[%s4873 + $0x618] sm:$0xff]
    %v5070 = vld [vmem:[%s4873 + $0x620] sm:$0xff]
    %v5071 = vld [vmem:[%s4873 + $0x628] sm:$0xff]
    %v5072 = vld [vmem:[%s4873 + $0x630] sm:$0xff]
    %v5073 = vld [vmem:[%s4873 + $0x638] sm:$0xff]
    %v5074 = vld [vmem:[%s4873 + $0x640] sm:$0xff]
    %v5075 = vld [vmem:[%s4873 + $0x648] sm:$0xff]
    %v5076 = vld [vmem:[%s4873 + $0x650] sm:$0xff]
    %v5077 = vld [vmem:[%s4873 + $0x658] sm:$0xff]
    %v5078 = vld [vmem:[%s4873 + $0x660] sm:$0xff]
    %v5079 = vld [vmem:[%s4873 + $0x668] sm:$0xff]
    %v5080 = vld [vmem:[%s4873 + $0x670] sm:$0xff]
    %v5081 = vld [vmem:[%s4873 + $0x678] sm:$0xff]
    %v5082 = vld [vmem:[%s4873 + $0x680] sm:$0xff]
    %v5083 = vld [vmem:[%s4873 + $0x688] sm:$0xff]
    %v5084 = vld [vmem:[%s4873 + $0x690] sm:$0xff]
    %v5085 = vld [vmem:[%s4873 + $0x698] sm:$0xff]
    %v5086 = vld [vmem:[%s4873 + $0x6a0] sm:$0xff]
    %v5087 = vld [vmem:[%s4873 + $0x6a8] sm:$0xff]
    %v5088 = vld [vmem:[%s4873 + $0x6b0] sm:$0xff]
    %v5089 = vld [vmem:[%s4873 + $0x6b8] sm:$0xff]
    %5090 = vst [vmem:[#allocation1] ss:$4 sm:$0xff] %v4845
    %s5091 = scalar_lea.vmem [#allocation1], 1
    %5092 = vst [vmem:[%s5091] ss:$4 sm:$0xff] %v4847
    %s5093 = scalar_lea.vmem [#allocation1], 2
    %5094 = vst [vmem:[%s5093] ss:$4 sm:$0xff] %v4849
    %s5095 = scalar_lea.vmem [#allocation1], 3
    %5096 = vst [vmem:[%s5095] ss:$4 sm:$0xff] %v4851
    %s5097 = scalar_lea.vmem [#allocation1], 32
    %5098 = vst [vmem:[%s5097] ss:$4 sm:$0xff] %v4853
    %s5099 = scalar_lea.vmem [#allocation1], 33
    %5100 = vst [vmem:[%s5099] ss:$4 sm:$0xff] %v4855
    %s5101 = scalar_lea.vmem [#allocation1], 34
    %5102 = vst [vmem:[%s5101] ss:$4 sm:$0xff] %v4857
    %s5103 = scalar_lea.vmem [#allocation1], 35
    %5104 = vst [vmem:[%s5103] ss:$4 sm:$0xff] %v4866
    %v5105 = vld.sshfl [vmem:[#allocation1] sm:$0xff pattern:$0x73625140]
    %v5106 = vld.sshfl [vmem:[#allocation1 + $0x8] sm:$0xff pattern:$0x73625140]
    %v5107 = vld.sshfl [vmem:[#allocation1 + $0x10] sm:$0xff pattern:$0x73625140]
    %v5108 = vld.sshfl [vmem:[#allocation1 + $0x18] sm:$0xff pattern:$0x73625140]
    %v5109 = vld.sshfl [vmem:[#allocation1 + $0x20] sm:$0xff pattern:$0x73625140]
    %v5110 = vld.sshfl [vmem:[#allocation1 + $0x28] sm:$0xff pattern:$0x73625140]
    %v5111 = vld.sshfl [vmem:[#allocation1 + $0x30] sm:$0xff pattern:$0x73625140]
    %v5112 = vld.sshfl [vmem:[#allocation1 + $0x38] sm:$0xff pattern:$0x73625140]
    %5113 = vst [vmem:[#allocation1] ss:$4 sm:$0xff] %v4867
    %5114 = vst [vmem:[%s5091] ss:$4 sm:$0xff] %v4868
    %5115 = vst [vmem:[%s5093] ss:$4 sm:$0xff] %v4869
    %5116 = vst [vmem:[%s5095] ss:$4 sm:$0xff] %v4870
    %5117 = vst [vmem:[%s5097] ss:$4 sm:$0xff] %v4871
    %5118 = vst [vmem:[%s5099] ss:$4 sm:$0xff] %v4872
    %v5119 = vld.sshfl [vmem:[#allocation1] sm:$0xff pattern:$0x73625140]
    %v5120 = vld.sshfl [vmem:[#allocation1 + $0x8] sm:$0xff pattern:$0x73625140]
    %v5121 = vld.sshfl [vmem:[#allocation1 + $0x10] sm:$0xff pattern:$0x73625140]
    %v5122 = vld.sshfl [vmem:[#allocation1 + $0x18] sm:$0xff pattern:$0x73625140]
    %v5123 = vld.sshfl [vmem:[#allocation1 + $0x20] sm:$0xff pattern:$0x73625140]
    %v5124 = vld.sshfl [vmem:[#allocation1 + $0x28] sm:$0xff pattern:$0x73625140]
    %v5125 = vld.sshfl [vmem:[#allocation1 + $0x30] sm:$0xff pattern:$0x73625140]
    %v5126 = vld.sshfl [vmem:[#allocation1 + $0x38] sm:$0xff pattern:$0x73625140]
    %v5139 = vsel %vm3842, %v5108, 0
    %v5141 = vsel %vm3842, %v5112, 0
    %v5143 = vsel %vm3842, %v5122, 0
    %v5145 = vsel %vm3842, %v5126, 0
    %5147 = vmatpush.msra.mxu0 %v4934
    %5148 = vmatpush.msra.mxu0 %v4930
    %5149 = vmatpush.msra.mxu0 %v4926
    %5150 = vmatpush.msra.mxu0 %v4922
    %5151 = vmatpush.msra.mxu0 %v4918
    %5152 = vmatpush.msra.mxu0 %v4914
    %5153 = vmatpush.msra.mxu0 %v4910
    %5154 = vmatpush.msra.mxu0 %v4906
    %5155 = vmatpush.msra.mxu0 %v4902
    %5156 = vmatpush.msra.mxu0 %v4898
    %5157 = vmatpush.msra.mxu0 %v4894
    %5158 = vmatpush.msra.mxu0 %v4890
    %5159 = vmatpush.msra.mxu0 %v4886
    %5160 = vmatpush.msra.mxu0 %v4882
    %5161 = vmatpush.msra.mxu0 %v4878
    %5162 = vmatpush.msra.mxu0 %v4874
    %5163 = vmatmul.f32.gmra.mxu0 %v5105
    %v5164 = vpop.f32.mrf.mxu0
    %v5165 = vadd.f32 0.0, %v5164
    %5166 = vmatmul.f32.gmra.mxu0 %v5109
    %v5167 = vpop.f32.mrf.mxu0
    %v5168 = vadd.f32 0.0, %v5167
    %5169 = vmatmul.f32.gmra.mxu0 %v5119
    %v5170 = vpop.f32.mrf.mxu0
    %v5171 = vadd.f32 0.0, %v5170
    %5172 = vmatmul.f32.gmra.mxu0 %v5123
    %v5173 = vpop.f32.mrf.mxu0
    %v5174 = vadd.f32 0.0, %v5173
    %5175 = vdwg.mxu0
    %5176 = vmatpush.msra.mxu0 %v4998
    %5177 = vmatpush.msra.mxu0 %v4994
    %5178 = vmatpush.msra.mxu0 %v4990
    %5179 = vmatpush.msra.mxu0 %v4986
    %5180 = vmatpush.msra.mxu0 %v4982
    %5181 = vmatpush.msra.mxu0 %v4978
    %5182 = vmatpush.msra.mxu0 %v4974
    %5183 = vmatpush.msra.mxu0 %v4970
    %5184 = vmatpush.msra.mxu0 %v4966
    %5185 = vmatpush.msra.mxu0 %v4962
    %5186 = vmatpush.msra.mxu0 %v4958
    %5187 = vmatpush.msra.mxu0 %v4954
    %5188 = vmatpush.msra.mxu0 %v4950
    %5189 = vmatpush.msra.mxu0 %v4946
    %5190 = vmatpush.msra.mxu0 %v4942
    %5191 = vmatpush.msra.mxu0 %v4938
    %5192 = vmatmul.f32.gmra.mxu0 %v5106
    %v5193 = vpop.f32.mrf.mxu0
    %v5194 = vadd.f32 %v5165, %v5193
    %5195 = vmatmul.f32.gmra.mxu0 %v5110
    %v5196 = vpop.f32.mrf.mxu0
    %v5197 = vadd.f32 %v5168, %v5196
    %5198 = vmatmul.f32.gmra.mxu0 %v5120
    %v5199 = vpop.f32.mrf.mxu0
    %v5200 = vadd.f32 %v5171, %v5199
    %5201 = vmatmul.f32.gmra.mxu0 %v5124
    %v5202 = vpop.f32.mrf.mxu0
    %v5203 = vadd.f32 %v5174, %v5202
    %5204 = vdwg.mxu0
    %5205 = vmatpush.msra.mxu0 %v5062
    %5206 = vmatpush.msra.mxu0 %v5058
    %5207 = vmatpush.msra.mxu0 %v5054
    %5208 = vmatpush.msra.mxu0 %v5050
    %5209 = vmatpush.msra.mxu0 %v5046
    %5210 = vmatpush.msra.mxu0 %v5042
    %5211 = vmatpush.msra.mxu0 %v5038
    %5212 = vmatpush.msra.mxu0 %v5034
    %5213 = vmatpush.msra.mxu0 %v5030
    %5214 = vmatpush.msra.mxu0 %v5026
    %5215 = vmatpush.msra.mxu0 %v5022
    %5216 = vmatpush.msra.mxu0 %v5018
    %5217 = vmatpush.msra.mxu0 %v5014
    %5218 = vmatpush.msra.mxu0 %v5010
    %5219 = vmatpush.msra.mxu0 %v5006
    %5220 = vmatpush.msra.mxu0 %v5002
    %5221 = vmatmul.f32.gmra.mxu0 %v5107
    %v5222 = vpop.f32.mrf.mxu0
    %v5223 = vadd.f32 %v5194, %v5222
    %5224 = vmatmul.f32.gmra.mxu0 %v5111
    %v5225 = vpop.f32.mrf.mxu0
    %v5226 = vadd.f32 %v5197, %v5225
    %5227 = vmatmul.f32.gmra.mxu0 %v5121
    %v5228 = vpop.f32.mrf.mxu0
    %v5229 = vadd.f32 %v5200, %v5228
    %5230 = vmatmul.f32.gmra.mxu0 %v5125
    %v5231 = vpop.f32.mrf.mxu0
    %v5232 = vadd.f32 %v5203, %v5231
    %5233 = vdwg.mxu0
    %5234 = vmatpush.msra.mxu0 0.0
    %5235 = vmatpush.msra.mxu0 0.0
    %5236 = vmatpush.msra.mxu0 0.0
    %5237 = vmatpush.msra.mxu0 0.0
    %5238 = vmatpush.msra.mxu0 0.0
    %5239 = vmatpush.msra.mxu0 0.0
    %5240 = vmatpush.msra.mxu0 0.0
    %5241 = vmatpush.msra.mxu0 0.0
    %5242 = vmatpush.msra.mxu0 0.0
    %5243 = vmatpush.msra.mxu0 0.0
    %5244 = vmatpush.msra.mxu0 %v5086
    %5245 = vmatpush.msra.mxu0 %v5082
    %5246 = vmatpush.msra.mxu0 %v5078
    %5247 = vmatpush.msra.mxu0 %v5074
    %5248 = vmatpush.msra.mxu0 %v5070
    %5249 = vmatpush.msra.mxu0 %v5066
    %5250 = vmatmul.f32.gmra.mxu0 %v5139
    %v5251 = vpop.f32.mrf.mxu0
    %v5252 = vadd.f32 %v5223, %v5251
    %5253 = vmatmul.f32.gmra.mxu0 %v5141
    %v5254 = vpop.f32.mrf.mxu0
    %v5255 = vadd.f32 %v5226, %v5254
    %5256 = vmatmul.f32.gmra.mxu0 %v5143
    %v5257 = vpop.f32.mrf.mxu0
    %v5258 = vadd.f32 %v5229, %v5257
    %5259 = vmatmul.f32.gmra.mxu0 %v5145
    %v5260 = vpop.f32.mrf.mxu0
    %v5261 = vadd.f32 %v5232, %v5260
    %5262 = vdwg.mxu0
    %5263 = vmatpush.msra.mxu0 %v4935
    %5264 = vmatpush.msra.mxu0 %v4931
    %5265 = vmatpush.msra.mxu0 %v4927
    %5266 = vmatpush.msra.mxu0 %v4923
    %5267 = vmatpush.msra.mxu0 %v4919
    %5268 = vmatpush.msra.mxu0 %v4915
    %5269 = vmatpush.msra.mxu0 %v4911
    %5270 = vmatpush.msra.mxu0 %v4907
    %5271 = vmatpush.msra.mxu0 %v4903
    %5272 = vmatpush.msra.mxu0 %v4899
    %5273 = vmatpush.msra.mxu0 %v4895
    %5274 = vmatpush.msra.mxu0 %v4891
    %5275 = vmatpush.msra.mxu0 %v4887
    %5276 = vmatpush.msra.mxu0 %v4883
    %5277 = vmatpush.msra.mxu0 %v4879
    %5278 = vmatpush.msra.mxu0 %v4875
    %5279 = vmatmul.f32.gmra.mxu0 %v5105
    %v5280 = vpop.f32.mrf.mxu0
    %v5281 = vadd.f32 0.0, %v5280
    %5282 = vmatmul.f32.gmra.mxu0 %v5109
    %v5283 = vpop.f32.mrf.mxu0
    %v5284 = vadd.f32 0.0, %v5283
    %5285 = vmatmul.f32.gmra.mxu0 %v5119
    %v5286 = vpop.f32.mrf.mxu0
    %v5287 = vadd.f32 0.0, %v5286
    %5288 = vmatmul.f32.gmra.mxu0 %v5123
    %v5289 = vpop.f32.mrf.mxu0
    %v5290 = vadd.f32 0.0, %v5289
    %5291 = vdwg.mxu0
    %5292 = vmatpush.msra.mxu0 %v4999
    %5293 = vmatpush.msra.mxu0 %v4995
    %5294 = vmatpush.msra.mxu0 %v4991
    %5295 = vmatpush.msra.mxu0 %v4987
    %5296 = vmatpush.msra.mxu0 %v4983
    %5297 = vmatpush.msra.mxu0 %v4979
    %5298 = vmatpush.msra.mxu0 %v4975
    %5299 = vmatpush.msra.mxu0 %v4971
    %5300 = vmatpush.msra.mxu0 %v4967
    %5301 = vmatpush.msra.mxu0 %v4963
    %5302 = vmatpush.msra.mxu0 %v4959
    %5303 = vmatpush.msra.mxu0 %v4955
    %5304 = vmatpush.msra.mxu0 %v4951
    %5305 = vmatpush.msra.mxu0 %v4947
    %5306 = vmatpush.msra.mxu0 %v4943
    %5307 = vmatpush.msra.mxu0 %v4939
    %5308 = vmatmul.f32.gmra.mxu0 %v5106
    %v5309 = vpop.f32.mrf.mxu0
    %v5310 = vadd.f32 %v5281, %v5309
    %5311 = vmatmul.f32.gmra.mxu0 %v5110
    %v5312 = vpop.f32.mrf.mxu0
    %v5313 = vadd.f32 %v5284, %v5312
    %5314 = vmatmul.f32.gmra.mxu0 %v5120
    %v5315 = vpop.f32.mrf.mxu0
    %v5316 = vadd.f32 %v5287, %v5315
    %5317 = vmatmul.f32.gmra.mxu0 %v5124
    %v5318 = vpop.f32.mrf.mxu0
    %v5319 = vadd.f32 %v5290, %v5318
    %5320 = vdwg.mxu0
    %5321 = vmatpush.msra.mxu0 %v5063
    %5322 = vmatpush.msra.mxu0 %v5059
    %5323 = vmatpush.msra.mxu0 %v5055
    %5324 = vmatpush.msra.mxu0 %v5051
    %5325 = vmatpush.msra.mxu0 %v5047
    %5326 = vmatpush.msra.mxu0 %v5043
    %5327 = vmatpush.msra.mxu0 %v5039
    %5328 = vmatpush.msra.mxu0 %v5035
    %5329 = vmatpush.msra.mxu0 %v5031
    %5330 = vmatpush.msra.mxu0 %v5027
    %5331 = vmatpush.msra.mxu0 %v5023
    %5332 = vmatpush.msra.mxu0 %v5019
    %5333 = vmatpush.msra.mxu0 %v5015
    %5334 = vmatpush.msra.mxu0 %v5011
    %5335 = vmatpush.msra.mxu0 %v5007
    %5336 = vmatpush.msra.mxu0 %v5003
    %5337 = vmatmul.f32.gmra.mxu0 %v5107
    %v5338 = vpop.f32.mrf.mxu0
    %v5339 = vadd.f32 %v5310, %v5338
    %5340 = vmatmul.f32.gmra.mxu0 %v5111
    %v5341 = vpop.f32.mrf.mxu0
    %v5342 = vadd.f32 %v5313, %v5341
    %5343 = vmatmul.f32.gmra.mxu0 %v5121
    %v5344 = vpop.f32.mrf.mxu0
    %v5345 = vadd.f32 %v5316, %v5344
    %5346 = vmatmul.f32.gmra.mxu0 %v5125
    %v5347 = vpop.f32.mrf.mxu0
    %v5348 = vadd.f32 %v5319, %v5347
    %5349 = vdwg.mxu0
    %5350 = vmatpush.msra.mxu0 0.0
    %5351 = vmatpush.msra.mxu0 0.0
    %5352 = vmatpush.msra.mxu0 0.0
    %5353 = vmatpush.msra.mxu0 0.0
    %5354 = vmatpush.msra.mxu0 0.0
    %5355 = vmatpush.msra.mxu0 0.0
    %5356 = vmatpush.msra.mxu0 0.0
    %5357 = vmatpush.msra.mxu0 0.0
    %5358 = vmatpush.msra.mxu0 0.0
    %5359 = vmatpush.msra.mxu0 0.0
    %5360 = vmatpush.msra.mxu0 %v5087
    %5361 = vmatpush.msra.mxu0 %v5083
    %5362 = vmatpush.msra.mxu0 %v5079
    %5363 = vmatpush.msra.mxu0 %v5075
    %5364 = vmatpush.msra.mxu0 %v5071
    %5365 = vmatpush.msra.mxu0 %v5067
    %5366 = vmatmul.f32.gmra.mxu0 %v5139
    %v5367 = vpop.f32.mrf.mxu0
    %v5368 = vadd.f32 %v5339, %v5367
    %5369 = vmatmul.f32.gmra.mxu0 %v5141
    %v5370 = vpop.f32.mrf.mxu0
    %v5371 = vadd.f32 %v5342, %v5370
    %5372 = vmatmul.f32.gmra.mxu0 %v5143
    %v5373 = vpop.f32.mrf.mxu0
    %v5374 = vadd.f32 %v5345, %v5373
    %5375 = vmatmul.f32.gmra.mxu0 %v5145
    %v5376 = vpop.f32.mrf.mxu0
    %v5377 = vadd.f32 %v5348, %v5376
    %5378 = vdwg.mxu0
    %5379 = vmatpush.msra.mxu0 %v4936
    %5380 = vmatpush.msra.mxu0 %v4932
    %5381 = vmatpush.msra.mxu0 %v4928
    %5382 = vmatpush.msra.mxu0 %v4924
    %5383 = vmatpush.msra.mxu0 %v4920
    %5384 = vmatpush.msra.mxu0 %v4916
    %5385 = vmatpush.msra.mxu0 %v4912
    %5386 = vmatpush.msra.mxu0 %v4908
    %5387 = vmatpush.msra.mxu0 %v4904
    %5388 = vmatpush.msra.mxu0 %v4900
    %5389 = vmatpush.msra.mxu0 %v4896
    %5390 = vmatpush.msra.mxu0 %v4892
    %5391 = vmatpush.msra.mxu0 %v4888
    %5392 = vmatpush.msra.mxu0 %v4884
    %5393 = vmatpush.msra.mxu0 %v4880
    %5394 = vmatpush.msra.mxu0 %v4876
    %5395 = vmatmul.f32.gmra.mxu0 %v5105
    %v5396 = vpop.f32.mrf.mxu0
    %v5397 = vadd.f32 0.0, %v5396
    %5398 = vmatmul.f32.gmra.mxu0 %v5109
    %v5399 = vpop.f32.mrf.mxu0
    %v5400 = vadd.f32 0.0, %v5399
    %5401 = vmatmul.f32.gmra.mxu0 %v5119
    %v5402 = vpop.f32.mrf.mxu0
    %v5403 = vadd.f32 0.0, %v5402
    %5404 = vmatmul.f32.gmra.mxu0 %v5123
    %v5405 = vpop.f32.mrf.mxu0
    %v5406 = vadd.f32 0.0, %v5405
    %5407 = vdwg.mxu0
    %5408 = vmatpush.msra.mxu0 %v5000
    %5409 = vmatpush.msra.mxu0 %v4996
    %5410 = vmatpush.msra.mxu0 %v4992
    %5411 = vmatpush.msra.mxu0 %v4988
    %5412 = vmatpush.msra.mxu0 %v4984
    %5413 = vmatpush.msra.mxu0 %v4980
    %5414 = vmatpush.msra.mxu0 %v4976
    %5415 = vmatpush.msra.mxu0 %v4972
    %5416 = vmatpush.msra.mxu0 %v4968
    %5417 = vmatpush.msra.mxu0 %v4964
    %5418 = vmatpush.msra.mxu0 %v4960
    %5419 = vmatpush.msra.mxu0 %v4956
    %5420 = vmatpush.msra.mxu0 %v4952
    %5421 = vmatpush.msra.mxu0 %v4948
    %5422 = vmatpush.msra.mxu0 %v4944
    %5423 = vmatpush.msra.mxu0 %v4940
    %5424 = vmatmul.f32.gmra.mxu0 %v5106
    %v5425 = vpop.f32.mrf.mxu0
    %v5426 = vadd.f32 %v5397, %v5425
    %5427 = vmatmul.f32.gmra.mxu0 %v5110
    %v5428 = vpop.f32.mrf.mxu0
    %v5429 = vadd.f32 %v5400, %v5428
    %5430 = vmatmul.f32.gmra.mxu0 %v5120
    %v5431 = vpop.f32.mrf.mxu0
    %v5432 = vadd.f32 %v5403, %v5431
    %5433 = vmatmul.f32.gmra.mxu0 %v5124
    %v5434 = vpop.f32.mrf.mxu0
    %v5435 = vadd.f32 %v5406, %v5434
    %5436 = vdwg.mxu0
    %5437 = vmatpush.msra.mxu0 %v5064
    %5438 = vmatpush.msra.mxu0 %v5060
    %5439 = vmatpush.msra.mxu0 %v5056
    %5440 = vmatpush.msra.mxu0 %v5052
    %5441 = vmatpush.msra.mxu0 %v5048
    %5442 = vmatpush.msra.mxu0 %v5044
    %5443 = vmatpush.msra.mxu0 %v5040
    %5444 = vmatpush.msra.mxu0 %v5036
    %5445 = vmatpush.msra.mxu0 %v5032
    %5446 = vmatpush.msra.mxu0 %v5028
    %5447 = vmatpush.msra.mxu0 %v5024
    %5448 = vmatpush.msra.mxu0 %v5020
    %5449 = vmatpush.msra.mxu0 %v5016
    %5450 = vmatpush.msra.mxu0 %v5012
    %5451 = vmatpush.msra.mxu0 %v5008
    %5452 = vmatpush.msra.mxu0 %v5004
    %5453 = vmatmul.f32.gmra.mxu0 %v5107
    %v5454 = vpop.f32.mrf.mxu0
    %v5455 = vadd.f32 %v5426, %v5454
    %5456 = vmatmul.f32.gmra.mxu0 %v5111
    %v5457 = vpop.f32.mrf.mxu0
    %v5458 = vadd.f32 %v5429, %v5457
    %5459 = vmatmul.f32.gmra.mxu0 %v5121
    %v5460 = vpop.f32.mrf.mxu0
    %v5461 = vadd.f32 %v5432, %v5460
    %5462 = vmatmul.f32.gmra.mxu0 %v5125
    %v5463 = vpop.f32.mrf.mxu0
    %v5464 = vadd.f32 %v5435, %v5463
    %5465 = vdwg.mxu0
    %5466 = vmatpush.msra.mxu0 0.0
    %5467 = vmatpush.msra.mxu0 0.0
    %5468 = vmatpush.msra.mxu0 0.0
    %5469 = vmatpush.msra.mxu0 0.0
    %5470 = vmatpush.msra.mxu0 0.0
    %5471 = vmatpush.msra.mxu0 0.0
    %5472 = vmatpush.msra.mxu0 0.0
    %5473 = vmatpush.msra.mxu0 0.0
    %5474 = vmatpush.msra.mxu0 0.0
    %5475 = vmatpush.msra.mxu0 0.0
    %5476 = vmatpush.msra.mxu0 %v5088
    %5477 = vmatpush.msra.mxu0 %v5084
    %5478 = vmatpush.msra.mxu0 %v5080
    %5479 = vmatpush.msra.mxu0 %v5076
    %5480 = vmatpush.msra.mxu0 %v5072
    %5481 = vmatpush.msra.mxu0 %v5068
    %5482 = vmatmul.f32.gmra.mxu0 %v5139
    %v5483 = vpop.f32.mrf.mxu0
    %v5484 = vadd.f32 %v5455, %v5483
    %5485 = vmatmul.f32.gmra.mxu0 %v5141
    %v5486 = vpop.f32.mrf.mxu0
    %v5487 = vadd.f32 %v5458, %v5486
    %5488 = vmatmul.f32.gmra.mxu0 %v5143
    %v5489 = vpop.f32.mrf.mxu0
    %v5490 = vadd.f32 %v5461, %v5489
    %5491 = vmatmul.f32.gmra.mxu0 %v5145
    %v5492 = vpop.f32.mrf.mxu0
    %v5493 = vadd.f32 %v5464, %v5492
    %5494 = vdwg.mxu0
    %5495 = vmatpush.msra.mxu0 %v4937
    %5496 = vmatpush.msra.mxu0 %v4933
    %5497 = vmatpush.msra.mxu0 %v4929
    %5498 = vmatpush.msra.mxu0 %v4925
    %5499 = vmatpush.msra.mxu0 %v4921
    %5500 = vmatpush.msra.mxu0 %v4917
    %5501 = vmatpush.msra.mxu0 %v4913
    %5502 = vmatpush.msra.mxu0 %v4909
    %5503 = vmatpush.msra.mxu0 %v4905
    %5504 = vmatpush.msra.mxu0 %v4901
    %5505 = vmatpush.msra.mxu0 %v4897
    %5506 = vmatpush.msra.mxu0 %v4893
    %5507 = vmatpush.msra.mxu0 %v4889
    %5508 = vmatpush.msra.mxu0 %v4885
    %5509 = vmatpush.msra.mxu0 %v4881
    %5510 = vmatpush.msra.mxu0 %v4877
    %5511 = vmatmul.f32.gmra.mxu0 %v5105
    %v5512 = vpop.f32.mrf.mxu0
    %v5513 = vadd.f32 0.0, %v5512
    %5514 = vmatmul.f32.gmra.mxu0 %v5109
    %v5515 = vpop.f32.mrf.mxu0
    %v5516 = vadd.f32 0.0, %v5515
    %5517 = vmatmul.f32.gmra.mxu0 %v5119
    %v5518 = vpop.f32.mrf.mxu0
    %v5519 = vadd.f32 0.0, %v5518
    %5520 = vmatmul.f32.gmra.mxu0 %v5123
    %v5521 = vpop.f32.mrf.mxu0
    %v5522 = vadd.f32 0.0, %v5521
    %5523 = vdwg.mxu0
    %5524 = vmatpush.msra.mxu0 %v5001
    %5525 = vmatpush.msra.mxu0 %v4997
    %5526 = vmatpush.msra.mxu0 %v4993
    %5527 = vmatpush.msra.mxu0 %v4989
    %5528 = vmatpush.msra.mxu0 %v4985
    %5529 = vmatpush.msra.mxu0 %v4981
    %5530 = vmatpush.msra.mxu0 %v4977
    %5531 = vmatpush.msra.mxu0 %v4973
    %5532 = vmatpush.msra.mxu0 %v4969
    %5533 = vmatpush.msra.mxu0 %v4965
    %5534 = vmatpush.msra.mxu0 %v4961
    %5535 = vmatpush.msra.mxu0 %v4957
    %5536 = vmatpush.msra.mxu0 %v4953
    %5537 = vmatpush.msra.mxu0 %v4949
    %5538 = vmatpush.msra.mxu0 %v4945
    %5539 = vmatpush.msra.mxu0 %v4941
    %5540 = vmatmul.f32.gmra.mxu0 %v5106
    %v5541 = vpop.f32.mrf.mxu0
    %v5542 = vadd.f32 %v5513, %v5541
    %5543 = vmatmul.f32.gmra.mxu0 %v5110
    %v5544 = vpop.f32.mrf.mxu0
    %v5545 = vadd.f32 %v5516, %v5544
    %5546 = vmatmul.f32.gmra.mxu0 %v5120
    %v5547 = vpop.f32.mrf.mxu0
    %v5548 = vadd.f32 %v5519, %v5547
    %5549 = vmatmul.f32.gmra.mxu0 %v5124
    %v5550 = vpop.f32.mrf.mxu0
    %v5551 = vadd.f32 %v5522, %v5550
    %5552 = vdwg.mxu0
    %5553 = vmatpush.msra.mxu0 %v5065
    %5554 = vmatpush.msra.mxu0 %v5061
    %5555 = vmatpush.msra.mxu0 %v5057
    %5556 = vmatpush.msra.mxu0 %v5053
    %5557 = vmatpush.msra.mxu0 %v5049
    %5558 = vmatpush.msra.mxu0 %v5045
    %5559 = vmatpush.msra.mxu0 %v5041
    %5560 = vmatpush.msra.mxu0 %v5037
    %5561 = vmatpush.msra.mxu0 %v5033
    %5562 = vmatpush.msra.mxu0 %v5029
    %5563 = vmatpush.msra.mxu0 %v5025
    %5564 = vmatpush.msra.mxu0 %v5021
    %5565 = vmatpush.msra.mxu0 %v5017
    %5566 = vmatpush.msra.mxu0 %v5013
    %5567 = vmatpush.msra.mxu0 %v5009
    %5568 = vmatpush.msra.mxu0 %v5005
    %5569 = vmatmul.f32.gmra.mxu0 %v5107
    %v5570 = vpop.f32.mrf.mxu0
    %v5571 = vadd.f32 %v5542, %v5570
    %5572 = vmatmul.f32.gmra.mxu0 %v5111
    %v5573 = vpop.f32.mrf.mxu0
    %v5574 = vadd.f32 %v5545, %v5573
    %5575 = vmatmul.f32.gmra.mxu0 %v5121
    %v5576 = vpop.f32.mrf.mxu0
    %v5577 = vadd.f32 %v5548, %v5576
    %5578 = vmatmul.f32.gmra.mxu0 %v5125
    %v5579 = vpop.f32.mrf.mxu0
    %v5580 = vadd.f32 %v5551, %v5579
    %5581 = vdwg.mxu0
    %5582 = vmatpush.msra.mxu0 0.0
    %5583 = vmatpush.msra.mxu0 0.0
    %5584 = vmatpush.msra.mxu0 0.0
    %5585 = vmatpush.msra.mxu0 0.0
    %5586 = vmatpush.msra.mxu0 0.0
    %5587 = vmatpush.msra.mxu0 0.0
    %5588 = vmatpush.msra.mxu0 0.0
    %5589 = vmatpush.msra.mxu0 0.0
    %5590 = vmatpush.msra.mxu0 0.0
    %5591 = vmatpush.msra.mxu0 0.0
    %5592 = vmatpush.msra.mxu0 %v5089
    %5593 = vmatpush.msra.mxu0 %v5085
    %5594 = vmatpush.msra.mxu0 %v5081
    %5595 = vmatpush.msra.mxu0 %v5077
    %5596 = vmatpush.msra.mxu0 %v5073
    %5597 = vmatpush.msra.mxu0 %v5069
    %5598 = vmatmul.f32.gmra.mxu0 %v5139
    %v5599 = vpop.f32.mrf.mxu0
    %v5600 = vadd.f32 %v5571, %v5599
    %5601 = vmatmul.f32.gmra.mxu0 %v5141
    %v5602 = vpop.f32.mrf.mxu0
    %v5603 = vadd.f32 %v5574, %v5602
    %5604 = vmatmul.f32.gmra.mxu0 %v5143
    %v5605 = vpop.f32.mrf.mxu0
    %v5606 = vadd.f32 %v5577, %v5605
    %5607 = vmatmul.f32.gmra.mxu0 %v5145
    %v5608 = vpop.f32.mrf.mxu0
    %v5609 = vadd.f32 %v5580, %v5608
    %5610 = vdwg.mxu0
    %v5611 = vadd.f32 %v4477, %v5252
    %v5612 = vadd.f32 %v4593, %v5368
    %v5613 = vadd.f32 %v4709, %v5484
    %v5614 = vadd.f32 %v4825, %v5600
    %v5615 = vadd.f32 %v4480, %v5255
    %v5616 = vadd.f32 %v4596, %v5371
    %v5617 = vadd.f32 %v4712, %v5487
    %v5618 = vadd.f32 %v4828, %v5603
    %v5619 = vadd.f32 %v4483, %v5258
    %v5620 = vadd.f32 %v4599, %v5374
    %v5621 = vadd.f32 %v4715, %v5490
    %v5622 = vadd.f32 %v4831, %v5606
    %v5623 = vadd.f32 %v4486, %v5261
    %v5624 = vadd.f32 %v4602, %v5377
    %v5625 = vadd.f32 %v4718, %v5493
    %v5626 = vadd.f32 %v4834, %v5609
    %v5627 = vld [vmem:[#allocation8] sm:$0xf]
    %v5629 = vperm.slane %v5627, 0
    %v5630 = vperm.slane %v5627, 1
    %v5631 = vperm.slane %v5627, 2
    %v5632 = vperm.slane %v5627, 3
    %v5637 = vadd.f32 %v5611, %v5629
    %v5638 = vadd.f32 %v5612, %v5630
    %v5639 = vadd.f32 %v5613, %v5631
    %v5640 = vadd.f32 %v5614, %v5632
    %v5641 = vadd.f32 %v5615, %v5629
    %v5642 = vadd.f32 %v5616, %v5630
    %v5643 = vadd.f32 %v5617, %v5631
    %v5644 = vadd.f32 %v5618, %v5632
    %v5645 = vadd.f32 %v5619, %v5629
    %v5646 = vadd.f32 %v5620, %v5630
    %v5647 = vadd.f32 %v5621, %v5631
    %v5648 = vadd.f32 %v5622, %v5632
    %v5649 = vadd.f32 %v5623, %v5629
    %v5650 = vadd.f32 %v5624, %v5630
    %v5651 = vadd.f32 %v5625, %v5631
    %v5652 = vadd.f32 %v5626, %v5632
    %v5653 = vmax.f32 %v5637, 0.0
    %v5654 = vmax.f32 %v5638, 0.0
    %v5655 = vmax.f32 %v5639, 0.0
    %v5656 = vmax.f32 %v5640, 0.0
    %v5657 = vmax.f32 %v5641, 0.0
    %v5658 = vmax.f32 %v5642, 0.0
    %v5659 = vmax.f32 %v5643, 0.0
    %v5660 = vmax.f32 %v5644, 0.0
    %v5661 = vmax.f32 %v5645, 0.0
    %v5662 = vmax.f32 %v5646, 0.0
    %v5663 = vmax.f32 %v5647, 0.0
    %v5664 = vmax.f32 %v5648, 0.0
    %v5665 = vmax.f32 %v5649, 0.0
    %v5666 = vmax.f32 %v5650, 0.0
    %v5667 = vmax.f32 %v5651, 0.0
    %v5668 = vmax.f32 %v5652, 0.0
    %v5685 = vrot.slane %v5654, 6
    %v5686 = vrot.slane %v5655, 4
    %v5687 = vrot.slane %v5656, 2
    %v5688 = vrot.slane %v5658, 6
    %v5689 = vrot.slane %v5659, 4
    %v5690 = vrot.slane %v5660, 2
    %v5691 = vrot.slane %v5662, 6
    %v5692 = vrot.slane %v5663, 4
    %v5693 = vrot.slane %v5664, 2
    %v5694 = vrot.slane %v5666, 6
    %v5695 = vrot.slane %v5667, 4
    %v5696 = vrot.slane %v5668, 2
    %v5697 = vsel %vm668, %v5653, %v5685
    %v5698 = vsel %vm669, %v5686, %v5687
    %v5699 = vsel %vm1083, %v5697, %v5698
    %v5700 = vsel %vm1085, %v5653, %v5685
    %v5701 = vsel %vm297, %v5687, %v5686
    %v5702 = vsel %vm1088, %v5700, %v5701
    %v5703 = vrot.slane %v5702, 2
    %v5704 = vsel %vm669, %v5653, %v5685
    %v5705 = vsel %vm668, %v5686, %v5687
    %v5706 = vsel %vm1083, %v5705, %v5704
    %v5707 = vrot.slane %v5706, 4
    %v5708 = vsel %vm297, %v5685, %v5653
    %v5709 = vsel %vm1085, %v5686, %v5687
    %v5710 = vsel %vm1088, %v5709, %v5708
    %v5711 = vrot.slane %v5710, 6
    %v5712 = vsel %vm668, %v5657, %v5688
    %v5713 = vsel %vm669, %v5689, %v5690
    %v5714 = vsel %vm1083, %v5712, %v5713
    %v5715 = vsel %vm1085, %v5657, %v5688
    %v5716 = vsel %vm297, %v5690, %v5689
    %v5717 = vsel %vm1088, %v5715, %v5716
    %v5718 = vrot.slane %v5717, 2
    %v5719 = vsel %vm669, %v5657, %v5688
    %v5720 = vsel %vm668, %v5689, %v5690
    %v5721 = vsel %vm1083, %v5720, %v5719
    %v5722 = vrot.slane %v5721, 4
    %v5723 = vsel %vm297, %v5688, %v5657
    %v5724 = vsel %vm1085, %v5689, %v5690
    %v5725 = vsel %vm1088, %v5724, %v5723
    %v5726 = vrot.slane %v5725, 6
    %v5727 = vsel %vm668, %v5661, %v5691
    %v5728 = vsel %vm669, %v5692, %v5693
    %v5729 = vsel %vm1083, %v5727, %v5728
    %v5730 = vsel %vm1085, %v5661, %v5691
    %v5731 = vsel %vm297, %v5693, %v5692
    %v5732 = vsel %vm1088, %v5730, %v5731
    %v5733 = vrot.slane %v5732, 2
    %v5734 = vsel %vm669, %v5661, %v5691
    %v5735 = vsel %vm668, %v5692, %v5693
    %v5736 = vsel %vm1083, %v5735, %v5734
    %v5737 = vrot.slane %v5736, 4
    %v5738 = vsel %vm297, %v5691, %v5661
    %v5739 = vsel %vm1085, %v5692, %v5693
    %v5740 = vsel %vm1088, %v5739, %v5738
    %v5741 = vrot.slane %v5740, 6
    %v5742 = vsel %vm668, %v5665, %v5694
    %v5743 = vsel %vm669, %v5695, %v5696
    %v5744 = vsel %vm1083, %v5742, %v5743
    %v5745 = vsel %vm1085, %v5665, %v5694
    %v5746 = vsel %vm297, %v5696, %v5695
    %v5747 = vsel %vm1088, %v5745, %v5746
    %v5748 = vrot.slane %v5747, 2
    %5749 = vst [vmem:[#allocation1] ss:$4 sm:$0xff] %v5699
    %v5750 = vld.sshfl [vmem:[#allocation1] sm:$0xff pattern:$0x73625140]
    %v5751 = vld.sshfl [vmem:[#allocation1 + $0x8] sm:$0xff pattern:$0x73625140]
    %v5752 = vld.sshfl [vmem:[#allocation1 + $0x10] sm:$0xff pattern:$0x73625140]
    %v5753 = vld.sshfl [vmem:[#allocation1 + $0x18] sm:$0xff pattern:$0x73625140]
    %s5754 = scalar_lea.vmem [#allocation1], 32
    %5755 = vst [vmem:[%s5754] ss:$4 sm:$0xff] %v5703
    %v5756 = vld.sshfl [vmem:[#allocation1 + $0x20] sm:$0xff pattern:$0x73625140]
    %v5757 = vld.sshfl [vmem:[#allocation1 + $0x28] sm:$0xff pattern:$0x73625140]
    %v5758 = vld.sshfl [vmem:[#allocation1 + $0x30] sm:$0xff pattern:$0x73625140]
    %v5759 = vld.sshfl [vmem:[#allocation1 + $0x38] sm:$0xff pattern:$0x73625140]
    %5760 = vst [vmem:[#allocation1] ss:$4 sm:$0xff] %v5707
    %v5761 = vld.sshfl [vmem:[#allocation1] sm:$0xff pattern:$0x73625140]
    %v5762 = vld.sshfl [vmem:[#allocation1 + $0x8] sm:$0xff pattern:$0x73625140]
    %v5763 = vld.sshfl [vmem:[#allocation1 + $0x10] sm:$0xff pattern:$0x73625140]
    %v5764 = vld.sshfl [vmem:[#allocation1 + $0x18] sm:$0xff pattern:$0x73625140]
    %5765 = vst [vmem:[%s5754] ss:$4 sm:$0xff] %v5711
    %v5766 = vld.sshfl [vmem:[#allocation1 + $0x20] sm:$0xff pattern:$0x73625140]
    %v5767 = vld.sshfl [vmem:[#allocation1 + $0x28] sm:$0xff pattern:$0x73625140]
    %v5768 = vld.sshfl [vmem:[#allocation1 + $0x30] sm:$0xff pattern:$0x73625140]
    %v5769 = vld.sshfl [vmem:[#allocation1 + $0x38] sm:$0xff pattern:$0x73625140]
    %5770 = vst [vmem:[#allocation1] ss:$4 sm:$0xff] %v5714
    %v5771 = vld.sshfl [vmem:[#allocation1] sm:$0xff pattern:$0x73625140]
    %v5772 = vld.sshfl [vmem:[#allocation1 + $0x8] sm:$0xff pattern:$0x73625140]
    %v5773 = vld.sshfl [vmem:[#allocation1 + $0x10] sm:$0xff pattern:$0x73625140]
    %v5774 = vld.sshfl [vmem:[#allocation1 + $0x18] sm:$0xff pattern:$0x73625140]
    %5775 = vst [vmem:[%s5754] ss:$4 sm:$0xff] %v5718
    %v5776 = vld.sshfl [vmem:[#allocation1 + $0x20] sm:$0xff pattern:$0x73625140]
    %v5777 = vld.sshfl [vmem:[#allocation1 + $0x28] sm:$0xff pattern:$0x73625140]
    %v5778 = vld.sshfl [vmem:[#allocation1 + $0x30] sm:$0xff pattern:$0x73625140]
    %v5779 = vld.sshfl [vmem:[#allocation1 + $0x38] sm:$0xff pattern:$0x73625140]
    %5780 = vst [vmem:[#allocation1] ss:$4 sm:$0xff] %v5722
    %v5781 = vld.sshfl [vmem:[#allocation1] sm:$0xff pattern:$0x73625140]
    %v5782 = vld.sshfl [vmem:[#allocation1 + $0x8] sm:$0xff pattern:$0x73625140]
    %v5783 = vld.sshfl [vmem:[#allocation1 + $0x10] sm:$0xff pattern:$0x73625140]
    %v5784 = vld.sshfl [vmem:[#allocation1 + $0x18] sm:$0xff pattern:$0x73625140]
    %5785 = vst [vmem:[%s5754] ss:$4 sm:$0xff] %v5726
    %v5786 = vld.sshfl [vmem:[#allocation1 + $0x20] sm:$0xff pattern:$0x73625140]
    %v5787 = vld.sshfl [vmem:[#allocation1 + $0x28] sm:$0xff pattern:$0x73625140]
    %v5788 = vld.sshfl [vmem:[#allocation1 + $0x30] sm:$0xff pattern:$0x73625140]
    %v5789 = vld.sshfl [vmem:[#allocation1 + $0x38] sm:$0xff pattern:$0x73625140]
    %5790 = vst [vmem:[#allocation1] ss:$4 sm:$0xff] %v5729
    %v5791 = vld.sshfl [vmem:[#allocation1] sm:$0xff pattern:$0x73625140]
    %v5792 = vld.sshfl [vmem:[#allocation1 + $0x8] sm:$0xff pattern:$0x73625140]
    %v5793 = vld.sshfl [vmem:[#allocation1 + $0x10] sm:$0xff pattern:$0x73625140]
    %v5794 = vld.sshfl [vmem:[#allocation1 + $0x18] sm:$0xff pattern:$0x73625140]
    %5795 = vst [vmem:[%s5754] ss:$4 sm:$0xff] %v5733
    %v5796 = vld.sshfl [vmem:[#allocation1 + $0x20] sm:$0xff pattern:$0x73625140]
    %v5797 = vld.sshfl [vmem:[#allocation1 + $0x28] sm:$0xff pattern:$0x73625140]
    %v5798 = vld.sshfl [vmem:[#allocation1 + $0x30] sm:$0xff pattern:$0x73625140]
    %v5799 = vld.sshfl [vmem:[#allocation1 + $0x38] sm:$0xff pattern:$0x73625140]
    %5800 = vst [vmem:[#allocation1] ss:$4 sm:$0xff] %v5737
    %v5801 = vld.sshfl [vmem:[#allocation1] sm:$0xff pattern:$0x73625140]
    %v5802 = vld.sshfl [vmem:[#allocation1 + $0x8] sm:$0xff pattern:$0x73625140]
    %v5803 = vld.sshfl [vmem:[#allocation1 + $0x10] sm:$0xff pattern:$0x73625140]
    %v5804 = vld.sshfl [vmem:[#allocation1 + $0x18] sm:$0xff pattern:$0x73625140]
    %5805 = vst [vmem:[%s5754] ss:$4 sm:$0xff] %v5741
    %v5806 = vld.sshfl [vmem:[#allocation1 + $0x20] sm:$0xff pattern:$0x73625140]
    %v5807 = vld.sshfl [vmem:[#allocation1 + $0x28] sm:$0xff pattern:$0x73625140]
    %v5808 = vld.sshfl [vmem:[#allocation1 + $0x30] sm:$0xff pattern:$0x73625140]
    %v5809 = vld.sshfl [vmem:[#allocation1 + $0x38] sm:$0xff pattern:$0x73625140]
    %5810 = vst [vmem:[#allocation1] ss:$4 sm:$0xff] %v5744
    %v5811 = vld.sshfl [vmem:[#allocation1] sm:$0xff pattern:$0x73625140]
    %v5812 = vld.sshfl [vmem:[#allocation1 + $0x8] sm:$0xff pattern:$0x73625140]
    %v5813 = vld.sshfl [vmem:[#allocation1 + $0x10] sm:$0xff pattern:$0x73625140]
    %v5814 = vld.sshfl [vmem:[#allocation1 + $0x18] sm:$0xff pattern:$0x73625140]
    %5815 = vst [vmem:[%s5754] ss:$4 sm:$0xff] %v5748
    %v5816 = vld.sshfl [vmem:[#allocation1 + $0x20] sm:$0xff pattern:$0x73625140]
    %v5817 = vld.sshfl [vmem:[#allocation1 + $0x28] sm:$0xff pattern:$0x73625140]
    %v5818 = vld.sshfl [vmem:[#allocation1 + $0x30] sm:$0xff pattern:$0x73625140]
    %v5819 = vld.sshfl [vmem:[#allocation1 + $0x38] sm:$0xff pattern:$0x73625140]
    %v5876 = vsel %vm668, %v5750, -inf
    %v5877 = vrot.slane %v5876, 4
    %v5878 = vmax.f32 %v5876, %v5877
    %v5879 = vrot.slane %v5878, 2
    %v5880 = vmax.f32 %v5878, %v5879
    %v5881 = vrot.slane %v5880, 1
    %v5882 = vmax.f32 %v5880, %v5881
    %v5883 = vsel %vm668, %v5751, -inf
    %v5884 = vrot.slane %v5883, 4
    %v5885 = vmax.f32 %v5883, %v5884
    %v5886 = vrot.slane %v5885, 2
    %v5887 = vmax.f32 %v5885, %v5886
    %v5888 = vrot.slane %v5887, 1
    %v5889 = vmax.f32 %v5887, %v5888
    %v5890 = vsel %vm668, %v5752, -inf
    %v5891 = vrot.slane %v5890, 4
    %v5892 = vmax.f32 %v5890, %v5891
    %v5893 = vrot.slane %v5892, 2
    %v5894 = vmax.f32 %v5892, %v5893
    %v5895 = vrot.slane %v5894, 1
    %v5896 = vmax.f32 %v5894, %v5895
    %v5897 = vsel %vm1463, %v5753, -inf
    %v5898 = vrot.slane %v5897, 4
    %v5899 = vmax.f32 %v5897, %v5898
    %v5900 = vrot.slane %v5899, 2
    %v5901 = vmax.f32 %v5899, %v5900
    %v5902 = vrot.slane %v5901, 1
    %v5903 = vmax.f32 %v5901, %v5902
    %v5904 = vsel %vm668, %v5756, -inf
    %v5905 = vrot.slane %v5904, 4
    %v5906 = vmax.f32 %v5904, %v5905
    %v5907 = vrot.slane %v5906, 2
    %v5908 = vmax.f32 %v5906, %v5907
    %v5909 = vrot.slane %v5908, 1
    %v5910 = vmax.f32 %v5908, %v5909
    %v5911 = vsel %vm668, %v5757, -inf
    %v5912 = vrot.slane %v5911, 4
    %v5913 = vmax.f32 %v5911, %v5912
    %v5914 = vrot.slane %v5913, 2
    %v5915 = vmax.f32 %v5913, %v5914
    %v5916 = vrot.slane %v5915, 1
    %v5917 = vmax.f32 %v5915, %v5916
    %v5918 = vsel %vm668, %v5758, -inf
    %v5919 = vrot.slane %v5918, 4
    %v5920 = vmax.f32 %v5918, %v5919
    %v5921 = vrot.slane %v5920, 2
    %v5922 = vmax.f32 %v5920, %v5921
    %v5923 = vrot.slane %v5922, 1
    %v5924 = vmax.f32 %v5922, %v5923
    %v5925 = vsel %vm1463, %v5759, -inf
    %v5926 = vrot.slane %v5925, 4
    %v5927 = vmax.f32 %v5925, %v5926
    %v5928 = vrot.slane %v5927, 2
    %v5929 = vmax.f32 %v5927, %v5928
    %v5930 = vrot.slane %v5929, 1
    %v5931 = vmax.f32 %v5929, %v5930
    %v5932 = vsel %vm668, %v5761, -inf
    %v5933 = vrot.slane %v5932, 4
    %v5934 = vmax.f32 %v5932, %v5933
    %v5935 = vrot.slane %v5934, 2
    %v5936 = vmax.f32 %v5934, %v5935
    %v5937 = vrot.slane %v5936, 1
    %v5938 = vmax.f32 %v5936, %v5937
    %v5939 = vsel %vm668, %v5762, -inf
    %v5940 = vrot.slane %v5939, 4
    %v5941 = vmax.f32 %v5939, %v5940
    %v5942 = vrot.slane %v5941, 2
    %v5943 = vmax.f32 %v5941, %v5942
    %v5944 = vrot.slane %v5943, 1
    %v5945 = vmax.f32 %v5943, %v5944
    %v5946 = vsel %vm668, %v5763, -inf
    %v5947 = vrot.slane %v5946, 4
    %v5948 = vmax.f32 %v5946, %v5947
    %v5949 = vrot.slane %v5948, 2
    %v5950 = vmax.f32 %v5948, %v5949
    %v5951 = vrot.slane %v5950, 1
    %v5952 = vmax.f32 %v5950, %v5951
    %v5953 = vsel %vm1463, %v5764, -inf
    %v5954 = vrot.slane %v5953, 4
    %v5955 = vmax.f32 %v5953, %v5954
    %v5956 = vrot.slane %v5955, 2
    %v5957 = vmax.f32 %v5955, %v5956
    %v5958 = vrot.slane %v5957, 1
    %v5959 = vmax.f32 %v5957, %v5958
    %v5960 = vsel %vm668, %v5766, -inf
    %v5961 = vrot.slane %v5960, 4
    %v5962 = vmax.f32 %v5960, %v5961
    %v5963 = vrot.slane %v5962, 2
    %v5964 = vmax.f32 %v5962, %v5963
    %v5965 = vrot.slane %v5964, 1
    %v5966 = vmax.f32 %v5964, %v5965
    %v5967 = vsel %vm668, %v5767, -inf
    %v5968 = vrot.slane %v5967, 4
    %v5969 = vmax.f32 %v5967, %v5968
    %v5970 = vrot.slane %v5969, 2
    %v5971 = vmax.f32 %v5969, %v5970
    %v5972 = vrot.slane %v5971, 1
    %v5973 = vmax.f32 %v5971, %v5972
    %v5974 = vsel %vm668, %v5768, -inf
    %v5975 = vrot.slane %v5974, 4
    %v5976 = vmax.f32 %v5974, %v5975
    %v5977 = vrot.slane %v5976, 2
    %v5978 = vmax.f32 %v5976, %v5977
    %v5979 = vrot.slane %v5978, 1
    %v5980 = vmax.f32 %v5978, %v5979
    %v5981 = vsel %vm1463, %v5769, -inf
    %v5982 = vrot.slane %v5981, 4
    %v5983 = vmax.f32 %v5981, %v5982
    %v5984 = vrot.slane %v5983, 2
    %v5985 = vmax.f32 %v5983, %v5984
    %v5986 = vrot.slane %v5985, 1
    %v5987 = vmax.f32 %v5985, %v5986
    %v5988 = vsel %vm668, %v5771, -inf
    %v5989 = vrot.slane %v5988, 4
    %v5990 = vmax.f32 %v5988, %v5989
    %v5991 = vrot.slane %v5990, 2
    %v5992 = vmax.f32 %v5990, %v5991
    %v5993 = vrot.slane %v5992, 1
    %v5994 = vmax.f32 %v5992, %v5993
    %v5995 = vsel %vm668, %v5772, -inf
    %v5996 = vrot.slane %v5995, 4
    %v5997 = vmax.f32 %v5995, %v5996
    %v5998 = vrot.slane %v5997, 2
    %v5999 = vmax.f32 %v5997, %v5998
    %v6000 = vrot.slane %v5999, 1
    %v6001 = vmax.f32 %v5999, %v6000
    %v6002 = vsel %vm668, %v5773, -inf
    %v6003 = vrot.slane %v6002, 4
    %v6004 = vmax.f32 %v6002, %v6003
    %v6005 = vrot.slane %v6004, 2
    %v6006 = vmax.f32 %v6004, %v6005
    %v6007 = vrot.slane %v6006, 1
    %v6008 = vmax.f32 %v6006, %v6007
    %v6009 = vsel %vm1463, %v5774, -inf
    %v6010 = vrot.slane %v6009, 4
    %v6011 = vmax.f32 %v6009, %v6010
    %v6012 = vrot.slane %v6011, 2
    %v6013 = vmax.f32 %v6011, %v6012
    %v6014 = vrot.slane %v6013, 1
    %v6015 = vmax.f32 %v6013, %v6014
    %v6016 = vsel %vm668, %v5776, -inf
    %v6017 = vrot.slane %v6016, 4
    %v6018 = vmax.f32 %v6016, %v6017
    %v6019 = vrot.slane %v6018, 2
    %v6020 = vmax.f32 %v6018, %v6019
    %v6021 = vrot.slane %v6020, 1
    %v6022 = vmax.f32 %v6020, %v6021
    %v6023 = vsel %vm668, %v5777, -inf
    %v6024 = vrot.slane %v6023, 4
    %v6025 = vmax.f32 %v6023, %v6024
    %v6026 = vrot.slane %v6025, 2
    %v6027 = vmax.f32 %v6025, %v6026
    %v6028 = vrot.slane %v6027, 1
    %v6029 = vmax.f32 %v6027, %v6028
    %v6030 = vsel %vm668, %v5778, -inf
    %v6031 = vrot.slane %v6030, 4
    %v6032 = vmax.f32 %v6030, %v6031
    %v6033 = vrot.slane %v6032, 2
    %v6034 = vmax.f32 %v6032, %v6033
    %v6035 = vrot.slane %v6034, 1
    %v6036 = vmax.f32 %v6034, %v6035
    %v6037 = vsel %vm1463, %v5779, -inf
    %v6038 = vrot.slane %v6037, 4
    %v6039 = vmax.f32 %v6037, %v6038
    %v6040 = vrot.slane %v6039, 2
    %v6041 = vmax.f32 %v6039, %v6040
    %v6042 = vrot.slane %v6041, 1
    %v6043 = vmax.f32 %v6041, %v6042
    %v6044 = vsel %vm668, %v5781, -inf
    %v6045 = vrot.slane %v6044, 4
    %v6046 = vmax.f32 %v6044, %v6045
    %v6047 = vrot.slane %v6046, 2
    %v6048 = vmax.f32 %v6046, %v6047
    %v6049 = vrot.slane %v6048, 1
    %v6050 = vmax.f32 %v6048, %v6049
    %v6051 = vsel %vm668, %v5782, -inf
    %v6052 = vrot.slane %v6051, 4
    %v6053 = vmax.f32 %v6051, %v6052
    %v6054 = vrot.slane %v6053, 2
    %v6055 = vmax.f32 %v6053, %v6054
    %v6056 = vrot.slane %v6055, 1
    %v6057 = vmax.f32 %v6055, %v6056
    %v6058 = vsel %vm668, %v5783, -inf
    %v6059 = vrot.slane %v6058, 4
    %v6060 = vmax.f32 %v6058, %v6059
    %v6061 = vrot.slane %v6060, 2
    %v6062 = vmax.f32 %v6060, %v6061
    %v6063 = vrot.slane %v6062, 1
    %v6064 = vmax.f32 %v6062, %v6063
    %v6065 = vsel %vm1463, %v5784, -inf
    %v6066 = vrot.slane %v6065, 4
    %v6067 = vmax.f32 %v6065, %v6066
    %v6068 = vrot.slane %v6067, 2
    %v6069 = vmax.f32 %v6067, %v6068
    %v6070 = vrot.slane %v6069, 1
    %v6071 = vmax.f32 %v6069, %v6070
    %v6072 = vsel %vm668, %v5786, -inf
    %v6073 = vrot.slane %v6072, 4
    %v6074 = vmax.f32 %v6072, %v6073
    %v6075 = vrot.slane %v6074, 2
    %v6076 = vmax.f32 %v6074, %v6075
    %v6077 = vrot.slane %v6076, 1
    %v6078 = vmax.f32 %v6076, %v6077
    %v6079 = vsel %vm668, %v5787, -inf
    %v6080 = vrot.slane %v6079, 4
    %v6081 = vmax.f32 %v6079, %v6080
    %v6082 = vrot.slane %v6081, 2
    %v6083 = vmax.f32 %v6081, %v6082
    %v6084 = vrot.slane %v6083, 1
    %v6085 = vmax.f32 %v6083, %v6084
    %v6086 = vsel %vm668, %v5788, -inf
    %v6087 = vrot.slane %v6086, 4
    %v6088 = vmax.f32 %v6086, %v6087
    %v6089 = vrot.slane %v6088, 2
    %v6090 = vmax.f32 %v6088, %v6089
    %v6091 = vrot.slane %v6090, 1
    %v6092 = vmax.f32 %v6090, %v6091
    %v6093 = vsel %vm1463, %v5789, -inf
    %v6094 = vrot.slane %v6093, 4
    %v6095 = vmax.f32 %v6093, %v6094
    %v6096 = vrot.slane %v6095, 2
    %v6097 = vmax.f32 %v6095, %v6096
    %v6098 = vrot.slane %v6097, 1
    %v6099 = vmax.f32 %v6097, %v6098
    %v6100 = vsel %vm668, %v5791, -inf
    %v6101 = vrot.slane %v6100, 4
    %v6102 = vmax.f32 %v6100, %v6101
    %v6103 = vrot.slane %v6102, 2
    %v6104 = vmax.f32 %v6102, %v6103
    %v6105 = vrot.slane %v6104, 1
    %v6106 = vmax.f32 %v6104, %v6105
    %v6107 = vsel %vm668, %v5792, -inf
    %v6108 = vrot.slane %v6107, 4
    %v6109 = vmax.f32 %v6107, %v6108
    %v6110 = vrot.slane %v6109, 2
    %v6111 = vmax.f32 %v6109, %v6110
    %v6112 = vrot.slane %v6111, 1
    %v6113 = vmax.f32 %v6111, %v6112
    %v6114 = vsel %vm668, %v5793, -inf
    %v6115 = vrot.slane %v6114, 4
    %v6116 = vmax.f32 %v6114, %v6115
    %v6117 = vrot.slane %v6116, 2
    %v6118 = vmax.f32 %v6116, %v6117
    %v6119 = vrot.slane %v6118, 1
    %v6120 = vmax.f32 %v6118, %v6119
    %v6121 = vsel %vm1463, %v5794, -inf
    %v6122 = vrot.slane %v6121, 4
    %v6123 = vmax.f32 %v6121, %v6122
    %v6124 = vrot.slane %v6123, 2
    %v6125 = vmax.f32 %v6123, %v6124
    %v6126 = vrot.slane %v6125, 1
    %v6127 = vmax.f32 %v6125, %v6126
    %v6128 = vsel %vm668, %v5796, -inf
    %v6129 = vrot.slane %v6128, 4
    %v6130 = vmax.f32 %v6128, %v6129
    %v6131 = vrot.slane %v6130, 2
    %v6132 = vmax.f32 %v6130, %v6131
    %v6133 = vrot.slane %v6132, 1
    %v6134 = vmax.f32 %v6132, %v6133
    %v6135 = vsel %vm668, %v5797, -inf
    %v6136 = vrot.slane %v6135, 4
    %v6137 = vmax.f32 %v6135, %v6136
    %v6138 = vrot.slane %v6137, 2
    %v6139 = vmax.f32 %v6137, %v6138
    %v6140 = vrot.slane %v6139, 1
    %v6141 = vmax.f32 %v6139, %v6140
    %v6142 = vsel %vm668, %v5798, -inf
    %v6143 = vrot.slane %v6142, 4
    %v6144 = vmax.f32 %v6142, %v6143
    %v6145 = vrot.slane %v6144, 2
    %v6146 = vmax.f32 %v6144, %v6145
    %v6147 = vrot.slane %v6146, 1
    %v6148 = vmax.f32 %v6146, %v6147
    %v6149 = vsel %vm1463, %v5799, -inf
    %v6150 = vrot.slane %v6149, 4
    %v6151 = vmax.f32 %v6149, %v6150
    %v6152 = vrot.slane %v6151, 2
    %v6153 = vmax.f32 %v6151, %v6152
    %v6154 = vrot.slane %v6153, 1
    %v6155 = vmax.f32 %v6153, %v6154
    %v6156 = vsel %vm668, %v5801, -inf
    %v6157 = vrot.slane %v6156, 4
    %v6158 = vmax.f32 %v6156, %v6157
    %v6159 = vrot.slane %v6158, 2
    %v6160 = vmax.f32 %v6158, %v6159
    %v6161 = vrot.slane %v6160, 1
    %v6162 = vmax.f32 %v6160, %v6161
    %v6163 = vsel %vm668, %v5802, -inf
    %v6164 = vrot.slane %v6163, 4
    %v6165 = vmax.f32 %v6163, %v6164
    %v6166 = vrot.slane %v6165, 2
    %v6167 = vmax.f32 %v6165, %v6166
    %v6168 = vrot.slane %v6167, 1
    %v6169 = vmax.f32 %v6167, %v6168
    %v6170 = vsel %vm668, %v5803, -inf
    %v6171 = vrot.slane %v6170, 4
    %v6172 = vmax.f32 %v6170, %v6171
    %v6173 = vrot.slane %v6172, 2
    %v6174 = vmax.f32 %v6172, %v6173
    %v6175 = vrot.slane %v6174, 1
    %v6176 = vmax.f32 %v6174, %v6175
    %v6177 = vsel %vm1463, %v5804, -inf
    %v6178 = vrot.slane %v6177, 4
    %v6179 = vmax.f32 %v6177, %v6178
    %v6180 = vrot.slane %v6179, 2
    %v6181 = vmax.f32 %v6179, %v6180
    %v6182 = vrot.slane %v6181, 1
    %v6183 = vmax.f32 %v6181, %v6182
    %v6184 = vsel %vm668, %v5806, -inf
    %v6185 = vrot.slane %v6184, 4
    %v6186 = vmax.f32 %v6184, %v6185
    %v6187 = vrot.slane %v6186, 2
    %v6188 = vmax.f32 %v6186, %v6187
    %v6189 = vrot.slane %v6188, 1
    %v6190 = vmax.f32 %v6188, %v6189
    %v6191 = vsel %vm668, %v5807, -inf
    %v6192 = vrot.slane %v6191, 4
    %v6193 = vmax.f32 %v6191, %v6192
    %v6194 = vrot.slane %v6193, 2
    %v6195 = vmax.f32 %v6193, %v6194
    %v6196 = vrot.slane %v6195, 1
    %v6197 = vmax.f32 %v6195, %v6196
    %v6198 = vsel %vm668, %v5808, -inf
    %v6199 = vrot.slane %v6198, 4
    %v6200 = vmax.f32 %v6198, %v6199
    %v6201 = vrot.slane %v6200, 2
    %v6202 = vmax.f32 %v6200, %v6201
    %v6203 = vrot.slane %v6202, 1
    %v6204 = vmax.f32 %v6202, %v6203
    %v6205 = vsel %vm1463, %v5809, -inf
    %v6206 = vrot.slane %v6205, 4
    %v6207 = vmax.f32 %v6205, %v6206
    %v6208 = vrot.slane %v6207, 2
    %v6209 = vmax.f32 %v6207, %v6208
    %v6210 = vrot.slane %v6209, 1
    %v6211 = vmax.f32 %v6209, %v6210
    %v6212 = vsel %vm668, %v5811, -inf
    %v6213 = vrot.slane %v6212, 4
    %v6214 = vmax.f32 %v6212, %v6213
    %v6215 = vrot.slane %v6214, 2
    %v6216 = vmax.f32 %v6214, %v6215
    %v6217 = vrot.slane %v6216, 1
    %v6218 = vmax.f32 %v6216, %v6217
    %v6219 = vsel %vm668, %v5812, -inf
    %v6220 = vrot.slane %v6219, 4
    %v6221 = vmax.f32 %v6219, %v6220
    %v6222 = vrot.slane %v6221, 2
    %v6223 = vmax.f32 %v6221, %v6222
    %v6224 = vrot.slane %v6223, 1
    %v6225 = vmax.f32 %v6223, %v6224
    %v6226 = vsel %vm668, %v5813, -inf
    %v6227 = vrot.slane %v6226, 4
    %v6228 = vmax.f32 %v6226, %v6227
    %v6229 = vrot.slane %v6228, 2
    %v6230 = vmax.f32 %v6228, %v6229
    %v6231 = vrot.slane %v6230, 1
    %v6232 = vmax.f32 %v6230, %v6231
    %v6233 = vsel %vm1463, %v5814, -inf
    %v6234 = vrot.slane %v6233, 4
    %v6235 = vmax.f32 %v6233, %v6234
    %v6236 = vrot.slane %v6235, 2
    %v6237 = vmax.f32 %v6235, %v6236
    %v6238 = vrot.slane %v6237, 1
    %v6239 = vmax.f32 %v6237, %v6238
    %v6240 = vsel %vm668, %v5816, -inf
    %v6241 = vrot.slane %v6240, 4
    %v6242 = vmax.f32 %v6240, %v6241
    %v6243 = vrot.slane %v6242, 2
    %v6244 = vmax.f32 %v6242, %v6243
    %v6245 = vrot.slane %v6244, 1
    %v6246 = vmax.f32 %v6244, %v6245
    %v6247 = vsel %vm668, %v5817, -inf
    %v6248 = vrot.slane %v6247, 4
    %v6249 = vmax.f32 %v6247, %v6248
    %v6250 = vrot.slane %v6249, 2
    %v6251 = vmax.f32 %v6249, %v6250
    %v6252 = vrot.slane %v6251, 1
    %v6253 = vmax.f32 %v6251, %v6252
    %v6254 = vsel %vm668, %v5818, -inf
    %v6255 = vrot.slane %v6254, 4
    %v6256 = vmax.f32 %v6254, %v6255
    %v6257 = vrot.slane %v6256, 2
    %v6258 = vmax.f32 %v6256, %v6257
    %v6259 = vrot.slane %v6258, 1
    %v6260 = vmax.f32 %v6258, %v6259
    %v6261 = vsel %vm1463, %v5819, -inf
    %v6262 = vrot.slane %v6261, 4
    %v6263 = vmax.f32 %v6261, %v6262
    %v6264 = vrot.slane %v6263, 2
    %v6265 = vmax.f32 %v6263, %v6264
    %v6266 = vrot.slane %v6265, 1
    %v6267 = vmax.f32 %v6265, %v6266
    %6324 = vrot.lane.b32.xlu0 %v5882, 96
    %v6325 = vpop.permute.xlu0 %6324
    %6326 = vrot.lane.b32.xlu0 %v5889, 96
    %v6327 = vpop.permute.xlu0 %6326
    %6328 = vrot.lane.b32.xlu0 %v5896, 96
    %v6329 = vpop.permute.xlu0 %6328
    %6330 = vrot.lane.b32.xlu0 %v5903, 96
    %v6331 = vpop.permute.xlu0 %6330
    %6332 = vrot.lane.b32.xlu0 %v5910, 96
    %v6333 = vpop.permute.xlu0 %6332
    %6334 = vrot.lane.b32.xlu0 %v5917, 96
    %v6335 = vpop.permute.xlu0 %6334
    %6336 = vrot.lane.b32.xlu0 %v5924, 96
    %v6337 = vpop.permute.xlu0 %6336
    %6338 = vrot.lane.b32.xlu0 %v5931, 96
    %v6339 = vpop.permute.xlu0 %6338
    %6340 = vrot.lane.b32.xlu0 %v5938, 96
    %v6341 = vpop.permute.xlu0 %6340
    %6342 = vrot.lane.b32.xlu0 %v5945, 96
    %v6343 = vpop.permute.xlu0 %6342
    %6344 = vrot.lane.b32.xlu0 %v5952, 96
    %v6345 = vpop.permute.xlu0 %6344
    %6346 = vrot.lane.b32.xlu0 %v5959, 96
    %v6347 = vpop.permute.xlu0 %6346
    %6348 = vrot.lane.b32.xlu0 %v5966, 96
    %v6349 = vpop.permute.xlu0 %6348
    %6350 = vrot.lane.b32.xlu0 %v5973, 96
    %v6351 = vpop.permute.xlu0 %6350
    %6352 = vrot.lane.b32.xlu0 %v5980, 96
    %v6353 = vpop.permute.xlu0 %6352
    %6354 = vrot.lane.b32.xlu0 %v5987, 96
    %v6355 = vpop.permute.xlu0 %6354
    %6356 = vrot.lane.b32.xlu0 %v5994, 96
    %v6357 = vpop.permute.xlu0 %6356
    %6358 = vrot.lane.b32.xlu0 %v6001, 96
    %v6359 = vpop.permute.xlu0 %6358
    %6360 = vrot.lane.b32.xlu0 %v6008, 96
    %v6361 = vpop.permute.xlu0 %6360
    %6362 = vrot.lane.b32.xlu0 %v6015, 96
    %v6363 = vpop.permute.xlu0 %6362
    %6364 = vrot.lane.b32.xlu0 %v6022, 96
    %v6365 = vpop.permute.xlu0 %6364
    %6366 = vrot.lane.b32.xlu0 %v6029, 96
    %v6367 = vpop.permute.xlu0 %6366
    %6368 = vrot.lane.b32.xlu0 %v6036, 96
    %v6369 = vpop.permute.xlu0 %6368
    %6370 = vrot.lane.b32.xlu0 %v6043, 96
    %v6371 = vpop.permute.xlu0 %6370
    %6372 = vrot.lane.b32.xlu0 %v6050, 96
    %v6373 = vpop.permute.xlu0 %6372
    %6374 = vrot.lane.b32.xlu0 %v6057, 96
    %v6375 = vpop.permute.xlu0 %6374
    %6376 = vrot.lane.b32.xlu0 %v6064, 96
    %v6377 = vpop.permute.xlu0 %6376
    %6378 = vrot.lane.b32.xlu0 %v6071, 96
    %v6379 = vpop.permute.xlu0 %6378
    %6380 = vrot.lane.b32.xlu0 %v6078, 96
    %v6381 = vpop.permute.xlu0 %6380
    %6382 = vrot.lane.b32.xlu0 %v6085, 96
    %v6383 = vpop.permute.xlu0 %6382
    %6384 = vrot.lane.b32.xlu0 %v6092, 96
    %v6385 = vpop.permute.xlu0 %6384
    %6386 = vrot.lane.b32.xlu0 %v6099, 96
    %v6387 = vpop.permute.xlu0 %6386
    %6388 = vrot.lane.b32.xlu0 %v6106, 96
    %v6389 = vpop.permute.xlu0 %6388
    %6390 = vrot.lane.b32.xlu0 %v6113, 96
    %v6391 = vpop.permute.xlu0 %6390
    %6392 = vrot.lane.b32.xlu0 %v6120, 96
    %v6393 = vpop.permute.xlu0 %6392
    %6394 = vrot.lane.b32.xlu0 %v6127, 96
    %v6395 = vpop.permute.xlu0 %6394
    %6396 = vrot.lane.b32.xlu0 %v6134, 96
    %v6397 = vpop.permute.xlu0 %6396
    %6398 = vrot.lane.b32.xlu0 %v6141, 96
    %v6399 = vpop.permute.xlu0 %6398
    %6400 = vrot.lane.b32.xlu0 %v6148, 96
    %v6401 = vpop.permute.xlu0 %6400
    %6402 = vrot.lane.b32.xlu0 %v6155, 96
    %v6403 = vpop.permute.xlu0 %6402
    %6404 = vrot.lane.b32.xlu0 %v6162, 96
    %v6405 = vpop.permute.xlu0 %6404
    %6406 = vrot.lane.b32.xlu0 %v6169, 96
    %v6407 = vpop.permute.xlu0 %6406
    %6408 = vrot.lane.b32.xlu0 %v6176, 96
    %v6409 = vpop.permute.xlu0 %6408
    %6410 = vrot.lane.b32.xlu0 %v6183, 96
    %v6411 = vpop.permute.xlu0 %6410
    %6412 = vrot.lane.b32.xlu0 %v6190, 96
    %v6413 = vpop.permute.xlu0 %6412
    %6414 = vrot.lane.b32.xlu0 %v6197, 96
    %v6415 = vpop.permute.xlu0 %6414
    %6416 = vrot.lane.b32.xlu0 %v6204, 96
    %v6417 = vpop.permute.xlu0 %6416
    %6418 = vrot.lane.b32.xlu0 %v6211, 96
    %v6419 = vpop.permute.xlu0 %6418
    %6420 = vrot.lane.b32.xlu0 %v6218, 96
    %v6421 = vpop.permute.xlu0 %6420
    %6422 = vrot.lane.b32.xlu0 %v6225, 96
    %v6423 = vpop.permute.xlu0 %6422
    %6424 = vrot.lane.b32.xlu0 %v6232, 96
    %v6425 = vpop.permute.xlu0 %6424
    %6426 = vrot.lane.b32.xlu0 %v6239, 96
    %v6427 = vpop.permute.xlu0 %6426
    %6428 = vrot.lane.b32.xlu0 %v6246, 96
    %v6429 = vpop.permute.xlu0 %6428
    %6430 = vrot.lane.b32.xlu0 %v6253, 96
    %v6431 = vpop.permute.xlu0 %6430
    %6432 = vrot.lane.b32.xlu0 %v6260, 96
    %v6433 = vpop.permute.xlu0 %6432
    %6434 = vrot.lane.b32.xlu0 %v6267, 96
    %v6435 = vpop.permute.xlu0 %6434
    %vm6436 = vcmask 785408
    %v6437 = vsel %vm6436, %v6325, %v6327
    %v6438 = vsel %vm6436, %v6327, %v6329
    %v6439 = vsel %vm6436, %v6329, %v6331
    %v6440 = vsel %vm6436, %v6333, %v6335
    %v6441 = vsel %vm6436, %v6335, %v6337
    %v6442 = vsel %vm6436, %v6337, %v6339
    %v6443 = vsel %vm6436, %v6341, %v6343
    %v6444 = vsel %vm6436, %v6343, %v6345
    %v6445 = vsel %vm6436, %v6345, %v6347
    %v6446 = vsel %vm6436, %v6349, %v6351
    %v6447 = vsel %vm6436, %v6351, %v6353
    %v6448 = vsel %vm6436, %v6353, %v6355
    %v6449 = vsel %vm6436, %v6357, %v6359
    %v6450 = vsel %vm6436, %v6359, %v6361
    %v6451 = vsel %vm6436, %v6361, %v6363
    %v6452 = vsel %vm6436, %v6365, %v6367
    %v6453 = vsel %vm6436, %v6367, %v6369
    %v6454 = vsel %vm6436, %v6369, %v6371
    %v6455 = vsel %vm6436, %v6373, %v6375
    %v6456 = vsel %vm6436, %v6375, %v6377
    %v6457 = vsel %vm6436, %v6377, %v6379
    %v6458 = vsel %vm6436, %v6381, %v6383
    %v6459 = vsel %vm6436, %v6383, %v6385
    %v6460 = vsel %vm6436, %v6385, %v6387
    %v6461 = vsel %vm6436, %v6389, %v6391
    %v6462 = vsel %vm6436, %v6391, %v6393
    %v6463 = vsel %vm6436, %v6393, %v6395
    %v6464 = vsel %vm6436, %v6397, %v6399
    %v6465 = vsel %vm6436, %v6399, %v6401
    %v6466 = vsel %vm6436, %v6401, %v6403
    %v6467 = vsel %vm6436, %v6405, %v6407
    %v6468 = vsel %vm6436, %v6407, %v6409
    %v6469 = vsel %vm6436, %v6409, %v6411
    %v6470 = vsel %vm6436, %v6413, %v6415
    %v6471 = vsel %vm6436, %v6415, %v6417
    %v6472 = vsel %vm6436, %v6417, %v6419
    %v6473 = vsel %vm6436, %v6421, %v6423
    %v6474 = vsel %vm6436, %v6423, %v6425
    %v6475 = vsel %vm6436, %v6425, %v6427
    %v6476 = vsel %vm6436, %v6429, %v6431
    %v6477 = vsel %vm6436, %v6431, %v6433
    %v6478 = vsel %vm6436, %v6433, %v6435
    %v6535 = vmax.f32 %v5882, %v6437
    %v6536 = vmax.f32 %v5889, %v6438
    %v6537 = vmax.f32 %v5896, %v6439
    %v6538 = vmax.f32 %v5903, %v6331
    %v6539 = vmax.f32 %v5910, %v6440
    %v6540 = vmax.f32 %v5917, %v6441
    %v6541 = vmax.f32 %v5924, %v6442
    %v6542 = vmax.f32 %v5931, %v6339
    %v6543 = vmax.f32 %v5938, %v6443
    %v6544 = vmax.f32 %v5945, %v6444
    %v6545 = vmax.f32 %v5952, %v6445
    %v6546 = vmax.f32 %v5959, %v6347
    %v6547 = vmax.f32 %v5966, %v6446
    %v6548 = vmax.f32 %v5973, %v6447
    %v6549 = vmax.f32 %v5980, %v6448
    %v6550 = vmax.f32 %v5987, %v6355
    %v6551 = vmax.f32 %v5994, %v6449
    %v6552 = vmax.f32 %v6001, %v6450
    %v6553 = vmax.f32 %v6008, %v6451
    %v6554 = vmax.f32 %v6015, %v6363
    %v6555 = vmax.f32 %v6022, %v6452
    %v6556 = vmax.f32 %v6029, %v6453
    %v6557 = vmax.f32 %v6036, %v6454
    %v6558 = vmax.f32 %v6043, %v6371
    %v6559 = vmax.f32 %v6050, %v6455
    %v6560 = vmax.f32 %v6057, %v6456
    %v6561 = vmax.f32 %v6064, %v6457
    %v6562 = vmax.f32 %v6071, %v6379
    %v6563 = vmax.f32 %v6078, %v6458
    %v6564 = vmax.f32 %v6085, %v6459
    %v6565 = vmax.f32 %v6092, %v6460
    %v6566 = vmax.f32 %v6099, %v6387
    %v6567 = vmax.f32 %v6106, %v6461
    %v6568 = vmax.f32 %v6113, %v6462
    %v6569 = vmax.f32 %v6120, %v6463
    %v6570 = vmax.f32 %v6127, %v6395
    %v6571 = vmax.f32 %v6134, %v6464
    %v6572 = vmax.f32 %v6141, %v6465
    %v6573 = vmax.f32 %v6148, %v6466
    %v6574 = vmax.f32 %v6155, %v6403
    %v6575 = vmax.f32 %v6162, %v6467
    %v6576 = vmax.f32 %v6169, %v6468
    %v6577 = vmax.f32 %v6176, %v6469
    %v6578 = vmax.f32 %v6183, %v6411
    %v6579 = vmax.f32 %v6190, %v6470
    %v6580 = vmax.f32 %v6197, %v6471
    %v6581 = vmax.f32 %v6204, %v6472
    %v6582 = vmax.f32 %v6211, %v6419
    %v6583 = vmax.f32 %v6218, %v6473
    %v6584 = vmax.f32 %v6225, %v6474
    %v6585 = vmax.f32 %v6232, %v6475
    %v6586 = vmax.f32 %v6239, %v6427
    %v6587 = vmax.f32 %v6246, %v6476
    %v6588 = vmax.f32 %v6253, %v6477
    %v6589 = vmax.f32 %v6260, %v6478
    %v6590 = vmax.f32 %v6267, %v6435
    %v6647 = vrot.slane %v6539, 7
    %v6648 = vsel %vm3043, %v6647, %v6535
    %v6649 = vrot.slane %v6543, 6
    %v6650 = vsel %vm2986, %v6649, %v6648
    %v6651 = vrot.slane %v6547, 5
    %v6652 = vsel %vm2989, %v6651, %v6650
    %v6653 = vrot.slane %v6551, 4
    %v6654 = vsel %vm2992, %v6653, %v6652
    %v6655 = vrot.slane %v6555, 3
    %v6656 = vsel %vm2995, %v6655, %v6654
    %v6657 = vrot.slane %v6559, 2
    %v6658 = vsel %vm2998, %v6657, %v6656
    %v6659 = vrot.slane %v6540, 7
    %v6660 = vsel %vm3043, %v6659, %v6536
    %v6661 = vrot.slane %v6544, 6
    %v6662 = vsel %vm2986, %v6661, %v6660
    %v6663 = vrot.slane %v6548, 5
    %v6664 = vsel %vm2989, %v6663, %v6662
    %v6665 = vrot.slane %v6552, 4
    %v6666 = vsel %vm2992, %v6665, %v6664
    %v6667 = vrot.slane %v6556, 3
    %v6668 = vsel %vm2995, %v6667, %v6666
    %v6669 = vrot.slane %v6560, 2
    %v6670 = vsel %vm2998, %v6669, %v6668
    %v6671 = vrot.slane %v6541, 7
    %v6672 = vsel %vm3043, %v6671, %v6537
    %v6673 = vrot.slane %v6545, 6
    %v6674 = vsel %vm2986, %v6673, %v6672
    %v6675 = vrot.slane %v6549, 5
    %v6676 = vsel %vm2989, %v6675, %v6674
    %v6677 = vrot.slane %v6553, 4
    %v6678 = vsel %vm2992, %v6677, %v6676
    %v6679 = vrot.slane %v6557, 3
    %v6680 = vsel %vm2995, %v6679, %v6678
    %v6681 = vrot.slane %v6561, 2
    %v6682 = vsel %vm2998, %v6681, %v6680
    %v6683 = vrot.slane %v6542, 7
    %v6684 = vsel %vm3043, %v6683, %v6538
    %v6685 = vrot.slane %v6546, 6
    %v6686 = vsel %vm2986, %v6685, %v6684
    %v6687 = vrot.slane %v6550, 5
    %v6688 = vsel %vm2989, %v6687, %v6686
    %v6689 = vrot.slane %v6554, 4
    %v6690 = vsel %vm2992, %v6689, %v6688
    %v6691 = vrot.slane %v6558, 3
    %v6692 = vsel %vm2995, %v6691, %v6690
    %v6693 = vrot.slane %v6562, 2
    %v6694 = vsel %vm2998, %v6693, %v6692
    %v6695 = vrot.slane %v6567, 7
    %v6696 = vsel %vm3043, %v6695, %v6563
    %v6697 = vrot.slane %v6571, 6
    %v6698 = vsel %vm2986, %v6697, %v6696
    %v6699 = vrot.slane %v6575, 5
    %v6700 = vsel %vm2989, %v6699, %v6698
    %v6701 = vrot.slane %v6579, 4
    %v6702 = vsel %vm2992, %v6701, %v6700
    %v6703 = vrot.slane %v6583, 3
    %v6704 = vsel %vm2995, %v6703, %v6702
    %v6705 = vrot.slane %v6587, 2
    %v6706 = vsel %vm2998, %v6705, %v6704
    %v6707 = vrot.slane %v6568, 7
    %v6708 = vsel %vm3043, %v6707, %v6564
    %v6709 = vrot.slane %v6572, 6
    %v6710 = vsel %vm2986, %v6709, %v6708
    %v6711 = vrot.slane %v6576, 5
    %v6712 = vsel %vm2989, %v6711, %v6710
    %v6713 = vrot.slane %v6580, 4
    %v6714 = vsel %vm2992, %v6713, %v6712
    %v6715 = vrot.slane %v6584, 3
    %v6716 = vsel %vm2995, %v6715, %v6714
    %v6717 = vrot.slane %v6588, 2
    %v6718 = vsel %vm2998, %v6717, %v6716
    %v6719 = vrot.slane %v6569, 7
    %v6720 = vsel %vm3043, %v6719, %v6565
    %v6721 = vrot.slane %v6573, 6
    %v6722 = vsel %vm2986, %v6721, %v6720
    %v6723 = vrot.slane %v6577, 5
    %v6724 = vsel %vm2989, %v6723, %v6722
    %v6725 = vrot.slane %v6581, 4
    %v6726 = vsel %vm2992, %v6725, %v6724
    %v6727 = vrot.slane %v6585, 3
    %v6728 = vsel %vm2995, %v6727, %v6726
    %v6729 = vrot.slane %v6589, 2
    %v6730 = vsel %vm2998, %v6729, %v6728
    %v6731 = vrot.slane %v6570, 7
    %v6732 = vsel %vm3043, %v6731, %v6566
    %v6733 = vrot.slane %v6574, 6
    %v6734 = vsel %vm2986, %v6733, %v6732
    %v6735 = vrot.slane %v6578, 5
    %v6736 = vsel %vm2989, %v6735, %v6734
    %v6737 = vrot.slane %v6582, 4
    %v6738 = vsel %vm2992, %v6737, %v6736
    %v6739 = vrot.slane %v6586, 3
    %v6740 = vsel %vm2995, %v6739, %v6738
    %v6741 = vrot.slane %v6590, 2
    %v6742 = vsel %vm2998, %v6741, %v6740
    %v6751 = vrot.slane %v6658, 4
    %vm6752 = vcmask 1047556
    %v6753 = vsel %vm6752, 0.0, %v6751
    %v6755 = vunpack.c.l.s4 1983009808
    %v6756 = vunpack.c.0.s8 %v6755
    %v6757 = vperm.slane %v6658, %v6756
    %v6759 = vunpack.c.l.s4 1983009808
    %v6760 = vunpack.c.0.s8 %v6759
    %v6761 = vperm.slane %v6753, %v6760
    %v6762 = vrot.slane %v6706, 4
    %v6763 = vsel %vm6752, 0.0, %v6762
    %v6765 = vunpack.c.l.s4 1983009808
    %v6766 = vunpack.c.0.s8 %v6765
    %v6767 = vperm.slane %v6706, %v6766
    %v6769 = vunpack.c.l.s4 1983009808
    %v6770 = vunpack.c.0.s8 %v6769
    %v6771 = vperm.slane %v6763, %v6770
    %v6772 = vrot.slane %v6767, 4
    %v6773 = vsel %vm6752, %v6772, %v6757
    %v6774 = vrot.slane %v6757, 4
    %v6775 = vsel %vm6752, %v6767, %v6774
    %v6777 = vunpack.c.l.s4 1934713408
    %v6778 = vunpack.c.0.s8 %v6777
    %v6779 = vperm.slane %v6773, %v6778
    %v6781 = vunpack.c.l.s4 1934713408
    %v6782 = vunpack.c.0.s8 %v6781
    %v6783 = vperm.slane %v6775, %v6782
    %v6784 = vrot.slane %v6771, 4
    %v6785 = vsel %vm6752, %v6784, %v6761
    %v6786 = vrot.slane %v6761, 4
    %v6787 = vsel %vm6752, %v6771, %v6786
    %v6789 = vunpack.c.l.s4 1934713408
    %v6790 = vunpack.c.0.s8 %v6789
    %v6791 = vperm.slane %v6785, %v6790
    %v6792 = vrot.slane %v6779, 4
    %v6793 = vsel %vm6752, 0.0, %v6792
    %v6794 = vrot.slane %v6783, 4
    %v6795 = vsel %vm6752, 0.0, %v6794
    %v6796 = vrot.slane %v6791, 4
    %v6797 = vsel %vm6752, 0.0, %v6796
    %v6799 = vunpack.c.l.s4 1934713408
    %v6800 = vunpack.c.0.s8 %v6799
    %v6801 = vperm.slane %v6787, %v6800
    %v6802 = vrot.slane %v6670, 4
    %v6803 = vsel %vm6752, 0.0, %v6802
    %v6805 = vunpack.c.l.s4 1983009808
    %v6806 = vunpack.c.0.s8 %v6805
    %v6807 = vperm.slane %v6670, %v6806
    %v6809 = vunpack.c.l.s4 1983009808
    %v6810 = vunpack.c.0.s8 %v6809
    %v6811 = vperm.slane %v6803, %v6810
    %v6812 = vrot.slane %v6718, 4
    %v6813 = vsel %vm6752, 0.0, %v6812
    %v6815 = vunpack.c.l.s4 1983009808
    %v6816 = vunpack.c.0.s8 %v6815
    %v6817 = vperm.slane %v6718, %v6816
    %v6819 = vunpack.c.l.s4 1983009808
    %v6820 = vunpack.c.0.s8 %v6819
    %v6821 = vperm.slane %v6813, %v6820
    %v6822 = vrot.slane %v6817, 4
    %v6823 = vsel %vm6752, %v6822, %v6807
    %v6824 = vrot.slane %v6807, 4
    %v6825 = vsel %vm6752, %v6817, %v6824
    %v6827 = vunpack.c.l.s4 1934713408
    %v6828 = vunpack.c.0.s8 %v6827
    %v6829 = vperm.slane %v6823, %v6828
    %v6831 = vunpack.c.l.s4 1934713408
    %v6832 = vunpack.c.0.s8 %v6831
    %v6833 = vperm.slane %v6825, %v6832
    %v6834 = vrot.slane %v6821, 4
    %v6835 = vsel %vm6752, %v6834, %v6811
    %v6836 = vrot.slane %v6811, 4
    %v6837 = vsel %vm6752, %v6821, %v6836
    %v6839 = vunpack.c.l.s4 1934713408
    %v6840 = vunpack.c.0.s8 %v6839
    %v6841 = vperm.slane %v6835, %v6840
    %v6842 = vrot.slane %v6829, 4
    %v6843 = vsel %vm6752, 0.0, %v6842
    %v6844 = vrot.slane %v6833, 4
    %v6845 = vsel %vm6752, 0.0, %v6844
    %v6846 = vrot.slane %v6841, 4
    %v6847 = vsel %vm6752, 0.0, %v6846
    %v6849 = vunpack.c.l.s4 1934713408
    %v6850 = vunpack.c.0.s8 %v6849
    %v6851 = vperm.slane %v6837, %v6850
    %v6852 = vrot.slane %v6682, 4
    %v6853 = vsel %vm6752, 0.0, %v6852
    %v6855 = vunpack.c.l.s4 1983009808
    %v6856 = vunpack.c.0.s8 %v6855
    %v6857 = vperm.slane %v6682, %v6856
    %v6859 = vunpack.c.l.s4 1983009808
    %v6860 = vunpack.c.0.s8 %v6859
    %v6861 = vperm.slane %v6853, %v6860
    %v6862 = vrot.slane %v6730, 4
    %v6863 = vsel %vm6752, 0.0, %v6862
    %v6865 = vunpack.c.l.s4 1983009808
    %v6866 = vunpack.c.0.s8 %v6865
    %v6867 = vperm.slane %v6730, %v6866
    %v6869 = vunpack.c.l.s4 1983009808
    %v6870 = vunpack.c.0.s8 %v6869
    %v6871 = vperm.slane %v6863, %v6870
    %v6872 = vrot.slane %v6867, 4
    %v6873 = vsel %vm6752, %v6872, %v6857
    %v6874 = vrot.slane %v6857, 4
    %v6875 = vsel %vm6752, %v6867, %v6874
    %v6877 = vunpack.c.l.s4 1934713408
    %v6878 = vunpack.c.0.s8 %v6877
    %v6879 = vperm.slane %v6873, %v6878
    %v6881 = vunpack.c.l.s4 1934713408
    %v6882 = vunpack.c.0.s8 %v6881
    %v6883 = vperm.slane %v6875, %v6882
    %v6884 = vrot.slane %v6871, 4
    %v6885 = vsel %vm6752, %v6884, %v6861
    %v6886 = vrot.slane %v6861, 4
    %v6887 = vsel %vm6752, %v6871, %v6886
    %v6889 = vunpack.c.l.s4 1934713408
    %v6890 = vunpack.c.0.s8 %v6889
    %v6891 = vperm.slane %v6885, %v6890
    %v6892 = vrot.slane %v6879, 4
    %v6893 = vsel %vm6752, 0.0, %v6892
    %v6894 = vrot.slane %v6883, 4
    %v6895 = vsel %vm6752, 0.0, %v6894
    %v6896 = vrot.slane %v6891, 4
    %v6897 = vsel %vm6752, 0.0, %v6896
    %v6899 = vunpack.c.l.s4 1934713408
    %v6900 = vunpack.c.0.s8 %v6899
    %v6901 = vperm.slane %v6887, %v6900
    %v6902 = vrot.slane %v6694, 4
    %v6903 = vsel %vm6752, 0.0, %v6902
    %v6905 = vunpack.c.l.s4 1983009808
    %v6906 = vunpack.c.0.s8 %v6905
    %v6907 = vperm.slane %v6694, %v6906
    %v6909 = vunpack.c.l.s4 1983009808
    %v6910 = vunpack.c.0.s8 %v6909
    %v6911 = vperm.slane %v6903, %v6910
    %v6912 = vrot.slane %v6742, 4
    %v6913 = vsel %vm6752, 0.0, %v6912
    %v6915 = vunpack.c.l.s4 1983009808
    %v6916 = vunpack.c.0.s8 %v6915
    %v6917 = vperm.slane %v6742, %v6916
    %v6919 = vunpack.c.l.s4 1983009808
    %v6920 = vunpack.c.0.s8 %v6919
    %v6921 = vperm.slane %v6913, %v6920
    %v6922 = vrot.slane %v6917, 4
    %v6923 = vsel %vm6752, %v6922, %v6907
    %v6924 = vrot.slane %v6907, 4
    %v6925 = vsel %vm6752, %v6917, %v6924
    %v6927 = vunpack.c.l.s4 1934713408
    %v6928 = vunpack.c.0.s8 %v6927
    %v6929 = vperm.slane %v6923, %v6928
    %v6931 = vunpack.c.l.s4 1934713408
    %v6932 = vunpack.c.0.s8 %v6931
    %v6933 = vperm.slane %v6925, %v6932
    %v6934 = vrot.slane %v6921, 4
    %v6935 = vsel %vm6752, %v6934, %v6911
    %v6936 = vrot.slane %v6911, 4
    %v6937 = vsel %vm6752, %v6921, %v6936
    %v6939 = vunpack.c.l.s4 1934713408
    %v6940 = vunpack.c.0.s8 %v6939
    %v6941 = vperm.slane %v6935, %v6940
    %v6942 = vrot.slane %v6929, 4
    %v6943 = vsel %vm6752, 0.0, %v6942
    %v6944 = vrot.slane %v6933, 4
    %v6945 = vsel %vm6752, 0.0, %v6944
    %v6946 = vrot.slane %v6941, 4
    %v6947 = vsel %vm6752, 0.0, %v6946
    %v6949 = vunpack.c.l.s4 1934713408
    %v6950 = vunpack.c.0.s8 %v6949
    %v6951 = vperm.slane %v6937, %v6950
    %6956 = vrot.lane.b32.xlu0 %v6793, 32
    %v6957 = vpop.permute.xlu0 %6956
    %6958 = vrot.lane.b32.xlu0 %v6843, 32
    %v6959 = vpop.permute.xlu0 %6958
    %6960 = vrot.lane.b32.xlu0 %v6893, 32
    %v6961 = vpop.permute.xlu0 %6960
    %6962 = vrot.lane.b32.xlu0 %v6943, 32
    %v6963 = vpop.permute.xlu0 %6962
    %vm6964 = vcmask 261120
    %v6965 = vsel %vm6964, %v6957, %v6959
    %v6966 = vsel %vm6964, %v6959, %v6961
    %v6967 = vsel %vm6964, %v6961, %v6963
    %6976 = vrot.lane.b32.xlu0 %v6783, 64
    %v6977 = vpop.permute.xlu0 %6976
    %6978 = vrot.lane.b32.xlu0 %v6833, 64
    %v6979 = vpop.permute.xlu0 %6978
    %6980 = vrot.lane.b32.xlu0 %v6883, 64
    %v6981 = vpop.permute.xlu0 %6980
    %6982 = vrot.lane.b32.xlu0 %v6933, 64
    %v6983 = vpop.permute.xlu0 %6982
    %vm6984 = vcmask 523264
    %v6985 = vsel %vm6984, %v6977, %v6979
    %v6986 = vsel %vm6984, %v6979, %v6981
    %v6987 = vsel %vm6984, %v6981, %v6983
    %6996 = vrot.lane.b32.xlu0 %v6795, 96
    %v6997 = vpop.permute.xlu0 %6996
    %6998 = vrot.lane.b32.xlu0 %v6845, 96
    %v6999 = vpop.permute.xlu0 %6998
    %7000 = vrot.lane.b32.xlu0 %v6895, 96
    %v7001 = vpop.permute.xlu0 %7000
    %7002 = vrot.lane.b32.xlu0 %v6945, 96
    %v7003 = vpop.permute.xlu0 %7002
    %v7004 = vsel %vm6436, %v6997, %v6999
    %v7005 = vsel %vm6436, %v6999, %v7001
    %v7006 = vsel %vm6436, %v7001, %v7003
    %7015 = vrot.lane.b32.xlu0 %v6797, 32
    %v7016 = vpop.permute.xlu0 %7015
    %7017 = vrot.lane.b32.xlu0 %v6847, 32
    %v7018 = vpop.permute.xlu0 %7017
    %7019 = vrot.lane.b32.xlu0 %v6897, 32
    %v7020 = vpop.permute.xlu0 %7019
    %7021 = vrot.lane.b32.xlu0 %v6947, 32
    %v7022 = vpop.permute.xlu0 %7021
    %v7023 = vsel %vm6964, %v7016, %v7018
    %v7024 = vsel %vm6964, %v7018, %v7020
    %v7025 = vsel %vm6964, %v7020, %v7022
    %7034 = vrot.lane.b32.xlu0 %v6801, 64
    %v7035 = vpop.permute.xlu0 %7034
    %7036 = vrot.lane.b32.xlu0 %v6851, 64
    %v7037 = vpop.permute.xlu0 %7036
    %7038 = vrot.lane.b32.xlu0 %v6901, 64
    %v7039 = vpop.permute.xlu0 %7038
    %7040 = vrot.lane.b32.xlu0 %v6951, 64
    %v7041 = vpop.permute.xlu0 %7040
    %v7042 = vsel %vm6984, %v7035, %v7037
    %v7043 = vsel %vm6984, %v7037, %v7039
    %v7044 = vsel %vm6984, %v7039, %v7041
    %v7048 = vsel %vm6964, %v6929, %v6957
    %v7049 = vsel %vm6984, %v6967, %v6977
    %v7050 = vsel %vm6436, %v6987, %v6997
    %v7051 = vsel %vm6964, %v6941, %v7016
    %v7052 = vsel %vm6984, %v7025, %v7035
    %v7053 = vld [vmem:[#allocation10] sm:$0xff]
    %v7054 = vld [vmem:[#allocation10 + $0x8] sm:$0xff]
    %v7055 = vld [vmem:[#allocation10 + $0x10] sm:$0xff]
    %v7056 = vld [vmem:[#allocation10 + $0x18] sm:$0xff]
    %v7057 = vld [vmem:[#allocation10 + $0x20] sm:$0xff]
    %v7058 = vld [vmem:[#allocation10 + $0x28] sm:$0xff]
    %v7059 = vld [vmem:[#allocation10 + $0x30] sm:$0xff]
    %v7060 = vld [vmem:[#allocation10 + $0x38] sm:$0xff]
    %v7061 = vld [vmem:[#allocation10 + $0x40] sm:$0xff]
    %v7062 = vld [vmem:[#allocation10 + $0x48] sm:$0xff]
    %v7063 = vld [vmem:[#allocation10 + $0x50] sm:$0xff]
    %v7064 = vld [vmem:[#allocation10 + $0x58] sm:$0xff]
    %v7065 = vld [vmem:[#allocation10 + $0x60] sm:$0xff]
    %v7066 = vld [vmem:[#allocation10 + $0x68] sm:$0xff]
    %v7067 = vld [vmem:[#allocation10 + $0x70] sm:$0xff]
    %v7068 = vld [vmem:[#allocation10 + $0x78] sm:$0xff]
    %v7069 = vld [vmem:[#allocation10 + $0x80] sm:$0xff]
    %v7070 = vld [vmem:[#allocation10 + $0x88] sm:$0xff]
    %v7071 = vld [vmem:[#allocation10 + $0x90] sm:$0xff]
    %v7072 = vld [vmem:[#allocation10 + $0x98] sm:$0xff]
    %v7073 = vld [vmem:[#allocation10 + $0xa0] sm:$0xff]
    %v7074 = vld [vmem:[#allocation10 + $0xa8] sm:$0xff]
    %v7075 = vld [vmem:[#allocation10 + $0xb0] sm:$0xff]
    %v7076 = vld [vmem:[#allocation10 + $0xb8] sm:$0xff]
    %v7077 = vld [vmem:[#allocation10 + $0xc0] sm:$0xff]
    %v7078 = vld [vmem:[#allocation10 + $0xc8] sm:$0xff]
    %v7079 = vld [vmem:[#allocation10 + $0xd0] sm:$0xff]
    %v7080 = vld [vmem:[#allocation10 + $0xd8] sm:$0xff]
    %v7081 = vld [vmem:[#allocation10 + $0xe0] sm:$0xff]
    %v7082 = vld [vmem:[#allocation10 + $0xe8] sm:$0xff]
    %v7083 = vld [vmem:[#allocation10 + $0xf0] sm:$0xff]
    %v7084 = vld [vmem:[#allocation10 + $0xf8] sm:$0xff]
    %v7085 = vld [vmem:[#allocation10 + $0x100] sm:$0xff]
    %v7086 = vld [vmem:[#allocation10 + $0x108] sm:$0xff]
    %v7087 = vld [vmem:[#allocation10 + $0x110] sm:$0xff]
    %v7088 = vld [vmem:[#allocation10 + $0x118] sm:$0xff]
    %v7089 = vld [vmem:[#allocation10 + $0x120] sm:$0xff]
    %v7090 = vld [vmem:[#allocation10 + $0x128] sm:$0xff]
    %v7091 = vld [vmem:[#allocation10 + $0x130] sm:$0xff]
    %v7092 = vld [vmem:[#allocation10 + $0x138] sm:$0xff]
    %v7093 = vld [vmem:[#allocation10 + $0x140] sm:$0xff]
    %v7094 = vld [vmem:[#allocation10 + $0x148] sm:$0xff]
    %v7095 = vld [vmem:[#allocation10 + $0x150] sm:$0xff]
    %v7096 = vld [vmem:[#allocation10 + $0x158] sm:$0xff]
    %v7097 = vld [vmem:[#allocation10 + $0x160] sm:$0xff]
    %v7098 = vld [vmem:[#allocation10 + $0x168] sm:$0xff]
    %v7099 = vld [vmem:[#allocation10 + $0x170] sm:$0xff]
    %v7100 = vld [vmem:[#allocation10 + $0x178] sm:$0xff]
    %v7101 = vld [vmem:[#allocation10 + $0x180] sm:$0xff]
    %v7102 = vld [vmem:[#allocation10 + $0x188] sm:$0xff]
    %v7103 = vld [vmem:[#allocation10 + $0x190] sm:$0xff]
    %v7104 = vld [vmem:[#allocation10 + $0x198] sm:$0xff]
    %v7105 = vld [vmem:[#allocation10 + $0x1a0] sm:$0xff]
    %v7106 = vld [vmem:[#allocation10 + $0x1a8] sm:$0xff]
    %v7107 = vld [vmem:[#allocation10 + $0x1b0] sm:$0xff]
    %v7108 = vld [vmem:[#allocation10 + $0x1b8] sm:$0xff]
    %v7109 = vld [vmem:[#allocation10 + $0x1c0] sm:$0xff]
    %v7110 = vld [vmem:[#allocation10 + $0x1c8] sm:$0xff]
    %v7111 = vld [vmem:[#allocation10 + $0x1d0] sm:$0xff]
    %v7112 = vld [vmem:[#allocation10 + $0x1d8] sm:$0xff]
    %v7113 = vld [vmem:[#allocation10 + $0x1e0] sm:$0xff]
    %v7114 = vld [vmem:[#allocation10 + $0x1e8] sm:$0xff]
    %v7115 = vld [vmem:[#allocation10 + $0x1f0] sm:$0xff]
    %v7116 = vld [vmem:[#allocation10 + $0x1f8] sm:$0xff]
    %v7117 = vld [vmem:[#allocation10 + $0x200] sm:$0xff]
    %v7118 = vld [vmem:[#allocation10 + $0x208] sm:$0xff]
    %v7119 = vld [vmem:[#allocation10 + $0x210] sm:$0xff]
    %v7120 = vld [vmem:[#allocation10 + $0x218] sm:$0xff]
    %v7121 = vld [vmem:[#allocation10 + $0x220] sm:$0xff]
    %v7122 = vld [vmem:[#allocation10 + $0x228] sm:$0xff]
    %v7123 = vld [vmem:[#allocation10 + $0x230] sm:$0xff]
    %v7124 = vld [vmem:[#allocation10 + $0x238] sm:$0xff]
    %v7125 = vld [vmem:[#allocation10 + $0x240] sm:$0xff]
    %v7126 = vld [vmem:[#allocation10 + $0x248] sm:$0xff]
    %v7127 = vld [vmem:[#allocation10 + $0x250] sm:$0xff]
    %v7128 = vld [vmem:[#allocation10 + $0x258] sm:$0xff]
    %v7129 = vld [vmem:[#allocation10 + $0x260] sm:$0xff]
    %v7130 = vld [vmem:[#allocation10 + $0x268] sm:$0xff]
    %v7131 = vld [vmem:[#allocation10 + $0x270] sm:$0xff]
    %v7132 = vld [vmem:[#allocation10 + $0x278] sm:$0xff]
    %v7133 = vld [vmem:[#allocation10 + $0x280] sm:$0xff]
    %v7134 = vld [vmem:[#allocation10 + $0x288] sm:$0xff]
    %v7135 = vld [vmem:[#allocation10 + $0x290] sm:$0xff]
    %v7136 = vld [vmem:[#allocation10 + $0x298] sm:$0xff]
    %v7137 = vld [vmem:[#allocation10 + $0x2a0] sm:$0xff]
    %v7138 = vld [vmem:[#allocation10 + $0x2a8] sm:$0xff]
    %v7139 = vld [vmem:[#allocation10 + $0x2b0] sm:$0xff]
    %v7140 = vld [vmem:[#allocation10 + $0x2b8] sm:$0xff]
    %v7141 = vld [vmem:[#allocation10 + $0x2c0] sm:$0xff]
    %v7142 = vld [vmem:[#allocation10 + $0x2c8] sm:$0xff]
    %v7143 = vld [vmem:[#allocation10 + $0x2d0] sm:$0xff]
    %v7144 = vld [vmem:[#allocation10 + $0x2d8] sm:$0xff]
    %v7145 = vld [vmem:[#allocation10 + $0x2e0] sm:$0xff]
    %v7146 = vld [vmem:[#allocation10 + $0x2e8] sm:$0xff]
    %v7147 = vld [vmem:[#allocation10 + $0x2f0] sm:$0xff]
    %v7148 = vld [vmem:[#allocation10 + $0x2f8] sm:$0xff]
    %v7149 = vld [vmem:[#allocation10 + $0x300] sm:$0xff]
    %v7150 = vld [vmem:[#allocation10 + $0x308] sm:$0xff]
    %v7151 = vld [vmem:[#allocation10 + $0x310] sm:$0xff]
    %v7152 = vld [vmem:[#allocation10 + $0x318] sm:$0xff]
    %v7153 = vld [vmem:[#allocation10 + $0x320] sm:$0xff]
    %v7154 = vld [vmem:[#allocation10 + $0x328] sm:$0xff]
    %v7155 = vld [vmem:[#allocation10 + $0x330] sm:$0xff]
    %v7156 = vld [vmem:[#allocation10 + $0x338] sm:$0xff]
    %v7157 = vld [vmem:[#allocation10 + $0x340] sm:$0xff]
    %v7158 = vld [vmem:[#allocation10 + $0x348] sm:$0xff]
    %v7159 = vld [vmem:[#allocation10 + $0x350] sm:$0xff]
    %v7160 = vld [vmem:[#allocation10 + $0x358] sm:$0xff]
    %v7161 = vld [vmem:[#allocation10 + $0x360] sm:$0xff]
    %v7162 = vld [vmem:[#allocation10 + $0x368] sm:$0xff]
    %v7163 = vld [vmem:[#allocation10 + $0x370] sm:$0xff]
    %v7164 = vld [vmem:[#allocation10 + $0x378] sm:$0xff]
    %v7165 = vld [vmem:[#allocation10 + $0x380] sm:$0xff]
    %v7166 = vld [vmem:[#allocation10 + $0x388] sm:$0xff]
    %v7167 = vld [vmem:[#allocation10 + $0x390] sm:$0xff]
    %v7168 = vld [vmem:[#allocation10 + $0x398] sm:$0xff]
    %v7169 = vld [vmem:[#allocation10 + $0x3a0] sm:$0xff]
    %v7170 = vld [vmem:[#allocation10 + $0x3a8] sm:$0xff]
    %v7171 = vld [vmem:[#allocation10 + $0x3b0] sm:$0xff]
    %v7172 = vld [vmem:[#allocation10 + $0x3b8] sm:$0xff]
    %v7173 = vld [vmem:[#allocation10 + $0x3c0] sm:$0xff]
    %v7174 = vld [vmem:[#allocation10 + $0x3c8] sm:$0xff]
    %v7175 = vld [vmem:[#allocation10 + $0x3d0] sm:$0xff]
    %v7176 = vld [vmem:[#allocation10 + $0x3d8] sm:$0xff]
    %v7177 = vld [vmem:[#allocation10 + $0x3e0] sm:$0xff]
    %v7178 = vld [vmem:[#allocation10 + $0x3e8] sm:$0xff]
    %v7179 = vld [vmem:[#allocation10 + $0x3f0] sm:$0xff]
    %v7180 = vld [vmem:[#allocation10 + $0x3f8] sm:$0xff]
    %v7181 = vld [vmem:[#allocation10 + $0x400] sm:$0xff]
    %v7182 = vld [vmem:[#allocation10 + $0x408] sm:$0xff]
    %v7183 = vld [vmem:[#allocation10 + $0x410] sm:$0xff]
    %v7184 = vld [vmem:[#allocation10 + $0x418] sm:$0xff]
    %v7185 = vld [vmem:[#allocation10 + $0x420] sm:$0xff]
    %v7186 = vld [vmem:[#allocation10 + $0x428] sm:$0xff]
    %v7187 = vld [vmem:[#allocation10 + $0x430] sm:$0xff]
    %v7188 = vld [vmem:[#allocation10 + $0x438] sm:$0xff]
    %v7189 = vld [vmem:[#allocation10 + $0x440] sm:$0xff]
    %v7190 = vld [vmem:[#allocation10 + $0x448] sm:$0xff]
    %v7191 = vld [vmem:[#allocation10 + $0x450] sm:$0xff]
    %v7192 = vld [vmem:[#allocation10 + $0x458] sm:$0xff]
    %v7193 = vld [vmem:[#allocation10 + $0x460] sm:$0xff]
    %v7194 = vld [vmem:[#allocation10 + $0x468] sm:$0xff]
    %v7195 = vld [vmem:[#allocation10 + $0x470] sm:$0xff]
    %v7196 = vld [vmem:[#allocation10 + $0x478] sm:$0xff]
    %v7197 = vld [vmem:[#allocation10 + $0x480] sm:$0xff]
    %v7198 = vld [vmem:[#allocation10 + $0x488] sm:$0xff]
    %v7199 = vld [vmem:[#allocation10 + $0x490] sm:$0xff]
    %v7200 = vld [vmem:[#allocation10 + $0x498] sm:$0xff]
    %v7201 = vld [vmem:[#allocation10 + $0x4a0] sm:$0xff]
    %v7202 = vld [vmem:[#allocation10 + $0x4a8] sm:$0xff]
    %v7203 = vld [vmem:[#allocation10 + $0x4b0] sm:$0xff]
    %v7204 = vld [vmem:[#allocation10 + $0x4b8] sm:$0xff]
    %v7205 = vld [vmem:[#allocation10 + $0x4c0] sm:$0xff]
    %v7206 = vld [vmem:[#allocation10 + $0x4c8] sm:$0xff]
    %v7207 = vld [vmem:[#allocation10 + $0x4d0] sm:$0xff]
    %v7208 = vld [vmem:[#allocation10 + $0x4d8] sm:$0xff]
    %v7209 = vld [vmem:[#allocation10 + $0x4e0] sm:$0xff]
    %v7210 = vld [vmem:[#allocation10 + $0x4e8] sm:$0xff]
    %v7211 = vld [vmem:[#allocation10 + $0x4f0] sm:$0xff]
    %v7212 = vld [vmem:[#allocation10 + $0x4f8] sm:$0xff]
    %v7213 = vld [vmem:[#allocation10 + $0x500] sm:$0xff]
    %v7214 = vld [vmem:[#allocation10 + $0x508] sm:$0xff]
    %v7215 = vld [vmem:[#allocation10 + $0x510] sm:$0xff]
    %v7216 = vld [vmem:[#allocation10 + $0x518] sm:$0xff]
    %v7217 = vld [vmem:[#allocation10 + $0x520] sm:$0xff]
    %v7218 = vld [vmem:[#allocation10 + $0x528] sm:$0xff]
    %v7219 = vld [vmem:[#allocation10 + $0x530] sm:$0xff]
    %v7220 = vld [vmem:[#allocation10 + $0x538] sm:$0xff]
    %v7221 = vld [vmem:[#allocation10 + $0x540] sm:$0xff]
    %v7222 = vld [vmem:[#allocation10 + $0x548] sm:$0xff]
    %v7223 = vld [vmem:[#allocation10 + $0x550] sm:$0xff]
    %v7224 = vld [vmem:[#allocation10 + $0x558] sm:$0xff]
    %v7225 = vld [vmem:[#allocation10 + $0x560] sm:$0xff]
    %v7226 = vld [vmem:[#allocation10 + $0x568] sm:$0xff]
    %v7227 = vld [vmem:[#allocation10 + $0x570] sm:$0xff]
    %v7228 = vld [vmem:[#allocation10 + $0x578] sm:$0xff]
    %v7229 = vld [vmem:[#allocation10 + $0x580] sm:$0xff]
    %v7230 = vld [vmem:[#allocation10 + $0x588] sm:$0xff]
    %v7231 = vld [vmem:[#allocation10 + $0x590] sm:$0xff]
    %v7232 = vld [vmem:[#allocation10 + $0x598] sm:$0xff]
    %v7233 = vld [vmem:[#allocation10 + $0x5a0] sm:$0xff]
    %v7234 = vld [vmem:[#allocation10 + $0x5a8] sm:$0xff]
    %v7235 = vld [vmem:[#allocation10 + $0x5b0] sm:$0xff]
    %v7236 = vld [vmem:[#allocation10 + $0x5b8] sm:$0xff]
    %v7237 = vld [vmem:[#allocation10 + $0x5c0] sm:$0xff]
    %v7238 = vld [vmem:[#allocation10 + $0x5c8] sm:$0xff]
    %v7239 = vld [vmem:[#allocation10 + $0x5d0] sm:$0xff]
    %v7240 = vld [vmem:[#allocation10 + $0x5d8] sm:$0xff]
    %v7241 = vld [vmem:[#allocation10 + $0x5e0] sm:$0xff]
    %v7242 = vld [vmem:[#allocation10 + $0x5e8] sm:$0xff]
    %v7243 = vld [vmem:[#allocation10 + $0x5f0] sm:$0xff]
    %v7244 = vld [vmem:[#allocation10 + $0x5f8] sm:$0xff]
    %v7245 = vld [vmem:[#allocation10 + $0x600] sm:$0xff]
    %v7246 = vld [vmem:[#allocation10 + $0x608] sm:$0xff]
    %v7247 = vld [vmem:[#allocation10 + $0x610] sm:$0xff]
    %v7248 = vld [vmem:[#allocation10 + $0x618] sm:$0xff]
    %v7249 = vld [vmem:[#allocation10 + $0x620] sm:$0xff]
    %v7250 = vld [vmem:[#allocation10 + $0x628] sm:$0xff]
    %v7251 = vld [vmem:[#allocation10 + $0x630] sm:$0xff]
    %v7252 = vld [vmem:[#allocation10 + $0x638] sm:$0xff]
    %v7253 = vld [vmem:[#allocation10 + $0x640] sm:$0xff]
    %v7254 = vld [vmem:[#allocation10 + $0x648] sm:$0xff]
    %v7255 = vld [vmem:[#allocation10 + $0x650] sm:$0xff]
    %v7256 = vld [vmem:[#allocation10 + $0x658] sm:$0xff]
    %v7257 = vld [vmem:[#allocation10 + $0x660] sm:$0xff]
    %v7258 = vld [vmem:[#allocation10 + $0x668] sm:$0xff]
    %v7259 = vld [vmem:[#allocation10 + $0x670] sm:$0xff]
    %v7260 = vld [vmem:[#allocation10 + $0x678] sm:$0xff]
    %v7261 = vld [vmem:[#allocation10 + $0x680] sm:$0xff]
    %v7262 = vld [vmem:[#allocation10 + $0x688] sm:$0xff]
    %v7263 = vld [vmem:[#allocation10 + $0x690] sm:$0xff]
    %v7264 = vld [vmem:[#allocation10 + $0x698] sm:$0xff]
    %v7265 = vld [vmem:[#allocation10 + $0x6a0] sm:$0xff]
    %v7266 = vld [vmem:[#allocation10 + $0x6a8] sm:$0xff]
    %v7267 = vld [vmem:[#allocation10 + $0x6b0] sm:$0xff]
    %v7268 = vld [vmem:[#allocation10 + $0x6b8] sm:$0xff]
    %v7269 = vld [vmem:[#allocation10 + $0x6c0] sm:$0xff]
    %v7270 = vld [vmem:[#allocation10 + $0x6c8] sm:$0xff]
    %v7271 = vld [vmem:[#allocation10 + $0x6d0] sm:$0xff]
    %v7272 = vld [vmem:[#allocation10 + $0x6d8] sm:$0xff]
    %v7273 = vld [vmem:[#allocation10 + $0x6e0] sm:$0xff]
    %v7274 = vld [vmem:[#allocation10 + $0x6e8] sm:$0xff]
    %v7275 = vld [vmem:[#allocation10 + $0x6f0] sm:$0xff]
    %v7276 = vld [vmem:[#allocation10 + $0x6f8] sm:$0xff]
    %v7277 = vld [vmem:[#allocation10 + $0x700] sm:$0xff]
    %v7278 = vld [vmem:[#allocation10 + $0x708] sm:$0xff]
    %v7279 = vld [vmem:[#allocation10 + $0x710] sm:$0xff]
    %v7280 = vld [vmem:[#allocation10 + $0x718] sm:$0xff]
    %v7281 = vld [vmem:[#allocation10 + $0x720] sm:$0xff]
    %v7282 = vld [vmem:[#allocation10 + $0x728] sm:$0xff]
    %v7283 = vld [vmem:[#allocation10 + $0x730] sm:$0xff]
    %v7284 = vld [vmem:[#allocation10 + $0x738] sm:$0xff]
    %v7285 = vld [vmem:[#allocation10 + $0x740] sm:$0xff]
    %v7286 = vld [vmem:[#allocation10 + $0x748] sm:$0xff]
    %v7287 = vld [vmem:[#allocation10 + $0x750] sm:$0xff]
    %v7288 = vld [vmem:[#allocation10 + $0x758] sm:$0xff]
    %v7289 = vld [vmem:[#allocation10 + $0x760] sm:$0xff]
    %v7290 = vld [vmem:[#allocation10 + $0x768] sm:$0xff]
    %v7291 = vld [vmem:[#allocation10 + $0x770] sm:$0xff]
    %v7292 = vld [vmem:[#allocation10 + $0x778] sm:$0xff]
    %v7293 = vld [vmem:[#allocation10 + $0x780] sm:$0xff]
    %v7294 = vld [vmem:[#allocation10 + $0x788] sm:$0xff]
    %v7295 = vld [vmem:[#allocation10 + $0x790] sm:$0xff]
    %v7296 = vld [vmem:[#allocation10 + $0x798] sm:$0xff]
    %v7297 = vld [vmem:[#allocation10 + $0x7a0] sm:$0xff]
    %v7298 = vld [vmem:[#allocation10 + $0x7a8] sm:$0xff]
    %v7299 = vld [vmem:[#allocation10 + $0x7b0] sm:$0xff]
    %v7300 = vld [vmem:[#allocation10 + $0x7b8] sm:$0xff]
    %v7301 = vld [vmem:[#allocation10 + $0x7c0] sm:$0xff]
    %v7302 = vld [vmem:[#allocation10 + $0x7c8] sm:$0xff]
    %v7303 = vld [vmem:[#allocation10 + $0x7d0] sm:$0xff]
    %v7304 = vld [vmem:[#allocation10 + $0x7d8] sm:$0xff]
    %v7305 = vld [vmem:[#allocation10 + $0x7e0] sm:$0xff]
    %v7306 = vld [vmem:[#allocation10 + $0x7e8] sm:$0xff]
    %v7307 = vld [vmem:[#allocation10 + $0x7f0] sm:$0xff]
    %v7308 = vld [vmem:[#allocation10 + $0x7f8] sm:$0xff]
    %v7309 = vld [vmem:[#allocation10 + $0x800] sm:$0xff]
    %v7310 = vld [vmem:[#allocation10 + $0x808] sm:$0xff]
    %v7311 = vld [vmem:[#allocation10 + $0x810] sm:$0xff]
    %v7312 = vld [vmem:[#allocation10 + $0x818] sm:$0xff]
    %v7313 = vld [vmem:[#allocation10 + $0x820] sm:$0xff]
    %v7314 = vld [vmem:[#allocation10 + $0x828] sm:$0xff]
    %v7315 = vld [vmem:[#allocation10 + $0x830] sm:$0xff]
    %v7316 = vld [vmem:[#allocation10 + $0x838] sm:$0xff]
    %v7317 = vld [vmem:[#allocation10 + $0x840] sm:$0xff]
    %v7318 = vld [vmem:[#allocation10 + $0x848] sm:$0xff]
    %v7319 = vld [vmem:[#allocation10 + $0x850] sm:$0xff]
    %v7320 = vld [vmem:[#allocation10 + $0x858] sm:$0xff]
    %v7321 = vld [vmem:[#allocation10 + $0x860] sm:$0xff]
    %v7322 = vld [vmem:[#allocation10 + $0x868] sm:$0xff]
    %v7323 = vld [vmem:[#allocation10 + $0x870] sm:$0xff]
    %v7324 = vld [vmem:[#allocation10 + $0x878] sm:$0xff]
    %v7325 = vld [vmem:[#allocation10 + $0x880] sm:$0xff]
    %v7326 = vld [vmem:[#allocation10 + $0x888] sm:$0xff]
    %v7327 = vld [vmem:[#allocation10 + $0x890] sm:$0xff]
    %v7328 = vld [vmem:[#allocation10 + $0x898] sm:$0xff]
    %v7329 = vld [vmem:[#allocation10 + $0x8a0] sm:$0xff]
    %v7330 = vld [vmem:[#allocation10 + $0x8a8] sm:$0xff]
    %v7331 = vld [vmem:[#allocation10 + $0x8b0] sm:$0xff]
    %v7332 = vld [vmem:[#allocation10 + $0x8b8] sm:$0xff]
    %v7333 = vld [vmem:[#allocation10 + $0x8c0] sm:$0xff]
    %v7334 = vld [vmem:[#allocation10 + $0x8c8] sm:$0xff]
    %v7335 = vld [vmem:[#allocation10 + $0x8d0] sm:$0xff]
    %v7336 = vld [vmem:[#allocation10 + $0x8d8] sm:$0xff]
    %v7337 = vld [vmem:[#allocation10 + $0x8e0] sm:$0xff]
    %v7338 = vld [vmem:[#allocation10 + $0x8e8] sm:$0xff]
    %v7339 = vld [vmem:[#allocation10 + $0x8f0] sm:$0xff]
    %v7340 = vld [vmem:[#allocation10 + $0x8f8] sm:$0xff]
    %v7341 = vld [vmem:[#allocation10 + $0x900] sm:$0xff]
    %v7342 = vld [vmem:[#allocation10 + $0x908] sm:$0xff]
    %v7343 = vld [vmem:[#allocation10 + $0x910] sm:$0xff]
    %v7344 = vld [vmem:[#allocation10 + $0x918] sm:$0xff]
    %v7345 = vld [vmem:[#allocation10 + $0x920] sm:$0xff]
    %v7346 = vld [vmem:[#allocation10 + $0x928] sm:$0xff]
    %v7347 = vld [vmem:[#allocation10 + $0x930] sm:$0xff]
    %v7348 = vld [vmem:[#allocation10 + $0x938] sm:$0xff]
    %v7349 = vld [vmem:[#allocation10 + $0x940] sm:$0xff]
    %v7350 = vld [vmem:[#allocation10 + $0x948] sm:$0xff]
    %v7351 = vld [vmem:[#allocation10 + $0x950] sm:$0xff]
    %v7352 = vld [vmem:[#allocation10 + $0x958] sm:$0xff]
    %v7353 = vld [vmem:[#allocation10 + $0x960] sm:$0xff]
    %v7354 = vld [vmem:[#allocation10 + $0x968] sm:$0xff]
    %v7355 = vld [vmem:[#allocation10 + $0x970] sm:$0xff]
    %v7356 = vld [vmem:[#allocation10 + $0x978] sm:$0xff]
    %v7357 = vld [vmem:[#allocation10 + $0x980] sm:$0xff]
    %v7358 = vld [vmem:[#allocation10 + $0x988] sm:$0xff]
    %v7359 = vld [vmem:[#allocation10 + $0x990] sm:$0xff]
    %v7360 = vld [vmem:[#allocation10 + $0x998] sm:$0xff]
    %v7361 = vld [vmem:[#allocation10 + $0x9a0] sm:$0xff]
    %v7362 = vld [vmem:[#allocation10 + $0x9a8] sm:$0xff]
    %v7363 = vld [vmem:[#allocation10 + $0x9b0] sm:$0xff]
    %v7364 = vld [vmem:[#allocation10 + $0x9b8] sm:$0xff]
    %v7365 = vld [vmem:[#allocation10 + $0x9c0] sm:$0xff]
    %v7366 = vld [vmem:[#allocation10 + $0x9c8] sm:$0xff]
    %v7367 = vld [vmem:[#allocation10 + $0x9d0] sm:$0xff]
    %v7368 = vld [vmem:[#allocation10 + $0x9d8] sm:$0xff]
    %v7369 = vld [vmem:[#allocation10 + $0x9e0] sm:$0xff]
    %v7370 = vld [vmem:[#allocation10 + $0x9e8] sm:$0xff]
    %v7371 = vld [vmem:[#allocation10 + $0x9f0] sm:$0xff]
    %v7372 = vld [vmem:[#allocation10 + $0x9f8] sm:$0xff]
    %v7373 = vld [vmem:[#allocation10 + $0xa00] sm:$0xff]
    %v7374 = vld [vmem:[#allocation10 + $0xa08] sm:$0xff]
    %v7375 = vld [vmem:[#allocation10 + $0xa10] sm:$0xff]
    %v7376 = vld [vmem:[#allocation10 + $0xa18] sm:$0xff]
    %v7377 = vld [vmem:[#allocation10 + $0xa20] sm:$0xff]
    %v7378 = vld [vmem:[#allocation10 + $0xa28] sm:$0xff]
    %v7379 = vld [vmem:[#allocation10 + $0xa30] sm:$0xff]
    %v7380 = vld [vmem:[#allocation10 + $0xa38] sm:$0xff]
    %v7381 = vld [vmem:[#allocation10 + $0xa40] sm:$0xff]
    %v7382 = vld [vmem:[#allocation10 + $0xa48] sm:$0xff]
    %v7383 = vld [vmem:[#allocation10 + $0xa50] sm:$0xff]
    %v7384 = vld [vmem:[#allocation10 + $0xa58] sm:$0xff]
    %v7385 = vld [vmem:[#allocation10 + $0xa60] sm:$0xff]
    %v7386 = vld [vmem:[#allocation10 + $0xa68] sm:$0xff]
    %v7387 = vld [vmem:[#allocation10 + $0xa70] sm:$0xff]
    %v7388 = vld [vmem:[#allocation10 + $0xa78] sm:$0xff]
    %v7389 = vld [vmem:[#allocation10 + $0xa80] sm:$0xff]
    %v7390 = vld [vmem:[#allocation10 + $0xa88] sm:$0xff]
    %v7391 = vld [vmem:[#allocation10 + $0xa90] sm:$0xff]
    %v7392 = vld [vmem:[#allocation10 + $0xa98] sm:$0xff]
    %v7393 = vld [vmem:[#allocation10 + $0xaa0] sm:$0xff]
    %v7394 = vld [vmem:[#allocation10 + $0xaa8] sm:$0xff]
    %v7395 = vld [vmem:[#allocation10 + $0xab0] sm:$0xff]
    %v7396 = vld [vmem:[#allocation10 + $0xab8] sm:$0xff]
    %v7397 = vld [vmem:[#allocation10 + $0xac0] sm:$0xff]
    %v7398 = vld [vmem:[#allocation10 + $0xac8] sm:$0xff]
    %v7399 = vld [vmem:[#allocation10 + $0xad0] sm:$0xff]
    %v7400 = vld [vmem:[#allocation10 + $0xad8] sm:$0xff]
    %v7401 = vld [vmem:[#allocation10 + $0xae0] sm:$0xff]
    %v7402 = vld [vmem:[#allocation10 + $0xae8] sm:$0xff]
    %v7403 = vld [vmem:[#allocation10 + $0xaf0] sm:$0xff]
    %v7404 = vld [vmem:[#allocation10 + $0xaf8] sm:$0xff]
    %v7405 = vld [vmem:[#allocation10 + $0xb00] sm:$0xff]
    %v7406 = vld [vmem:[#allocation10 + $0xb08] sm:$0xff]
    %v7407 = vld [vmem:[#allocation10 + $0xb10] sm:$0xff]
    %v7408 = vld [vmem:[#allocation10 + $0xb18] sm:$0xff]
    %v7409 = vld [vmem:[#allocation10 + $0xb20] sm:$0xff]
    %v7410 = vld [vmem:[#allocation10 + $0xb28] sm:$0xff]
    %v7411 = vld [vmem:[#allocation10 + $0xb30] sm:$0xff]
    %v7412 = vld [vmem:[#allocation10 + $0xb38] sm:$0xff]
    %v7413 = vld [vmem:[#allocation10 + $0xb40] sm:$0xff]
    %v7414 = vld [vmem:[#allocation10 + $0xb48] sm:$0xff]
    %v7415 = vld [vmem:[#allocation10 + $0xb50] sm:$0xff]
    %v7416 = vld [vmem:[#allocation10 + $0xb58] sm:$0xff]
    %v7417 = vld [vmem:[#allocation11] sm:$0x1]
    %v7419 = vperm.slane %v7417, 0
    %v7421 = vsel %vm6436, %v7044, 0
    %7423 = vmatpush.msra.mxu0 %v7068
    %7424 = vmatpush.msra.mxu0 %v7067
    %7425 = vmatpush.msra.mxu0 %v7066
    %7426 = vmatpush.msra.mxu0 %v7065
    %7427 = vmatpush.msra.mxu0 %v7064
    %7428 = vmatpush.msra.mxu0 %v7063
    %7429 = vmatpush.msra.mxu0 %v7062
    %7430 = vmatpush.msra.mxu0 %v7061
    %7431 = vmatpush.msra.mxu0 %v7060
    %7432 = vmatpush.msra.mxu0 %v7059
    %7433 = vmatpush.msra.mxu0 %v7058
    %7434 = vmatpush.msra.mxu0 %v7057
    %7435 = vmatpush.msra.mxu0 %v7056
    %7436 = vmatpush.msra.mxu0 %v7055
    %7437 = vmatpush.msra.mxu0 %v7054
    %7438 = vmatpush.msra.mxu0 %v7053
    %7439 = vmatmul.f32.gmra.mxu0 %v6779
    %v7440 = vpop.f32.mrf.mxu0
    %v7441 = vadd.f32 %v7419, %v7440
    %7442 = vdwg.mxu0
    %7443 = vmatpush.msra.mxu0 %v7084
    %7444 = vmatpush.msra.mxu0 %v7083
    %7445 = vmatpush.msra.mxu0 %v7082
    %7446 = vmatpush.msra.mxu0 %v7081
    %7447 = vmatpush.msra.mxu0 %v7080
    %7448 = vmatpush.msra.mxu0 %v7079
    %7449 = vmatpush.msra.mxu0 %v7078
    %7450 = vmatpush.msra.mxu0 %v7077
    %7451 = vmatpush.msra.mxu0 %v7076
    %7452 = vmatpush.msra.mxu0 %v7075
    %7453 = vmatpush.msra.mxu0 %v7074
    %7454 = vmatpush.msra.mxu0 %v7073
    %7455 = vmatpush.msra.mxu0 %v7072
    %7456 = vmatpush.msra.mxu0 %v7071
    %7457 = vmatpush.msra.mxu0 %v7070
    %7458 = vmatpush.msra.mxu0 %v7069
    %7459 = vmatmul.f32.gmra.mxu0 %v6829
    %v7460 = vpop.f32.mrf.mxu0
    %v7461 = vadd.f32 %v7441, %v7460
    %7462 = vdwg.mxu0
    %7463 = vmatpush.msra.mxu0 %v7100
    %7464 = vmatpush.msra.mxu0 %v7099
    %7465 = vmatpush.msra.mxu0 %v7098
    %7466 = vmatpush.msra.mxu0 %v7097
    %7467 = vmatpush.msra.mxu0 %v7096
    %7468 = vmatpush.msra.mxu0 %v7095
    %7469 = vmatpush.msra.mxu0 %v7094
    %7470 = vmatpush.msra.mxu0 %v7093
    %7471 = vmatpush.msra.mxu0 %v7092
    %7472 = vmatpush.msra.mxu0 %v7091
    %7473 = vmatpush.msra.mxu0 %v7090
    %7474 = vmatpush.msra.mxu0 %v7089
    %7475 = vmatpush.msra.mxu0 %v7088
    %7476 = vmatpush.msra.mxu0 %v7087
    %7477 = vmatpush.msra.mxu0 %v7086
    %7478 = vmatpush.msra.mxu0 %v7085
    %7479 = vmatmul.f32.gmra.mxu0 %v6879
    %v7480 = vpop.f32.mrf.mxu0
    %v7481 = vadd.f32 %v7461, %v7480
    %7482 = vdwg.mxu0
    %7483 = vmatpush.msra.mxu0 %v7116
    %7484 = vmatpush.msra.mxu0 %v7115
    %7485 = vmatpush.msra.mxu0 %v7114
    %7486 = vmatpush.msra.mxu0 %v7113
    %7487 = vmatpush.msra.mxu0 %v7112
    %7488 = vmatpush.msra.mxu0 %v7111
    %7489 = vmatpush.msra.mxu0 %v7110
    %7490 = vmatpush.msra.mxu0 %v7109
    %7491 = vmatpush.msra.mxu0 %v7108
    %7492 = vmatpush.msra.mxu0 %v7107
    %7493 = vmatpush.msra.mxu0 %v7106
    %7494 = vmatpush.msra.mxu0 %v7105
    %7495 = vmatpush.msra.mxu0 %v7104
    %7496 = vmatpush.msra.mxu0 %v7103
    %7497 = vmatpush.msra.mxu0 %v7102
    %7498 = vmatpush.msra.mxu0 %v7101
    %7499 = vmatmul.f32.gmra.mxu0 %v7048
    %v7500 = vpop.f32.mrf.mxu0
    %v7501 = vadd.f32 %v7481, %v7500
    %7502 = vdwg.mxu0
    %7503 = vmatpush.msra.mxu0 %v7132
    %7504 = vmatpush.msra.mxu0 %v7131
    %7505 = vmatpush.msra.mxu0 %v7130
    %7506 = vmatpush.msra.mxu0 %v7129
    %7507 = vmatpush.msra.mxu0 %v7128
    %7508 = vmatpush.msra.mxu0 %v7127
    %7509 = vmatpush.msra.mxu0 %v7126
    %7510 = vmatpush.msra.mxu0 %v7125
    %7511 = vmatpush.msra.mxu0 %v7124
    %7512 = vmatpush.msra.mxu0 %v7123
    %7513 = vmatpush.msra.mxu0 %v7122
    %7514 = vmatpush.msra.mxu0 %v7121
    %7515 = vmatpush.msra.mxu0 %v7120
    %7516 = vmatpush.msra.mxu0 %v7119
    %7517 = vmatpush.msra.mxu0 %v7118
    %7518 = vmatpush.msra.mxu0 %v7117
    %7519 = vmatmul.f32.gmra.mxu0 %v6965
    %v7520 = vpop.f32.mrf.mxu0
    %v7521 = vadd.f32 %v7501, %v7520
    %7522 = vdwg.mxu0
    %7523 = vmatpush.msra.mxu0 %v7148
    %7524 = vmatpush.msra.mxu0 %v7147
    %7525 = vmatpush.msra.mxu0 %v7146
    %7526 = vmatpush.msra.mxu0 %v7145
    %7527 = vmatpush.msra.mxu0 %v7144
    %7528 = vmatpush.msra.mxu0 %v7143
    %7529 = vmatpush.msra.mxu0 %v7142
    %7530 = vmatpush.msra.mxu0 %v7141
    %7531 = vmatpush.msra.mxu0 %v7140
    %7532 = vmatpush.msra.mxu0 %v7139
    %7533 = vmatpush.msra.mxu0 %v7138
    %7534 = vmatpush.msra.mxu0 %v7137
    %7535 = vmatpush.msra.mxu0 %v7136
    %7536 = vmatpush.msra.mxu0 %v7135
    %7537 = vmatpush.msra.mxu0 %v7134
    %7538 = vmatpush.msra.mxu0 %v7133
    %7539 = vmatmul.f32.gmra.mxu0 %v6966
    %v7540 = vpop.f32.mrf.mxu0
    %v7541 = vadd.f32 %v7521, %v7540
    %7542 = vdwg.mxu0
    %7543 = vmatpush.msra.mxu0 %v7164
    %7544 = vmatpush.msra.mxu0 %v7163
    %7545 = vmatpush.msra.mxu0 %v7162
    %7546 = vmatpush.msra.mxu0 %v7161
    %7547 = vmatpush.msra.mxu0 %v7160
    %7548 = vmatpush.msra.mxu0 %v7159
    %7549 = vmatpush.msra.mxu0 %v7158
    %7550 = vmatpush.msra.mxu0 %v7157
    %7551 = vmatpush.msra.mxu0 %v7156
    %7552 = vmatpush.msra.mxu0 %v7155
    %7553 = vmatpush.msra.mxu0 %v7154
    %7554 = vmatpush.msra.mxu0 %v7153
    %7555 = vmatpush.msra.mxu0 %v7152
    %7556 = vmatpush.msra.mxu0 %v7151
    %7557 = vmatpush.msra.mxu0 %v7150
    %7558 = vmatpush.msra.mxu0 %v7149
    %7559 = vmatmul.f32.gmra.mxu0 %v7049
    %v7560 = vpop.f32.mrf.mxu0
    %v7561 = vadd.f32 %v7541, %v7560
    %7562 = vdwg.mxu0
    %7563 = vmatpush.msra.mxu0 %v7180
    %7564 = vmatpush.msra.mxu0 %v7179
    %7565 = vmatpush.msra.mxu0 %v7178
    %7566 = vmatpush.msra.mxu0 %v7177
    %7567 = vmatpush.msra.mxu0 %v7176
    %7568 = vmatpush.msra.mxu0 %v7175
    %7569 = vmatpush.msra.mxu0 %v7174
    %7570 = vmatpush.msra.mxu0 %v7173
    %7571 = vmatpush.msra.mxu0 %v7172
    %7572 = vmatpush.msra.mxu0 %v7171
    %7573 = vmatpush.msra.mxu0 %v7170
    %7574 = vmatpush.msra.mxu0 %v7169
    %7575 = vmatpush.msra.mxu0 %v7168
    %7576 = vmatpush.msra.mxu0 %v7167
    %7577 = vmatpush.msra.mxu0 %v7166
    %7578 = vmatpush.msra.mxu0 %v7165
    %7579 = vmatmul.f32.gmra.mxu0 %v6985
    %v7580 = vpop.f32.mrf.mxu0
    %v7581 = vadd.f32 %v7561, %v7580
    %7582 = vdwg.mxu0
    %7583 = vmatpush.msra.mxu0 %v7196
    %7584 = vmatpush.msra.mxu0 %v7195
    %7585 = vmatpush.msra.mxu0 %v7194
    %7586 = vmatpush.msra.mxu0 %v7193
    %7587 = vmatpush.msra.mxu0 %v7192
    %7588 = vmatpush.msra.mxu0 %v7191
    %7589 = vmatpush.msra.mxu0 %v7190
    %7590 = vmatpush.msra.mxu0 %v7189
    %7591 = vmatpush.msra.mxu0 %v7188
    %7592 = vmatpush.msra.mxu0 %v7187
    %7593 = vmatpush.msra.mxu0 %v7186
    %7594 = vmatpush.msra.mxu0 %v7185
    %7595 = vmatpush.msra.mxu0 %v7184
    %7596 = vmatpush.msra.mxu0 %v7183
    %7597 = vmatpush.msra.mxu0 %v7182
    %7598 = vmatpush.msra.mxu0 %v7181
    %7599 = vmatmul.f32.gmra.mxu0 %v6986
    %v7600 = vpop.f32.mrf.mxu0
    %v7601 = vadd.f32 %v7581, %v7600
    %7602 = vdwg.mxu0
    %7603 = vmatpush.msra.mxu0 %v7212
    %7604 = vmatpush.msra.mxu0 %v7211
    %7605 = vmatpush.msra.mxu0 %v7210
    %7606 = vmatpush.msra.mxu0 %v7209
    %7607 = vmatpush.msra.mxu0 %v7208
    %7608 = vmatpush.msra.mxu0 %v7207
    %7609 = vmatpush.msra.mxu0 %v7206
    %7610 = vmatpush.msra.mxu0 %v7205
    %7611 = vmatpush.msra.mxu0 %v7204
    %7612 = vmatpush.msra.mxu0 %v7203
    %7613 = vmatpush.msra.mxu0 %v7202
    %7614 = vmatpush.msra.mxu0 %v7201
    %7615 = vmatpush.msra.mxu0 %v7200
    %7616 = vmatpush.msra.mxu0 %v7199
    %7617 = vmatpush.msra.mxu0 %v7198
    %7618 = vmatpush.msra.mxu0 %v7197
    %7619 = vmatmul.f32.gmra.mxu0 %v7050
    %v7620 = vpop.f32.mrf.mxu0
    %v7621 = vadd.f32 %v7601, %v7620
    %7622 = vdwg.mxu0
    %7623 = vmatpush.msra.mxu0 %v7228
    %7624 = vmatpush.msra.mxu0 %v7227
    %7625 = vmatpush.msra.mxu0 %v7226
    %7626 = vmatpush.msra.mxu0 %v7225
    %7627 = vmatpush.msra.mxu0 %v7224
    %7628 = vmatpush.msra.mxu0 %v7223
    %7629 = vmatpush.msra.mxu0 %v7222
    %7630 = vmatpush.msra.mxu0 %v7221
    %7631 = vmatpush.msra.mxu0 %v7220
    %7632 = vmatpush.msra.mxu0 %v7219
    %7633 = vmatpush.msra.mxu0 %v7218
    %7634 = vmatpush.msra.mxu0 %v7217
    %7635 = vmatpush.msra.mxu0 %v7216
    %7636 = vmatpush.msra.mxu0 %v7215
    %7637 = vmatpush.msra.mxu0 %v7214
    %7638 = vmatpush.msra.mxu0 %v7213
    %7639 = vmatmul.f32.gmra.mxu0 %v7004
    %v7640 = vpop.f32.mrf.mxu0
    %v7641 = vadd.f32 %v7621, %v7640
    %7642 = vdwg.mxu0
    %7643 = vmatpush.msra.mxu0 %v7244
    %7644 = vmatpush.msra.mxu0 %v7243
    %7645 = vmatpush.msra.mxu0 %v7242
    %7646 = vmatpush.msra.mxu0 %v7241
    %7647 = vmatpush.msra.mxu0 %v7240
    %7648 = vmatpush.msra.mxu0 %v7239
    %7649 = vmatpush.msra.mxu0 %v7238
    %7650 = vmatpush.msra.mxu0 %v7237
    %7651 = vmatpush.msra.mxu0 %v7236
    %7652 = vmatpush.msra.mxu0 %v7235
    %7653 = vmatpush.msra.mxu0 %v7234
    %7654 = vmatpush.msra.mxu0 %v7233
    %7655 = vmatpush.msra.mxu0 %v7232
    %7656 = vmatpush.msra.mxu0 %v7231
    %7657 = vmatpush.msra.mxu0 %v7230
    %7658 = vmatpush.msra.mxu0 %v7229
    %7659 = vmatmul.f32.gmra.mxu0 %v7005
    %v7660 = vpop.f32.mrf.mxu0
    %v7661 = vadd.f32 %v7641, %v7660
    %7662 = vdwg.mxu0
    %7663 = vmatpush.msra.mxu0 %v7260
    %7664 = vmatpush.msra.mxu0 %v7259
    %7665 = vmatpush.msra.mxu0 %v7258
    %7666 = vmatpush.msra.mxu0 %v7257
    %7667 = vmatpush.msra.mxu0 %v7256
    %7668 = vmatpush.msra.mxu0 %v7255
    %7669 = vmatpush.msra.mxu0 %v7254
    %7670 = vmatpush.msra.mxu0 %v7253
    %7671 = vmatpush.msra.mxu0 %v7252
    %7672 = vmatpush.msra.mxu0 %v7251
    %7673 = vmatpush.msra.mxu0 %v7250
    %7674 = vmatpush.msra.mxu0 %v7249
    %7675 = vmatpush.msra.mxu0 %v7248
    %7676 = vmatpush.msra.mxu0 %v7247
    %7677 = vmatpush.msra.mxu0 %v7246
    %7678 = vmatpush.msra.mxu0 %v7245
    %7679 = vmatmul.f32.gmra.mxu0 %v7006
    %v7680 = vpop.f32.mrf.mxu0
    %v7681 = vadd.f32 %v7661, %v7680
    %7682 = vdwg.mxu0
    %7683 = vmatpush.msra.mxu0 %v7276
    %7684 = vmatpush.msra.mxu0 %v7275
    %7685 = vmatpush.msra.mxu0 %v7274
    %7686 = vmatpush.msra.mxu0 %v7273
    %7687 = vmatpush.msra.mxu0 %v7272
    %7688 = vmatpush.msra.mxu0 %v7271
    %7689 = vmatpush.msra.mxu0 %v7270
    %7690 = vmatpush.msra.mxu0 %v7269
    %7691 = vmatpush.msra.mxu0 %v7268
    %7692 = vmatpush.msra.mxu0 %v7267
    %7693 = vmatpush.msra.mxu0 %v7266
    %7694 = vmatpush.msra.mxu0 %v7265
    %7695 = vmatpush.msra.mxu0 %v7264
    %7696 = vmatpush.msra.mxu0 %v7263
    %7697 = vmatpush.msra.mxu0 %v7262
    %7698 = vmatpush.msra.mxu0 %v7261
    %7699 = vmatmul.f32.gmra.mxu0 %v6791
    %v7700 = vpop.f32.mrf.mxu0
    %v7701 = vadd.f32 %v7681, %v7700
    %7702 = vdwg.mxu0
    %7703 = vmatpush.msra.mxu0 %v7292
    %7704 = vmatpush.msra.mxu0 %v7291
    %7705 = vmatpush.msra.mxu0 %v7290
    %7706 = vmatpush.msra.mxu0 %v7289
    %7707 = vmatpush.msra.mxu0 %v7288
    %7708 = vmatpush.msra.mxu0 %v7287
    %7709 = vmatpush.msra.mxu0 %v7286
    %7710 = vmatpush.msra.mxu0 %v7285
    %7711 = vmatpush.msra.mxu0 %v7284
    %7712 = vmatpush.msra.mxu0 %v7283
    %7713 = vmatpush.msra.mxu0 %v7282
    %7714 = vmatpush.msra.mxu0 %v7281
    %7715 = vmatpush.msra.mxu0 %v7280
    %7716 = vmatpush.msra.mxu0 %v7279
    %7717 = vmatpush.msra.mxu0 %v7278
    %7718 = vmatpush.msra.mxu0 %v7277
    %7719 = vmatmul.f32.gmra.mxu0 %v6841
    %v7720 = vpop.f32.mrf.mxu0
    %v7721 = vadd.f32 %v7701, %v7720
    %7722 = vdwg.mxu0
    %7723 = vmatpush.msra.mxu0 %v7308
    %7724 = vmatpush.msra.mxu0 %v7307
    %7725 = vmatpush.msra.mxu0 %v7306
    %7726 = vmatpush.msra.mxu0 %v7305
    %7727 = vmatpush.msra.mxu0 %v7304
    %7728 = vmatpush.msra.mxu0 %v7303
    %7729 = vmatpush.msra.mxu0 %v7302
    %7730 = vmatpush.msra.mxu0 %v7301
    %7731 = vmatpush.msra.mxu0 %v7300
    %7732 = vmatpush.msra.mxu0 %v7299
    %7733 = vmatpush.msra.mxu0 %v7298
    %7734 = vmatpush.msra.mxu0 %v7297
    %7735 = vmatpush.msra.mxu0 %v7296
    %7736 = vmatpush.msra.mxu0 %v7295
    %7737 = vmatpush.msra.mxu0 %v7294
    %7738 = vmatpush.msra.mxu0 %v7293
    %7739 = vmatmul.f32.gmra.mxu0 %v6891
    %v7740 = vpop.f32.mrf.mxu0
    %v7741 = vadd.f32 %v7721, %v7740
    %7742 = vdwg.mxu0
    %7743 = vmatpush.msra.mxu0 %v7324
    %7744 = vmatpush.msra.mxu0 %v7323
    %7745 = vmatpush.msra.mxu0 %v7322
    %7746 = vmatpush.msra.mxu0 %v7321
    %7747 = vmatpush.msra.mxu0 %v7320
    %7748 = vmatpush.msra.mxu0 %v7319
    %7749 = vmatpush.msra.mxu0 %v7318
    %7750 = vmatpush.msra.mxu0 %v7317
    %7751 = vmatpush.msra.mxu0 %v7316
    %7752 = vmatpush.msra.mxu0 %v7315
    %7753 = vmatpush.msra.mxu0 %v7314
    %7754 = vmatpush.msra.mxu0 %v7313
    %7755 = vmatpush.msra.mxu0 %v7312
    %7756 = vmatpush.msra.mxu0 %v7311
    %7757 = vmatpush.msra.mxu0 %v7310
    %7758 = vmatpush.msra.mxu0 %v7309
    %7759 = vmatmul.f32.gmra.mxu0 %v7051
    %v7760 = vpop.f32.mrf.mxu0
    %v7761 = vadd.f32 %v7741, %v7760
    %7762 = vdwg.mxu0
    %7763 = vmatpush.msra.mxu0 %v7340
    %7764 = vmatpush.msra.mxu0 %v7339
    %7765 = vmatpush.msra.mxu0 %v7338
    %7766 = vmatpush.msra.mxu0 %v7337
    %7767 = vmatpush.msra.mxu0 %v7336
    %7768 = vmatpush.msra.mxu0 %v7335
    %7769 = vmatpush.msra.mxu0 %v7334
    %7770 = vmatpush.msra.mxu0 %v7333
    %7771 = vmatpush.msra.mxu0 %v7332
    %7772 = vmatpush.msra.mxu0 %v7331
    %7773 = vmatpush.msra.mxu0 %v7330
    %7774 = vmatpush.msra.mxu0 %v7329
    %7775 = vmatpush.msra.mxu0 %v7328
    %7776 = vmatpush.msra.mxu0 %v7327
    %7777 = vmatpush.msra.mxu0 %v7326
    %7778 = vmatpush.msra.mxu0 %v7325
    %7779 = vmatmul.f32.gmra.mxu0 %v7023
    %v7780 = vpop.f32.mrf.mxu0
    %v7781 = vadd.f32 %v7761, %v7780
    %7782 = vdwg.mxu0
    %7783 = vmatpush.msra.mxu0 %v7356
    %7784 = vmatpush.msra.mxu0 %v7355
    %7785 = vmatpush.msra.mxu0 %v7354
    %7786 = vmatpush.msra.mxu0 %v7353
    %7787 = vmatpush.msra.mxu0 %v7352
    %7788 = vmatpush.msra.mxu0 %v7351
    %7789 = vmatpush.msra.mxu0 %v7350
    %7790 = vmatpush.msra.mxu0 %v7349
    %7791 = vmatpush.msra.mxu0 %v7348
    %7792 = vmatpush.msra.mxu0 %v7347
    %7793 = vmatpush.msra.mxu0 %v7346
    %7794 = vmatpush.msra.mxu0 %v7345
    %7795 = vmatpush.msra.mxu0 %v7344
    %7796 = vmatpush.msra.mxu0 %v7343
    %7797 = vmatpush.msra.mxu0 %v7342
    %7798 = vmatpush.msra.mxu0 %v7341
    %7799 = vmatmul.f32.gmra.mxu0 %v7024
    %v7800 = vpop.f32.mrf.mxu0
    %v7801 = vadd.f32 %v7781, %v7800
    %7802 = vdwg.mxu0
    %7803 = vmatpush.msra.mxu0 %v7372
    %7804 = vmatpush.msra.mxu0 %v7371
    %7805 = vmatpush.msra.mxu0 %v7370
    %7806 = vmatpush.msra.mxu0 %v7369
    %7807 = vmatpush.msra.mxu0 %v7368
    %7808 = vmatpush.msra.mxu0 %v7367
    %7809 = vmatpush.msra.mxu0 %v7366
    %7810 = vmatpush.msra.mxu0 %v7365
    %7811 = vmatpush.msra.mxu0 %v7364
    %7812 = vmatpush.msra.mxu0 %v7363
    %7813 = vmatpush.msra.mxu0 %v7362
    %7814 = vmatpush.msra.mxu0 %v7361
    %7815 = vmatpush.msra.mxu0 %v7360
    %7816 = vmatpush.msra.mxu0 %v7359
    %7817 = vmatpush.msra.mxu0 %v7358
    %7818 = vmatpush.msra.mxu0 %v7357
    %7819 = vmatmul.f32.gmra.mxu0 %v7052
    %v7820 = vpop.f32.mrf.mxu0
    %v7821 = vadd.f32 %v7801, %v7820
    %7822 = vdwg.mxu0
    %7823 = vmatpush.msra.mxu0 %v7388
    %7824 = vmatpush.msra.mxu0 %v7387
    %7825 = vmatpush.msra.mxu0 %v7386
    %7826 = vmatpush.msra.mxu0 %v7385
    %7827 = vmatpush.msra.mxu0 %v7384
    %7828 = vmatpush.msra.mxu0 %v7383
    %7829 = vmatpush.msra.mxu0 %v7382
    %7830 = vmatpush.msra.mxu0 %v7381
    %7831 = vmatpush.msra.mxu0 %v7380
    %7832 = vmatpush.msra.mxu0 %v7379
    %7833 = vmatpush.msra.mxu0 %v7378
    %7834 = vmatpush.msra.mxu0 %v7377
    %7835 = vmatpush.msra.mxu0 %v7376
    %7836 = vmatpush.msra.mxu0 %v7375
    %7837 = vmatpush.msra.mxu0 %v7374
    %7838 = vmatpush.msra.mxu0 %v7373
    %7839 = vmatmul.f32.gmra.mxu0 %v7042
    %v7840 = vpop.f32.mrf.mxu0
    %v7841 = vadd.f32 %v7821, %v7840
    %7842 = vdwg.mxu0
    %7843 = vmatpush.msra.mxu0 %v7404
    %7844 = vmatpush.msra.mxu0 %v7403
    %7845 = vmatpush.msra.mxu0 %v7402
    %7846 = vmatpush.msra.mxu0 %v7401
    %7847 = vmatpush.msra.mxu0 %v7400
    %7848 = vmatpush.msra.mxu0 %v7399
    %7849 = vmatpush.msra.mxu0 %v7398
    %7850 = vmatpush.msra.mxu0 %v7397
    %7851 = vmatpush.msra.mxu0 %v7396
    %7852 = vmatpush.msra.mxu0 %v7395
    %7853 = vmatpush.msra.mxu0 %v7394
    %7854 = vmatpush.msra.mxu0 %v7393
    %7855 = vmatpush.msra.mxu0 %v7392
    %7856 = vmatpush.msra.mxu0 %v7391
    %7857 = vmatpush.msra.mxu0 %v7390
    %7858 = vmatpush.msra.mxu0 %v7389
    %7859 = vmatmul.f32.gmra.mxu0 %v7043
    %v7860 = vpop.f32.mrf.mxu0
    %v7861 = vadd.f32 %v7841, %v7860
    %7862 = vdwg.mxu0
    %7863 = vmatpush.msra.mxu0 0.0
    %7864 = vmatpush.msra.mxu0 0.0
    %7865 = vmatpush.msra.mxu0 0.0
    %7866 = vmatpush.msra.mxu0 0.0
    %7867 = vmatpush.msra.mxu0 %v7416
    %7868 = vmatpush.msra.mxu0 %v7415
    %7869 = vmatpush.msra.mxu0 %v7414
    %7870 = vmatpush.msra.mxu0 %v7413
    %7871 = vmatpush.msra.mxu0 %v7412
    %7872 = vmatpush.msra.mxu0 %v7411
    %7873 = vmatpush.msra.mxu0 %v7410
    %7874 = vmatpush.msra.mxu0 %v7409
    %7875 = vmatpush.msra.mxu0 %v7408
    %7876 = vmatpush.msra.mxu0 %v7407
    %7877 = vmatpush.msra.mxu0 %v7406
    %7878 = vmatpush.msra.mxu0 %v7405
    %7879 = vmatmul.f32.gmra.mxu0 %v7421
    %v7880 = vpop.f32.mrf.mxu0
    %v7881 = vadd.f32 %v7861, %v7880
    %7882 = vdwg.mxu0
    %v7883 = vmax.f32 %v7881, 0.0
    %v7884 = vld [vmem:[#allocation13] sm:$0xff]
    %v7885 = vld [vmem:[#allocation13 + $0x8] sm:$0xff]
    %v7886 = vld [vmem:[#allocation13 + $0x10] sm:$0xff]
    %v7887 = vld [vmem:[#allocation13 + $0x18] sm:$0xff]
    %v7888 = vld [vmem:[#allocation13 + $0x20] sm:$0xff]
    %v7889 = vld [vmem:[#allocation13 + $0x28] sm:$0xff]
    %v7890 = vld [vmem:[#allocation13 + $0x30] sm:$0xff]
    %v7891 = vld [vmem:[#allocation13 + $0x38] sm:$0xff]
    %v7892 = vld [vmem:[#allocation13 + $0x40] sm:$0xff]
    %v7893 = vld [vmem:[#allocation13 + $0x48] sm:$0xff]
    %v7894 = vld [vmem:[#allocation13 + $0x50] sm:$0xff]
    %v7895 = vld [vmem:[#allocation13 + $0x58] sm:$0xff]
    %v7896 = vld [vmem:[#allocation13 + $0x60] sm:$0xff]
    %v7897 = vld [vmem:[#allocation13 + $0x68] sm:$0xff]
    %v7898 = vld [vmem:[#allocation13 + $0x70] sm:$0xff]
    %v7899 = vld [vmem:[#allocation13 + $0x78] sm:$0xff]
    %v7900 = vld [vmem:[#allocation14] sm:$0x1]
    %v7902 = vperm.slane %v7900, 0
    %7904 = vmatpush.msra.mxu0 %v7899
    %7905 = vmatpush.msra.mxu0 %v7898
    %7906 = vmatpush.msra.mxu0 %v7897
    %7907 = vmatpush.msra.mxu0 %v7896
    %7908 = vmatpush.msra.mxu0 %v7895
    %7909 = vmatpush.msra.mxu0 %v7894
    %7910 = vmatpush.msra.mxu0 %v7893
    %7911 = vmatpush.msra.mxu0 %v7892
    %7912 = vmatpush.msra.mxu0 %v7891
    %7913 = vmatpush.msra.mxu0 %v7890
    %7914 = vmatpush.msra.mxu0 %v7889
    %7915 = vmatpush.msra.mxu0 %v7888
    %7916 = vmatpush.msra.mxu0 %v7887
    %7917 = vmatpush.msra.mxu0 %v7886
    %7918 = vmatpush.msra.mxu0 %v7885
    %7919 = vmatpush.msra.mxu0 %v7884
    %7920 = vmatmul.f32.gmra.mxu0 %v7883
    %v7921 = vpop.f32.mrf.mxu0
    %v7922 = vadd.f32 %v7902, %v7921
    %7923 = vdwg.mxu0
    %7924 = vst [vmem:[#allocation16] sm:$0x3] %v7922
    // Predicated region
    $region70: #{cnn_forward.1} parent=1 // pred_check
      _
    $region71: #{cnn_forward.1} parent=1 // pred_check_branch
      %7926 = sbr.rel (0) target = $region73
    $region72: #{cnn_forward.1} parent=1 // pred_region
      %7928 = vsyncadd [#allocation4], 0
      %s7930 = sshll.u32 [#allocation16], 4
      %s7931 = int_to_ptr.vmem [resolvable:$true] %s7930
      %s7932 = sshll.u32 %s9, 4
      %s7933 = int_to_ptr.hbm [resolvable:$true] %s7932
      %7935 = dma.vmem_to_hbm [thread:$0]  %s7931, 32, %s7933, [#allocation4]
    $region73: #{cnn_forward.1} parent=1 // pred_fallthru
      _
    // Predicated region
    $region74: #{cnn_forward.1} parent=1 // pred_check
      _
    $region75: #{cnn_forward.1} parent=1 // pred_check_branch
      %7937 = sbr.rel (0) target = $region77
    $region76: #{cnn_forward.1} parent=1 // pred_region
      %7939 = dma.done [#allocation4], 32
    $region77: #{cnn_forward.1} parent=1 // pred_fallthru
      _
    %7940 = vsyncpa [#allocation3], 1
    %7941 = vsyncpa [#allocation6], 1
    %7942 = vsyncpa [#allocation9], 1
    %7943 = vsyncpa [#allocation12], 1
    %7944 = vsyncpa [#allocation15], 1
    %7945 = vsyncpa [#allocation4], 1

</llo_original>
